<compile_context>
chip_gen: v5e
topology: v5e:2x2
jax: 0.10.0
libtpu: 0.0.40
codegen_flags: <defaults>
</compile_context>

<pallas_src>
import functools
import math

import jax
import jax.numpy as jnp
from jax.experimental import pallas as pl
from jax.experimental.pallas import tpu as pltpu

EPS = 1e-5
CPAD = 128                      # lane-dense channel padding on conv outputs
TM_MAX = 512                    # max row-tile size (rows = N*Ho*Wo)
VMEM_LIMIT = 32 * 1024 * 1024
VMEM_SPEC = pl.BlockSpec(memory_space=pltpu.MemorySpace.VMEM)


def cdiv(a, b):
    return (a + b - 1) // b


def round_up(x, m):
    return cdiv(x, m) * m


# ----------------------------------------------------------------------------
# Pallas kernels
# ----------------------------------------------------------------------------
def conv_bn_kernel(*refs, relu, has_residual, n_rows, eps):
    """Fused conv-as-matmul + exact BatchNorm (+residual, +ReLU) for one conv.

    Grid: 1-D over row tiles ("arbitrary"). Per step: MXU matmul of one (tm, K)
    bf16 patch tile against the resident (K, CPAD) bf16 weights with f32
    accumulation, stored into a VMEM scratch spanning all tiles, plus
    per-channel sum / sum-of-squares accumulation. On the last step the global
    batch statistics are finalized and BN (+residual, +ReLU) is applied to the
    whole resident activation, written once as bf16.
    """
    if has_residual:
        p_ref, w_ref, g_ref, b_ref, r_ref, o_ref, y_scr, s_scr, ss_scr = refs
    else:
        p_ref, w_ref, g_ref, b_ref, o_ref, y_scr, s_scr, ss_scr = refs
        r_ref = None

    i = pl.program_id(0)

    @pl.when(i == 0)
    def _():
        s_scr[...] = jnp.zeros_like(s_scr)
        ss_scr[...] = jnp.zeros_like(ss_scr)

    y = jnp.dot(p_ref[...], w_ref[...], preferred_element_type=jnp.float32)
    y_scr[i] = y                                              # (tm, CPAD) f32
    s_scr[...] += jnp.sum(y, axis=0, keepdims=True)           # (1, CPAD)
    ss_scr[...] += jnp.sum(y * y, axis=0, keepdims=True)      # (1, CPAD)

    @pl.when(i == pl.num_programs(0) - 1)
    def _():
        inv_n = 1.0 / n_rows
        mean = s_scr[...] * inv_n                             # (1, CPAD)
        var = jnp.maximum(ss_scr[...] * inv_n - mean * mean, 0.0)
        scale = jax.lax.rsqrt(var + eps) * g_ref[...]
        shift = b_ref[...] - mean * scale
        out = y_scr[...] * scale[None] + shift[None]          # (nt, tm, CPAD)
        if has_residual:
            out = out + r_ref[...].astype(jnp.float32)
        if relu:
            out = jnp.maximum(out, 0.0)
        o_ref[...] = out.astype(o_ref.dtype)


def pool_fc_kernel(x_ref, w_ref, b_ref, o_ref, *, inv_hw):
    """AdaptiveAvgPool2d((1,1)) + flatten + Linear (class dim padded to 128 lanes)."""
    pooled = jnp.sum(x_ref[...].astype(jnp.float32), axis=1) * inv_hw   # (N, CPAD)
    o_ref[...] = jnp.dot(pooled, w_ref[...],
                         preferred_element_type=jnp.float32) + b_ref[...]


# ----------------------------------------------------------------------------
# JAX glue: im2col + kernel invocations
# ----------------------------------------------------------------------------
def im2col(x, k, stride, pad):
    """x: (N,H,W,C) NHWC -> (N*Ho*Wo, k*k*C) patches (column order: kh, kw, c)."""
    N, H, W, C = x.shape
    Ho = (H + 2 * pad - k) // stride + 1
    Wo = (W + 2 * pad - k) // stride + 1
    xp = jnp.pad(x, ((0, 0), (pad, pad), (pad, pad), (0, 0)))
    cols = []
    for kh in range(k):
        for kw in range(k):
            cols.append(xp[:, kh:kh + (Ho - 1) * stride + 1:stride,
                              kw:kw + (Wo - 1) * stride + 1:stride, :])
    patches = jnp.stack(cols, axis=3)                 # (N, Ho, Wo, k*k, C)
    return patches.reshape(N * Ho * Wo, k * k * C), (N, Ho, Wo)


def conv_bn(x, w, gamma, beta, *, stride, pad, relu, residual=None):
    """x: NHWC activation (only the first Cin channels are consumed).
    w: PyTorch (Cout, Cin, k, k). Returns NHWC bf16 with CPAD channels (real
    values in the first Cout, zeros elsewhere)."""
    cout, cin, k, _ = w.shape

    # Slice to real input channels BEFORE im2col, cast to bf16 BEFORE padding.
    xs = x[..., :cin].astype(jnp.bfloat16)
    patches, (N, Ho, Wo) = im2col(xs, k, stride, pad)

    R = N * Ho * Wo
    K_raw = patches.shape[1]
    K = round_up(K_raw, 128)

    # Row tile: multiple of 16 (bf16 sublane packing); aim for ~4 grid steps so
    # the patch DMA / MXU pipeline has work in flight even for small convs.
    tm = max(16, min(TM_MAX, round_up(cdiv(R, 4), 16)))
    Rp = round_up(R, tm)
    nt = Rp // tm

    patches = jnp.pad(patches, ((0, Rp - R), (0, K - K_raw)))   # bf16 already

    # Weight matrix (K, CPAD): real block top-left, zero padding elsewhere.
    w_t = jnp.transpose(w, (2, 3, 1, 0)).reshape(k * k * cin, cout)
    wmat = jnp.zeros((K, CPAD), jnp.bfloat16).at[:k * k * cin, :cout].set(
        w_t.astype(jnp.bfloat16))

    # gamma=1 / beta=0 on padded channels keeps them exactly zero through BN+ReLU.
    g = jnp.ones((1, CPAD), jnp.float32).at[0, :cout].set(gamma)
    b = jnp.zeros((1, CPAD), jnp.float32).at[0, :cout].set(beta)

    in_specs = [
        pl.BlockSpec((tm, K), lambda i: (i, 0)),            # patches: streamed
        pl.BlockSpec((K, CPAD), lambda i: (0, 0)),           # weights: resident
        pl.BlockSpec((1, CPAD), lambda i: (0, 0)),           # gamma
        pl.BlockSpec((1, CPAD), lambda i: (0, 0)),           # beta
    ]
    args = [patches, wmat, g, b]
    if residual is not None:
        res = residual.astype(jnp.bfloat16).reshape(R, CPAD)
        res = jnp.pad(res, ((0, Rp - R), (0, 0))).reshape(nt, tm, CPAD)
        in_specs.append(pl.BlockSpec((nt, tm, CPAD), lambda i: (0, 0, 0)))
        args.append(res)

    kern = functools.partial(conv_bn_kernel, relu=relu,
                             has_residual=residual is not None,
                             n_rows=float(R), eps=EPS)

    out = pl.pallas_call(
        kern,
        grid=(nt,),
        in_specs=in_specs,
        out_specs=pl.BlockSpec((nt, tm, CPAD), lambda i: (0, 0, 0)),   # resident
        out_shape=jax.ShapeDtypeStruct((nt, tm, CPAD), jnp.bfloat16),
        scratch_shapes=[
            pltpu.VMEM((nt, tm, CPAD), jnp.float32),   # raw conv output, all tiles
            pltpu.VMEM((1, CPAD), jnp.float32),        # per-channel sum
            pltpu.VMEM((1, CPAD), jnp.float32),        # per-channel sum of squares
        ],
        compiler_params=pltpu.CompilerParams(
            dimension_semantics=("arbitrary",),
            vmem_limit_bytes=VMEM_LIMIT,
        ),
    )(*args)

    # Padded rows [R, Rp) carry BN-shift garbage; they are sliced off here.
    return out.reshape(Rp, CPAD)[:R].reshape(N, Ho, Wo, CPAD)


def basic_block(x, bp, stride):
    """CIFAR BasicBlock (expansion=1): conv3x3-bn-relu, conv3x3-bn, +identity, relu."""
    out = conv_bn(x, bp['w1'], bp['g1'], bp['b1'], stride=stride, pad=1, relu=True)
    if 'wd' in bp:   # downsample path: conv1x1(stride) + bn
        identity = conv_bn(x, bp['wd'], bp['gd'], bp['bd'],
                           stride=stride, pad=0, relu=False)
    else:
        identity = x
    out = conv_bn(out, bp['w2'], bp['g2'], bp['b2'],
                  stride=1, pad=1, relu=True, residual=identity)
    return out


def head(x, w_fc, b_fc):
    """x NHWC bf16 (CPAD channels) -> avgpool(1,1) -> flatten -> fc, one Pallas kernel."""
    N, H, W, C = x.shape
    ncls, cin = w_fc.shape
    xr = x.reshape(N, H * W, C)
    wmat = jnp.zeros((C, CPAD), jnp.float32).at[:cin, :ncls].set(w_fc.T)
    bmat = jnp.zeros((1, CPAD), jnp.float32).at[0, :ncls].set(b_fc)
    out = pl.pallas_call(
        functools.partial(pool_fc_kernel, inv_hw=1.0 / (H * W)),
        out_shape=jax.ShapeDtypeStruct((N, CPAD), jnp.float32),
        in_specs=[VMEM_SPEC] * 3, out_specs=VMEM_SPEC,
        compiler_params=pltpu.CompilerParams(vmem_limit_bytes=VMEM_LIMIT),
    )(xr, wmat, bmat)
    return out[:, :ncls]


# ----------------------------------------------------------------------------
# Parameter construction (matching the module's __init__ init rules)
# ----------------------------------------------------------------------------
def kaiming_conv(key, cout, cin, k):
    fan_out = cout * k * k
    std = math.sqrt(2.0 / fan_out)                   # kaiming_normal, fan_out, relu
    return jax.random.normal(key, (cout, cin, k, k), jnp.float32) * std


def make_block_params(key, cin, planes, stride):
    k1, k2, kd = jax.random.split(key, 3)
    bp = {
        'w1': kaiming_conv(k1, planes, cin, 3),
        'g1': jnp.ones((planes,), jnp.float32), 'b1': jnp.zeros((planes,), jnp.float32),
        'w2': kaiming_conv(k2, planes, planes, 3),
        'g2': jnp.ones((planes,), jnp.float32), 'b2': jnp.zeros((planes,), jnp.float32),
    }
    if stride != 1 or cin != planes:
        bp['wd'] = kaiming_conv(kd, planes, cin, 1)
        bp['gd'] = jnp.ones((planes,), jnp.float32)
        bp['bd'] = jnp.zeros((planes,), jnp.float32)
    return bp


def make_params(key, num_classes=10, layers=(1, 1, 1)):
    keys = jax.random.split(key, 8)
    params = {
        'conv1_w': kaiming_conv(keys[0], 16, 3, 3),
        'bn1_g': jnp.ones((16,), jnp.float32),
        'bn1_b': jnp.zeros((16,), jnp.float32),
        'layer1': [], 'layer2': [], 'layer3': [],
    }
    cfgs = [('layer1', 16, 16, 1), ('layer2', 16, 32, 2), ('layer3', 32, 64, 2)]
    for li, (name, cin, planes, stride) in enumerate(cfgs):
        bkeys = jax.random.split(keys[1 + li], layers[li])
        for bidx in range(layers[li]):
            s = stride if bidx == 0 else 1
            ci = cin if bidx == 0 else planes
            params[name].append(make_block_params(bkeys[bidx], ci, planes, s))
    fan_in = 64
    bound = 1.0 / math.sqrt(fan_in)
    params['fc_w'] = jax.random.uniform(keys[5], (num_classes, 64), jnp.float32,
                                        -bound, bound)
    params['fc_b'] = jax.random.uniform(keys[6], (num_classes,), jnp.float32,
                                        -bound, bound)
    return params


# ----------------------------------------------------------------------------
# Forward pass (_forward_CIFAR10)
# ----------------------------------------------------------------------------
def resnet_forward(params, x_nchw):
    x = jnp.transpose(x_nchw, (0, 2, 3, 1))          # NCHW -> NHWC
    x = conv_bn(x, params['conv1_w'], params['bn1_g'], params['bn1_b'],
                stride=1, pad=1, relu=True)
    strides = {'layer1': 1, 'layer2': 2, 'layer3': 2}
    for name in ('layer1', 'layer2', 'layer3'):
        for bidx, bp in enumerate(params[name]):
            x = basic_block(x, bp, strides[name] if bidx == 0 else 1)
    return head(x, params['fc_w'], params['fc_b'])


if __name__ == "__main__":
    key = jax.random.PRNGKey(0)
    kx, kp = jax.random.split(key)
    # small input; batch=4 so every conv exercises the multi-tile (nt>1) path
    x = jax.random.normal(kx, (4, 3, 16, 16), jnp.float32)
    params = make_params(kp, num_classes=10, layers=(1, 1, 1))
    fwd = jax.jit(resnet_forward)
    out = fwd(params, x)
    out = jax.block_until_ready(out)
    assert out.shape == (4, 10)
    assert bool(jnp.all(jnp.isfinite(out)))
    print("KERNEL_OK")
</pallas_src>

<mosaic_0001>
module attributes {stable_mosaic.version = 11 : i64} {
  func.func @conv_bn_kernel(%arg0: i32, %arg1: memref<256x128xbf16, #tpu.memory_space<vmem>>, %arg2: memref<128x128xbf16, #tpu.memory_space<vmem>>, %arg3: memref<1x128xf32, #tpu.memory_space<vmem>>, %arg4: memref<1x128xf32, #tpu.memory_space<vmem>>, %arg5: memref<4x256x128xbf16, #tpu.memory_space<vmem>>, %arg6: memref<4x256x128xf32, #tpu.memory_space<vmem>>, %arg7: memref<1x128xf32, #tpu.memory_space<vmem>>, %arg8: memref<1x128xf32, #tpu.memory_space<vmem>>) attributes {dimension_semantics = [#tpu.dimension_semantics<arbitrary>], iteration_bounds = array<i64: 4>, scalar_prefetch = 0 : i64, scratch_operands = 3 : i64, tpu.core_type = #tpu.core_type<tc>, window_params = [{transform_indices = @transform_0, window_bounds = array<i64: 256, 128>}, {pipeline_mode = #tpu.pipeline_mode<synchronous>, transform_indices = @transform_1, window_bounds = array<i64: 128, 128>}, {pipeline_mode = #tpu.pipeline_mode<synchronous>, transform_indices = @transform_2, window_bounds = array<i64: 1, 128>}, {pipeline_mode = #tpu.pipeline_mode<synchronous>, transform_indices = @transform_3, window_bounds = array<i64: 1, 128>}, {pipeline_mode = #tpu.pipeline_mode<synchronous>, transform_indices = @transform_4, window_bounds = array<i64: 4, 256, 128>}]} {
    %c0_i32 = arith.constant 0 : i32
    %0 = arith.cmpi eq, %arg0, %c0_i32 : i32
    %1 = arith.extui %0 : i1 to i32
    %c0_i32_0 = arith.constant 0 : i32
    %2 = arith.cmpi ne, %1, %c0_i32_0 : i32
    scf.if %2 {
      %cst_17 = arith.constant 0.000000e+00 : f32
      %24 = vector.broadcast %cst_17 : f32 to vector<1x128xf32>
      %c0_18 = arith.constant 0 : index
      %c0_19 = arith.constant 0 : index
      %25 = vector.load %arg7[%c0_18, %c0_19] : memref<1x128xf32, #tpu.memory_space<vmem>>, vector<1x128xf32>
      tpu.vector_store %arg7[%c0_18, %c0_19], %24 {strides = array<i32>} : memref<1x128xf32, #tpu.memory_space<vmem>>, vector<1x128xf32>,
      %cst_20 = arith.constant 0.000000e+00 : f32
      %26 = vector.broadcast %cst_20 : f32 to vector<1x128xf32>
      %c0_21 = arith.constant 0 : index
      %c0_22 = arith.constant 0 : index
      %27 = vector.load %arg8[%c0_21, %c0_22] : memref<1x128xf32, #tpu.memory_space<vmem>>, vector<1x128xf32>
      tpu.vector_store %arg8[%c0_21, %c0_22], %26 {strides = array<i32>} : memref<1x128xf32, #tpu.memory_space<vmem>>, vector<1x128xf32>,
    } else {
    }
    %c0 = arith.constant 0 : index
    %c0_1 = arith.constant 0 : index
    %3 = vector.load %arg1[%c0, %c0_1] : memref<256x128xbf16, #tpu.memory_space<vmem>>, vector<256x128xbf16>
    %c0_2 = arith.constant 0 : index
    %c0_3 = arith.constant 0 : index
    %4 = vector.load %arg2[%c0_2, %c0_3] : memref<128x128xbf16, #tpu.memory_space<vmem>>, vector<128x128xbf16>
    %cst = arith.constant dense<0.000000e+00> : vector<256x128xf32>
    %5 = tpu.matmul %3, %4, %cst {dimension_numbers = #tpu.dot_dimension_numbers<[1], [0], [0], [1], [0, 0, 1, 1], [], []>} : vector<256x128xbf16>, vector<128x128xbf16>, vector<256x128xf32> -> vector<256x128xf32>
    %6 = arith.index_cast %arg0 : i32 to index
    %c0_4 = arith.constant 0 : index
    %c0_5 = arith.constant 0 : index
    %7 = vector.load %arg6[%6, %c0_4, %c0_5] : memref<4x256x128xf32, #tpu.memory_space<vmem>>, vector<1x256x128xf32>
    %8 = vector.shape_cast %7 : vector<1x256x128xf32> to vector<256x128xf32>
    %9 = vector.shape_cast %5 : vector<256x128xf32> to vector<1x256x128xf32>
    tpu.vector_store %arg6[%6, %c0_4, %c0_5], %9 {strides = array<i32>} : memref<4x256x128xf32, #tpu.memory_space<vmem>>, vector<1x256x128xf32>,
    %c0_6 = arith.constant 0 : index
    %c0_7 = arith.constant 0 : index
    %10 = vector.load %arg7[%c0_6, %c0_7] : memref<1x128xf32, #tpu.memory_space<vmem>>, vector<1x128xf32>
    %cst_8 = arith.constant dense<0.000000e+00> : vector<128xf32>
    %11 = vector.multi_reduction <add>, %5, %cst_8 [0] : vector<256x128xf32> to vector<128xf32>
    %12 = vector.shape_cast %11 : vector<128xf32> to vector<1x128xf32>
    %13 = arith.addf %10, %12 : vector<1x128xf32>
    %c0_9 = arith.constant 0 : index
    %c0_10 = arith.constant 0 : index
    %14 = vector.load %arg7[%c0_9, %c0_10] : memref<1x128xf32, #tpu.memory_space<vmem>>, vector<1x128xf32>
    tpu.vector_store %arg7[%c0_9, %c0_10], %13 {strides = array<i32>} : memref<1x128xf32, #tpu.memory_space<vmem>>, vector<1x128xf32>,
    %c0_11 = arith.constant 0 : index
    %c0_12 = arith.constant 0 : index
    %15 = vector.load %arg8[%c0_11, %c0_12] : memref<1x128xf32, #tpu.memory_space<vmem>>, vector<1x128xf32>
    %16 = arith.mulf %5, %5 : vector<256x128xf32>
    %cst_13 = arith.constant dense<0.000000e+00> : vector<128xf32>
    %17 = vector.multi_reduction <add>, %16, %cst_13 [0] : vector<256x128xf32> to vector<128xf32>
    %18 = vector.shape_cast %17 : vector<128xf32> to vector<1x128xf32>
    %19 = arith.addf %15, %18 : vector<1x128xf32>
    %c0_14 = arith.constant 0 : index
    %c0_15 = arith.constant 0 : index
    %20 = vector.load %arg8[%c0_14, %c0_15] : memref<1x128xf32, #tpu.memory_space<vmem>>, vector<1x128xf32>
    tpu.vector_store %arg8[%c0_14, %c0_15], %19 {strides = array<i32>} : memref<1x128xf32, #tpu.memory_space<vmem>>, vector<1x128xf32>,
    %c3_i32 = arith.constant 3 : i32
    %21 = arith.cmpi eq, %arg0, %c3_i32 : i32
    %22 = arith.extui %21 : i1 to i32
    %c0_i32_16 = arith.constant 0 : i32
    %23 = arith.cmpi ne, %22, %c0_i32_16 : i32
    scf.if %23 {
      %c0_17 = arith.constant 0 : index
      %c0_18 = arith.constant 0 : index
      %24 = vector.load %arg7[%c0_17, %c0_18] : memref<1x128xf32, #tpu.memory_space<vmem>>, vector<1x128xf32>
      %cst_19 = arith.constant 9.765625E-4 : f32
      %25 = vector.broadcast %cst_19 : f32 to vector<1x128xf32>
      %26 = arith.mulf %24, %25 : vector<1x128xf32>
      %c0_20 = arith.constant 0 : index
      %c0_21 = arith.constant 0 : index
      %27 = vector.load %arg8[%c0_20, %c0_21] : memref<1x128xf32, #tpu.memory_space<vmem>>, vector<1x128xf32>
      %cst_22 = arith.constant 9.765625E-4 : f32
      %28 = vector.broadcast %cst_22 : f32 to vector<1x128xf32>
      %29 = arith.mulf %27, %28 : vector<1x128xf32>
      %30 = arith.mulf %26, %26 : vector<1x128xf32>
      %31 = arith.subf %29, %30 : vector<1x128xf32>
      %cst_23 = arith.constant 0.000000e+00 : f32
      %32 = vector.broadcast %cst_23 : f32 to vector<1x128xf32>
      %33 = arith.maximumf %31, %32 : vector<1x128xf32>
      %cst_24 = arith.constant 9.99999974E-6 : f32
      %34 = vector.broadcast %cst_24 : f32 to vector<1x128xf32>
      %35 = arith.addf %33, %34 : vector<1x128xf32>
      %36 = math.rsqrt %35 : vector<1x128xf32>
      %c0_25 = arith.constant 0 : index
      %c0_26 = arith.constant 0 : index
      %37 = vector.load %arg3[%c0_25, %c0_26] : memref<1x128xf32, #tpu.memory_space<vmem>>, vector<1x128xf32>
      %38 = arith.mulf %36, %37 : vector<1x128xf32>
      %c0_27 = arith.constant 0 : index
      %c0_28 = arith.constant 0 : index
      %39 = vector.load %arg4[%c0_27, %c0_28] : memref<1x128xf32, #tpu.memory_space<vmem>>, vector<1x128xf32>
      %40 = arith.mulf %26, %38 : vector<1x128xf32>
      %41 = arith.subf %39, %40 : vector<1x128xf32>
      %c0_29 = arith.constant 0 : index
      %c0_30 = arith.constant 0 : index
      %c0_31 = arith.constant 0 : index
      %42 = vector.load %arg6[%c0_29, %c0_30, %c0_31] : memref<4x256x128xf32, #tpu.memory_space<vmem>>, vector<4x256x128xf32>
      %43 = vector.shape_cast %38 : vector<1x128xf32> to vector<1x1x128xf32>
      %44 = vector.broadcast %43 : vector<1x1x128xf32> to vector<4x256x128xf32>
      %45 = arith.mulf %42, %44 : vector<4x256x128xf32>
      %46 = vector.shape_cast %41 : vector<1x128xf32> to vector<1x1x128xf32>
      %47 = vector.broadcast %46 : vector<1x1x128xf32> to vector<4x256x128xf32>
      %48 = arith.addf %45, %47 : vector<4x256x128xf32>
      %cst_32 = arith.constant 0.000000e+00 : f32
      %49 = vector.broadcast %cst_32 : f32 to vector<4x256x128xf32>
      %50 = arith.maximumf %48, %49 : vector<4x256x128xf32>
      %51 = arith.truncf %50 : vector<4x256x128xf32> to vector<4x256x128xbf16>
      %c0_33 = arith.constant 0 : index
      %c0_34 = arith.constant 0 : index
      %c0_35 = arith.constant 0 : index
      %52 = vector.load %arg5[%c0_33, %c0_34, %c0_35] : memref<4x256x128xbf16, #tpu.memory_space<vmem>>, vector<4x256x128xbf16>
      tpu.vector_store %arg5[%c0_33, %c0_34, %c0_35], %51 {strides = array<i32>} : memref<4x256x128xbf16, #tpu.memory_space<vmem>>, vector<4x256x128xbf16>,
    } else {
    }
    return
  }
  func.func @transform_0(%arg0: i32) -> (i32, i32) {
    %c0_i32 = arith.constant 0 : i32
    %c0_i32_0 = arith.constant 0 : i32
    return %arg0, %c0_i32 : i32, i32
  }
  func.func @transform_1(%arg0: i32) -> (i32, i32) {
    %c0_i32 = arith.constant 0 : i32
    %c0_i32_0 = arith.constant 0 : i32
    %c0_i32_1 = arith.constant 0 : i32
    return %c0_i32, %c0_i32_0 : i32, i32
  }
  func.func @transform_2(%arg0: i32) -> (i32, i32) {
    %c0_i32 = arith.constant 0 : i32
    %c0_i32_0 = arith.constant 0 : i32
    %c0_i32_1 = arith.constant 0 : i32
    return %c0_i32, %c0_i32_0 : i32, i32
  }
  func.func @transform_3(%arg0: i32) -> (i32, i32) {
    %c0_i32 = arith.constant 0 : i32
    %c0_i32_0 = arith.constant 0 : i32
    %c0_i32_1 = arith.constant 0 : i32
    return %c0_i32, %c0_i32_0 : i32, i32
  }
  func.func @transform_4(%arg0: i32) -> (i32, i32, i32) {
    %c0_i32 = arith.constant 0 : i32
    %c0_i32_0 = arith.constant 0 : i32
    %c0_i32_1 = arith.constant 0 : i32
    %c0_i32_2 = arith.constant 0 : i32
    return %c0_i32, %c0_i32_0, %c0_i32_1 : i32, i32, i32
  }
}

module attributes {stable_mosaic.version = 11 : i64} {
  func.func @conv_bn_kernel(%arg0: i32, %arg1: memref<256x256xbf16, #tpu.memory_space<vmem>>, %arg2: memref<256x128xbf16, #tpu.memory_space<vmem>>, %arg3: memref<1x128xf32, #tpu.memory_space<vmem>>, %arg4: memref<1x128xf32, #tpu.memory_space<vmem>>, %arg5: memref<4x256x128xbf16, #tpu.memory_space<vmem>>, %arg6: memref<4x256x128xbf16, #tpu.memory_space<vmem>>, %arg7: memref<4x256x128xf32, #tpu.memory_space<vmem>>, %arg8: memref<1x128xf32, #tpu.memory_space<vmem>>, %arg9: memref<1x128xf32, #tpu.memory_space<vmem>>) attributes {dimension_semantics = [#tpu.dimension_semantics<arbitrary>], iteration_bounds = array<i64: 4>, scalar_prefetch = 0 : i64, scratch_operands = 3 : i64, tpu.core_type = #tpu.core_type<tc>, window_params = [{transform_indices = @transform_0, window_bounds = array<i64: 256, 256>}, {pipeline_mode = #tpu.pipeline_mode<synchronous>, transform_indices = @transform_1, window_bounds = array<i64: 256, 128>}, {pipeline_mode = #tpu.pipeline_mode<synchronous>, transform_indices = @transform_2, window_bounds = array<i64: 1, 128>}, {pipeline_mode = #tpu.pipeline_mode<synchronous>, transform_indices = @transform_3, window_bounds = array<i64: 1, 128>}, {pipeline_mode = #tpu.pipeline_mode<synchronous>, transform_indices = @transform_4, window_bounds = array<i64: 4, 256, 128>}, {pipeline_mode = #tpu.pipeline_mode<synchronous>, transform_indices = @transform_5, window_bounds = array<i64: 4, 256, 128>}]} {
    %c0_i32 = arith.constant 0 : i32
    %0 = arith.cmpi eq, %arg0, %c0_i32 : i32
    %1 = arith.extui %0 : i1 to i32
    %c0_i32_0 = arith.constant 0 : i32
    %2 = arith.cmpi ne, %1, %c0_i32_0 : i32
    scf.if %2 {
      %cst_17 = arith.constant 0.000000e+00 : f32
      %24 = vector.broadcast %cst_17 : f32 to vector<1x128xf32>
      %c0_18 = arith.constant 0 : index
      %c0_19 = arith.constant 0 : index
      %25 = vector.load %arg8[%c0_18, %c0_19] : memref<1x128xf32, #tpu.memory_space<vmem>>, vector<1x128xf32>
      tpu.vector_store %arg8[%c0_18, %c0_19], %24 {strides = array<i32>} : memref<1x128xf32, #tpu.memory_space<vmem>>, vector<1x128xf32>,
      %cst_20 = arith.constant 0.000000e+00 : f32
      %26 = vector.broadcast %cst_20 : f32 to vector<1x128xf32>
      %c0_21 = arith.constant 0 : index
      %c0_22 = arith.constant 0 : index
      %27 = vector.load %arg9[%c0_21, %c0_22] : memref<1x128xf32, #tpu.memory_space<vmem>>, vector<1x128xf32>
      tpu.vector_store %arg9[%c0_21, %c0_22], %26 {strides = array<i32>} : memref<1x128xf32, #tpu.memory_space<vmem>>, vector<1x128xf32>,
    } else {
    }
    %c0 = arith.constant 0 : index
    %c0_1 = arith.constant 0 : index
    %3 = vector.load %arg1[%c0, %c0_1] : memref<256x256xbf16, #tpu.memory_space<vmem>>, vector<256x256xbf16>
    %c0_2 = arith.constant 0 : index
    %c0_3 = arith.constant 0 : index
    %4 = vector.load %arg2[%c0_2, %c0_3] : memref<256x128xbf16, #tpu.memory_space<vmem>>, vector<256x128xbf16>
    %cst = arith.constant dense<0.000000e+00> : vector<256x128xf32>
    %5 = tpu.matmul %3, %4, %cst {dimension_numbers = #tpu.dot_dimension_numbers<[1], [0], [0], [1], [0, 0, 1, 1], [], []>} : vector<256x256xbf16>, vector<256x128xbf16>, vector<256x128xf32> -> vector<256x128xf32>
    %6 = arith.index_cast %arg0 : i32 to index
    %c0_4 = arith.constant 0 : index
    %c0_5 = arith.constant 0 : index
    %7 = vector.load %arg7[%6, %c0_4, %c0_5] : memref<4x256x128xf32, #tpu.memory_space<vmem>>, vector<1x256x128xf32>
    %8 = vector.shape_cast %7 : vector<1x256x128xf32> to vector<256x128xf32>
    %9 = vector.shape_cast %5 : vector<256x128xf32> to vector<1x256x128xf32>
    tpu.vector_store %arg7[%6, %c0_4, %c0_5], %9 {strides = array<i32>} : memref<4x256x128xf32, #tpu.memory_space<vmem>>, vector<1x256x128xf32>,
    %c0_6 = arith.constant 0 : index
    %c0_7 = arith.constant 0 : index
    %10 = vector.load %arg8[%c0_6, %c0_7] : memref<1x128xf32, #tpu.memory_space<vmem>>, vector<1x128xf32>
    %cst_8 = arith.constant dense<0.000000e+00> : vector<128xf32>
    %11 = vector.multi_reduction <add>, %5, %cst_8 [0] : vector<256x128xf32> to vector<128xf32>
    %12 = vector.shape_cast %11 : vector<128xf32> to vector<1x128xf32>
    %13 = arith.addf %10, %12 : vector<1x128xf32>
    %c0_9 = arith.constant 0 : index
    %c0_10 = arith.constant 0 : index
    %14 = vector.load %arg8[%c0_9, %c0_10] : memref<1x128xf32, #tpu.memory_space<vmem>>, vector<1x128xf32>
    tpu.vector_store %arg8[%c0_9, %c0_10], %13 {strides = array<i32>} : memref<1x128xf32, #tpu.memory_space<vmem>>, vector<1x128xf32>,
    %c0_11 = arith.constant 0 : index
    %c0_12 = arith.constant 0 : index
    %15 = vector.load %arg9[%c0_11, %c0_12] : memref<1x128xf32, #tpu.memory_space<vmem>>, vector<1x128xf32>
    %16 = arith.mulf %5, %5 : vector<256x128xf32>
    %cst_13 = arith.constant dense<0.000000e+00> : vector<128xf32>
    %17 = vector.multi_reduction <add>, %16, %cst_13 [0] : vector<256x128xf32> to vector<128xf32>
    %18 = vector.shape_cast %17 : vector<128xf32> to vector<1x128xf32>
    %19 = arith.addf %15, %18 : vector<1x128xf32>
    %c0_14 = arith.constant 0 : index
    %c0_15 = arith.constant 0 : index
    %20 = vector.load %arg9[%c0_14, %c0_15] : memref<1x128xf32, #tpu.memory_space<vmem>>, vector<1x128xf32>
    tpu.vector_store %arg9[%c0_14, %c0_15], %19 {strides = array<i32>} : memref<1x128xf32, #tpu.memory_space<vmem>>, vector<1x128xf32>,
    %c3_i32 = arith.constant 3 : i32
    %21 = arith.cmpi eq, %arg0, %c3_i32 : i32
    %22 = arith.extui %21 : i1 to i32
    %c0_i32_16 = arith.constant 0 : i32
    %23 = arith.cmpi ne, %22, %c0_i32_16 : i32
    scf.if %23 {
      %c0_17 = arith.constant 0 : index
      %c0_18 = arith.constant 0 : index
      %24 = vector.load %arg8[%c0_17, %c0_18] : memref<1x128xf32, #tpu.memory_space<vmem>>, vector<1x128xf32>
      %cst_19 = arith.constant 9.765625E-4 : f32
      %25 = vector.broadcast %cst_19 : f32 to vector<1x128xf32>
      %26 = arith.mulf %24, %25 : vector<1x128xf32>
      %c0_20 = arith.constant 0 : index
      %c0_21 = arith.constant 0 : index
      %27 = vector.load %arg9[%c0_20, %c0_21] : memref<1x128xf32, #tpu.memory_space<vmem>>, vector<1x128xf32>
      %cst_22 = arith.constant 9.765625E-4 : f32
      %28 = vector.broadcast %cst_22 : f32 to vector<1x128xf32>
      %29 = arith.mulf %27, %28 : vector<1x128xf32>
      %30 = arith.mulf %26, %26 : vector<1x128xf32>
      %31 = arith.subf %29, %30 : vector<1x128xf32>
      %cst_23 = arith.constant 0.000000e+00 : f32
      %32 = vector.broadcast %cst_23 : f32 to vector<1x128xf32>
      %33 = arith.maximumf %31, %32 : vector<1x128xf32>
      %cst_24 = arith.constant 9.99999974E-6 : f32
      %34 = vector.broadcast %cst_24 : f32 to vector<1x128xf32>
      %35 = arith.addf %33, %34 : vector<1x128xf32>
      %36 = math.rsqrt %35 : vector<1x128xf32>
      %c0_25 = arith.constant 0 : index
      %c0_26 = arith.constant 0 : index
      %37 = vector.load %arg3[%c0_25, %c0_26] : memref<1x128xf32, #tpu.memory_space<vmem>>, vector<1x128xf32>
      %38 = arith.mulf %36, %37 : vector<1x128xf32>
      %c0_27 = arith.constant 0 : index
      %c0_28 = arith.constant 0 : index
      %39 = vector.load %arg4[%c0_27, %c0_28] : memref<1x128xf32, #tpu.memory_space<vmem>>, vector<1x128xf32>
      %40 = arith.mulf %26, %38 : vector<1x128xf32>
      %41 = arith.subf %39, %40 : vector<1x128xf32>
      %c0_29 = arith.constant 0 : index
      %c0_30 = arith.constant 0 : index
      %c0_31 = arith.constant 0 : index
      %42 = vector.load %arg7[%c0_29, %c0_30, %c0_31] : memref<4x256x128xf32, #tpu.memory_space<vmem>>, vector<4x256x128xf32>
      %43 = vector.shape_cast %38 : vector<1x128xf32> to vector<1x1x128xf32>
      %44 = vector.broadcast %43 : vector<1x1x128xf32> to vector<4x256x128xf32>
      %45 = arith.mulf %42, %44 : vector<4x256x128xf32>
      %46 = vector.shape_cast %41 : vector<1x128xf32> to vector<1x1x128xf32>
      %47 = vector.broadcast %46 : vector<1x1x128xf32> to vector<4x256x128xf32>
      %48 = arith.addf %45, %47 : vector<4x256x128xf32>
      %c0_32 = arith.constant 0 : index
      %c0_33 = arith.constant 0 : index
      %c0_34 = arith.constant 0 : index
      %49 = vector.load %arg5[%c0_32, %c0_33, %c0_34] : memref<4x256x128xbf16, #tpu.memory_space<vmem>>, vector<4x256x128xbf16>
      %50 = arith.extf %49 : vector<4x256x128xbf16> to vector<4x256x128xf32>
      %51 = arith.addf %48, %50 : vector<4x256x128xf32>
      %cst_35 = arith.constant 0.000000e+00 : f32
      %52 = vector.broadcast %cst_35 : f32 to vector<4x256x128xf32>
      %53 = arith.maximumf %51, %52 : vector<4x256x128xf32>
      %54 = arith.truncf %53 : vector<4x256x128xf32> to vector<4x256x128xbf16>
      %c0_36 = arith.constant 0 : index
      %c0_37 = arith.constant 0 : index
      %c0_38 = arith.constant 0 : index
      %55 = vector.load %arg6[%c0_36, %c0_37, %c0_38] : memref<4x256x128xbf16, #tpu.memory_space<vmem>>, vector<4x256x128xbf16>
      tpu.vector_store %arg6[%c0_36, %c0_37, %c0_38], %54 {strides = array<i32>} : memref<4x256x128xbf16, #tpu.memory_space<vmem>>, vector<4x256x128xbf16>,
    } else {
    }
    return
  }
  func.func @transform_0(%arg0: i32) -> (i32, i32) {
    %c0_i32 = arith.constant 0 : i32
    %c0_i32_0 = arith.constant 0 : i32
    return %arg0, %c0_i32 : i32, i32
  }
  func.func @transform_1(%arg0: i32) -> (i32, i32) {
    %c0_i32 = arith.constant 0 : i32
    %c0_i32_0 = arith.constant 0 : i32
    %c0_i32_1 = arith.constant 0 : i32
    return %c0_i32, %c0_i32_0 : i32, i32
  }
  func.func @transform_2(%arg0: i32) -> (i32, i32) {
    %c0_i32 = arith.constant 0 : i32
    %c0_i32_0 = arith.constant 0 : i32
    %c0_i32_1 = arith.constant 0 : i32
    return %c0_i32, %c0_i32_0 : i32, i32
  }
  func.func @transform_3(%arg0: i32) -> (i32, i32) {
    %c0_i32 = arith.constant 0 : i32
    %c0_i32_0 = arith.constant 0 : i32
    %c0_i32_1 = arith.constant 0 : i32
    return %c0_i32, %c0_i32_0 : i32, i32
  }
  func.func @transform_4(%arg0: i32) -> (i32, i32, i32) {
    %c0_i32 = arith.constant 0 : i32
    %c0_i32_0 = arith.constant 0 : i32
    %c0_i32_1 = arith.constant 0 : i32
    %c0_i32_2 = arith.constant 0 : i32
    return %c0_i32, %c0_i32_0, %c0_i32_1 : i32, i32, i32
  }
  func.func @transform_5(%arg0: i32) -> (i32, i32, i32) {
    %c0_i32 = arith.constant 0 : i32
    %c0_i32_0 = arith.constant 0 : i32
    %c0_i32_1 = arith.constant 0 : i32
    %c0_i32_2 = arith.constant 0 : i32
    return %c0_i32, %c0_i32_0, %c0_i32_1 : i32, i32, i32
  }
}

module attributes {stable_mosaic.version = 11 : i64} {
  func.func @conv_bn_kernel(%arg0: i32, %arg1: memref<256x256xbf16, #tpu.memory_space<vmem>>, %arg2: memref<256x128xbf16, #tpu.memory_space<vmem>>, %arg3: memref<1x128xf32, #tpu.memory_space<vmem>>, %arg4: memref<1x128xf32, #tpu.memory_space<vmem>>, %arg5: memref<4x256x128xbf16, #tpu.memory_space<vmem>>, %arg6: memref<4x256x128xf32, #tpu.memory_space<vmem>>, %arg7: memref<1x128xf32, #tpu.memory_space<vmem>>, %arg8: memref<1x128xf32, #tpu.memory_space<vmem>>) attributes {dimension_semantics = [#tpu.dimension_semantics<arbitrary>], iteration_bounds = array<i64: 4>, scalar_prefetch = 0 : i64, scratch_operands = 3 : i64, tpu.core_type = #tpu.core_type<tc>, window_params = [{transform_indices = @transform_0, window_bounds = array<i64: 256, 256>}, {pipeline_mode = #tpu.pipeline_mode<synchronous>, transform_indices = @transform_1, window_bounds = array<i64: 256, 128>}, {pipeline_mode = #tpu.pipeline_mode<synchronous>, transform_indices = @transform_2, window_bounds = array<i64: 1, 128>}, {pipeline_mode = #tpu.pipeline_mode<synchronous>, transform_indices = @transform_3, window_bounds = array<i64: 1, 128>}, {pipeline_mode = #tpu.pipeline_mode<synchronous>, transform_indices = @transform_4, window_bounds = array<i64: 4, 256, 128>}]} {
    %c0_i32 = arith.constant 0 : i32
    %0 = arith.cmpi eq, %arg0, %c0_i32 : i32
    %1 = arith.extui %0 : i1 to i32
    %c0_i32_0 = arith.constant 0 : i32
    %2 = arith.cmpi ne, %1, %c0_i32_0 : i32
    scf.if %2 {
      %cst_17 = arith.constant 0.000000e+00 : f32
      %24 = vector.broadcast %cst_17 : f32 to vector<1x128xf32>
      %c0_18 = arith.constant 0 : index
      %c0_19 = arith.constant 0 : index
      %25 = vector.load %arg7[%c0_18, %c0_19] : memref<1x128xf32, #tpu.memory_space<vmem>>, vector<1x128xf32>
      tpu.vector_store %arg7[%c0_18, %c0_19], %24 {strides = array<i32>} : memref<1x128xf32, #tpu.memory_space<vmem>>, vector<1x128xf32>,
      %cst_20 = arith.constant 0.000000e+00 : f32
      %26 = vector.broadcast %cst_20 : f32 to vector<1x128xf32>
      %c0_21 = arith.constant 0 : index
      %c0_22 = arith.constant 0 : index
      %27 = vector.load %arg8[%c0_21, %c0_22] : memref<1x128xf32, #tpu.memory_space<vmem>>, vector<1x128xf32>
      tpu.vector_store %arg8[%c0_21, %c0_22], %26 {strides = array<i32>} : memref<1x128xf32, #tpu.memory_space<vmem>>, vector<1x128xf32>,
    } else {
    }
    %c0 = arith.constant 0 : index
    %c0_1 = arith.constant 0 : index
    %3 = vector.load %arg1[%c0, %c0_1] : memref<256x256xbf16, #tpu.memory_space<vmem>>, vector<256x256xbf16>
    %c0_2 = arith.constant 0 : index
    %c0_3 = arith.constant 0 : index
    %4 = vector.load %arg2[%c0_2, %c0_3] : memref<256x128xbf16, #tpu.memory_space<vmem>>, vector<256x128xbf16>
    %cst = arith.constant dense<0.000000e+00> : vector<256x128xf32>
    %5 = tpu.matmul %3, %4, %cst {dimension_numbers = #tpu.dot_dimension_numbers<[1], [0], [0], [1], [0, 0, 1, 1], [], []>} : vector<256x256xbf16>, vector<256x128xbf16>, vector<256x128xf32> -> vector<256x128xf32>
    %6 = arith.index_cast %arg0 : i32 to index
    %c0_4 = arith.constant 0 : index
    %c0_5 = arith.constant 0 : index
    %7 = vector.load %arg6[%6, %c0_4, %c0_5] : memref<4x256x128xf32, #tpu.memory_space<vmem>>, vector<1x256x128xf32>
    %8 = vector.shape_cast %7 : vector<1x256x128xf32> to vector<256x128xf32>
    %9 = vector.shape_cast %5 : vector<256x128xf32> to vector<1x256x128xf32>
    tpu.vector_store %arg6[%6, %c0_4, %c0_5], %9 {strides = array<i32>} : memref<4x256x128xf32, #tpu.memory_space<vmem>>, vector<1x256x128xf32>,
    %c0_6 = arith.constant 0 : index
    %c0_7 = arith.constant 0 : index
    %10 = vector.load %arg7[%c0_6, %c0_7] : memref<1x128xf32, #tpu.memory_space<vmem>>, vector<1x128xf32>
    %cst_8 = arith.constant dense<0.000000e+00> : vector<128xf32>
    %11 = vector.multi_reduction <add>, %5, %cst_8 [0] : vector<256x128xf32> to vector<128xf32>
    %12 = vector.shape_cast %11 : vector<128xf32> to vector<1x128xf32>
    %13 = arith.addf %10, %12 : vector<1x128xf32>
    %c0_9 = arith.constant 0 : index
    %c0_10 = arith.constant 0 : index
    %14 = vector.load %arg7[%c0_9, %c0_10] : memref<1x128xf32, #tpu.memory_space<vmem>>, vector<1x128xf32>
    tpu.vector_store %arg7[%c0_9, %c0_10], %13 {strides = array<i32>} : memref<1x128xf32, #tpu.memory_space<vmem>>, vector<1x128xf32>,
    %c0_11 = arith.constant 0 : index
    %c0_12 = arith.constant 0 : index
    %15 = vector.load %arg8[%c0_11, %c0_12] : memref<1x128xf32, #tpu.memory_space<vmem>>, vector<1x128xf32>
    %16 = arith.mulf %5, %5 : vector<256x128xf32>
    %cst_13 = arith.constant dense<0.000000e+00> : vector<128xf32>
    %17 = vector.multi_reduction <add>, %16, %cst_13 [0] : vector<256x128xf32> to vector<128xf32>
    %18 = vector.shape_cast %17 : vector<128xf32> to vector<1x128xf32>
    %19 = arith.addf %15, %18 : vector<1x128xf32>
    %c0_14 = arith.constant 0 : index
    %c0_15 = arith.constant 0 : index
    %20 = vector.load %arg8[%c0_14, %c0_15] : memref<1x128xf32, #tpu.memory_space<vmem>>, vector<1x128xf32>
    tpu.vector_store %arg8[%c0_14, %c0_15], %19 {strides = array<i32>} : memref<1x128xf32, #tpu.memory_space<vmem>>, vector<1x128xf32>,
    %c3_i32 = arith.constant 3 : i32
    %21 = arith.cmpi eq, %arg0, %c3_i32 : i32
    %22 = arith.extui %21 : i1 to i32
    %c0_i32_16 = arith.constant 0 : i32
    %23 = arith.cmpi ne, %22, %c0_i32_16 : i32
    scf.if %23 {
      %c0_17 = arith.constant 0 : index
      %c0_18 = arith.constant 0 : index
      %24 = vector.load %arg7[%c0_17, %c0_18] : memref<1x128xf32, #tpu.memory_space<vmem>>, vector<1x128xf32>
      %cst_19 = arith.constant 9.765625E-4 : f32
      %25 = vector.broadcast %cst_19 : f32 to vector<1x128xf32>
      %26 = arith.mulf %24, %25 : vector<1x128xf32>
      %c0_20 = arith.constant 0 : index
      %c0_21 = arith.constant 0 : index
      %27 = vector.load %arg8[%c0_20, %c0_21] : memref<1x128xf32, #tpu.memory_space<vmem>>, vector<1x128xf32>
      %cst_22 = arith.constant 9.765625E-4 : f32
      %28 = vector.broadcast %cst_22 : f32 to vector<1x128xf32>
      %29 = arith.mulf %27, %28 : vector<1x128xf32>
      %30 = arith.mulf %26, %26 : vector<1x128xf32>
      %31 = arith.subf %29, %30 : vector<1x128xf32>
      %cst_23 = arith.constant 0.000000e+00 : f32
      %32 = vector.broadcast %cst_23 : f32 to vector<1x128xf32>
      %33 = arith.maximumf %31, %32 : vector<1x128xf32>
      %cst_24 = arith.constant 9.99999974E-6 : f32
      %34 = vector.broadcast %cst_24 : f32 to vector<1x128xf32>
      %35 = arith.addf %33, %34 : vector<1x128xf32>
      %36 = math.rsqrt %35 : vector<1x128xf32>
      %c0_25 = arith.constant 0 : index
      %c0_26 = arith.constant 0 : index
      %37 = vector.load %arg3[%c0_25, %c0_26] : memref<1x128xf32, #tpu.memory_space<vmem>>, vector<1x128xf32>
      %38 = arith.mulf %36, %37 : vector<1x128xf32>
      %c0_27 = arith.constant 0 : index
      %c0_28 = arith.constant 0 : index
      %39 = vector.load %arg4[%c0_27, %c0_28] : memref<1x128xf32, #tpu.memory_space<vmem>>, vector<1x128xf32>
      %40 = arith.mulf %26, %38 : vector<1x128xf32>
      %41 = arith.subf %39, %40 : vector<1x128xf32>
      %c0_29 = arith.constant 0 : index
      %c0_30 = arith.constant 0 : index
      %c0_31 = arith.constant 0 : index
      %42 = vector.load %arg6[%c0_29, %c0_30, %c0_31] : memref<4x256x128xf32, #tpu.memory_space<vmem>>, vector<4x256x128xf32>
      %43 = vector.shape_cast %38 : vector<1x128xf32> to vector<1x1x128xf32>
      %44 = vector.broadcast %43 : vector<1x1x128xf32> to vector<4x256x128xf32>
      %45 = arith.mulf %42, %44 : vector<4x256x128xf32>
      %46 = vector.shape_cast %41 : vector<1x128xf32> to vector<1x1x128xf32>
      %47 = vector.broadcast %46 : vector<1x1x128xf32> to vector<4x256x128xf32>
      %48 = arith.addf %45, %47 : vector<4x256x128xf32>
      %cst_32 = arith.constant 0.000000e+00 : f32
      %49 = vector.broadcast %cst_32 : f32 to vector<4x256x128xf32>
      %50 = arith.maximumf %48, %49 : vector<4x256x128xf32>
      %51 = arith.truncf %50 : vector<4x256x128xf32> to vector<4x256x128xbf16>
      %c0_33 = arith.constant 0 : index
      %c0_34 = arith.constant 0 : index
      %c0_35 = arith.constant 0 : index
      %52 = vector.load %arg5[%c0_33, %c0_34, %c0_35] : memref<4x256x128xbf16, #tpu.memory_space<vmem>>, vector<4x256x128xbf16>
      tpu.vector_store %arg5[%c0_33, %c0_34, %c0_35], %51 {strides = array<i32>} : memref<4x256x128xbf16, #tpu.memory_space<vmem>>, vector<4x256x128xbf16>,
    } else {
    }
    return
  }
  func.func @transform_0(%arg0: i32) -> (i32, i32) {
    %c0_i32 = arith.constant 0 : i32
    %c0_i32_0 = arith.constant 0 : i32
    return %arg0, %c0_i32 : i32, i32
  }
  func.func @transform_1(%arg0: i32) -> (i32, i32) {
    %c0_i32 = arith.constant 0 : i32
    %c0_i32_0 = arith.constant 0 : i32
    %c0_i32_1 = arith.constant 0 : i32
    return %c0_i32, %c0_i32_0 : i32, i32
  }
  func.func @transform_2(%arg0: i32) -> (i32, i32) {
    %c0_i32 = arith.constant 0 : i32
    %c0_i32_0 = arith.constant 0 : i32
    %c0_i32_1 = arith.constant 0 : i32
    return %c0_i32, %c0_i32_0 : i32, i32
  }
  func.func @transform_3(%arg0: i32) -> (i32, i32) {
    %c0_i32 = arith.constant 0 : i32
    %c0_i32_0 = arith.constant 0 : i32
    %c0_i32_1 = arith.constant 0 : i32
    return %c0_i32, %c0_i32_0 : i32, i32
  }
  func.func @transform_4(%arg0: i32) -> (i32, i32, i32) {
    %c0_i32 = arith.constant 0 : i32
    %c0_i32_0 = arith.constant 0 : i32
    %c0_i32_1 = arith.constant 0 : i32
    %c0_i32_2 = arith.constant 0 : i32
    return %c0_i32, %c0_i32_0, %c0_i32_1 : i32, i32, i32
  }
}

module attributes {stable_mosaic.version = 11 : i64} {
  func.func @conv_bn_kernel(%arg0: i32, %arg1: memref<64x256xbf16, #tpu.memory_space<vmem>>, %arg2: memref<256x128xbf16, #tpu.memory_space<vmem>>, %arg3: memref<1x128xf32, #tpu.memory_space<vmem>>, %arg4: memref<1x128xf32, #tpu.memory_space<vmem>>, %arg5: memref<4x64x128xbf16, #tpu.memory_space<vmem>>, %arg6: memref<4x64x128xf32, #tpu.memory_space<vmem>>, %arg7: memref<1x128xf32, #tpu.memory_space<vmem>>, %arg8: memref<1x128xf32, #tpu.memory_space<vmem>>) attributes {dimension_semantics = [#tpu.dimension_semantics<arbitrary>], iteration_bounds = array<i64: 4>, scalar_prefetch = 0 : i64, scratch_operands = 3 : i64, tpu.core_type = #tpu.core_type<tc>, window_params = [{transform_indices = @transform_0, window_bounds = array<i64: 64, 256>}, {pipeline_mode = #tpu.pipeline_mode<synchronous>, transform_indices = @transform_1, window_bounds = array<i64: 256, 128>}, {pipeline_mode = #tpu.pipeline_mode<synchronous>, transform_indices = @transform_2, window_bounds = array<i64: 1, 128>}, {pipeline_mode = #tpu.pipeline_mode<synchronous>, transform_indices = @transform_3, window_bounds = array<i64: 1, 128>}, {pipeline_mode = #tpu.pipeline_mode<synchronous>, transform_indices = @transform_4, window_bounds = array<i64: 4, 64, 128>}]} {
    %c0_i32 = arith.constant 0 : i32
    %0 = arith.cmpi eq, %arg0, %c0_i32 : i32
    %1 = arith.extui %0 : i1 to i32
    %c0_i32_0 = arith.constant 0 : i32
    %2 = arith.cmpi ne, %1, %c0_i32_0 : i32
    scf.if %2 {
      %cst_17 = arith.constant 0.000000e+00 : f32
      %24 = vector.broadcast %cst_17 : f32 to vector<1x128xf32>
      %c0_18 = arith.constant 0 : index
      %c0_19 = arith.constant 0 : index
      %25 = vector.load %arg7[%c0_18, %c0_19] : memref<1x128xf32, #tpu.memory_space<vmem>>, vector<1x128xf32>
      tpu.vector_store %arg7[%c0_18, %c0_19], %24 {strides = array<i32>} : memref<1x128xf32, #tpu.memory_space<vmem>>, vector<1x128xf32>,
      %cst_20 = arith.constant 0.000000e+00 : f32
      %26 = vector.broadcast %cst_20 : f32 to vector<1x128xf32>
      %c0_21 = arith.constant 0 : index
      %c0_22 = arith.constant 0 : index
      %27 = vector.load %arg8[%c0_21, %c0_22] : memref<1x128xf32, #tpu.memory_space<vmem>>, vector<1x128xf32>
      tpu.vector_store %arg8[%c0_21, %c0_22], %26 {strides = array<i32>} : memref<1x128xf32, #tpu.memory_space<vmem>>, vector<1x128xf32>,
    } else {
    }
    %c0 = arith.constant 0 : index
    %c0_1 = arith.constant 0 : index
    %3 = vector.load %arg1[%c0, %c0_1] : memref<64x256xbf16, #tpu.memory_space<vmem>>, vector<64x256xbf16>
    %c0_2 = arith.constant 0 : index
    %c0_3 = arith.constant 0 : index
    %4 = vector.load %arg2[%c0_2, %c0_3] : memref<256x128xbf16, #tpu.memory_space<vmem>>, vector<256x128xbf16>
    %cst = arith.constant dense<0.000000e+00> : vector<64x128xf32>
    %5 = tpu.matmul %3, %4, %cst {dimension_numbers = #tpu.dot_dimension_numbers<[1], [0], [0], [1], [0, 0, 1, 1], [], []>} : vector<64x256xbf16>, vector<256x128xbf16>, vector<64x128xf32> -> vector<64x128xf32>
    %6 = arith.index_cast %arg0 : i32 to index
    %c0_4 = arith.constant 0 : index
    %c0_5 = arith.constant 0 : index
    %7 = vector.load %arg6[%6, %c0_4, %c0_5] : memref<4x64x128xf32, #tpu.memory_space<vmem>>, vector<1x64x128xf32>
    %8 = vector.shape_cast %7 : vector<1x64x128xf32> to vector<64x128xf32>
    %9 = vector.shape_cast %5 : vector<64x128xf32> to vector<1x64x128xf32>
    tpu.vector_store %arg6[%6, %c0_4, %c0_5], %9 {strides = array<i32>} : memref<4x64x128xf32, #tpu.memory_space<vmem>>, vector<1x64x128xf32>,
    %c0_6 = arith.constant 0 : index
    %c0_7 = arith.constant 0 : index
    %10 = vector.load %arg7[%c0_6, %c0_7] : memref<1x128xf32, #tpu.memory_space<vmem>>, vector<1x128xf32>
    %cst_8 = arith.constant dense<0.000000e+00> : vector<128xf32>
    %11 = vector.multi_reduction <add>, %5, %cst_8 [0] : vector<64x128xf32> to vector<128xf32>
    %12 = vector.shape_cast %11 : vector<128xf32> to vector<1x128xf32>
    %13 = arith.addf %10, %12 : vector<1x128xf32>
    %c0_9 = arith.constant 0 : index
    %c0_10 = arith.constant 0 : index
    %14 = vector.load %arg7[%c0_9, %c0_10] : memref<1x128xf32, #tpu.memory_space<vmem>>, vector<1x128xf32>
    tpu.vector_store %arg7[%c0_9, %c0_10], %13 {strides = array<i32>} : memref<1x128xf32, #tpu.memory_space<vmem>>, vector<1x128xf32>,
    %c0_11 = arith.constant 0 : index
    %c0_12 = arith.constant 0 : index
    %15 = vector.load %arg8[%c0_11, %c0_12] : memref<1x128xf32, #tpu.memory_space<vmem>>, vector<1x128xf32>
    %16 = arith.mulf %5, %5 : vector<64x128xf32>
    %cst_13 = arith.constant dense<0.000000e+00> : vector<128xf32>
    %17 = vector.multi_reduction <add>, %16, %cst_13 [0] : vector<64x128xf32> to vector<128xf32>
    %18 = vector.shape_cast %17 : vector<128xf32> to vector<1x128xf32>
    %19 = arith.addf %15, %18 : vector<1x128xf32>
    %c0_14 = arith.constant 0 : index
    %c0_15 = arith.constant 0 : index
    %20 = vector.load %arg8[%c0_14, %c0_15] : memref<1x128xf32, #tpu.memory_space<vmem>>, vector<1x128xf32>
    tpu.vector_store %arg8[%c0_14, %c0_15], %19 {strides = array<i32>} : memref<1x128xf32, #tpu.memory_space<vmem>>, vector<1x128xf32>,
    %c3_i32 = arith.constant 3 : i32
    %21 = arith.cmpi eq, %arg0, %c3_i32 : i32
    %22 = arith.extui %21 : i1 to i32
    %c0_i32_16 = arith.constant 0 : i32
    %23 = arith.cmpi ne, %22, %c0_i32_16 : i32
    scf.if %23 {
      %c0_17 = arith.constant 0 : index
      %c0_18 = arith.constant 0 : index
      %24 = vector.load %arg7[%c0_17, %c0_18] : memref<1x128xf32, #tpu.memory_space<vmem>>, vector<1x128xf32>
      %cst_19 = arith.constant 3.906250e-03 : f32
      %25 = vector.broadcast %cst_19 : f32 to vector<1x128xf32>
      %26 = arith.mulf %24, %25 : vector<1x128xf32>
      %c0_20 = arith.constant 0 : index
      %c0_21 = arith.constant 0 : index
      %27 = vector.load %arg8[%c0_20, %c0_21] : memref<1x128xf32, #tpu.memory_space<vmem>>, vector<1x128xf32>
      %cst_22 = arith.constant 3.906250e-03 : f32
      %28 = vector.broadcast %cst_22 : f32 to vector<1x128xf32>
      %29 = arith.mulf %27, %28 : vector<1x128xf32>
      %30 = arith.mulf %26, %26 : vector<1x128xf32>
      %31 = arith.subf %29, %30 : vector<1x128xf32>
      %cst_23 = arith.constant 0.000000e+00 : f32
      %32 = vector.broadcast %cst_23 : f32 to vector<1x128xf32>
      %33 = arith.maximumf %31, %32 : vector<1x128xf32>
      %cst_24 = arith.constant 9.99999974E-6 : f32
      %34 = vector.broadcast %cst_24 : f32 to vector<1x128xf32>
      %35 = arith.addf %33, %34 : vector<1x128xf32>
      %36 = math.rsqrt %35 : vector<1x128xf32>
      %c0_25 = arith.constant 0 : index
      %c0_26 = arith.constant 0 : index
      %37 = vector.load %arg3[%c0_25, %c0_26] : memref<1x128xf32, #tpu.memory_space<vmem>>, vector<1x128xf32>
      %38 = arith.mulf %36, %37 : vector<1x128xf32>
      %c0_27 = arith.constant 0 : index
      %c0_28 = arith.constant 0 : index
      %39 = vector.load %arg4[%c0_27, %c0_28] : memref<1x128xf32, #tpu.memory_space<vmem>>, vector<1x128xf32>
      %40 = arith.mulf %26, %38 : vector<1x128xf32>
      %41 = arith.subf %39, %40 : vector<1x128xf32>
      %c0_29 = arith.constant 0 : index
      %c0_30 = arith.constant 0 : index
      %c0_31 = arith.constant 0 : index
      %42 = vector.load %arg6[%c0_29, %c0_30, %c0_31] : memref<4x64x128xf32, #tpu.memory_space<vmem>>, vector<4x64x128xf32>
      %43 = vector.shape_cast %38 : vector<1x128xf32> to vector<1x1x128xf32>
      %44 = vector.broadcast %43 : vector<1x1x128xf32> to vector<4x64x128xf32>
      %45 = arith.mulf %42, %44 : vector<4x64x128xf32>
      %46 = vector.shape_cast %41 : vector<1x128xf32> to vector<1x1x128xf32>
      %47 = vector.broadcast %46 : vector<1x1x128xf32> to vector<4x64x128xf32>
      %48 = arith.addf %45, %47 : vector<4x64x128xf32>
      %cst_32 = arith.constant 0.000000e+00 : f32
      %49 = vector.broadcast %cst_32 : f32 to vector<4x64x128xf32>
      %50 = arith.maximumf %48, %49 : vector<4x64x128xf32>
      %51 = arith.truncf %50 : vector<4x64x128xf32> to vector<4x64x128xbf16>
      %c0_33 = arith.constant 0 : index
      %c0_34 = arith.constant 0 : index
      %c0_35 = arith.constant 0 : index
      %52 = vector.load %arg5[%c0_33, %c0_34, %c0_35] : memref<4x64x128xbf16, #tpu.memory_space<vmem>>, vector<4x64x128xbf16>
      tpu.vector_store %arg5[%c0_33, %c0_34, %c0_35], %51 {strides = array<i32>} : memref<4x64x128xbf16, #tpu.memory_space<vmem>>, vector<4x64x128xbf16>,
    } else {
    }
    return
  }
  func.func @transform_0(%arg0: i32) -> (i32, i32) {
    %c0_i32 = arith.constant 0 : i32
    %c0_i32_0 = arith.constant 0 : i32
    return %arg0, %c0_i32 : i32, i32
  }
  func.func @transform_1(%arg0: i32) -> (i32, i32) {
    %c0_i32 = arith.constant 0 : i32
    %c0_i32_0 = arith.constant 0 : i32
    %c0_i32_1 = arith.constant 0 : i32
    return %c0_i32, %c0_i32_0 : i32, i32
  }
  func.func @transform_2(%arg0: i32) -> (i32, i32) {
    %c0_i32 = arith.constant 0 : i32
    %c0_i32_0 = arith.constant 0 : i32
    %c0_i32_1 = arith.constant 0 : i32
    return %c0_i32, %c0_i32_0 : i32, i32
  }
  func.func @transform_3(%arg0: i32) -> (i32, i32) {
    %c0_i32 = arith.constant 0 : i32
    %c0_i32_0 = arith.constant 0 : i32
    %c0_i32_1 = arith.constant 0 : i32
    return %c0_i32, %c0_i32_0 : i32, i32
  }
  func.func @transform_4(%arg0: i32) -> (i32, i32, i32) {
    %c0_i32 = arith.constant 0 : i32
    %c0_i32_0 = arith.constant 0 : i32
    %c0_i32_1 = arith.constant 0 : i32
    %c0_i32_2 = arith.constant 0 : i32
    return %c0_i32, %c0_i32_0, %c0_i32_1 : i32, i32, i32
  }
}

module attributes {stable_mosaic.version = 11 : i64} {
  func.func @conv_bn_kernel(%arg0: i32, %arg1: memref<64x128xbf16, #tpu.memory_space<vmem>>, %arg2: memref<128x128xbf16, #tpu.memory_space<vmem>>, %arg3: memref<1x128xf32, #tpu.memory_space<vmem>>, %arg4: memref<1x128xf32, #tpu.memory_space<vmem>>, %arg5: memref<4x64x128xbf16, #tpu.memory_space<vmem>>, %arg6: memref<4x64x128xf32, #tpu.memory_space<vmem>>, %arg7: memref<1x128xf32, #tpu.memory_space<vmem>>, %arg8: memref<1x128xf32, #tpu.memory_space<vmem>>) attributes {dimension_semantics = [#tpu.dimension_semantics<arbitrary>], iteration_bounds = array<i64: 4>, scalar_prefetch = 0 : i64, scratch_operands = 3 : i64, tpu.core_type = #tpu.core_type<tc>, window_params = [{transform_indices = @transform_0, window_bounds = array<i64: 64, 128>}, {pipeline_mode = #tpu.pipeline_mode<synchronous>, transform_indices = @transform_1, window_bounds = array<i64: 128, 128>}, {pipeline_mode = #tpu.pipeline_mode<synchronous>, transform_indices = @transform_2, window_bounds = array<i64: 1, 128>}, {pipeline_mode = #tpu.pipeline_mode<synchronous>, transform_indices = @transform_3, window_bounds = array<i64: 1, 128>}, {pipeline_mode = #tpu.pipeline_mode<synchronous>, transform_indices = @transform_4, window_bounds = array<i64: 4, 64, 128>}]} {
    %c0_i32 = arith.constant 0 : i32
    %0 = arith.cmpi eq, %arg0, %c0_i32 : i32
    %1 = arith.extui %0 : i1 to i32
    %c0_i32_0 = arith.constant 0 : i32
    %2 = arith.cmpi ne, %1, %c0_i32_0 : i32
    scf.if %2 {
      %cst_17 = arith.constant 0.000000e+00 : f32
      %24 = vector.broadcast %cst_17 : f32 to vector<1x128xf32>
      %c0_18 = arith.constant 0 : index
      %c0_19 = arith.constant 0 : index
      %25 = vector.load %arg7[%c0_18, %c0_19] : memref<1x128xf32, #tpu.memory_space<vmem>>, vector<1x128xf32>
      tpu.vector_store %arg7[%c0_18, %c0_19], %24 {strides = array<i32>} : memref<1x128xf32, #tpu.memory_space<vmem>>, vector<1x128xf32>,
      %cst_20 = arith.constant 0.000000e+00 : f32
      %26 = vector.broadcast %cst_20 : f32 to vector<1x128xf32>
      %c0_21 = arith.constant 0 : index
      %c0_22 = arith.constant 0 : index
      %27 = vector.load %arg8[%c0_21, %c0_22] : memref<1x128xf32, #tpu.memory_space<vmem>>, vector<1x128xf32>
      tpu.vector_store %arg8[%c0_21, %c0_22], %26 {strides = array<i32>} : memref<1x128xf32, #tpu.memory_space<vmem>>, vector<1x128xf32>,
    } else {
    }
    %c0 = arith.constant 0 : index
    %c0_1 = arith.constant 0 : index
    %3 = vector.load %arg1[%c0, %c0_1] : memref<64x128xbf16, #tpu.memory_space<vmem>>, vector<64x128xbf16>
    %c0_2 = arith.constant 0 : index
    %c0_3 = arith.constant 0 : index
    %4 = vector.load %arg2[%c0_2, %c0_3] : memref<128x128xbf16, #tpu.memory_space<vmem>>, vector<128x128xbf16>
    %cst = arith.constant dense<0.000000e+00> : vector<64x128xf32>
    %5 = tpu.matmul %3, %4, %cst {dimension_numbers = #tpu.dot_dimension_numbers<[1], [0], [0], [1], [0, 0, 1, 1], [], []>} : vector<64x128xbf16>, vector<128x128xbf16>, vector<64x128xf32> -> vector<64x128xf32>
    %6 = arith.index_cast %arg0 : i32 to index
    %c0_4 = arith.constant 0 : index
    %c0_5 = arith.constant 0 : index
    %7 = vector.load %arg6[%6, %c0_4, %c0_5] : memref<4x64x128xf32, #tpu.memory_space<vmem>>, vector<1x64x128xf32>
    %8 = vector.shape_cast %7 : vector<1x64x128xf32> to vector<64x128xf32>
    %9 = vector.shape_cast %5 : vector<64x128xf32> to vector<1x64x128xf32>
    tpu.vector_store %arg6[%6, %c0_4, %c0_5], %9 {strides = array<i32>} : memref<4x64x128xf32, #tpu.memory_space<vmem>>, vector<1x64x128xf32>,
    %c0_6 = arith.constant 0 : index
    %c0_7 = arith.constant 0 : index
    %10 = vector.load %arg7[%c0_6, %c0_7] : memref<1x128xf32, #tpu.memory_space<vmem>>, vector<1x128xf32>
    %cst_8 = arith.constant dense<0.000000e+00> : vector<128xf32>
    %11 = vector.multi_reduction <add>, %5, %cst_8 [0] : vector<64x128xf32> to vector<128xf32>
    %12 = vector.shape_cast %11 : vector<128xf32> to vector<1x128xf32>
    %13 = arith.addf %10, %12 : vector<1x128xf32>
    %c0_9 = arith.constant 0 : index
    %c0_10 = arith.constant 0 : index
    %14 = vector.load %arg7[%c0_9, %c0_10] : memref<1x128xf32, #tpu.memory_space<vmem>>, vector<1x128xf32>
    tpu.vector_store %arg7[%c0_9, %c0_10], %13 {strides = array<i32>} : memref<1x128xf32, #tpu.memory_space<vmem>>, vector<1x128xf32>,
    %c0_11 = arith.constant 0 : index
    %c0_12 = arith.constant 0 : index
    %15 = vector.load %arg8[%c0_11, %c0_12] : memref<1x128xf32, #tpu.memory_space<vmem>>, vector<1x128xf32>
    %16 = arith.mulf %5, %5 : vector<64x128xf32>
    %cst_13 = arith.constant dense<0.000000e+00> : vector<128xf32>
    %17 = vector.multi_reduction <add>, %16, %cst_13 [0] : vector<64x128xf32> to vector<128xf32>
    %18 = vector.shape_cast %17 : vector<128xf32> to vector<1x128xf32>
    %19 = arith.addf %15, %18 : vector<1x128xf32>
    %c0_14 = arith.constant 0 : index
    %c0_15 = arith.constant 0 : index
    %20 = vector.load %arg8[%c0_14, %c0_15] : memref<1x128xf32, #tpu.memory_space<vmem>>, vector<1x128xf32>
    tpu.vector_store %arg8[%c0_14, %c0_15], %19 {strides = array<i32>} : memref<1x128xf32, #tpu.memory_space<vmem>>, vector<1x128xf32>,
    %c3_i32 = arith.constant 3 : i32
    %21 = arith.cmpi eq, %arg0, %c3_i32 : i32
    %22 = arith.extui %21 : i1 to i32
    %c0_i32_16 = arith.constant 0 : i32
    %23 = arith.cmpi ne, %22, %c0_i32_16 : i32
    scf.if %23 {
      %c0_17 = arith.constant 0 : index
      %c0_18 = arith.constant 0 : index
      %24 = vector.load %arg7[%c0_17, %c0_18] : memref<1x128xf32, #tpu.memory_space<vmem>>, vector<1x128xf32>
      %cst_19 = arith.constant 3.906250e-03 : f32
      %25 = vector.broadcast %cst_19 : f32 to vector<1x128xf32>
      %26 = arith.mulf %24, %25 : vector<1x128xf32>
      %c0_20 = arith.constant 0 : index
      %c0_21 = arith.constant 0 : index
      %27 = vector.load %arg8[%c0_20, %c0_21] : memref<1x128xf32, #tpu.memory_space<vmem>>, vector<1x128xf32>
      %cst_22 = arith.constant 3.906250e-03 : f32
      %28 = vector.broadcast %cst_22 : f32 to vector<1x128xf32>
      %29 = arith.mulf %27, %28 : vector<1x128xf32>
      %30 = arith.mulf %26, %26 : vector<1x128xf32>
      %31 = arith.subf %29, %30 : vector<1x128xf32>
      %cst_23 = arith.constant 0.000000e+00 : f32
      %32 = vector.broadcast %cst_23 : f32 to vector<1x128xf32>
      %33 = arith.maximumf %31, %32 : vector<1x128xf32>
      %cst_24 = arith.constant 9.99999974E-6 : f32
      %34 = vector.broadcast %cst_24 : f32 to vector<1x128xf32>
      %35 = arith.addf %33, %34 : vector<1x128xf32>
      %36 = math.rsqrt %35 : vector<1x128xf32>
      %c0_25 = arith.constant 0 : index
      %c0_26 = arith.constant 0 : index
      %37 = vector.load %arg3[%c0_25, %c0_26] : memref<1x128xf32, #tpu.memory_space<vmem>>, vector<1x128xf32>
      %38 = arith.mulf %36, %37 : vector<1x128xf32>
      %c0_27 = arith.constant 0 : index
      %c0_28 = arith.constant 0 : index
      %39 = vector.load %arg4[%c0_27, %c0_28] : memref<1x128xf32, #tpu.memory_space<vmem>>, vector<1x128xf32>
      %40 = arith.mulf %26, %38 : vector<1x128xf32>
      %41 = arith.subf %39, %40 : vector<1x128xf32>
      %c0_29 = arith.constant 0 : index
      %c0_30 = arith.constant 0 : index
      %c0_31 = arith.constant 0 : index
      %42 = vector.load %arg6[%c0_29, %c0_30, %c0_31] : memref<4x64x128xf32, #tpu.memory_space<vmem>>, vector<4x64x128xf32>
      %43 = vector.shape_cast %38 : vector<1x128xf32> to vector<1x1x128xf32>
      %44 = vector.broadcast %43 : vector<1x1x128xf32> to vector<4x64x128xf32>
      %45 = arith.mulf %42, %44 : vector<4x64x128xf32>
      %46 = vector.shape_cast %41 : vector<1x128xf32> to vector<1x1x128xf32>
      %47 = vector.broadcast %46 : vector<1x1x128xf32> to vector<4x64x128xf32>
      %48 = arith.addf %45, %47 : vector<4x64x128xf32>
      %49 = arith.truncf %48 : vector<4x64x128xf32> to vector<4x64x128xbf16>
      %c0_32 = arith.constant 0 : index
      %c0_33 = arith.constant 0 : index
      %c0_34 = arith.constant 0 : index
      %50 = vector.load %arg5[%c0_32, %c0_33, %c0_34] : memref<4x64x128xbf16, #tpu.memory_space<vmem>>, vector<4x64x128xbf16>
      tpu.vector_store %arg5[%c0_32, %c0_33, %c0_34], %49 {strides = array<i32>} : memref<4x64x128xbf16, #tpu.memory_space<vmem>>, vector<4x64x128xbf16>,
    } else {
    }
    return
  }
  func.func @transform_0(%arg0: i32) -> (i32, i32) {
    %c0_i32 = arith.constant 0 : i32
    %c0_i32_0 = arith.constant 0 : i32
    return %arg0, %c0_i32 : i32, i32
  }
  func.func @transform_1(%arg0: i32) -> (i32, i32) {
    %c0_i32 = arith.constant 0 : i32
    %c0_i32_0 = arith.constant 0 : i32
    %c0_i32_1 = arith.constant 0 : i32
    return %c0_i32, %c0_i32_0 : i32, i32
  }
  func.func @transform_2(%arg0: i32) -> (i32, i32) {
    %c0_i32 = arith.constant 0 : i32
    %c0_i32_0 = arith.constant 0 : i32
    %c0_i32_1 = arith.constant 0 : i32
    return %c0_i32, %c0_i32_0 : i32, i32
  }
  func.func @transform_3(%arg0: i32) -> (i32, i32) {
    %c0_i32 = arith.constant 0 : i32
    %c0_i32_0 = arith.constant 0 : i32
    %c0_i32_1 = arith.constant 0 : i32
    return %c0_i32, %c0_i32_0 : i32, i32
  }
  func.func @transform_4(%arg0: i32) -> (i32, i32, i32) {
    %c0_i32 = arith.constant 0 : i32
    %c0_i32_0 = arith.constant 0 : i32
    %c0_i32_1 = arith.constant 0 : i32
    %c0_i32_2 = arith.constant 0 : i32
    return %c0_i32, %c0_i32_0, %c0_i32_1 : i32, i32, i32
  }
}

module attributes {stable_mosaic.version = 11 : i64} {
  func.func @conv_bn_kernel(%arg0: i32, %arg1: memref<64x384xbf16, #tpu.memory_space<vmem>>, %arg2: memref<384x128xbf16, #tpu.memory_space<vmem>>, %arg3: memref<1x128xf32, #tpu.memory_space<vmem>>, %arg4: memref<1x128xf32, #tpu.memory_space<vmem>>, %arg5: memref<4x64x128xbf16, #tpu.memory_space<vmem>>, %arg6: memref<4x64x128xbf16, #tpu.memory_space<vmem>>, %arg7: memref<4x64x128xf32, #tpu.memory_space<vmem>>, %arg8: memref<1x128xf32, #tpu.memory_space<vmem>>, %arg9: memref<1x128xf32, #tpu.memory_space<vmem>>) attributes {dimension_semantics = [#tpu.dimension_semantics<arbitrary>], iteration_bounds = array<i64: 4>, scalar_prefetch = 0 : i64, scratch_operands = 3 : i64, tpu.core_type = #tpu.core_type<tc>, window_params = [{transform_indices = @transform_0, window_bounds = array<i64: 64, 384>}, {pipeline_mode = #tpu.pipeline_mode<synchronous>, transform_indices = @transform_1, window_bounds = array<i64: 384, 128>}, {pipeline_mode = #tpu.pipeline_mode<synchronous>, transform_indices = @transform_2, window_bounds = array<i64: 1, 128>}, {pipeline_mode = #tpu.pipeline_mode<synchronous>, transform_indices = @transform_3, window_bounds = array<i64: 1, 128>}, {pipeline_mode = #tpu.pipeline_mode<synchronous>, transform_indices = @transform_4, window_bounds = array<i64: 4, 64, 128>}, {pipeline_mode = #tpu.pipeline_mode<synchronous>, transform_indices = @transform_5, window_bounds = array<i64: 4, 64, 128>}]} {
    %c0_i32 = arith.constant 0 : i32
    %0 = arith.cmpi eq, %arg0, %c0_i32 : i32
    %1 = arith.extui %0 : i1 to i32
    %c0_i32_0 = arith.constant 0 : i32
    %2 = arith.cmpi ne, %1, %c0_i32_0 : i32
    scf.if %2 {
      %cst_17 = arith.constant 0.000000e+00 : f32
      %24 = vector.broadcast %cst_17 : f32 to vector<1x128xf32>
      %c0_18 = arith.constant 0 : index
      %c0_19 = arith.constant 0 : index
      %25 = vector.load %arg8[%c0_18, %c0_19] : memref<1x128xf32, #tpu.memory_space<vmem>>, vector<1x128xf32>
      tpu.vector_store %arg8[%c0_18, %c0_19], %24 {strides = array<i32>} : memref<1x128xf32, #tpu.memory_space<vmem>>, vector<1x128xf32>,
      %cst_20 = arith.constant 0.000000e+00 : f32
      %26 = vector.broadcast %cst_20 : f32 to vector<1x128xf32>
      %c0_21 = arith.constant 0 : index
      %c0_22 = arith.constant 0 : index
      %27 = vector.load %arg9[%c0_21, %c0_22] : memref<1x128xf32, #tpu.memory_space<vmem>>, vector<1x128xf32>
      tpu.vector_store %arg9[%c0_21, %c0_22], %26 {strides = array<i32>} : memref<1x128xf32, #tpu.memory_space<vmem>>, vector<1x128xf32>,
    } else {
    }
    %c0 = arith.constant 0 : index
    %c0_1 = arith.constant 0 : index
    %3 = vector.load %arg1[%c0, %c0_1] : memref<64x384xbf16, #tpu.memory_space<vmem>>, vector<64x384xbf16>
    %c0_2 = arith.constant 0 : index
    %c0_3 = arith.constant 0 : index
    %4 = vector.load %arg2[%c0_2, %c0_3] : memref<384x128xbf16, #tpu.memory_space<vmem>>, vector<384x128xbf16>
    %cst = arith.constant dense<0.000000e+00> : vector<64x128xf32>
    %5 = tpu.matmul %3, %4, %cst {dimension_numbers = #tpu.dot_dimension_numbers<[1], [0], [0], [1], [0, 0, 1, 1], [], []>} : vector<64x384xbf16>, vector<384x128xbf16>, vector<64x128xf32> -> vector<64x128xf32>
    %6 = arith.index_cast %arg0 : i32 to index
    %c0_4 = arith.constant 0 : index
    %c0_5 = arith.constant 0 : index
    %7 = vector.load %arg7[%6, %c0_4, %c0_5] : memref<4x64x128xf32, #tpu.memory_space<vmem>>, vector<1x64x128xf32>
    %8 = vector.shape_cast %7 : vector<1x64x128xf32> to vector<64x128xf32>
    %9 = vector.shape_cast %5 : vector<64x128xf32> to vector<1x64x128xf32>
    tpu.vector_store %arg7[%6, %c0_4, %c0_5], %9 {strides = array<i32>} : memref<4x64x128xf32, #tpu.memory_space<vmem>>, vector<1x64x128xf32>,
    %c0_6 = arith.constant 0 : index
    %c0_7 = arith.constant 0 : index
    %10 = vector.load %arg8[%c0_6, %c0_7] : memref<1x128xf32, #tpu.memory_space<vmem>>, vector<1x128xf32>
    %cst_8 = arith.constant dense<0.000000e+00> : vector<128xf32>
    %11 = vector.multi_reduction <add>, %5, %cst_8 [0] : vector<64x128xf32> to vector<128xf32>
    %12 = vector.shape_cast %11 : vector<128xf32> to vector<1x128xf32>
    %13 = arith.addf %10, %12 : vector<1x128xf32>
    %c0_9 = arith.constant 0 : index
    %c0_10 = arith.constant 0 : index
    %14 = vector.load %arg8[%c0_9, %c0_10] : memref<1x128xf32, #tpu.memory_space<vmem>>, vector<1x128xf32>
    tpu.vector_store %arg8[%c0_9, %c0_10], %13 {strides = array<i32>} : memref<1x128xf32, #tpu.memory_space<vmem>>, vector<1x128xf32>,
    %c0_11 = arith.constant 0 : index
    %c0_12 = arith.constant 0 : index
    %15 = vector.load %arg9[%c0_11, %c0_12] : memref<1x128xf32, #tpu.memory_space<vmem>>, vector<1x128xf32>
    %16 = arith.mulf %5, %5 : vector<64x128xf32>
    %cst_13 = arith.constant dense<0.000000e+00> : vector<128xf32>
    %17 = vector.multi_reduction <add>, %16, %cst_13 [0] : vector<64x128xf32> to vector<128xf32>
    %18 = vector.shape_cast %17 : vector<128xf32> to vector<1x128xf32>
    %19 = arith.addf %15, %18 : vector<1x128xf32>
    %c0_14 = arith.constant 0 : index
    %c0_15 = arith.constant 0 : index
    %20 = vector.load %arg9[%c0_14, %c0_15] : memref<1x128xf32, #tpu.memory_space<vmem>>, vector<1x128xf32>
    tpu.vector_store %arg9[%c0_14, %c0_15], %19 {strides = array<i32>} : memref<1x128xf32, #tpu.memory_space<vmem>>, vector<1x128xf32>,
    %c3_i32 = arith.constant 3 : i32
    %21 = arith.cmpi eq, %arg0, %c3_i32 : i32
    %22 = arith.extui %21 : i1 to i32
    %c0_i32_16 = arith.constant 0 : i32
    %23 = arith.cmpi ne, %22, %c0_i32_16 : i32
    scf.if %23 {
      %c0_17 = arith.constant 0 : index
      %c0_18 = arith.constant 0 : index
      %24 = vector.load %arg8[%c0_17, %c0_18] : memref<1x128xf32, #tpu.memory_space<vmem>>, vector<1x128xf32>
      %cst_19 = arith.constant 3.906250e-03 : f32
      %25 = vector.broadcast %cst_19 : f32 to vector<1x128xf32>
      %26 = arith.mulf %24, %25 : vector<1x128xf32>
      %c0_20 = arith.constant 0 : index
      %c0_21 = arith.constant 0 : index
      %27 = vector.load %arg9[%c0_20, %c0_21] : memref<1x128xf32, #tpu.memory_space<vmem>>, vector<1x128xf32>
      %cst_22 = arith.constant 3.906250e-03 : f32
      %28 = vector.broadcast %cst_22 : f32 to vector<1x128xf32>
      %29 = arith.mulf %27, %28 : vector<1x128xf32>
      %30 = arith.mulf %26, %26 : vector<1x128xf32>
      %31 = arith.subf %29, %30 : vector<1x128xf32>
      %cst_23 = arith.constant 0.000000e+00 : f32
      %32 = vector.broadcast %cst_23 : f32 to vector<1x128xf32>
      %33 = arith.maximumf %31, %32 : vector<1x128xf32>
      %cst_24 = arith.constant 9.99999974E-6 : f32
      %34 = vector.broadcast %cst_24 : f32 to vector<1x128xf32>
      %35 = arith.addf %33, %34 : vector<1x128xf32>
      %36 = math.rsqrt %35 : vector<1x128xf32>
      %c0_25 = arith.constant 0 : index
      %c0_26 = arith.constant 0 : index
      %37 = vector.load %arg3[%c0_25, %c0_26] : memref<1x128xf32, #tpu.memory_space<vmem>>, vector<1x128xf32>
      %38 = arith.mulf %36, %37 : vector<1x128xf32>
      %c0_27 = arith.constant 0 : index
      %c0_28 = arith.constant 0 : index
      %39 = vector.load %arg4[%c0_27, %c0_28] : memref<1x128xf32, #tpu.memory_space<vmem>>, vector<1x128xf32>
      %40 = arith.mulf %26, %38 : vector<1x128xf32>
      %41 = arith.subf %39, %40 : vector<1x128xf32>
      %c0_29 = arith.constant 0 : index
      %c0_30 = arith.constant 0 : index
      %c0_31 = arith.constant 0 : index
      %42 = vector.load %arg7[%c0_29, %c0_30, %c0_31] : memref<4x64x128xf32, #tpu.memory_space<vmem>>, vector<4x64x128xf32>
      %43 = vector.shape_cast %38 : vector<1x128xf32> to vector<1x1x128xf32>
      %44 = vector.broadcast %43 : vector<1x1x128xf32> to vector<4x64x128xf32>
      %45 = arith.mulf %42, %44 : vector<4x64x128xf32>
      %46 = vector.shape_cast %41 : vector<1x128xf32> to vector<1x1x128xf32>
      %47 = vector.broadcast %46 : vector<1x1x128xf32> to vector<4x64x128xf32>
      %48 = arith.addf %45, %47 : vector<4x64x128xf32>
      %c0_32 = arith.constant 0 : index
      %c0_33 = arith.constant 0 : index
      %c0_34 = arith.constant 0 : index
      %49 = vector.load %arg5[%c0_32, %c0_33, %c0_34] : memref<4x64x128xbf16, #tpu.memory_space<vmem>>, vector<4x64x128xbf16>
      %50 = arith.extf %49 : vector<4x64x128xbf16> to vector<4x64x128xf32>
      %51 = arith.addf %48, %50 : vector<4x64x128xf32>
      %cst_35 = arith.constant 0.000000e+00 : f32
      %52 = vector.broadcast %cst_35 : f32 to vector<4x64x128xf32>
      %53 = arith.maximumf %51, %52 : vector<4x64x128xf32>
      %54 = arith.truncf %53 : vector<4x64x128xf32> to vector<4x64x128xbf16>
      %c0_36 = arith.constant 0 : index
      %c0_37 = arith.constant 0 : index
      %c0_38 = arith.constant 0 : index
      %55 = vector.load %arg6[%c0_36, %c0_37, %c0_38] : memref<4x64x128xbf16, #tpu.memory_space<vmem>>, vector<4x64x128xbf16>
      tpu.vector_store %arg6[%c0_36, %c0_37, %c0_38], %54 {strides = array<i32>} : memref<4x64x128xbf16, #tpu.memory_space<vmem>>, vector<4x64x128xbf16>,
    } else {
    }
    return
  }
  func.func @transform_0(%arg0: i32) -> (i32, i32) {
    %c0_i32 = arith.constant 0 : i32
    %c0_i32_0 = arith.constant 0 : i32
    return %arg0, %c0_i32 : i32, i32
  }
  func.func @transform_1(%arg0: i32) -> (i32, i32) {
    %c0_i32 = arith.constant 0 : i32
    %c0_i32_0 = arith.constant 0 : i32
    %c0_i32_1 = arith.constant 0 : i32
    return %c0_i32, %c0_i32_0 : i32, i32
  }
  func.func @transform_2(%arg0: i32) -> (i32, i32) {
    %c0_i32 = arith.constant 0 : i32
    %c0_i32_0 = arith.constant 0 : i32
    %c0_i32_1 = arith.constant 0 : i32
    return %c0_i32, %c0_i32_0 : i32, i32
  }
  func.func @transform_3(%arg0: i32) -> (i32, i32) {
    %c0_i32 = arith.constant 0 : i32
    %c0_i32_0 = arith.constant 0 : i32
    %c0_i32_1 = arith.constant 0 : i32
    return %c0_i32, %c0_i32_0 : i32, i32
  }
  func.func @transform_4(%arg0: i32) -> (i32, i32, i32) {
    %c0_i32 = arith.constant 0 : i32
    %c0_i32_0 = arith.constant 0 : i32
    %c0_i32_1 = arith.constant 0 : i32
    %c0_i32_2 = arith.constant 0 : i32
    return %c0_i32, %c0_i32_0, %c0_i32_1 : i32, i32, i32
  }
  func.func @transform_5(%arg0: i32) -> (i32, i32, i32) {
    %c0_i32 = arith.constant 0 : i32
    %c0_i32_0 = arith.constant 0 : i32
    %c0_i32_1 = arith.constant 0 : i32
    %c0_i32_2 = arith.constant 0 : i32
    return %c0_i32, %c0_i32_0, %c0_i32_1 : i32, i32, i32
  }
}

module attributes {stable_mosaic.version = 11 : i64} {
  func.func @conv_bn_kernel(%arg0: i32, %arg1: memref<16x384xbf16, #tpu.memory_space<vmem>>, %arg2: memref<384x128xbf16, #tpu.memory_space<vmem>>, %arg3: memref<1x128xf32, #tpu.memory_space<vmem>>, %arg4: memref<1x128xf32, #tpu.memory_space<vmem>>, %arg5: memref<4x16x128xbf16, #tpu.memory_space<vmem>>, %arg6: memref<4x16x128xf32, #tpu.memory_space<vmem>>, %arg7: memref<1x128xf32, #tpu.memory_space<vmem>>, %arg8: memref<1x128xf32, #tpu.memory_space<vmem>>) attributes {dimension_semantics = [#tpu.dimension_semantics<arbitrary>], iteration_bounds = array<i64: 4>, scalar_prefetch = 0 : i64, scratch_operands = 3 : i64, tpu.core_type = #tpu.core_type<tc>, window_params = [{transform_indices = @transform_0, window_bounds = array<i64: 16, 384>}, {pipeline_mode = #tpu.pipeline_mode<synchronous>, transform_indices = @transform_1, window_bounds = array<i64: 384, 128>}, {pipeline_mode = #tpu.pipeline_mode<synchronous>, transform_indices = @transform_2, window_bounds = array<i64: 1, 128>}, {pipeline_mode = #tpu.pipeline_mode<synchronous>, transform_indices = @transform_3, window_bounds = array<i64: 1, 128>}, {pipeline_mode = #tpu.pipeline_mode<synchronous>, transform_indices = @transform_4, window_bounds = array<i64: 4, 16, 128>}]} {
    %c0_i32 = arith.constant 0 : i32
    %0 = arith.cmpi eq, %arg0, %c0_i32 : i32
    %1 = arith.extui %0 : i1 to i32
    %c0_i32_0 = arith.constant 0 : i32
    %2 = arith.cmpi ne, %1, %c0_i32_0 : i32
    scf.if %2 {
      %cst_17 = arith.constant 0.000000e+00 : f32
      %24 = vector.broadcast %cst_17 : f32 to vector<1x128xf32>
      %c0_18 = arith.constant 0 : index
      %c0_19 = arith.constant 0 : index
      %25 = vector.load %arg7[%c0_18, %c0_19] : memref<1x128xf32, #tpu.memory_space<vmem>>, vector<1x128xf32>
      tpu.vector_store %arg7[%c0_18, %c0_19], %24 {strides = array<i32>} : memref<1x128xf32, #tpu.memory_space<vmem>>, vector<1x128xf32>,
      %cst_20 = arith.constant 0.000000e+00 : f32
      %26 = vector.broadcast %cst_20 : f32 to vector<1x128xf32>
      %c0_21 = arith.constant 0 : index
      %c0_22 = arith.constant 0 : index
      %27 = vector.load %arg8[%c0_21, %c0_22] : memref<1x128xf32, #tpu.memory_space<vmem>>, vector<1x128xf32>
      tpu.vector_store %arg8[%c0_21, %c0_22], %26 {strides = array<i32>} : memref<1x128xf32, #tpu.memory_space<vmem>>, vector<1x128xf32>,
    } else {
    }
    %c0 = arith.constant 0 : index
    %c0_1 = arith.constant 0 : index
    %3 = vector.load %arg1[%c0, %c0_1] : memref<16x384xbf16, #tpu.memory_space<vmem>>, vector<16x384xbf16>
    %c0_2 = arith.constant 0 : index
    %c0_3 = arith.constant 0 : index
    %4 = vector.load %arg2[%c0_2, %c0_3] : memref<384x128xbf16, #tpu.memory_space<vmem>>, vector<384x128xbf16>
    %cst = arith.constant dense<0.000000e+00> : vector<16x128xf32>
    %5 = tpu.matmul %3, %4, %cst {dimension_numbers = #tpu.dot_dimension_numbers<[1], [0], [0], [1], [0, 0, 1, 1], [], []>} : vector<16x384xbf16>, vector<384x128xbf16>, vector<16x128xf32> -> vector<16x128xf32>
    %6 = arith.index_cast %arg0 : i32 to index
    %c0_4 = arith.constant 0 : index
    %c0_5 = arith.constant 0 : index
    %7 = vector.load %arg6[%6, %c0_4, %c0_5] : memref<4x16x128xf32, #tpu.memory_space<vmem>>, vector<1x16x128xf32>
    %8 = vector.shape_cast %7 : vector<1x16x128xf32> to vector<16x128xf32>
    %9 = vector.shape_cast %5 : vector<16x128xf32> to vector<1x16x128xf32>
    tpu.vector_store %arg6[%6, %c0_4, %c0_5], %9 {strides = array<i32>} : memref<4x16x128xf32, #tpu.memory_space<vmem>>, vector<1x16x128xf32>,
    %c0_6 = arith.constant 0 : index
    %c0_7 = arith.constant 0 : index
    %10 = vector.load %arg7[%c0_6, %c0_7] : memref<1x128xf32, #tpu.memory_space<vmem>>, vector<1x128xf32>
    %cst_8 = arith.constant dense<0.000000e+00> : vector<128xf32>
    %11 = vector.multi_reduction <add>, %5, %cst_8 [0] : vector<16x128xf32> to vector<128xf32>
    %12 = vector.shape_cast %11 : vector<128xf32> to vector<1x128xf32>
    %13 = arith.addf %10, %12 : vector<1x128xf32>
    %c0_9 = arith.constant 0 : index
    %c0_10 = arith.constant 0 : index
    %14 = vector.load %arg7[%c0_9, %c0_10] : memref<1x128xf32, #tpu.memory_space<vmem>>, vector<1x128xf32>
    tpu.vector_store %arg7[%c0_9, %c0_10], %13 {strides = array<i32>} : memref<1x128xf32, #tpu.memory_space<vmem>>, vector<1x128xf32>,
    %c0_11 = arith.constant 0 : index
    %c0_12 = arith.constant 0 : index
    %15 = vector.load %arg8[%c0_11, %c0_12] : memref<1x128xf32, #tpu.memory_space<vmem>>, vector<1x128xf32>
    %16 = arith.mulf %5, %5 : vector<16x128xf32>
    %cst_13 = arith.constant dense<0.000000e+00> : vector<128xf32>
    %17 = vector.multi_reduction <add>, %16, %cst_13 [0] : vector<16x128xf32> to vector<128xf32>
    %18 = vector.shape_cast %17 : vector<128xf32> to vector<1x128xf32>
    %19 = arith.addf %15, %18 : vector<1x128xf32>
    %c0_14 = arith.constant 0 : index
    %c0_15 = arith.constant 0 : index
    %20 = vector.load %arg8[%c0_14, %c0_15] : memref<1x128xf32, #tpu.memory_space<vmem>>, vector<1x128xf32>
    tpu.vector_store %arg8[%c0_14, %c0_15], %19 {strides = array<i32>} : memref<1x128xf32, #tpu.memory_space<vmem>>, vector<1x128xf32>,
    %c3_i32 = arith.constant 3 : i32
    %21 = arith.cmpi eq, %arg0, %c3_i32 : i32
    %22 = arith.extui %21 : i1 to i32
    %c0_i32_16 = arith.constant 0 : i32
    %23 = arith.cmpi ne, %22, %c0_i32_16 : i32
    scf.if %23 {
      %c0_17 = arith.constant 0 : index
      %c0_18 = arith.constant 0 : index
      %24 = vector.load %arg7[%c0_17, %c0_18] : memref<1x128xf32, #tpu.memory_space<vmem>>, vector<1x128xf32>
      %cst_19 = arith.constant 1.562500e-02 : f32
      %25 = vector.broadcast %cst_19 : f32 to vector<1x128xf32>
      %26 = arith.mulf %24, %25 : vector<1x128xf32>
      %c0_20 = arith.constant 0 : index
      %c0_21 = arith.constant 0 : index
      %27 = vector.load %arg8[%c0_20, %c0_21] : memref<1x128xf32, #tpu.memory_space<vmem>>, vector<1x128xf32>
      %cst_22 = arith.constant 1.562500e-02 : f32
      %28 = vector.broadcast %cst_22 : f32 to vector<1x128xf32>
      %29 = arith.mulf %27, %28 : vector<1x128xf32>
      %30 = arith.mulf %26, %26 : vector<1x128xf32>
      %31 = arith.subf %29, %30 : vector<1x128xf32>
      %cst_23 = arith.constant 0.000000e+00 : f32
      %32 = vector.broadcast %cst_23 : f32 to vector<1x128xf32>
      %33 = arith.maximumf %31, %32 : vector<1x128xf32>
      %cst_24 = arith.constant 9.99999974E-6 : f32
      %34 = vector.broadcast %cst_24 : f32 to vector<1x128xf32>
      %35 = arith.addf %33, %34 : vector<1x128xf32>
      %36 = math.rsqrt %35 : vector<1x128xf32>
      %c0_25 = arith.constant 0 : index
      %c0_26 = arith.constant 0 : index
      %37 = vector.load %arg3[%c0_25, %c0_26] : memref<1x128xf32, #tpu.memory_space<vmem>>, vector<1x128xf32>
      %38 = arith.mulf %36, %37 : vector<1x128xf32>
      %c0_27 = arith.constant 0 : index
      %c0_28 = arith.constant 0 : index
      %39 = vector.load %arg4[%c0_27, %c0_28] : memref<1x128xf32, #tpu.memory_space<vmem>>, vector<1x128xf32>
      %40 = arith.mulf %26, %38 : vector<1x128xf32>
      %41 = arith.subf %39, %40 : vector<1x128xf32>
      %c0_29 = arith.constant 0 : index
      %c0_30 = arith.constant 0 : index
      %c0_31 = arith.constant 0 : index
      %42 = vector.load %arg6[%c0_29, %c0_30, %c0_31] : memref<4x16x128xf32, #tpu.memory_space<vmem>>, vector<4x16x128xf32>
      %43 = vector.shape_cast %38 : vector<1x128xf32> to vector<1x1x128xf32>
      %44 = vector.broadcast %43 : vector<1x1x128xf32> to vector<4x16x128xf32>
      %45 = arith.mulf %42, %44 : vector<4x16x128xf32>
      %46 = vector.shape_cast %41 : vector<1x128xf32> to vector<1x1x128xf32>
      %47 = vector.broadcast %46 : vector<1x1x128xf32> to vector<4x16x128xf32>
      %48 = arith.addf %45, %47 : vector<4x16x128xf32>
      %cst_32 = arith.constant 0.000000e+00 : f32
      %49 = vector.broadcast %cst_32 : f32 to vector<4x16x128xf32>
      %50 = arith.maximumf %48, %49 : vector<4x16x128xf32>
      %51 = arith.truncf %50 : vector<4x16x128xf32> to vector<4x16x128xbf16>
      %c0_33 = arith.constant 0 : index
      %c0_34 = arith.constant 0 : index
      %c0_35 = arith.constant 0 : index
      %52 = vector.load %arg5[%c0_33, %c0_34, %c0_35] : memref<4x16x128xbf16, #tpu.memory_space<vmem>>, vector<4x16x128xbf16>
      tpu.vector_store %arg5[%c0_33, %c0_34, %c0_35], %51 {strides = array<i32>} : memref<4x16x128xbf16, #tpu.memory_space<vmem>>, vector<4x16x128xbf16>,
    } else {
    }
    return
  }
  func.func @transform_0(%arg0: i32) -> (i32, i32) {
    %c0_i32 = arith.constant 0 : i32
    %c0_i32_0 = arith.constant 0 : i32
    return %arg0, %c0_i32 : i32, i32
  }
  func.func @transform_1(%arg0: i32) -> (i32, i32) {
    %c0_i32 = arith.constant 0 : i32
    %c0_i32_0 = arith.constant 0 : i32
    %c0_i32_1 = arith.constant 0 : i32
    return %c0_i32, %c0_i32_0 : i32, i32
  }
  func.func @transform_2(%arg0: i32) -> (i32, i32) {
    %c0_i32 = arith.constant 0 : i32
    %c0_i32_0 = arith.constant 0 : i32
    %c0_i32_1 = arith.constant 0 : i32
    return %c0_i32, %c0_i32_0 : i32, i32
  }
  func.func @transform_3(%arg0: i32) -> (i32, i32) {
    %c0_i32 = arith.constant 0 : i32
    %c0_i32_0 = arith.constant 0 : i32
    %c0_i32_1 = arith.constant 0 : i32
    return %c0_i32, %c0_i32_0 : i32, i32
  }
  func.func @transform_4(%arg0: i32) -> (i32, i32, i32) {
    %c0_i32 = arith.constant 0 : i32
    %c0_i32_0 = arith.constant 0 : i32
    %c0_i32_1 = arith.constant 0 : i32
    %c0_i32_2 = arith.constant 0 : i32
    return %c0_i32, %c0_i32_0, %c0_i32_1 : i32, i32, i32
  }
}

module attributes {stable_mosaic.version = 11 : i64} {
  func.func @conv_bn_kernel(%arg0: i32, %arg1: memref<16x128xbf16, #tpu.memory_space<vmem>>, %arg2: memref<128x128xbf16, #tpu.memory_space<vmem>>, %arg3: memref<1x128xf32, #tpu.memory_space<vmem>>, %arg4: memref<1x128xf32, #tpu.memory_space<vmem>>, %arg5: memref<4x16x128xbf16, #tpu.memory_space<vmem>>, %arg6: memref<4x16x128xf32, #tpu.memory_space<vmem>>, %arg7: memref<1x128xf32, #tpu.memory_space<vmem>>, %arg8: memref<1x128xf32, #tpu.memory_space<vmem>>) attributes {dimension_semantics = [#tpu.dimension_semantics<arbitrary>], iteration_bounds = array<i64: 4>, scalar_prefetch = 0 : i64, scratch_operands = 3 : i64, tpu.core_type = #tpu.core_type<tc>, window_params = [{transform_indices = @transform_0, window_bounds = array<i64: 16, 128>}, {pipeline_mode = #tpu.pipeline_mode<synchronous>, transform_indices = @transform_1, window_bounds = array<i64: 128, 128>}, {pipeline_mode = #tpu.pipeline_mode<synchronous>, transform_indices = @transform_2, window_bounds = array<i64: 1, 128>}, {pipeline_mode = #tpu.pipeline_mode<synchronous>, transform_indices = @transform_3, window_bounds = array<i64: 1, 128>}, {pipeline_mode = #tpu.pipeline_mode<synchronous>, transform_indices = @transform_4, window_bounds = array<i64: 4, 16, 128>}]} {
    %c0_i32 = arith.constant 0 : i32
    %0 = arith.cmpi eq, %arg0, %c0_i32 : i32
    %1 = arith.extui %0 : i1 to i32
    %c0_i32_0 = arith.constant 0 : i32
    %2 = arith.cmpi ne, %1, %c0_i32_0 : i32
    scf.if %2 {
      %cst_17 = arith.constant 0.000000e+00 : f32
      %24 = vector.broadcast %cst_17 : f32 to vector<1x128xf32>
      %c0_18 = arith.constant 0 : index
      %c0_19 = arith.constant 0 : index
      %25 = vector.load %arg7[%c0_18, %c0_19] : memref<1x128xf32, #tpu.memory_space<vmem>>, vector<1x128xf32>
      tpu.vector_store %arg7[%c0_18, %c0_19], %24 {strides = array<i32>} : memref<1x128xf32, #tpu.memory_space<vmem>>, vector<1x128xf32>,
      %cst_20 = arith.constant 0.000000e+00 : f32
      %26 = vector.broadcast %cst_20 : f32 to vector<1x128xf32>
      %c0_21 = arith.constant 0 : index
      %c0_22 = arith.constant 0 : index
      %27 = vector.load %arg8[%c0_21, %c0_22] : memref<1x128xf32, #tpu.memory_space<vmem>>, vector<1x128xf32>
      tpu.vector_store %arg8[%c0_21, %c0_22], %26 {strides = array<i32>} : memref<1x128xf32, #tpu.memory_space<vmem>>, vector<1x128xf32>,
    } else {
    }
    %c0 = arith.constant 0 : index
    %c0_1 = arith.constant 0 : index
    %3 = vector.load %arg1[%c0, %c0_1] : memref<16x128xbf16, #tpu.memory_space<vmem>>, vector<16x128xbf16>
    %c0_2 = arith.constant 0 : index
    %c0_3 = arith.constant 0 : index
    %4 = vector.load %arg2[%c0_2, %c0_3] : memref<128x128xbf16, #tpu.memory_space<vmem>>, vector<128x128xbf16>
    %cst = arith.constant dense<0.000000e+00> : vector<16x128xf32>
    %5 = tpu.matmul %3, %4, %cst {dimension_numbers = #tpu.dot_dimension_numbers<[1], [0], [0], [1], [0, 0, 1, 1], [], []>} : vector<16x128xbf16>, vector<128x128xbf16>, vector<16x128xf32> -> vector<16x128xf32>
    %6 = arith.index_cast %arg0 : i32 to index
    %c0_4 = arith.constant 0 : index
    %c0_5 = arith.constant 0 : index
    %7 = vector.load %arg6[%6, %c0_4, %c0_5] : memref<4x16x128xf32, #tpu.memory_space<vmem>>, vector<1x16x128xf32>
    %8 = vector.shape_cast %7 : vector<1x16x128xf32> to vector<16x128xf32>
    %9 = vector.shape_cast %5 : vector<16x128xf32> to vector<1x16x128xf32>
    tpu.vector_store %arg6[%6, %c0_4, %c0_5], %9 {strides = array<i32>} : memref<4x16x128xf32, #tpu.memory_space<vmem>>, vector<1x16x128xf32>,
    %c0_6 = arith.constant 0 : index
    %c0_7 = arith.constant 0 : index
    %10 = vector.load %arg7[%c0_6, %c0_7] : memref<1x128xf32, #tpu.memory_space<vmem>>, vector<1x128xf32>
    %cst_8 = arith.constant dense<0.000000e+00> : vector<128xf32>
    %11 = vector.multi_reduction <add>, %5, %cst_8 [0] : vector<16x128xf32> to vector<128xf32>
    %12 = vector.shape_cast %11 : vector<128xf32> to vector<1x128xf32>
    %13 = arith.addf %10, %12 : vector<1x128xf32>
    %c0_9 = arith.constant 0 : index
    %c0_10 = arith.constant 0 : index
    %14 = vector.load %arg7[%c0_9, %c0_10] : memref<1x128xf32, #tpu.memory_space<vmem>>, vector<1x128xf32>
    tpu.vector_store %arg7[%c0_9, %c0_10], %13 {strides = array<i32>} : memref<1x128xf32, #tpu.memory_space<vmem>>, vector<1x128xf32>,
    %c0_11 = arith.constant 0 : index
    %c0_12 = arith.constant 0 : index
    %15 = vector.load %arg8[%c0_11, %c0_12] : memref<1x128xf32, #tpu.memory_space<vmem>>, vector<1x128xf32>
    %16 = arith.mulf %5, %5 : vector<16x128xf32>
    %cst_13 = arith.constant dense<0.000000e+00> : vector<128xf32>
    %17 = vector.multi_reduction <add>, %16, %cst_13 [0] : vector<16x128xf32> to vector<128xf32>
    %18 = vector.shape_cast %17 : vector<128xf32> to vector<1x128xf32>
    %19 = arith.addf %15, %18 : vector<1x128xf32>
    %c0_14 = arith.constant 0 : index
    %c0_15 = arith.constant 0 : index
    %20 = vector.load %arg8[%c0_14, %c0_15] : memref<1x128xf32, #tpu.memory_space<vmem>>, vector<1x128xf32>
    tpu.vector_store %arg8[%c0_14, %c0_15], %19 {strides = array<i32>} : memref<1x128xf32, #tpu.memory_space<vmem>>, vector<1x128xf32>,
    %c3_i32 = arith.constant 3 : i32
    %21 = arith.cmpi eq, %arg0, %c3_i32 : i32
    %22 = arith.extui %21 : i1 to i32
    %c0_i32_16 = arith.constant 0 : i32
    %23 = arith.cmpi ne, %22, %c0_i32_16 : i32
    scf.if %23 {
      %c0_17 = arith.constant 0 : index
      %c0_18 = arith.constant 0 : index
      %24 = vector.load %arg7[%c0_17, %c0_18] : memref<1x128xf32, #tpu.memory_space<vmem>>, vector<1x128xf32>
      %cst_19 = arith.constant 1.562500e-02 : f32
      %25 = vector.broadcast %cst_19 : f32 to vector<1x128xf32>
      %26 = arith.mulf %24, %25 : vector<1x128xf32>
      %c0_20 = arith.constant 0 : index
      %c0_21 = arith.constant 0 : index
      %27 = vector.load %arg8[%c0_20, %c0_21] : memref<1x128xf32, #tpu.memory_space<vmem>>, vector<1x128xf32>
      %cst_22 = arith.constant 1.562500e-02 : f32
      %28 = vector.broadcast %cst_22 : f32 to vector<1x128xf32>
      %29 = arith.mulf %27, %28 : vector<1x128xf32>
      %30 = arith.mulf %26, %26 : vector<1x128xf32>
      %31 = arith.subf %29, %30 : vector<1x128xf32>
      %cst_23 = arith.constant 0.000000e+00 : f32
      %32 = vector.broadcast %cst_23 : f32 to vector<1x128xf32>
      %33 = arith.maximumf %31, %32 : vector<1x128xf32>
      %cst_24 = arith.constant 9.99999974E-6 : f32
      %34 = vector.broadcast %cst_24 : f32 to vector<1x128xf32>
      %35 = arith.addf %33, %34 : vector<1x128xf32>
      %36 = math.rsqrt %35 : vector<1x128xf32>
      %c0_25 = arith.constant 0 : index
      %c0_26 = arith.constant 0 : index
      %37 = vector.load %arg3[%c0_25, %c0_26] : memref<1x128xf32, #tpu.memory_space<vmem>>, vector<1x128xf32>
      %38 = arith.mulf %36, %37 : vector<1x128xf32>
      %c0_27 = arith.constant 0 : index
      %c0_28 = arith.constant 0 : index
      %39 = vector.load %arg4[%c0_27, %c0_28] : memref<1x128xf32, #tpu.memory_space<vmem>>, vector<1x128xf32>
      %40 = arith.mulf %26, %38 : vector<1x128xf32>
      %41 = arith.subf %39, %40 : vector<1x128xf32>
      %c0_29 = arith.constant 0 : index
      %c0_30 = arith.constant 0 : index
      %c0_31 = arith.constant 0 : index
      %42 = vector.load %arg6[%c0_29, %c0_30, %c0_31] : memref<4x16x128xf32, #tpu.memory_space<vmem>>, vector<4x16x128xf32>
      %43 = vector.shape_cast %38 : vector<1x128xf32> to vector<1x1x128xf32>
      %44 = vector.broadcast %43 : vector<1x1x128xf32> to vector<4x16x128xf32>
      %45 = arith.mulf %42, %44 : vector<4x16x128xf32>
      %46 = vector.shape_cast %41 : vector<1x128xf32> to vector<1x1x128xf32>
      %47 = vector.broadcast %46 : vector<1x1x128xf32> to vector<4x16x128xf32>
      %48 = arith.addf %45, %47 : vector<4x16x128xf32>
      %49 = arith.truncf %48 : vector<4x16x128xf32> to vector<4x16x128xbf16>
      %c0_32 = arith.constant 0 : index
      %c0_33 = arith.constant 0 : index
      %c0_34 = arith.constant 0 : index
      %50 = vector.load %arg5[%c0_32, %c0_33, %c0_34] : memref<4x16x128xbf16, #tpu.memory_space<vmem>>, vector<4x16x128xbf16>
      tpu.vector_store %arg5[%c0_32, %c0_33, %c0_34], %49 {strides = array<i32>} : memref<4x16x128xbf16, #tpu.memory_space<vmem>>, vector<4x16x128xbf16>,
    } else {
    }
    return
  }
  func.func @transform_0(%arg0: i32) -> (i32, i32) {
    %c0_i32 = arith.constant 0 : i32
    %c0_i32_0 = arith.constant 0 : i32
    return %arg0, %c0_i32 : i32, i32
  }
  func.func @transform_1(%arg0: i32) -> (i32, i32) {
    %c0_i32 = arith.constant 0 : i32
    %c0_i32_0 = arith.constant 0 : i32
    %c0_i32_1 = arith.constant 0 : i32
    return %c0_i32, %c0_i32_0 : i32, i32
  }
  func.func @transform_2(%arg0: i32) -> (i32, i32) {
    %c0_i32 = arith.constant 0 : i32
    %c0_i32_0 = arith.constant 0 : i32
    %c0_i32_1 = arith.constant 0 : i32
    return %c0_i32, %c0_i32_0 : i32, i32
  }
  func.func @transform_3(%arg0: i32) -> (i32, i32) {
    %c0_i32 = arith.constant 0 : i32
    %c0_i32_0 = arith.constant 0 : i32
    %c0_i32_1 = arith.constant 0 : i32
    return %c0_i32, %c0_i32_0 : i32, i32
  }
  func.func @transform_4(%arg0: i32) -> (i32, i32, i32) {
    %c0_i32 = arith.constant 0 : i32
    %c0_i32_0 = arith.constant 0 : i32
    %c0_i32_1 = arith.constant 0 : i32
    %c0_i32_2 = arith.constant 0 : i32
    return %c0_i32, %c0_i32_0, %c0_i32_1 : i32, i32, i32
  }
}

module attributes {stable_mosaic.version = 11 : i64} {
  func.func @conv_bn_kernel(%arg0: i32, %arg1: memref<16x640xbf16, #tpu.memory_space<vmem>>, %arg2: memref<640x128xbf16, #tpu.memory_space<vmem>>, %arg3: memref<1x128xf32, #tpu.memory_space<vmem>>, %arg4: memref<1x128xf32, #tpu.memory_space<vmem>>, %arg5: memref<4x16x128xbf16, #tpu.memory_space<vmem>>, %arg6: memref<4x16x128xbf16, #tpu.memory_space<vmem>>, %arg7: memref<4x16x128xf32, #tpu.memory_space<vmem>>, %arg8: memref<1x128xf32, #tpu.memory_space<vmem>>, %arg9: memref<1x128xf32, #tpu.memory_space<vmem>>) attributes {dimension_semantics = [#tpu.dimension_semantics<arbitrary>], iteration_bounds = array<i64: 4>, scalar_prefetch = 0 : i64, scratch_operands = 3 : i64, tpu.core_type = #tpu.core_type<tc>, window_params = [{transform_indices = @transform_0, window_bounds = array<i64: 16, 640>}, {pipeline_mode = #tpu.pipeline_mode<synchronous>, transform_indices = @transform_1, window_bounds = array<i64: 640, 128>}, {pipeline_mode = #tpu.pipeline_mode<synchronous>, transform_indices = @transform_2, window_bounds = array<i64: 1, 128>}, {pipeline_mode = #tpu.pipeline_mode<synchronous>, transform_indices = @transform_3, window_bounds = array<i64: 1, 128>}, {pipeline_mode = #tpu.pipeline_mode<synchronous>, transform_indices = @transform_4, window_bounds = array<i64: 4, 16, 128>}, {pipeline_mode = #tpu.pipeline_mode<synchronous>, transform_indices = @transform_5, window_bounds = array<i64: 4, 16, 128>}]} {
    %c0_i32 = arith.constant 0 : i32
    %0 = arith.cmpi eq, %arg0, %c0_i32 : i32
    %1 = arith.extui %0 : i1 to i32
    %c0_i32_0 = arith.constant 0 : i32
    %2 = arith.cmpi ne, %1, %c0_i32_0 : i32
    scf.if %2 {
      %cst_17 = arith.constant 0.000000e+00 : f32
      %24 = vector.broadcast %cst_17 : f32 to vector<1x128xf32>
      %c0_18 = arith.constant 0 : index
      %c0_19 = arith.constant 0 : index
      %25 = vector.load %arg8[%c0_18, %c0_19] : memref<1x128xf32, #tpu.memory_space<vmem>>, vector<1x128xf32>
      tpu.vector_store %arg8[%c0_18, %c0_19], %24 {strides = array<i32>} : memref<1x128xf32, #tpu.memory_space<vmem>>, vector<1x128xf32>,
      %cst_20 = arith.constant 0.000000e+00 : f32
      %26 = vector.broadcast %cst_20 : f32 to vector<1x128xf32>
      %c0_21 = arith.constant 0 : index
      %c0_22 = arith.constant 0 : index
      %27 = vector.load %arg9[%c0_21, %c0_22] : memref<1x128xf32, #tpu.memory_space<vmem>>, vector<1x128xf32>
      tpu.vector_store %arg9[%c0_21, %c0_22], %26 {strides = array<i32>} : memref<1x128xf32, #tpu.memory_space<vmem>>, vector<1x128xf32>,
    } else {
    }
    %c0 = arith.constant 0 : index
    %c0_1 = arith.constant 0 : index
    %3 = vector.load %arg1[%c0, %c0_1] : memref<16x640xbf16, #tpu.memory_space<vmem>>, vector<16x640xbf16>
    %c0_2 = arith.constant 0 : index
    %c0_3 = arith.constant 0 : index
    %4 = vector.load %arg2[%c0_2, %c0_3] : memref<640x128xbf16, #tpu.memory_space<vmem>>, vector<640x128xbf16>
    %cst = arith.constant dense<0.000000e+00> : vector<16x128xf32>
    %5 = tpu.matmul %3, %4, %cst {dimension_numbers = #tpu.dot_dimension_numbers<[1], [0], [0], [1], [0, 0, 1, 1], [], []>} : vector<16x640xbf16>, vector<640x128xbf16>, vector<16x128xf32> -> vector<16x128xf32>
    %6 = arith.index_cast %arg0 : i32 to index
    %c0_4 = arith.constant 0 : index
    %c0_5 = arith.constant 0 : index
    %7 = vector.load %arg7[%6, %c0_4, %c0_5] : memref<4x16x128xf32, #tpu.memory_space<vmem>>, vector<1x16x128xf32>
    %8 = vector.shape_cast %7 : vector<1x16x128xf32> to vector<16x128xf32>
    %9 = vector.shape_cast %5 : vector<16x128xf32> to vector<1x16x128xf32>
    tpu.vector_store %arg7[%6, %c0_4, %c0_5], %9 {strides = array<i32>} : memref<4x16x128xf32, #tpu.memory_space<vmem>>, vector<1x16x128xf32>,
    %c0_6 = arith.constant 0 : index
    %c0_7 = arith.constant 0 : index
    %10 = vector.load %arg8[%c0_6, %c0_7] : memref<1x128xf32, #tpu.memory_space<vmem>>, vector<1x128xf32>
    %cst_8 = arith.constant dense<0.000000e+00> : vector<128xf32>
    %11 = vector.multi_reduction <add>, %5, %cst_8 [0] : vector<16x128xf32> to vector<128xf32>
    %12 = vector.shape_cast %11 : vector<128xf32> to vector<1x128xf32>
    %13 = arith.addf %10, %12 : vector<1x128xf32>
    %c0_9 = arith.constant 0 : index
    %c0_10 = arith.constant 0 : index
    %14 = vector.load %arg8[%c0_9, %c0_10] : memref<1x128xf32, #tpu.memory_space<vmem>>, vector<1x128xf32>
    tpu.vector_store %arg8[%c0_9, %c0_10], %13 {strides = array<i32>} : memref<1x128xf32, #tpu.memory_space<vmem>>, vector<1x128xf32>,
    %c0_11 = arith.constant 0 : index
    %c0_12 = arith.constant 0 : index
    %15 = vector.load %arg9[%c0_11, %c0_12] : memref<1x128xf32, #tpu.memory_space<vmem>>, vector<1x128xf32>
    %16 = arith.mulf %5, %5 : vector<16x128xf32>
    %cst_13 = arith.constant dense<0.000000e+00> : vector<128xf32>
    %17 = vector.multi_reduction <add>, %16, %cst_13 [0] : vector<16x128xf32> to vector<128xf32>
    %18 = vector.shape_cast %17 : vector<128xf32> to vector<1x128xf32>
    %19 = arith.addf %15, %18 : vector<1x128xf32>
    %c0_14 = arith.constant 0 : index
    %c0_15 = arith.constant 0 : index
    %20 = vector.load %arg9[%c0_14, %c0_15] : memref<1x128xf32, #tpu.memory_space<vmem>>, vector<1x128xf32>
    tpu.vector_store %arg9[%c0_14, %c0_15], %19 {strides = array<i32>} : memref<1x128xf32, #tpu.memory_space<vmem>>, vector<1x128xf32>,
    %c3_i32 = arith.constant 3 : i32
    %21 = arith.cmpi eq, %arg0, %c3_i32 : i32
    %22 = arith.extui %21 : i1 to i32
    %c0_i32_16 = arith.constant 0 : i32
    %23 = arith.cmpi ne, %22, %c0_i32_16 : i32
    scf.if %23 {
      %c0_17 = arith.constant 0 : index
      %c0_18 = arith.constant 0 : index
      %24 = vector.load %arg8[%c0_17, %c0_18] : memref<1x128xf32, #tpu.memory_space<vmem>>, vector<1x128xf32>
      %cst_19 = arith.constant 1.562500e-02 : f32
      %25 = vector.broadcast %cst_19 : f32 to vector<1x128xf32>
      %26 = arith.mulf %24, %25 : vector<1x128xf32>
      %c0_20 = arith.constant 0 : index
      %c0_21 = arith.constant 0 : index
      %27 = vector.load %arg9[%c0_20, %c0_21] : memref<1x128xf32, #tpu.memory_space<vmem>>, vector<1x128xf32>
      %cst_22 = arith.constant 1.562500e-02 : f32
      %28 = vector.broadcast %cst_22 : f32 to vector<1x128xf32>
      %29 = arith.mulf %27, %28 : vector<1x128xf32>
      %30 = arith.mulf %26, %26 : vector<1x128xf32>
      %31 = arith.subf %29, %30 : vector<1x128xf32>
      %cst_23 = arith.constant 0.000000e+00 : f32
      %32 = vector.broadcast %cst_23 : f32 to vector<1x128xf32>
      %33 = arith.maximumf %31, %32 : vector<1x128xf32>
      %cst_24 = arith.constant 9.99999974E-6 : f32
      %34 = vector.broadcast %cst_24 : f32 to vector<1x128xf32>
      %35 = arith.addf %33, %34 : vector<1x128xf32>
      %36 = math.rsqrt %35 : vector<1x128xf32>
      %c0_25 = arith.constant 0 : index
      %c0_26 = arith.constant 0 : index
      %37 = vector.load %arg3[%c0_25, %c0_26] : memref<1x128xf32, #tpu.memory_space<vmem>>, vector<1x128xf32>
      %38 = arith.mulf %36, %37 : vector<1x128xf32>
      %c0_27 = arith.constant 0 : index
      %c0_28 = arith.constant 0 : index
      %39 = vector.load %arg4[%c0_27, %c0_28] : memref<1x128xf32, #tpu.memory_space<vmem>>, vector<1x128xf32>
      %40 = arith.mulf %26, %38 : vector<1x128xf32>
      %41 = arith.subf %39, %40 : vector<1x128xf32>
      %c0_29 = arith.constant 0 : index
      %c0_30 = arith.constant 0 : index
      %c0_31 = arith.constant 0 : index
      %42 = vector.load %arg7[%c0_29, %c0_30, %c0_31] : memref<4x16x128xf32, #tpu.memory_space<vmem>>, vector<4x16x128xf32>
      %43 = vector.shape_cast %38 : vector<1x128xf32> to vector<1x1x128xf32>
      %44 = vector.broadcast %43 : vector<1x1x128xf32> to vector<4x16x128xf32>
      %45 = arith.mulf %42, %44 : vector<4x16x128xf32>
      %46 = vector.shape_cast %41 : vector<1x128xf32> to vector<1x1x128xf32>
      %47 = vector.broadcast %46 : vector<1x1x128xf32> to vector<4x16x128xf32>
      %48 = arith.addf %45, %47 : vector<4x16x128xf32>
      %c0_32 = arith.constant 0 : index
      %c0_33 = arith.constant 0 : index
      %c0_34 = arith.constant 0 : index
      %49 = vector.load %arg5[%c0_32, %c0_33, %c0_34] : memref<4x16x128xbf16, #tpu.memory_space<vmem>>, vector<4x16x128xbf16>
      %50 = arith.extf %49 : vector<4x16x128xbf16> to vector<4x16x128xf32>
      %51 = arith.addf %48, %50 : vector<4x16x128xf32>
      %cst_35 = arith.constant 0.000000e+00 : f32
      %52 = vector.broadcast %cst_35 : f32 to vector<4x16x128xf32>
      %53 = arith.maximumf %51, %52 : vector<4x16x128xf32>
      %54 = arith.truncf %53 : vector<4x16x128xf32> to vector<4x16x128xbf16>
      %c0_36 = arith.constant 0 : index
      %c0_37 = arith.constant 0 : index
      %c0_38 = arith.constant 0 : index
      %55 = vector.load %arg6[%c0_36, %c0_37, %c0_38] : memref<4x16x128xbf16, #tpu.memory_space<vmem>>, vector<4x16x128xbf16>
      tpu.vector_store %arg6[%c0_36, %c0_37, %c0_38], %54 {strides = array<i32>} : memref<4x16x128xbf16, #tpu.memory_space<vmem>>, vector<4x16x128xbf16>,
    } else {
    }
    return
  }
  func.func @transform_0(%arg0: i32) -> (i32, i32) {
    %c0_i32 = arith.constant 0 : i32
    %c0_i32_0 = arith.constant 0 : i32
    return %arg0, %c0_i32 : i32, i32
  }
  func.func @transform_1(%arg0: i32) -> (i32, i32) {
    %c0_i32 = arith.constant 0 : i32
    %c0_i32_0 = arith.constant 0 : i32
    %c0_i32_1 = arith.constant 0 : i32
    return %c0_i32, %c0_i32_0 : i32, i32
  }
  func.func @transform_2(%arg0: i32) -> (i32, i32) {
    %c0_i32 = arith.constant 0 : i32
    %c0_i32_0 = arith.constant 0 : i32
    %c0_i32_1 = arith.constant 0 : i32
    return %c0_i32, %c0_i32_0 : i32, i32
  }
  func.func @transform_3(%arg0: i32) -> (i32, i32) {
    %c0_i32 = arith.constant 0 : i32
    %c0_i32_0 = arith.constant 0 : i32
    %c0_i32_1 = arith.constant 0 : i32
    return %c0_i32, %c0_i32_0 : i32, i32
  }
  func.func @transform_4(%arg0: i32) -> (i32, i32, i32) {
    %c0_i32 = arith.constant 0 : i32
    %c0_i32_0 = arith.constant 0 : i32
    %c0_i32_1 = arith.constant 0 : i32
    %c0_i32_2 = arith.constant 0 : i32
    return %c0_i32, %c0_i32_0, %c0_i32_1 : i32, i32, i32
  }
  func.func @transform_5(%arg0: i32) -> (i32, i32, i32) {
    %c0_i32 = arith.constant 0 : i32
    %c0_i32_0 = arith.constant 0 : i32
    %c0_i32_1 = arith.constant 0 : i32
    %c0_i32_2 = arith.constant 0 : i32
    return %c0_i32, %c0_i32_0, %c0_i32_1 : i32, i32, i32
  }
}

module attributes {stable_mosaic.version = 11 : i64} {
  func.func @pool_fc_kernel(%arg0: memref<4x16x128xbf16, #tpu.memory_space<vmem>>, %arg1: memref<128x128xf32, #tpu.memory_space<vmem>>, %arg2: memref<1x128xf32, #tpu.memory_space<vmem>>, %arg3: memref<4x128xf32, #tpu.memory_space<vmem>>) attributes {dimension_semantics = [], scalar_prefetch = 0 : i64, scratch_operands = 0 : i64, tpu.core_type = #tpu.core_type<tc>} {
    %c0 = arith.constant 0 : index
    %c0_0 = arith.constant 0 : index
    %c0_1 = arith.constant 0 : index
    %0 = vector.load %arg0[%c0, %c0_0, %c0_1] : memref<4x16x128xbf16, #tpu.memory_space<vmem>>, vector<4x16x128xbf16>
    %1 = arith.extf %0 : vector<4x16x128xbf16> to vector<4x16x128xf32>
    %cst = arith.constant dense<0.000000e+00> : vector<4x128xf32>
    %2 = vector.multi_reduction <add>, %1, %cst [1] : vector<4x16x128xf32> to vector<4x128xf32>
    %cst_2 = arith.constant 6.250000e-02 : f32
    %3 = vector.broadcast %cst_2 : f32 to vector<4x128xf32>
    %4 = arith.mulf %2, %3 : vector<4x128xf32>
    %c0_3 = arith.constant 0 : index
    %c0_4 = arith.constant 0 : index
    %5 = vector.load %arg1[%c0_3, %c0_4] : memref<128x128xf32, #tpu.memory_space<vmem>>, vector<128x128xf32>
    %cst_5 = arith.constant dense<0.000000e+00> : vector<4x128xf32>
    %6 = tpu.matmul %4, %5, %cst_5 {dimension_numbers = #tpu.dot_dimension_numbers<[1], [0], [0], [1], [0, 0, 1, 1], [], []>} : vector<4x128xf32>, vector<128x128xf32>, vector<4x128xf32> -> vector<4x128xf32>
    %c0_6 = arith.constant 0 : index
    %c0_7 = arith.constant 0 : index
    %7 = vector.load %arg2[%c0_6, %c0_7] : memref<1x128xf32, #tpu.memory_space<vmem>>, vector<1x128xf32>
    %8 = vector.broadcast %7 : vector<1x128xf32> to vector<4x128xf32>
    %9 = arith.addf %6, %8 : vector<4x128xf32>
    %c0_8 = arith.constant 0 : index
    %c0_9 = arith.constant 0 : index
    %10 = vector.load %arg3[%c0_8, %c0_9] : memref<4x128xf32, #tpu.memory_space<vmem>>, vector<4x128xf32>
    tpu.vector_store %arg3[%c0_8, %c0_9], %9 {strides = array<i32>} : memref<4x128xf32, #tpu.memory_space<vmem>>, vector<4x128xf32>,
    return
  }
}

</mosaic_0001>

<llo_original>
// kernel: resnet_forward.10
$region0: #{resnet_forward.10}
  #allocation0 [shape = 'u32[]', space=smem, size = 0x4, offset = 0x4, fixed_abs, tag = 'smem constant byte address 0x4 - core index']
  #allocation1 [shape = 'u32[72,128]{1,0:T(1,128)}', space=vmem, size = 0x9000, scoped, tag = 'internal scratch']
  #allocation2 [shape = 'f32[4,256,128]{2,1,0:T(8,128)}', space=vmem, size = 0x80000, scoped, tag = 'scratch operand']
  #allocation3 [shape = 'f32[1,128]{1,0:T(1,128)}', space=vmem, size = 0x200, scoped, tag = 'scratch operand']
  #allocation4 [shape = 'f32[1,128]{1,0:T(1,128)}', space=vmem, size = 0x200, scoped, tag = 'scratch operand']
  %s0 = inlined_call_operand.vmem [shape: bf16[1024,128], index: 0, kind: input, shape index: {}]
  %s1 = inlined_call_operand.vmem [shape: bf16[128,128], index: 1, kind: input, shape index: {}]
  %s2 = inlined_call_operand.vmem [shape: f32[1,128], index: 2, kind: input, shape index: {}]
  %s3 = inlined_call_operand.vmem [shape: f32[1,128], index: 3, kind: input, shape index: {}]
  %s4 = inlined_call_operand.vmem [shape: bf16[4,256,128], index: 4, kind: output, shape index: {}]
  %s5 = sld [smem:[#allocation0]]
  $region57: #{resnet_forward.10} parent=0
    _
  %s7 = ssub.s32 1, %s5
  %s8 = scalar_select 0, %s7, %s5
  loop: start=0, step=1, limit=6
  $region2: #{resnet_forward.10} parent=0 // loop_pre_header
    _
  $region3: #{resnet_forward.10} parent=0 // loop_header
    %s10 = sphi 0, %s14
    %p11 = scmp.ge.s32.totalorder %s10, 6
    %s20 = sphi 0, %s22
    %s23 = sphi 0, %s20
    %s24 = sphi 0, %s23
    %s40 = sphi 0, %s24
    %s44 = sphi 0, %s44
    %s46 = sphi 0, %s44
    %s47 = sphi 0, %s46
    %s61 = sphi 0, %s47
    %s65 = sphi 0, %s65
    %s67 = sphi 0, %s65
    %s68 = sphi 0, %s67
    %s82 = sphi 0, %s68
    %s86 = sphi 0, %s86
    %s88 = sphi 0, %s86
    %s89 = sphi 0, %s88
    %s103 = sphi 0, %s89
    %s107 = sphi 0, %s107
    %s109 = sphi 0, %s107
    %s110 = sphi 0, %s109
    %s124 = sphi 0, %s110
  $region4: #{resnet_forward.10} parent=0 // loop_header_branch
    %13 = sbr.rel (%p11) target = $region8
  $region5: #{resnet_forward.10} parent=0 // loop_body
    %s15 = ssub.s32 %s10, 1
    %s16 = ssub.s32 %s10, 2
    %s17 = sadd.s32 %s10, 1
    %s18 = ssub.s32 %s10, %s17
    %p19 = scmp.eq.s32.totalorder %s18, 0
    %s21 = sadd.s32 %s20, 1
    %s22 = scalar_select %p19, %s20, %s21
    %p25 = pneg %p19
    %p26 = scmp.eq.s32.totalorder %s10, 3
    %p27 = por %p25, %p26
    %p28 = scmp.ne.s32.totalorder %s20, %s23
    %p29 = scmp.eq.s32.totalorder %s10, 0
    %p30 = por %p28, %p29
    %p31 = scmp.ne.s32.totalorder %s20, %s23
    %p32 = scmp.eq.s32.totalorder %s15, 3
    %p33 = por %p31, %p32
    %p34 = scmp.ne.s32.totalorder %s23, %s24
    %p35 = scmp.eq.s32.totalorder %s15, 0
    %p36 = por %p34, %p35
    %p37 = scmp.ne.s32.totalorder %s23, %s24
    %p38 = scmp.eq.s32.totalorder %s16, 3
    %p39 = por %p37, %p38
    %p41 = scmp.ne.s32.totalorder %s24, %s40
    %p42 = scmp.eq.s32.totalorder %s16, 0
    %p43 = por %p41, %p42
    %s45 = sadd.s32 %s44, 1
    %p48 = scmp.eq.s32.totalorder %s10, 3
    %p49 = scmp.ne.s32.totalorder %s44, %s46
    %p50 = scmp.eq.s32.totalorder %s10, 0
    %p51 = por %p49, %p50
    %p52 = scmp.ne.s32.totalorder %s44, %s46
    %p53 = scmp.eq.s32.totalorder %s15, 3
    %p54 = por %p52, %p53
    %p55 = scmp.ne.s32.totalorder %s46, %s47
    %p56 = scmp.eq.s32.totalorder %s15, 0
    %p57 = por %p55, %p56
    %p58 = scmp.ne.s32.totalorder %s46, %s47
    %p59 = scmp.eq.s32.totalorder %s16, 3
    %p60 = por %p58, %p59
    %p62 = scmp.ne.s32.totalorder %s47, %s61
    %p63 = scmp.eq.s32.totalorder %s16, 0
    %p64 = por %p62, %p63
    %s66 = sadd.s32 %s65, 1
    %p69 = scmp.eq.s32.totalorder %s10, 3
    %p70 = scmp.ne.s32.totalorder %s65, %s67
    %p71 = scmp.eq.s32.totalorder %s10, 0
    %p72 = por %p70, %p71
    %p73 = scmp.ne.s32.totalorder %s65, %s67
    %p74 = scmp.eq.s32.totalorder %s15, 3
    %p75 = por %p73, %p74
    %p76 = scmp.ne.s32.totalorder %s67, %s68
    %p77 = scmp.eq.s32.totalorder %s15, 0
    %p78 = por %p76, %p77
    %p79 = scmp.ne.s32.totalorder %s67, %s68
    %p80 = scmp.eq.s32.totalorder %s16, 3
    %p81 = por %p79, %p80
    %p83 = scmp.ne.s32.totalorder %s68, %s82
    %p84 = scmp.eq.s32.totalorder %s16, 0
    %p85 = por %p83, %p84
    %s87 = sadd.s32 %s86, 1
    %p90 = scmp.eq.s32.totalorder %s10, 3
    %p91 = scmp.ne.s32.totalorder %s86, %s88
    %p92 = scmp.eq.s32.totalorder %s10, 0
    %p93 = por %p91, %p92
    %p94 = scmp.ne.s32.totalorder %s86, %s88
    %p95 = scmp.eq.s32.totalorder %s15, 3
    %p96 = por %p94, %p95
    %p97 = scmp.ne.s32.totalorder %s88, %s89
    %p98 = scmp.eq.s32.totalorder %s15, 0
    %p99 = por %p97, %p98
    %p100 = scmp.ne.s32.totalorder %s88, %s89
    %p101 = scmp.eq.s32.totalorder %s16, 3
    %p102 = por %p100, %p101
    %p104 = scmp.ne.s32.totalorder %s89, %s103
    %p105 = scmp.eq.s32.totalorder %s16, 0
    %p106 = por %p104, %p105
    %s108 = sadd.s32 %s107, 1
    %p111 = scmp.eq.s32.totalorder %s10, 3
    %p112 = scmp.ne.s32.totalorder %s107, %s109
    %p113 = scmp.eq.s32.totalorder %s10, 0
    %p114 = por %p112, %p113
    %p115 = scmp.ne.s32.totalorder %s107, %s109
    %p116 = scmp.eq.s32.totalorder %s15, 3
    %p117 = por %p115, %p116
    %p118 = scmp.ne.s32.totalorder %s109, %s110
    %p119 = scmp.eq.s32.totalorder %s15, 0
    %p120 = por %p118, %p119
    %p121 = scmp.ne.s32.totalorder %s109, %s110
    %p122 = scmp.eq.s32.totalorder %s16, 3
    %p123 = por %p121, %p122
    %p125 = scmp.ne.s32.totalorder %s110, %s124
    %p126 = scmp.eq.s32.totalorder %s16, 0
    %p127 = por %p125, %p126
    %p128 = scmp.le.s32.totalorder 1, %s10
    %p129 = scmp.lt.s32.totalorder %s10, 5
    %p130 = pnand %p128, %p129
    %p131 = pneg %p130
    // Predicated region
    $region9: #{resnet_forward.10} parent=5 // pred_check
      _
    $region10: #{resnet_forward.10} parent=5 // pred_check_branch
      %133 = sbr.rel (%p130) target = $region12
    $region11: #{resnet_forward.10} parent=5 // pred_region
      %s134 = ssub.s32 %s10, 1
      // Predicated region
      $region13: #{resnet_forward.10} parent=11 // pred_check
        %p135 = pneg %p57
      $region14: #{resnet_forward.10} parent=11 // pred_check_branch
        %137 = sbr.rel (%p135) target = $region16
      $region15: #{resnet_forward.10} parent=11 // pred_region
        _
      $region16: #{resnet_forward.10} parent=11 // pred_fallthru
        _
      // Predicated region
      $region17: #{resnet_forward.10} parent=11 // pred_check
        %p138 = pneg %p78
      $region18: #{resnet_forward.10} parent=11 // pred_check_branch
        %140 = sbr.rel (%p138) target = $region20
      $region19: #{resnet_forward.10} parent=11 // pred_region
        _
      $region20: #{resnet_forward.10} parent=11 // pred_fallthru
        _
      // Predicated region
      $region21: #{resnet_forward.10} parent=11 // pred_check
        %p141 = pneg %p99
      $region22: #{resnet_forward.10} parent=11 // pred_check_branch
        %143 = sbr.rel (%p141) target = $region24
      $region23: #{resnet_forward.10} parent=11 // pred_region
        _
      $region24: #{resnet_forward.10} parent=11 // pred_fallthru
        _
    $region12: #{resnet_forward.10} parent=5 // pred_fallthru
      _
    %p144 = scmp.lt.s32.totalorder %s10, 4
    // Predicated region
    $region25: #{resnet_forward.10} parent=5 // pred_check
      %p145 = pneg %p144
    $region26: #{resnet_forward.10} parent=5 // pred_check_branch
      %147 = sbr.rel (%p145) target = $region28
    $region27: #{resnet_forward.10} parent=5 // pred_region
      // Predicated region
      $region29: #{resnet_forward.10} parent=27 // pred_check
        %p148 = pneg %p30
      $region30: #{resnet_forward.10} parent=27 // pred_check_branch
        %150 = sbr.rel (%p148) target = $region32
      $region31: #{resnet_forward.10} parent=27 // pred_region
        %s151 = smul.u32 32, %s10
        %p152 = scmp.lt.s32.totalorder %s151, 127
        %s153 = scalar_select %p152, %s151, 127
        %s154 = smul.addr %s153, 4
        %s155 = scalar_lea.vmem %s0, %s154
        %s156 = smul.u32 32, %s10
      $region32: #{resnet_forward.10} parent=27 // pred_fallthru
        _
    $region28: #{resnet_forward.10} parent=5 // pred_fallthru
      _
    %p157 = scmp.le.s32.totalorder 1, %s10
    %p158 = scmp.lt.s32.totalorder %s10, 5
    %p159 = pnand %p157, %p158
    %p160 = pneg %p159
    // Predicated region
    $region33: #{resnet_forward.10} parent=5 // pred_check
      _
    $region34: #{resnet_forward.10} parent=5 // pred_check_branch
      %162 = sbr.rel (%p159) target = $region36
    $region35: #{resnet_forward.10} parent=5 // pred_region
      %s163 = ssub.s32 %s10, 1
      %s164 = smul.u32 32, %s15
      %p165 = scmp.lt.s32.totalorder %s164, 127
      %s166 = scalar_select %p165, %s164, 127
      %s167 = smul.addr %s166, 4
      %s168 = scalar_lea.vmem %s0, %s167
      %p169 = pneg %p36
      %p170 = pneg %p33
      %p171 = pneg %p57
      %p172 = pneg %p54
      %p173 = pneg %p78
      %p174 = pneg %p75
      %p175 = pneg %p99
      %p176 = pneg %p96
      %p177 = pneg %p120
      %p178 = pneg %p117
      %s179 = smul.u32 32, %s15
      %p180 = scmp.lt.s32.totalorder %s179, 127
      %s181 = scalar_select %p180, %s179, 127
      %s182 = smul.addr %s181, 4
      %s183 = scalar_lea.vmem %s0, %s182
      %s184 = smul.u32 32, %s15
      %p185 = scmp.eq.s32.totalorder %s15, 0
      // Predicated region
      $region37: #{resnet_forward.10} parent=35 // pred_check
        %p186 = pneg %p185
      $region38: #{resnet_forward.10} parent=35 // pred_check_branch
        %188 = sbr.rel (%p186) target = $region40
      $region39: #{resnet_forward.10} parent=35 // pred_region
        %189 = vst [vmem:[#allocation3] sm:$0x1] 0.0
        %190 = vst [vmem:[#allocation4] sm:$0x1] 0.0
      $region40: #{resnet_forward.10} parent=35 // pred_fallthru
        _
      %v191 = vld [vmem:[%s183] sm:$0xf]
      %v192 = vld [vmem:[%s183 + $0x4] sm:$0xf]
      %v193 = vld [vmem:[%s183 + $0x8] sm:$0xf]
      %v194 = vld [vmem:[%s183 + $0xc] sm:$0xf]
      %v195 = vld [vmem:[%s183 + $0x10] sm:$0xf]
      %v196 = vld [vmem:[%s183 + $0x14] sm:$0xf]
      %v197 = vld [vmem:[%s183 + $0x18] sm:$0xf]
      %v198 = vld [vmem:[%s183 + $0x1c] sm:$0xf]
      %v199 = vld [vmem:[%s183 + $0x20] sm:$0xf]
      %v200 = vld [vmem:[%s183 + $0x24] sm:$0xf]
      %v201 = vld [vmem:[%s183 + $0x28] sm:$0xf]
      %v202 = vld [vmem:[%s183 + $0x2c] sm:$0xf]
      %v203 = vld [vmem:[%s183 + $0x30] sm:$0xf]
      %v204 = vld [vmem:[%s183 + $0x34] sm:$0xf]
      %v205 = vld [vmem:[%s183 + $0x38] sm:$0xf]
      %v206 = vld [vmem:[%s183 + $0x3c] sm:$0xf]
      %v207 = vld [vmem:[%s183 + $0x40] sm:$0xf]
      %v208 = vld [vmem:[%s183 + $0x44] sm:$0xf]
      %v209 = vld [vmem:[%s183 + $0x48] sm:$0xf]
      %v210 = vld [vmem:[%s183 + $0x4c] sm:$0xf]
      %v211 = vld [vmem:[%s183 + $0x50] sm:$0xf]
      %v212 = vld [vmem:[%s183 + $0x54] sm:$0xf]
      %v213 = vld [vmem:[%s183 + $0x58] sm:$0xf]
      %v214 = vld [vmem:[%s183 + $0x5c] sm:$0xf]
      %v215 = vld [vmem:[%s183 + $0x60] sm:$0xf]
      %v216 = vld [vmem:[%s183 + $0x64] sm:$0xf]
      %v217 = vld [vmem:[%s183 + $0x68] sm:$0xf]
      %v218 = vld [vmem:[%s183 + $0x6c] sm:$0xf]
      %v219 = vld [vmem:[%s183 + $0x70] sm:$0xf]
      %v220 = vld [vmem:[%s183 + $0x74] sm:$0xf]
      %v221 = vld [vmem:[%s183 + $0x78] sm:$0xf]
      %v222 = vld [vmem:[%s183 + $0x7c] sm:$0xf]
      %v223 = vld [vmem:[%s1] sm:$0xf]
      %v224 = vld [vmem:[%s1 + $0x4] sm:$0xf]
      %v225 = vld [vmem:[%s1 + $0x8] sm:$0xf]
      %v226 = vld [vmem:[%s1 + $0xc] sm:$0xf]
      %v227 = vld [vmem:[%s1 + $0x10] sm:$0xf]
      %v228 = vld [vmem:[%s1 + $0x14] sm:$0xf]
      %v229 = vld [vmem:[%s1 + $0x18] sm:$0xf]
      %v230 = vld [vmem:[%s1 + $0x1c] sm:$0xf]
      %v231 = vld [vmem:[%s1 + $0x20] sm:$0xf]
      %v232 = vld [vmem:[%s1 + $0x24] sm:$0xf]
      %v233 = vld [vmem:[%s1 + $0x28] sm:$0xf]
      %v234 = vld [vmem:[%s1 + $0x2c] sm:$0xf]
      %v235 = vld [vmem:[%s1 + $0x30] sm:$0xf]
      %v236 = vld [vmem:[%s1 + $0x34] sm:$0xf]
      %v237 = vld [vmem:[%s1 + $0x38] sm:$0xf]
      %v238 = vld [vmem:[%s1 + $0x3c] sm:$0xf]
      %v271 = vunpack.c.l.b16 %v191
      %v272 = vunpack.c.l.b16 %v192
      %v273 = vunpack.c.l.b16 %v193
      %v274 = vunpack.c.l.b16 %v194
      %v275 = vunpack.c.l.b16 %v195
      %v276 = vunpack.c.l.b16 %v196
      %v277 = vunpack.c.l.b16 %v197
      %v278 = vunpack.c.l.b16 %v198
      %v279 = vunpack.c.l.b16 %v199
      %v280 = vunpack.c.l.b16 %v200
      %v281 = vunpack.c.l.b16 %v201
      %v282 = vunpack.c.l.b16 %v202
      %v283 = vunpack.c.l.b16 %v203
      %v284 = vunpack.c.l.b16 %v204
      %v285 = vunpack.c.l.b16 %v205
      %v286 = vunpack.c.l.b16 %v206
      %v287 = vunpack.c.l.b16 %v207
      %v288 = vunpack.c.l.b16 %v208
      %v289 = vunpack.c.l.b16 %v209
      %v290 = vunpack.c.l.b16 %v210
      %v291 = vunpack.c.l.b16 %v211
      %v292 = vunpack.c.l.b16 %v212
      %v293 = vunpack.c.l.b16 %v213
      %v294 = vunpack.c.l.b16 %v214
      %v295 = vunpack.c.l.b16 %v215
      %v296 = vunpack.c.l.b16 %v216
      %v297 = vunpack.c.l.b16 %v217
      %v298 = vunpack.c.l.b16 %v218
      %v299 = vunpack.c.l.b16 %v219
      %v300 = vunpack.c.l.b16 %v220
      %v301 = vunpack.c.l.b16 %v221
      %v302 = vunpack.c.l.b16 %v222
      %v303 = vpack.c.b16 %v272, %v271
      %v304 = vpack.c.b16 %v274, %v273
      %v305 = vpack.c.b16 %v276, %v275
      %v306 = vpack.c.b16 %v278, %v277
      %v307 = vpack.c.b16 %v280, %v279
      %v308 = vpack.c.b16 %v282, %v281
      %v309 = vpack.c.b16 %v284, %v283
      %v310 = vpack.c.b16 %v286, %v285
      %v311 = vpack.c.b16 %v288, %v287
      %v312 = vpack.c.b16 %v290, %v289
      %v313 = vpack.c.b16 %v292, %v291
      %v314 = vpack.c.b16 %v294, %v293
      %v315 = vpack.c.b16 %v296, %v295
      %v316 = vpack.c.b16 %v298, %v297
      %v317 = vpack.c.b16 %v300, %v299
      %v318 = vpack.c.b16 %v302, %v301
      %v351 = vunpack.c.l.b16 %v223
      %v352 = vunpack.c.l.b16 %v224
      %v353 = vunpack.c.l.b16 %v225
      %v354 = vunpack.c.l.b16 %v226
      %v355 = vunpack.c.l.b16 %v227
      %v356 = vunpack.c.l.b16 %v228
      %v357 = vunpack.c.l.b16 %v229
      %v358 = vunpack.c.l.b16 %v230
      %v359 = vunpack.c.l.b16 %v231
      %v360 = vunpack.c.l.b16 %v232
      %v361 = vunpack.c.l.b16 %v233
      %v362 = vunpack.c.l.b16 %v234
      %v363 = vunpack.c.l.b16 %v235
      %v364 = vunpack.c.l.b16 %v236
      %v365 = vunpack.c.l.b16 %v237
      %v366 = vunpack.c.l.b16 %v238
      %v367 = vpack.c.b16 %v352, %v351
      %v368 = vpack.c.b16 %v354, %v353
      %v369 = vpack.c.b16 %v356, %v355
      %v370 = vpack.c.b16 %v358, %v357
      %v371 = vpack.c.b16 %v360, %v359
      %v372 = vpack.c.b16 %v362, %v361
      %v373 = vpack.c.b16 %v364, %v363
      %v374 = vpack.c.b16 %v366, %v365
      %383 = vmatpush.bf16.msra.mxu0 %v374
      %384 = vmatpush.bf16.msra.mxu0 %v373
      %385 = vmatpush.bf16.msra.mxu0 %v372
      %386 = vmatpush.bf16.msra.mxu0 %v371
      %387 = vmatpush.bf16.msra.mxu0 %v370
      %388 = vmatpush.bf16.msra.mxu0 %v369
      %389 = vmatpush.bf16.msra.mxu0 %v368
      %390 = vmatpush.bf16.msra.mxu0 %v367
      %391 = vmatmul.bf16.gmra.mxu0 %v303
      %v392 = vpop.f32.mrf.mxu0
      %v393 = vadd.f32 0.0, %v392
      %v394 = vpop.f32.mrf.mxu0
      %v395 = vadd.f32 0.0, %v394
      %396 = vmatmul.bf16.gmra.mxu0 %v304
      %v397 = vpop.f32.mrf.mxu0
      %v398 = vadd.f32 0.0, %v397
      %v399 = vpop.f32.mrf.mxu0
      %v400 = vadd.f32 0.0, %v399
      %401 = vmatmul.bf16.gmra.mxu0 %v305
      %v402 = vpop.f32.mrf.mxu0
      %v403 = vadd.f32 0.0, %v402
      %v404 = vpop.f32.mrf.mxu0
      %v405 = vadd.f32 0.0, %v404
      %406 = vmatmul.bf16.gmra.mxu0 %v306
      %v407 = vpop.f32.mrf.mxu0
      %v408 = vadd.f32 0.0, %v407
      %v409 = vpop.f32.mrf.mxu0
      %v410 = vadd.f32 0.0, %v409
      %411 = vmatmul.bf16.gmra.mxu0 %v307
      %v412 = vpop.f32.mrf.mxu0
      %v413 = vadd.f32 0.0, %v412
      %v414 = vpop.f32.mrf.mxu0
      %v415 = vadd.f32 0.0, %v414
      %416 = vmatmul.bf16.gmra.mxu0 %v308
      %v417 = vpop.f32.mrf.mxu0
      %v418 = vadd.f32 0.0, %v417
      %v419 = vpop.f32.mrf.mxu0
      %v420 = vadd.f32 0.0, %v419
      %421 = vmatmul.bf16.gmra.mxu0 %v309
      %v422 = vpop.f32.mrf.mxu0
      %v423 = vadd.f32 0.0, %v422
      %v424 = vpop.f32.mrf.mxu0
      %v425 = vadd.f32 0.0, %v424
      %426 = vmatmul.bf16.gmra.mxu0 %v310
      %v427 = vpop.f32.mrf.mxu0
      %v428 = vadd.f32 0.0, %v427
      %v429 = vpop.f32.mrf.mxu0
      %v430 = vadd.f32 0.0, %v429
      %431 = vmatmul.bf16.gmra.mxu0 %v311
      %v432 = vpop.f32.mrf.mxu0
      %v433 = vadd.f32 0.0, %v432
      %v434 = vpop.f32.mrf.mxu0
      %v435 = vadd.f32 0.0, %v434
      %436 = vmatmul.bf16.gmra.mxu0 %v312
      %v437 = vpop.f32.mrf.mxu0
      %v438 = vadd.f32 0.0, %v437
      %v439 = vpop.f32.mrf.mxu0
      %v440 = vadd.f32 0.0, %v439
      %441 = vmatmul.bf16.gmra.mxu0 %v313
      %v442 = vpop.f32.mrf.mxu0
      %v443 = vadd.f32 0.0, %v442
      %v444 = vpop.f32.mrf.mxu0
      %v445 = vadd.f32 0.0, %v444
      %446 = vmatmul.bf16.gmra.mxu0 %v314
      %v447 = vpop.f32.mrf.mxu0
      %v448 = vadd.f32 0.0, %v447
      %v449 = vpop.f32.mrf.mxu0
      %v450 = vadd.f32 0.0, %v449
      %451 = vmatmul.bf16.gmra.mxu0 %v315
      %v452 = vpop.f32.mrf.mxu0
      %v453 = vadd.f32 0.0, %v452
      %v454 = vpop.f32.mrf.mxu0
      %v455 = vadd.f32 0.0, %v454
      %456 = vmatmul.bf16.gmra.mxu0 %v316
      %v457 = vpop.f32.mrf.mxu0
      %v458 = vadd.f32 0.0, %v457
      %v459 = vpop.f32.mrf.mxu0
      %v460 = vadd.f32 0.0, %v459
      %461 = vmatmul.bf16.gmra.mxu0 %v317
      %v462 = vpop.f32.mrf.mxu0
      %v463 = vadd.f32 0.0, %v462
      %v464 = vpop.f32.mrf.mxu0
      %v465 = vadd.f32 0.0, %v464
      %466 = vmatmul.bf16.gmra.mxu0 %v318
      %v467 = vpop.f32.mrf.mxu0
      %v468 = vadd.f32 0.0, %v467
      %v469 = vpop.f32.mrf.mxu0
      %v470 = vadd.f32 0.0, %v469
      %471 = vdwg.mxu0
      %s472 = smul.u32 %s15, 256
      %s473 = scalar_lea.vmem [#allocation2], %s472
      %474 = vst [vmem:[%s473] sm:$0xff] %v393
      %475 = vst [vmem:[%s473 + $0x8] sm:$0xff] %v395
      %476 = vst [vmem:[%s473 + $0x10] sm:$0xff] %v398
      %477 = vst [vmem:[%s473 + $0x18] sm:$0xff] %v400
      %478 = vst [vmem:[%s473 + $0x20] sm:$0xff] %v403
      %479 = vst [vmem:[%s473 + $0x28] sm:$0xff] %v405
      %480 = vst [vmem:[%s473 + $0x30] sm:$0xff] %v408
      %481 = vst [vmem:[%s473 + $0x38] sm:$0xff] %v410
      %482 = vst [vmem:[%s473 + $0x40] sm:$0xff] %v413
      %483 = vst [vmem:[%s473 + $0x48] sm:$0xff] %v415
      %484 = vst [vmem:[%s473 + $0x50] sm:$0xff] %v418
      %485 = vst [vmem:[%s473 + $0x58] sm:$0xff] %v420
      %486 = vst [vmem:[%s473 + $0x60] sm:$0xff] %v423
      %487 = vst [vmem:[%s473 + $0x68] sm:$0xff] %v425
      %488 = vst [vmem:[%s473 + $0x70] sm:$0xff] %v428
      %489 = vst [vmem:[%s473 + $0x78] sm:$0xff] %v430
      %490 = vst [vmem:[%s473 + $0x80] sm:$0xff] %v433
      %491 = vst [vmem:[%s473 + $0x88] sm:$0xff] %v435
      %492 = vst [vmem:[%s473 + $0x90] sm:$0xff] %v438
      %493 = vst [vmem:[%s473 + $0x98] sm:$0xff] %v440
      %494 = vst [vmem:[%s473 + $0xa0] sm:$0xff] %v443
      %495 = vst [vmem:[%s473 + $0xa8] sm:$0xff] %v445
      %496 = vst [vmem:[%s473 + $0xb0] sm:$0xff] %v448
      %497 = vst [vmem:[%s473 + $0xb8] sm:$0xff] %v450
      %498 = vst [vmem:[%s473 + $0xc0] sm:$0xff] %v453
      %499 = vst [vmem:[%s473 + $0xc8] sm:$0xff] %v455
      %500 = vst [vmem:[%s473 + $0xd0] sm:$0xff] %v458
      %501 = vst [vmem:[%s473 + $0xd8] sm:$0xff] %v460
      %502 = vst [vmem:[%s473 + $0xe0] sm:$0xff] %v463
      %503 = vst [vmem:[%s473 + $0xe8] sm:$0xff] %v465
      %504 = vst [vmem:[%s473 + $0xf0] sm:$0xff] %v468
      %505 = vst [vmem:[%s473 + $0xf8] sm:$0xff] %v470
      %v506 = vld [vmem:[#allocation3] sm:$0x1]
      %v507 = vadd.f32 %v393, %v395
      %v508 = vadd.f32 %v507, %v398
      %v509 = vadd.f32 %v508, %v400
      %v510 = vadd.f32 %v509, %v403
      %v511 = vadd.f32 %v510, %v405
      %v512 = vadd.f32 %v511, %v408
      %v513 = vadd.f32 %v512, %v410
      %v514 = vadd.f32 %v513, %v413
      %v515 = vadd.f32 %v514, %v415
      %v516 = vadd.f32 %v515, %v418
      %v517 = vadd.f32 %v516, %v420
      %v518 = vadd.f32 %v517, %v423
      %v519 = vadd.f32 %v518, %v425
      %v520 = vadd.f32 %v519, %v428
      %v521 = vadd.f32 %v520, %v430
      %v522 = vadd.f32 %v521, %v433
      %v523 = vadd.f32 %v522, %v435
      %v524 = vadd.f32 %v523, %v438
      %v525 = vadd.f32 %v524, %v440
      %v526 = vadd.f32 %v525, %v443
      %v527 = vadd.f32 %v526, %v445
      %v528 = vadd.f32 %v527, %v448
      %v529 = vadd.f32 %v528, %v450
      %v530 = vadd.f32 %v529, %v453
      %v531 = vadd.f32 %v530, %v455
      %v532 = vadd.f32 %v531, %v458
      %v533 = vadd.f32 %v532, %v460
      %v534 = vadd.f32 %v533, %v463
      %v535 = vadd.f32 %v534, %v465
      %v536 = vadd.f32 %v535, %v468
      %v537 = vadd.f32 %v536, %v470
      %v538 = vrot.slane %v537, 4
      %v539 = vadd.f32 %v537, %v538
      %v540 = vrot.slane %v539, 2
      %v541 = vadd.f32 %v539, %v540
      %v542 = vrot.slane %v541, 1
      %v543 = vadd.f32 %v541, %v542
      %v544 = vadd.f32 %v506, %v543
      %545 = vst [vmem:[#allocation3] sm:$0x1] %v544
      %v546 = vld [vmem:[#allocation4] sm:$0x1]
      %v547 = vmul.f32 %v393, %v393
      %v548 = vmul.f32 %v395, %v395
      %v549 = vmul.f32 %v398, %v398
      %v550 = vmul.f32 %v400, %v400
      %v551 = vmul.f32 %v403, %v403
      %v552 = vmul.f32 %v405, %v405
      %v553 = vmul.f32 %v408, %v408
      %v554 = vmul.f32 %v410, %v410
      %v555 = vmul.f32 %v413, %v413
      %v556 = vmul.f32 %v415, %v415
      %v557 = vmul.f32 %v418, %v418
      %v558 = vmul.f32 %v420, %v420
      %v559 = vmul.f32 %v423, %v423
      %v560 = vmul.f32 %v425, %v425
      %v561 = vmul.f32 %v428, %v428
      %v562 = vmul.f32 %v430, %v430
      %v563 = vmul.f32 %v433, %v433
      %v564 = vmul.f32 %v435, %v435
      %v565 = vmul.f32 %v438, %v438
      %v566 = vmul.f32 %v440, %v440
      %v567 = vmul.f32 %v443, %v443
      %v568 = vmul.f32 %v445, %v445
      %v569 = vmul.f32 %v448, %v448
      %v570 = vmul.f32 %v450, %v450
      %v571 = vmul.f32 %v453, %v453
      %v572 = vmul.f32 %v455, %v455
      %v573 = vmul.f32 %v458, %v458
      %v574 = vmul.f32 %v460, %v460
      %v575 = vmul.f32 %v463, %v463
      %v576 = vmul.f32 %v465, %v465
      %v577 = vmul.f32 %v468, %v468
      %v578 = vmul.f32 %v470, %v470
      %v579 = vadd.f32 %v547, %v548
      %v580 = vadd.f32 %v579, %v549
      %v581 = vadd.f32 %v580, %v550
      %v582 = vadd.f32 %v581, %v551
      %v583 = vadd.f32 %v582, %v552
      %v584 = vadd.f32 %v583, %v553
      %v585 = vadd.f32 %v584, %v554
      %v586 = vadd.f32 %v585, %v555
      %v587 = vadd.f32 %v586, %v556
      %v588 = vadd.f32 %v587, %v557
      %v589 = vadd.f32 %v588, %v558
      %v590 = vadd.f32 %v589, %v559
      %v591 = vadd.f32 %v590, %v560
      %v592 = vadd.f32 %v591, %v561
      %v593 = vadd.f32 %v592, %v562
      %v594 = vadd.f32 %v593, %v563
      %v595 = vadd.f32 %v594, %v564
      %v596 = vadd.f32 %v595, %v565
      %v597 = vadd.f32 %v596, %v566
      %v598 = vadd.f32 %v597, %v567
      %v599 = vadd.f32 %v598, %v568
      %v600 = vadd.f32 %v599, %v569
      %v601 = vadd.f32 %v600, %v570
      %v602 = vadd.f32 %v601, %v571
      %v603 = vadd.f32 %v602, %v572
      %v604 = vadd.f32 %v603, %v573
      %v605 = vadd.f32 %v604, %v574
      %v606 = vadd.f32 %v605, %v575
      %v607 = vadd.f32 %v606, %v576
      %v608 = vadd.f32 %v607, %v577
      %v609 = vadd.f32 %v608, %v578
      %v610 = vrot.slane %v609, 4
      %v611 = vadd.f32 %v609, %v610
      %v612 = vrot.slane %v611, 2
      %v613 = vadd.f32 %v611, %v612
      %v614 = vrot.slane %v613, 1
      %v615 = vadd.f32 %v613, %v614
      %v616 = vadd.f32 %v546, %v615
      %617 = vst [vmem:[#allocation4] sm:$0x1] %v616
      %p618 = scmp.eq.s32.totalorder %s15, 3
      // Predicated region
      $region41: #{resnet_forward.10} parent=35 // pred_check
        %p619 = pneg %p618
      $region42: #{resnet_forward.10} parent=35 // pred_check_branch
        %621 = sbr.rel (%p619) target = $region44
      $region43: #{resnet_forward.10} parent=35 // pred_region
        %v622 = vld [vmem:[#allocation3] sm:$0x1]
        %v623 = vmul.f32 %v622, 0.0009765625
        %v624 = vld [vmem:[#allocation4] sm:$0x1]
        %v625 = vmul.f32 %v624, 0.0009765625
        %v626 = vmul.f32 %v623, %v623
        %v627 = vsub.f32 %v625, %v626
        %v628 = vmax.f32 %v627, 0.0
        %v629 = vadd.f32 %v628, 1e-05
        %v630 = vrsqrt.pop %v629
        %v631 = vmul.f32 %v630, %v629
        %v632 = vmul.f32 %v631, %v630
        %v633 = vmul.f32 0.5, %v632
        %v634 = vsub.f32 1.5, %v633
        %v635 = vmul.f32 %v630, %v634
        %vm636 = vweird.f32 %v629
        %vm637 = vweird.f32 %v630
        %vm638 = vmor %vm636, %vm637
        %v639 = vsel %vm638, %v630, %v635
        %v640 = vld [vmem:[%s2] sm:$0x1]
        %v641 = vmul.f32 %v639, %v640
        %v642 = vld [vmem:[%s3] sm:$0x1]
        %v643 = vmul.f32 %v623, %v641
        %v644 = vsub.f32 %v642, %v643
        %v645 = vld [vmem:[#allocation2] sm:$0xff]
        %v646 = vld [vmem:[#allocation2 + $0x8] sm:$0xff]
        %v647 = vld [vmem:[#allocation2 + $0x10] sm:$0xff]
        %v648 = vld [vmem:[#allocation2 + $0x18] sm:$0xff]
        %v649 = vld [vmem:[#allocation2 + $0x20] sm:$0xff]
        %v650 = vld [vmem:[#allocation2 + $0x28] sm:$0xff]
        %v651 = vld [vmem:[#allocation2 + $0x30] sm:$0xff]
        %v652 = vld [vmem:[#allocation2 + $0x38] sm:$0xff]
        %v653 = vld [vmem:[#allocation2 + $0x40] sm:$0xff]
        %v654 = vld [vmem:[#allocation2 + $0x48] sm:$0xff]
        %v655 = vld [vmem:[#allocation2 + $0x50] sm:$0xff]
        %v656 = vld [vmem:[#allocation2 + $0x58] sm:$0xff]
        %v657 = vld [vmem:[#allocation2 + $0x60] sm:$0xff]
        %v658 = vld [vmem:[#allocation2 + $0x68] sm:$0xff]
        %v659 = vld [vmem:[#allocation2 + $0x70] sm:$0xff]
        %v660 = vld [vmem:[#allocation2 + $0x78] sm:$0xff]
        %v661 = vld [vmem:[#allocation2 + $0x80] sm:$0xff]
        %v662 = vld [vmem:[#allocation2 + $0x88] sm:$0xff]
        %v663 = vld [vmem:[#allocation2 + $0x90] sm:$0xff]
        %v664 = vld [vmem:[#allocation2 + $0x98] sm:$0xff]
        %v665 = vld [vmem:[#allocation2 + $0xa0] sm:$0xff]
        %v666 = vld [vmem:[#allocation2 + $0xa8] sm:$0xff]
        %v667 = vld [vmem:[#allocation2 + $0xb0] sm:$0xff]
        %v668 = vld [vmem:[#allocation2 + $0xb8] sm:$0xff]
        %v669 = vld [vmem:[#allocation2 + $0xc0] sm:$0xff]
        %v670 = vld [vmem:[#allocation2 + $0xc8] sm:$0xff]
        %v671 = vld [vmem:[#allocation2 + $0xd0] sm:$0xff]
        %v672 = vld [vmem:[#allocation2 + $0xd8] sm:$0xff]
        %v673 = vld [vmem:[#allocation2 + $0xe0] sm:$0xff]
        %v674 = vld [vmem:[#allocation2 + $0xe8] sm:$0xff]
        %v675 = vld [vmem:[#allocation2 + $0xf0] sm:$0xff]
        %v676 = vld [vmem:[#allocation2 + $0xf8] sm:$0xff]
        %v677 = vld [vmem:[#allocation2 + $0x100] sm:$0xff]
        %v678 = vld [vmem:[#allocation2 + $0x108] sm:$0xff]
        %v679 = vld [vmem:[#allocation2 + $0x110] sm:$0xff]
        %v680 = vld [vmem:[#allocation2 + $0x118] sm:$0xff]
        %v681 = vld [vmem:[#allocation2 + $0x120] sm:$0xff]
        %v682 = vld [vmem:[#allocation2 + $0x128] sm:$0xff]
        %v683 = vld [vmem:[#allocation2 + $0x130] sm:$0xff]
        %v684 = vld [vmem:[#allocation2 + $0x138] sm:$0xff]
        %v685 = vld [vmem:[#allocation2 + $0x140] sm:$0xff]
        %v686 = vld [vmem:[#allocation2 + $0x148] sm:$0xff]
        %v687 = vld [vmem:[#allocation2 + $0x150] sm:$0xff]
        %v688 = vld [vmem:[#allocation2 + $0x158] sm:$0xff]
        %v689 = vld [vmem:[#allocation2 + $0x160] sm:$0xff]
        %v690 = vld [vmem:[#allocation2 + $0x168] sm:$0xff]
        %v691 = vld [vmem:[#allocation2 + $0x170] sm:$0xff]
        %v692 = vld [vmem:[#allocation2 + $0x178] sm:$0xff]
        %v693 = vld [vmem:[#allocation2 + $0x180] sm:$0xff]
        %v694 = vld [vmem:[#allocation2 + $0x188] sm:$0xff]
        %v695 = vld [vmem:[#allocation2 + $0x190] sm:$0xff]
        %v696 = vld [vmem:[#allocation2 + $0x198] sm:$0xff]
        %v697 = vld [vmem:[#allocation2 + $0x1a0] sm:$0xff]
        %v698 = vld [vmem:[#allocation2 + $0x1a8] sm:$0xff]
        %v699 = vld [vmem:[#allocation2 + $0x1b0] sm:$0xff]
        %v700 = vld [vmem:[#allocation2 + $0x1b8] sm:$0xff]
        %v701 = vld [vmem:[#allocation2 + $0x1c0] sm:$0xff]
        %v702 = vld [vmem:[#allocation2 + $0x1c8] sm:$0xff]
        %v703 = vld [vmem:[#allocation2 + $0x1d0] sm:$0xff]
        %v704 = vld [vmem:[#allocation2 + $0x1d8] sm:$0xff]
        %v705 = vld [vmem:[#allocation2 + $0x1e0] sm:$0xff]
        %v706 = vld [vmem:[#allocation2 + $0x1e8] sm:$0xff]
        %v707 = vld [vmem:[#allocation2 + $0x1f0] sm:$0xff]
        %v708 = vld [vmem:[#allocation2 + $0x1f8] sm:$0xff]
        %v709 = vld [vmem:[#allocation2 + $0x200] sm:$0xff]
        %v710 = vld [vmem:[#allocation2 + $0x208] sm:$0xff]
        %v711 = vld [vmem:[#allocation2 + $0x210] sm:$0xff]
        %v712 = vld [vmem:[#allocation2 + $0x218] sm:$0xff]
        %v713 = vld [vmem:[#allocation2 + $0x220] sm:$0xff]
        %v714 = vld [vmem:[#allocation2 + $0x228] sm:$0xff]
        %v715 = vld [vmem:[#allocation2 + $0x230] sm:$0xff]
        %v716 = vld [vmem:[#allocation2 + $0x238] sm:$0xff]
        %v717 = vld [vmem:[#allocation2 + $0x240] sm:$0xff]
        %v718 = vld [vmem:[#allocation2 + $0x248] sm:$0xff]
        %v719 = vld [vmem:[#allocation2 + $0x250] sm:$0xff]
        %v720 = vld [vmem:[#allocation2 + $0x258] sm:$0xff]
        %v721 = vld [vmem:[#allocation2 + $0x260] sm:$0xff]
        %v722 = vld [vmem:[#allocation2 + $0x268] sm:$0xff]
        %v723 = vld [vmem:[#allocation2 + $0x270] sm:$0xff]
        %v724 = vld [vmem:[#allocation2 + $0x278] sm:$0xff]
        %v725 = vld [vmem:[#allocation2 + $0x280] sm:$0xff]
        %v726 = vld [vmem:[#allocation2 + $0x288] sm:$0xff]
        %v727 = vld [vmem:[#allocation2 + $0x290] sm:$0xff]
        %v728 = vld [vmem:[#allocation2 + $0x298] sm:$0xff]
        %v729 = vld [vmem:[#allocation2 + $0x2a0] sm:$0xff]
        %v730 = vld [vmem:[#allocation2 + $0x2a8] sm:$0xff]
        %v731 = vld [vmem:[#allocation2 + $0x2b0] sm:$0xff]
        %v732 = vld [vmem:[#allocation2 + $0x2b8] sm:$0xff]
        %v733 = vld [vmem:[#allocation2 + $0x2c0] sm:$0xff]
        %v734 = vld [vmem:[#allocation2 + $0x2c8] sm:$0xff]
        %v735 = vld [vmem:[#allocation2 + $0x2d0] sm:$0xff]
        %v736 = vld [vmem:[#allocation2 + $0x2d8] sm:$0xff]
        %v737 = vld [vmem:[#allocation2 + $0x2e0] sm:$0xff]
        %v738 = vld [vmem:[#allocation2 + $0x2e8] sm:$0xff]
        %v739 = vld [vmem:[#allocation2 + $0x2f0] sm:$0xff]
        %v740 = vld [vmem:[#allocation2 + $0x2f8] sm:$0xff]
        %v741 = vld [vmem:[#allocation2 + $0x300] sm:$0xff]
        %v742 = vld [vmem:[#allocation2 + $0x308] sm:$0xff]
        %v743 = vld [vmem:[#allocation2 + $0x310] sm:$0xff]
        %v744 = vld [vmem:[#allocation2 + $0x318] sm:$0xff]
        %v745 = vld [vmem:[#allocation2 + $0x320] sm:$0xff]
        %v746 = vld [vmem:[#allocation2 + $0x328] sm:$0xff]
        %v747 = vld [vmem:[#allocation2 + $0x330] sm:$0xff]
        %v748 = vld [vmem:[#allocation2 + $0x338] sm:$0xff]
        %v749 = vld [vmem:[#allocation2 + $0x340] sm:$0xff]
        %v750 = vld [vmem:[#allocation2 + $0x348] sm:$0xff]
        %v751 = vld [vmem:[#allocation2 + $0x350] sm:$0xff]
        %v752 = vld [vmem:[#allocation2 + $0x358] sm:$0xff]
        %v753 = vld [vmem:[#allocation2 + $0x360] sm:$0xff]
        %v754 = vld [vmem:[#allocation2 + $0x368] sm:$0xff]
        %v755 = vld [vmem:[#allocation2 + $0x370] sm:$0xff]
        %v756 = vld [vmem:[#allocation2 + $0x378] sm:$0xff]
        %v757 = vld [vmem:[#allocation2 + $0x380] sm:$0xff]
        %v758 = vld [vmem:[#allocation2 + $0x388] sm:$0xff]
        %v759 = vld [vmem:[#allocation2 + $0x390] sm:$0xff]
        %v760 = vld [vmem:[#allocation2 + $0x398] sm:$0xff]
        %v761 = vld [vmem:[#allocation2 + $0x3a0] sm:$0xff]
        %v762 = vld [vmem:[#allocation2 + $0x3a8] sm:$0xff]
        %v763 = vld [vmem:[#allocation2 + $0x3b0] sm:$0xff]
        %v764 = vld [vmem:[#allocation2 + $0x3b8] sm:$0xff]
        %v765 = vld [vmem:[#allocation2 + $0x3c0] sm:$0xff]
        %v766 = vld [vmem:[#allocation2 + $0x3c8] sm:$0xff]
        %v767 = vld [vmem:[#allocation2 + $0x3d0] sm:$0xff]
        %v768 = vld [vmem:[#allocation2 + $0x3d8] sm:$0xff]
        %v769 = vld [vmem:[#allocation2 + $0x3e0] sm:$0xff]
        %v770 = vld [vmem:[#allocation2 + $0x3e8] sm:$0xff]
        %v771 = vld [vmem:[#allocation2 + $0x3f0] sm:$0xff]
        %v772 = vld [vmem:[#allocation2 + $0x3f8] sm:$0xff]
        %v774 = vperm.slane %v641, 0
        %v776 = vmul.f32 %v645, %v774
        %v777 = vmul.f32 %v646, %v774
        %v778 = vmul.f32 %v647, %v774
        %v779 = vmul.f32 %v648, %v774
        %v780 = vmul.f32 %v649, %v774
        %v781 = vmul.f32 %v650, %v774
        %v782 = vmul.f32 %v651, %v774
        %v783 = vmul.f32 %v652, %v774
        %v784 = vmul.f32 %v653, %v774
        %v785 = vmul.f32 %v654, %v774
        %v786 = vmul.f32 %v655, %v774
        %v787 = vmul.f32 %v656, %v774
        %v788 = vmul.f32 %v657, %v774
        %v789 = vmul.f32 %v658, %v774
        %v790 = vmul.f32 %v659, %v774
        %v791 = vmul.f32 %v660, %v774
        %v792 = vmul.f32 %v661, %v774
        %v793 = vmul.f32 %v662, %v774
        %v794 = vmul.f32 %v663, %v774
        %v795 = vmul.f32 %v664, %v774
        %v796 = vmul.f32 %v665, %v774
        %v797 = vmul.f32 %v666, %v774
        %v798 = vmul.f32 %v667, %v774
        %v799 = vmul.f32 %v668, %v774
        %v800 = vmul.f32 %v669, %v774
        %v801 = vmul.f32 %v670, %v774
        %v802 = vmul.f32 %v671, %v774
        %v803 = vmul.f32 %v672, %v774
        %v804 = vmul.f32 %v673, %v774
        %v805 = vmul.f32 %v674, %v774
        %v806 = vmul.f32 %v675, %v774
        %v807 = vmul.f32 %v676, %v774
        %v808 = vmul.f32 %v677, %v774
        %v809 = vmul.f32 %v678, %v774
        %v810 = vmul.f32 %v679, %v774
        %v811 = vmul.f32 %v680, %v774
        %v812 = vmul.f32 %v681, %v774
        %v813 = vmul.f32 %v682, %v774
        %v814 = vmul.f32 %v683, %v774
        %v815 = vmul.f32 %v684, %v774
        %v816 = vmul.f32 %v685, %v774
        %v817 = vmul.f32 %v686, %v774
        %v818 = vmul.f32 %v687, %v774
        %v819 = vmul.f32 %v688, %v774
        %v820 = vmul.f32 %v689, %v774
        %v821 = vmul.f32 %v690, %v774
        %v822 = vmul.f32 %v691, %v774
        %v823 = vmul.f32 %v692, %v774
        %v824 = vmul.f32 %v693, %v774
        %v825 = vmul.f32 %v694, %v774
        %v826 = vmul.f32 %v695, %v774
        %v827 = vmul.f32 %v696, %v774
        %v828 = vmul.f32 %v697, %v774
        %v829 = vmul.f32 %v698, %v774
        %v830 = vmul.f32 %v699, %v774
        %v831 = vmul.f32 %v700, %v774
        %v832 = vmul.f32 %v701, %v774
        %v833 = vmul.f32 %v702, %v774
        %v834 = vmul.f32 %v703, %v774
        %v835 = vmul.f32 %v704, %v774
        %v836 = vmul.f32 %v705, %v774
        %v837 = vmul.f32 %v706, %v774
        %v838 = vmul.f32 %v707, %v774
        %v839 = vmul.f32 %v708, %v774
        %v840 = vmul.f32 %v709, %v774
        %v841 = vmul.f32 %v710, %v774
        %v842 = vmul.f32 %v711, %v774
        %v843 = vmul.f32 %v712, %v774
        %v844 = vmul.f32 %v713, %v774
        %v845 = vmul.f32 %v714, %v774
        %v846 = vmul.f32 %v715, %v774
        %v847 = vmul.f32 %v716, %v774
        %v848 = vmul.f32 %v717, %v774
        %v849 = vmul.f32 %v718, %v774
        %v850 = vmul.f32 %v719, %v774
        %v851 = vmul.f32 %v720, %v774
        %v852 = vmul.f32 %v721, %v774
        %v853 = vmul.f32 %v722, %v774
        %v854 = vmul.f32 %v723, %v774
        %v855 = vmul.f32 %v724, %v774
        %v856 = vmul.f32 %v725, %v774
        %v857 = vmul.f32 %v726, %v774
        %v858 = vmul.f32 %v727, %v774
        %v859 = vmul.f32 %v728, %v774
        %v860 = vmul.f32 %v729, %v774
        %v861 = vmul.f32 %v730, %v774
        %v862 = vmul.f32 %v731, %v774
        %v863 = vmul.f32 %v732, %v774
        %v864 = vmul.f32 %v733, %v774
        %v865 = vmul.f32 %v734, %v774
        %v866 = vmul.f32 %v735, %v774
        %v867 = vmul.f32 %v736, %v774
        %v868 = vmul.f32 %v737, %v774
        %v869 = vmul.f32 %v738, %v774
        %v870 = vmul.f32 %v739, %v774
        %v871 = vmul.f32 %v740, %v774
        %v872 = vmul.f32 %v741, %v774
        %v873 = vmul.f32 %v742, %v774
        %v874 = vmul.f32 %v743, %v774
        %v875 = vmul.f32 %v744, %v774
        %v876 = vmul.f32 %v745, %v774
        %v877 = vmul.f32 %v746, %v774
        %v878 = vmul.f32 %v747, %v774
        %v879 = vmul.f32 %v748, %v774
        %v880 = vmul.f32 %v749, %v774
        %v881 = vmul.f32 %v750, %v774
        %v882 = vmul.f32 %v751, %v774
        %v883 = vmul.f32 %v752, %v774
        %v884 = vmul.f32 %v753, %v774
        %v885 = vmul.f32 %v754, %v774
        %v886 = vmul.f32 %v755, %v774
        %v887 = vmul.f32 %v756, %v774
        %v888 = vmul.f32 %v757, %v774
        %v889 = vmul.f32 %v758, %v774
        %v890 = vmul.f32 %v759, %v774
        %v891 = vmul.f32 %v760, %v774
        %v892 = vmul.f32 %v761, %v774
        %v893 = vmul.f32 %v762, %v774
        %v894 = vmul.f32 %v763, %v774
        %v895 = vmul.f32 %v764, %v774
        %v896 = vmul.f32 %v765, %v774
        %v897 = vmul.f32 %v766, %v774
        %v898 = vmul.f32 %v767, %v774
        %v899 = vmul.f32 %v768, %v774
        %v900 = vmul.f32 %v769, %v774
        %v901 = vmul.f32 %v770, %v774
        %v902 = vmul.f32 %v771, %v774
        %v903 = vmul.f32 %v772, %v774
        %v905 = vperm.slane %v644, 0
        %v907 = vadd.f32 %v776, %v905
        %v908 = vadd.f32 %v777, %v905
        %v909 = vadd.f32 %v778, %v905
        %v910 = vadd.f32 %v779, %v905
        %v911 = vadd.f32 %v780, %v905
        %v912 = vadd.f32 %v781, %v905
        %v913 = vadd.f32 %v782, %v905
        %v914 = vadd.f32 %v783, %v905
        %v915 = vadd.f32 %v784, %v905
        %v916 = vadd.f32 %v785, %v905
        %v917 = vadd.f32 %v786, %v905
        %v918 = vadd.f32 %v787, %v905
        %v919 = vadd.f32 %v788, %v905
        %v920 = vadd.f32 %v789, %v905
        %v921 = vadd.f32 %v790, %v905
        %v922 = vadd.f32 %v791, %v905
        %v923 = vadd.f32 %v792, %v905
        %v924 = vadd.f32 %v793, %v905
        %v925 = vadd.f32 %v794, %v905
        %v926 = vadd.f32 %v795, %v905
        %v927 = vadd.f32 %v796, %v905
        %v928 = vadd.f32 %v797, %v905
        %v929 = vadd.f32 %v798, %v905
        %v930 = vadd.f32 %v799, %v905
        %v931 = vadd.f32 %v800, %v905
        %v932 = vadd.f32 %v801, %v905
        %v933 = vadd.f32 %v802, %v905
        %v934 = vadd.f32 %v803, %v905
        %v935 = vadd.f32 %v804, %v905
        %v936 = vadd.f32 %v805, %v905
        %v937 = vadd.f32 %v806, %v905
        %v938 = vadd.f32 %v807, %v905
        %v939 = vadd.f32 %v808, %v905
        %v940 = vadd.f32 %v809, %v905
        %v941 = vadd.f32 %v810, %v905
        %v942 = vadd.f32 %v811, %v905
        %v943 = vadd.f32 %v812, %v905
        %v944 = vadd.f32 %v813, %v905
        %v945 = vadd.f32 %v814, %v905
        %v946 = vadd.f32 %v815, %v905
        %v947 = vadd.f32 %v816, %v905
        %v948 = vadd.f32 %v817, %v905
        %v949 = vadd.f32 %v818, %v905
        %v950 = vadd.f32 %v819, %v905
        %v951 = vadd.f32 %v820, %v905
        %v952 = vadd.f32 %v821, %v905
        %v953 = vadd.f32 %v822, %v905
        %v954 = vadd.f32 %v823, %v905
        %v955 = vadd.f32 %v824, %v905
        %v956 = vadd.f32 %v825, %v905
        %v957 = vadd.f32 %v826, %v905
        %v958 = vadd.f32 %v827, %v905
        %v959 = vadd.f32 %v828, %v905
        %v960 = vadd.f32 %v829, %v905
        %v961 = vadd.f32 %v830, %v905
        %v962 = vadd.f32 %v831, %v905
        %v963 = vadd.f32 %v832, %v905
        %v964 = vadd.f32 %v833, %v905
        %v965 = vadd.f32 %v834, %v905
        %v966 = vadd.f32 %v835, %v905
        %v967 = vadd.f32 %v836, %v905
        %v968 = vadd.f32 %v837, %v905
        %v969 = vadd.f32 %v838, %v905
        %v970 = vadd.f32 %v839, %v905
        %v971 = vadd.f32 %v840, %v905
        %v972 = vadd.f32 %v841, %v905
        %v973 = vadd.f32 %v842, %v905
        %v974 = vadd.f32 %v843, %v905
        %v975 = vadd.f32 %v844, %v905
        %v976 = vadd.f32 %v845, %v905
        %v977 = vadd.f32 %v846, %v905
        %v978 = vadd.f32 %v847, %v905
        %v979 = vadd.f32 %v848, %v905
        %v980 = vadd.f32 %v849, %v905
        %v981 = vadd.f32 %v850, %v905
        %v982 = vadd.f32 %v851, %v905
        %v983 = vadd.f32 %v852, %v905
        %v984 = vadd.f32 %v853, %v905
        %v985 = vadd.f32 %v854, %v905
        %v986 = vadd.f32 %v855, %v905
        %v987 = vadd.f32 %v856, %v905
        %v988 = vadd.f32 %v857, %v905
        %v989 = vadd.f32 %v858, %v905
        %v990 = vadd.f32 %v859, %v905
        %v991 = vadd.f32 %v860, %v905
        %v992 = vadd.f32 %v861, %v905
        %v993 = vadd.f32 %v862, %v905
        %v994 = vadd.f32 %v863, %v905
        %v995 = vadd.f32 %v864, %v905
        %v996 = vadd.f32 %v865, %v905
        %v997 = vadd.f32 %v866, %v905
        %v998 = vadd.f32 %v867, %v905
        %v999 = vadd.f32 %v868, %v905
        %v1000 = vadd.f32 %v869, %v905
        %v1001 = vadd.f32 %v870, %v905
        %v1002 = vadd.f32 %v871, %v905
        %v1003 = vadd.f32 %v872, %v905
        %v1004 = vadd.f32 %v873, %v905
        %v1005 = vadd.f32 %v874, %v905
        %v1006 = vadd.f32 %v875, %v905
        %v1007 = vadd.f32 %v876, %v905
        %v1008 = vadd.f32 %v877, %v905
        %v1009 = vadd.f32 %v878, %v905
        %v1010 = vadd.f32 %v879, %v905
        %v1011 = vadd.f32 %v880, %v905
        %v1012 = vadd.f32 %v881, %v905
        %v1013 = vadd.f32 %v882, %v905
        %v1014 = vadd.f32 %v883, %v905
        %v1015 = vadd.f32 %v884, %v905
        %v1016 = vadd.f32 %v885, %v905
        %v1017 = vadd.f32 %v886, %v905
        %v1018 = vadd.f32 %v887, %v905
        %v1019 = vadd.f32 %v888, %v905
        %v1020 = vadd.f32 %v889, %v905
        %v1021 = vadd.f32 %v890, %v905
        %v1022 = vadd.f32 %v891, %v905
        %v1023 = vadd.f32 %v892, %v905
        %v1024 = vadd.f32 %v893, %v905
        %v1025 = vadd.f32 %v894, %v905
        %v1026 = vadd.f32 %v895, %v905
        %v1027 = vadd.f32 %v896, %v905
        %v1028 = vadd.f32 %v897, %v905
        %v1029 = vadd.f32 %v898, %v905
        %v1030 = vadd.f32 %v899, %v905
        %v1031 = vadd.f32 %v900, %v905
        %v1032 = vadd.f32 %v901, %v905
        %v1033 = vadd.f32 %v902, %v905
        %v1034 = vadd.f32 %v903, %v905
        %v1035 = vmax.f32 %v907, 0.0
        %v1036 = vmax.f32 %v908, 0.0
        %v1037 = vmax.f32 %v909, 0.0
        %v1038 = vmax.f32 %v910, 0.0
        %v1039 = vmax.f32 %v911, 0.0
        %v1040 = vmax.f32 %v912, 0.0
        %v1041 = vmax.f32 %v913, 0.0
        %v1042 = vmax.f32 %v914, 0.0
        %v1043 = vmax.f32 %v915, 0.0
        %v1044 = vmax.f32 %v916, 0.0
        %v1045 = vmax.f32 %v917, 0.0
        %v1046 = vmax.f32 %v918, 0.0
        %v1047 = vmax.f32 %v919, 0.0
        %v1048 = vmax.f32 %v920, 0.0
        %v1049 = vmax.f32 %v921, 0.0
        %v1050 = vmax.f32 %v922, 0.0
        %v1051 = vmax.f32 %v923, 0.0
        %v1052 = vmax.f32 %v924, 0.0
        %v1053 = vmax.f32 %v925, 0.0
        %v1054 = vmax.f32 %v926, 0.0
        %v1055 = vmax.f32 %v927, 0.0
        %v1056 = vmax.f32 %v928, 0.0
        %v1057 = vmax.f32 %v929, 0.0
        %v1058 = vmax.f32 %v930, 0.0
        %v1059 = vmax.f32 %v931, 0.0
        %v1060 = vmax.f32 %v932, 0.0
        %v1061 = vmax.f32 %v933, 0.0
        %v1062 = vmax.f32 %v934, 0.0
        %v1063 = vmax.f32 %v935, 0.0
        %v1064 = vmax.f32 %v936, 0.0
        %v1065 = vmax.f32 %v937, 0.0
        %v1066 = vmax.f32 %v938, 0.0
        %v1067 = vmax.f32 %v939, 0.0
        %v1068 = vmax.f32 %v940, 0.0
        %v1069 = vmax.f32 %v941, 0.0
        %v1070 = vmax.f32 %v942, 0.0
        %v1071 = vmax.f32 %v943, 0.0
        %v1072 = vmax.f32 %v944, 0.0
        %v1073 = vmax.f32 %v945, 0.0
        %v1074 = vmax.f32 %v946, 0.0
        %v1075 = vmax.f32 %v947, 0.0
        %v1076 = vmax.f32 %v948, 0.0
        %v1077 = vmax.f32 %v949, 0.0
        %v1078 = vmax.f32 %v950, 0.0
        %v1079 = vmax.f32 %v951, 0.0
        %v1080 = vmax.f32 %v952, 0.0
        %v1081 = vmax.f32 %v953, 0.0
        %v1082 = vmax.f32 %v954, 0.0
        %v1083 = vmax.f32 %v955, 0.0
        %v1084 = vmax.f32 %v956, 0.0
        %v1085 = vmax.f32 %v957, 0.0
        %v1086 = vmax.f32 %v958, 0.0
        %v1087 = vmax.f32 %v959, 0.0
        %v1088 = vmax.f32 %v960, 0.0
        %v1089 = vmax.f32 %v961, 0.0
        %v1090 = vmax.f32 %v962, 0.0
        %v1091 = vmax.f32 %v963, 0.0
        %v1092 = vmax.f32 %v964, 0.0
        %v1093 = vmax.f32 %v965, 0.0
        %v1094 = vmax.f32 %v966, 0.0
        %v1095 = vmax.f32 %v967, 0.0
        %v1096 = vmax.f32 %v968, 0.0
        %v1097 = vmax.f32 %v969, 0.0
        %v1098 = vmax.f32 %v970, 0.0
        %v1099 = vmax.f32 %v971, 0.0
        %v1100 = vmax.f32 %v972, 0.0
        %v1101 = vmax.f32 %v973, 0.0
        %v1102 = vmax.f32 %v974, 0.0
        %v1103 = vmax.f32 %v975, 0.0
        %v1104 = vmax.f32 %v976, 0.0
        %v1105 = vmax.f32 %v977, 0.0
        %v1106 = vmax.f32 %v978, 0.0
        %v1107 = vmax.f32 %v979, 0.0
        %v1108 = vmax.f32 %v980, 0.0
        %v1109 = vmax.f32 %v981, 0.0
        %v1110 = vmax.f32 %v982, 0.0
        %v1111 = vmax.f32 %v983, 0.0
        %v1112 = vmax.f32 %v984, 0.0
        %v1113 = vmax.f32 %v985, 0.0
        %v1114 = vmax.f32 %v986, 0.0
        %v1115 = vmax.f32 %v987, 0.0
        %v1116 = vmax.f32 %v988, 0.0
        %v1117 = vmax.f32 %v989, 0.0
        %v1118 = vmax.f32 %v990, 0.0
        %v1119 = vmax.f32 %v991, 0.0
        %v1120 = vmax.f32 %v992, 0.0
        %v1121 = vmax.f32 %v993, 0.0
        %v1122 = vmax.f32 %v994, 0.0
        %v1123 = vmax.f32 %v995, 0.0
        %v1124 = vmax.f32 %v996, 0.0
        %v1125 = vmax.f32 %v997, 0.0
        %v1126 = vmax.f32 %v998, 0.0
        %v1127 = vmax.f32 %v999, 0.0
        %v1128 = vmax.f32 %v1000, 0.0
        %v1129 = vmax.f32 %v1001, 0.0
        %v1130 = vmax.f32 %v1002, 0.0
        %v1131 = vmax.f32 %v1003, 0.0
        %v1132 = vmax.f32 %v1004, 0.0
        %v1133 = vmax.f32 %v1005, 0.0
        %v1134 = vmax.f32 %v1006, 0.0
        %v1135 = vmax.f32 %v1007, 0.0
        %v1136 = vmax.f32 %v1008, 0.0
        %v1137 = vmax.f32 %v1009, 0.0
        %v1138 = vmax.f32 %v1010, 0.0
        %v1139 = vmax.f32 %v1011, 0.0
        %v1140 = vmax.f32 %v1012, 0.0
        %v1141 = vmax.f32 %v1013, 0.0
        %v1142 = vmax.f32 %v1014, 0.0
        %v1143 = vmax.f32 %v1015, 0.0
        %v1144 = vmax.f32 %v1016, 0.0
        %v1145 = vmax.f32 %v1017, 0.0
        %v1146 = vmax.f32 %v1018, 0.0
        %v1147 = vmax.f32 %v1019, 0.0
        %v1148 = vmax.f32 %v1020, 0.0
        %v1149 = vmax.f32 %v1021, 0.0
        %v1150 = vmax.f32 %v1022, 0.0
        %v1151 = vmax.f32 %v1023, 0.0
        %v1152 = vmax.f32 %v1024, 0.0
        %v1153 = vmax.f32 %v1025, 0.0
        %v1154 = vmax.f32 %v1026, 0.0
        %v1155 = vmax.f32 %v1027, 0.0
        %v1156 = vmax.f32 %v1028, 0.0
        %v1157 = vmax.f32 %v1029, 0.0
        %v1158 = vmax.f32 %v1030, 0.0
        %v1159 = vmax.f32 %v1031, 0.0
        %v1160 = vmax.f32 %v1032, 0.0
        %v1161 = vmax.f32 %v1033, 0.0
        %v1162 = vmax.f32 %v1034, 0.0
        %v1163 = vpack.c.bf16 %v1035, %v1035
        %v1164 = vpack.c.bf16 %v1036, %v1036
        %v1165 = vpack.c.bf16 %v1037, %v1037
        %v1166 = vpack.c.bf16 %v1038, %v1038
        %v1167 = vpack.c.bf16 %v1039, %v1039
        %v1168 = vpack.c.bf16 %v1040, %v1040
        %v1169 = vpack.c.bf16 %v1041, %v1041
        %v1170 = vpack.c.bf16 %v1042, %v1042
        %v1171 = vpack.c.bf16 %v1043, %v1043
        %v1172 = vpack.c.bf16 %v1044, %v1044
        %v1173 = vpack.c.bf16 %v1045, %v1045
        %v1174 = vpack.c.bf16 %v1046, %v1046
        %v1175 = vpack.c.bf16 %v1047, %v1047
        %v1176 = vpack.c.bf16 %v1048, %v1048
        %v1177 = vpack.c.bf16 %v1049, %v1049
        %v1178 = vpack.c.bf16 %v1050, %v1050
        %v1179 = vpack.c.bf16 %v1051, %v1051
        %v1180 = vpack.c.bf16 %v1052, %v1052
        %v1181 = vpack.c.bf16 %v1053, %v1053
        %v1182 = vpack.c.bf16 %v1054, %v1054
        %v1183 = vpack.c.bf16 %v1055, %v1055
        %v1184 = vpack.c.bf16 %v1056, %v1056
        %v1185 = vpack.c.bf16 %v1057, %v1057
        %v1186 = vpack.c.bf16 %v1058, %v1058
        %v1187 = vpack.c.bf16 %v1059, %v1059
        %v1188 = vpack.c.bf16 %v1060, %v1060
        %v1189 = vpack.c.bf16 %v1061, %v1061
        %v1190 = vpack.c.bf16 %v1062, %v1062
        %v1191 = vpack.c.bf16 %v1063, %v1063
        %v1192 = vpack.c.bf16 %v1064, %v1064
        %v1193 = vpack.c.bf16 %v1065, %v1065
        %v1194 = vpack.c.bf16 %v1066, %v1066
        %v1195 = vpack.c.bf16 %v1067, %v1067
        %v1196 = vpack.c.bf16 %v1068, %v1068
        %v1197 = vpack.c.bf16 %v1069, %v1069
        %v1198 = vpack.c.bf16 %v1070, %v1070
        %v1199 = vpack.c.bf16 %v1071, %v1071
        %v1200 = vpack.c.bf16 %v1072, %v1072
        %v1201 = vpack.c.bf16 %v1073, %v1073
        %v1202 = vpack.c.bf16 %v1074, %v1074
        %v1203 = vpack.c.bf16 %v1075, %v1075
        %v1204 = vpack.c.bf16 %v1076, %v1076
        %v1205 = vpack.c.bf16 %v1077, %v1077
        %v1206 = vpack.c.bf16 %v1078, %v1078
        %v1207 = vpack.c.bf16 %v1079, %v1079
        %v1208 = vpack.c.bf16 %v1080, %v1080
        %v1209 = vpack.c.bf16 %v1081, %v1081
        %v1210 = vpack.c.bf16 %v1082, %v1082
        %v1211 = vpack.c.bf16 %v1083, %v1083
        %v1212 = vpack.c.bf16 %v1084, %v1084
        %v1213 = vpack.c.bf16 %v1085, %v1085
        %v1214 = vpack.c.bf16 %v1086, %v1086
        %v1215 = vpack.c.bf16 %v1087, %v1087
        %v1216 = vpack.c.bf16 %v1088, %v1088
        %v1217 = vpack.c.bf16 %v1089, %v1089
        %v1218 = vpack.c.bf16 %v1090, %v1090
        %v1219 = vpack.c.bf16 %v1091, %v1091
        %v1220 = vpack.c.bf16 %v1092, %v1092
        %v1221 = vpack.c.bf16 %v1093, %v1093
        %v1222 = vpack.c.bf16 %v1094, %v1094
        %v1223 = vpack.c.bf16 %v1095, %v1095
        %v1224 = vpack.c.bf16 %v1096, %v1096
        %v1225 = vpack.c.bf16 %v1097, %v1097
        %v1226 = vpack.c.bf16 %v1098, %v1098
        %v1227 = vpack.c.bf16 %v1099, %v1099
        %v1228 = vpack.c.bf16 %v1100, %v1100
        %v1229 = vpack.c.bf16 %v1101, %v1101
        %v1230 = vpack.c.bf16 %v1102, %v1102
        %v1231 = vpack.c.bf16 %v1103, %v1103
        %v1232 = vpack.c.bf16 %v1104, %v1104
        %v1233 = vpack.c.bf16 %v1105, %v1105
        %v1234 = vpack.c.bf16 %v1106, %v1106
        %v1235 = vpack.c.bf16 %v1107, %v1107
        %v1236 = vpack.c.bf16 %v1108, %v1108
        %v1237 = vpack.c.bf16 %v1109, %v1109
        %v1238 = vpack.c.bf16 %v1110, %v1110
        %v1239 = vpack.c.bf16 %v1111, %v1111
        %v1240 = vpack.c.bf16 %v1112, %v1112
        %v1241 = vpack.c.bf16 %v1113, %v1113
        %v1242 = vpack.c.bf16 %v1114, %v1114
        %v1243 = vpack.c.bf16 %v1115, %v1115
        %v1244 = vpack.c.bf16 %v1116, %v1116
        %v1245 = vpack.c.bf16 %v1117, %v1117
        %v1246 = vpack.c.bf16 %v1118, %v1118
        %v1247 = vpack.c.bf16 %v1119, %v1119
        %v1248 = vpack.c.bf16 %v1120, %v1120
        %v1249 = vpack.c.bf16 %v1121, %v1121
        %v1250 = vpack.c.bf16 %v1122, %v1122
        %v1251 = vpack.c.bf16 %v1123, %v1123
        %v1252 = vpack.c.bf16 %v1124, %v1124
        %v1253 = vpack.c.bf16 %v1125, %v1125
        %v1254 = vpack.c.bf16 %v1126, %v1126
        %v1255 = vpack.c.bf16 %v1127, %v1127
        %v1256 = vpack.c.bf16 %v1128, %v1128
        %v1257 = vpack.c.bf16 %v1129, %v1129
        %v1258 = vpack.c.bf16 %v1130, %v1130
        %v1259 = vpack.c.bf16 %v1131, %v1131
        %v1260 = vpack.c.bf16 %v1132, %v1132
        %v1261 = vpack.c.bf16 %v1133, %v1133
        %v1262 = vpack.c.bf16 %v1134, %v1134
        %v1263 = vpack.c.bf16 %v1135, %v1135
        %v1264 = vpack.c.bf16 %v1136, %v1136
        %v1265 = vpack.c.bf16 %v1137, %v1137
        %v1266 = vpack.c.bf16 %v1138, %v1138
        %v1267 = vpack.c.bf16 %v1139, %v1139
        %v1268 = vpack.c.bf16 %v1140, %v1140
        %v1269 = vpack.c.bf16 %v1141, %v1141
        %v1270 = vpack.c.bf16 %v1142, %v1142
        %v1271 = vpack.c.bf16 %v1143, %v1143
        %v1272 = vpack.c.bf16 %v1144, %v1144
        %v1273 = vpack.c.bf16 %v1145, %v1145
        %v1274 = vpack.c.bf16 %v1146, %v1146
        %v1275 = vpack.c.bf16 %v1147, %v1147
        %v1276 = vpack.c.bf16 %v1148, %v1148
        %v1277 = vpack.c.bf16 %v1149, %v1149
        %v1278 = vpack.c.bf16 %v1150, %v1150
        %v1279 = vpack.c.bf16 %v1151, %v1151
        %v1280 = vpack.c.bf16 %v1152, %v1152
        %v1281 = vpack.c.bf16 %v1153, %v1153
        %v1282 = vpack.c.bf16 %v1154, %v1154
        %v1283 = vpack.c.bf16 %v1155, %v1155
        %v1284 = vpack.c.bf16 %v1156, %v1156
        %v1285 = vpack.c.bf16 %v1157, %v1157
        %v1286 = vpack.c.bf16 %v1158, %v1158
        %v1287 = vpack.c.bf16 %v1159, %v1159
        %v1288 = vpack.c.bf16 %v1160, %v1160
        %v1289 = vpack.c.bf16 %v1161, %v1161
        %v1290 = vpack.c.bf16 %v1162, %v1162
        %1291 = vst [vmem:[%s4] sm:$0xf] %v1163
        %1292 = vst [vmem:[%s4 + $0x4] sm:$0xf] %v1164
        %1293 = vst [vmem:[%s4 + $0x8] sm:$0xf] %v1165
        %1294 = vst [vmem:[%s4 + $0xc] sm:$0xf] %v1166
        %1295 = vst [vmem:[%s4 + $0x10] sm:$0xf] %v1167
        %1296 = vst [vmem:[%s4 + $0x14] sm:$0xf] %v1168
        %1297 = vst [vmem:[%s4 + $0x18] sm:$0xf] %v1169
        %1298 = vst [vmem:[%s4 + $0x1c] sm:$0xf] %v1170
        %1299 = vst [vmem:[%s4 + $0x20] sm:$0xf] %v1171
        %1300 = vst [vmem:[%s4 + $0x24] sm:$0xf] %v1172
        %1301 = vst [vmem:[%s4 + $0x28] sm:$0xf] %v1173
        %1302 = vst [vmem:[%s4 + $0x2c] sm:$0xf] %v1174
        %1303 = vst [vmem:[%s4 + $0x30] sm:$0xf] %v1175
        %1304 = vst [vmem:[%s4 + $0x34] sm:$0xf] %v1176
        %1305 = vst [vmem:[%s4 + $0x38] sm:$0xf] %v1177
        %1306 = vst [vmem:[%s4 + $0x3c] sm:$0xf] %v1178
        %1307 = vst [vmem:[%s4 + $0x40] sm:$0xf] %v1179
        %1308 = vst [vmem:[%s4 + $0x44] sm:$0xf] %v1180
        %1309 = vst [vmem:[%s4 + $0x48] sm:$0xf] %v1181
        %1310 = vst [vmem:[%s4 + $0x4c] sm:$0xf] %v1182
        %1311 = vst [vmem:[%s4 + $0x50] sm:$0xf] %v1183
        %1312 = vst [vmem:[%s4 + $0x54] sm:$0xf] %v1184
        %1313 = vst [vmem:[%s4 + $0x58] sm:$0xf] %v1185
        %1314 = vst [vmem:[%s4 + $0x5c] sm:$0xf] %v1186
        %1315 = vst [vmem:[%s4 + $0x60] sm:$0xf] %v1187
        %1316 = vst [vmem:[%s4 + $0x64] sm:$0xf] %v1188
        %1317 = vst [vmem:[%s4 + $0x68] sm:$0xf] %v1189
        %1318 = vst [vmem:[%s4 + $0x6c] sm:$0xf] %v1190
        %1319 = vst [vmem:[%s4 + $0x70] sm:$0xf] %v1191
        %1320 = vst [vmem:[%s4 + $0x74] sm:$0xf] %v1192
        %1321 = vst [vmem:[%s4 + $0x78] sm:$0xf] %v1193
        %1322 = vst [vmem:[%s4 + $0x7c] sm:$0xf] %v1194
        %1323 = vst [vmem:[%s4 + $0x80] sm:$0xf] %v1195
        %1324 = vst [vmem:[%s4 + $0x84] sm:$0xf] %v1196
        %1325 = vst [vmem:[%s4 + $0x88] sm:$0xf] %v1197
        %1326 = vst [vmem:[%s4 + $0x8c] sm:$0xf] %v1198
        %1327 = vst [vmem:[%s4 + $0x90] sm:$0xf] %v1199
        %1328 = vst [vmem:[%s4 + $0x94] sm:$0xf] %v1200
        %1329 = vst [vmem:[%s4 + $0x98] sm:$0xf] %v1201
        %1330 = vst [vmem:[%s4 + $0x9c] sm:$0xf] %v1202
        %1331 = vst [vmem:[%s4 + $0xa0] sm:$0xf] %v1203
        %1332 = vst [vmem:[%s4 + $0xa4] sm:$0xf] %v1204
        %1333 = vst [vmem:[%s4 + $0xa8] sm:$0xf] %v1205
        %1334 = vst [vmem:[%s4 + $0xac] sm:$0xf] %v1206
        %1335 = vst [vmem:[%s4 + $0xb0] sm:$0xf] %v1207
        %1336 = vst [vmem:[%s4 + $0xb4] sm:$0xf] %v1208
        %1337 = vst [vmem:[%s4 + $0xb8] sm:$0xf] %v1209
        %1338 = vst [vmem:[%s4 + $0xbc] sm:$0xf] %v1210
        %1339 = vst [vmem:[%s4 + $0xc0] sm:$0xf] %v1211
        %1340 = vst [vmem:[%s4 + $0xc4] sm:$0xf] %v1212
        %1341 = vst [vmem:[%s4 + $0xc8] sm:$0xf] %v1213
        %1342 = vst [vmem:[%s4 + $0xcc] sm:$0xf] %v1214
        %1343 = vst [vmem:[%s4 + $0xd0] sm:$0xf] %v1215
        %1344 = vst [vmem:[%s4 + $0xd4] sm:$0xf] %v1216
        %1345 = vst [vmem:[%s4 + $0xd8] sm:$0xf] %v1217
        %1346 = vst [vmem:[%s4 + $0xdc] sm:$0xf] %v1218
        %1347 = vst [vmem:[%s4 + $0xe0] sm:$0xf] %v1219
        %1348 = vst [vmem:[%s4 + $0xe4] sm:$0xf] %v1220
        %1349 = vst [vmem:[%s4 + $0xe8] sm:$0xf] %v1221
        %1350 = vst [vmem:[%s4 + $0xec] sm:$0xf] %v1222
        %1351 = vst [vmem:[%s4 + $0xf0] sm:$0xf] %v1223
        %1352 = vst [vmem:[%s4 + $0xf4] sm:$0xf] %v1224
        %1353 = vst [vmem:[%s4 + $0xf8] sm:$0xf] %v1225
        %1354 = vst [vmem:[%s4 + $0xfc] sm:$0xf] %v1226
        %1355 = vst [vmem:[%s4 + $0x100] sm:$0xf] %v1227
        %1356 = vst [vmem:[%s4 + $0x104] sm:$0xf] %v1228
        %1357 = vst [vmem:[%s4 + $0x108] sm:$0xf] %v1229
        %1358 = vst [vmem:[%s4 + $0x10c] sm:$0xf] %v1230
        %1359 = vst [vmem:[%s4 + $0x110] sm:$0xf] %v1231
        %1360 = vst [vmem:[%s4 + $0x114] sm:$0xf] %v1232
        %1361 = vst [vmem:[%s4 + $0x118] sm:$0xf] %v1233
        %1362 = vst [vmem:[%s4 + $0x11c] sm:$0xf] %v1234
        %1363 = vst [vmem:[%s4 + $0x120] sm:$0xf] %v1235
        %1364 = vst [vmem:[%s4 + $0x124] sm:$0xf] %v1236
        %1365 = vst [vmem:[%s4 + $0x128] sm:$0xf] %v1237
        %1366 = vst [vmem:[%s4 + $0x12c] sm:$0xf] %v1238
        %1367 = vst [vmem:[%s4 + $0x130] sm:$0xf] %v1239
        %1368 = vst [vmem:[%s4 + $0x134] sm:$0xf] %v1240
        %1369 = vst [vmem:[%s4 + $0x138] sm:$0xf] %v1241
        %1370 = vst [vmem:[%s4 + $0x13c] sm:$0xf] %v1242
        %1371 = vst [vmem:[%s4 + $0x140] sm:$0xf] %v1243
        %1372 = vst [vmem:[%s4 + $0x144] sm:$0xf] %v1244
        %1373 = vst [vmem:[%s4 + $0x148] sm:$0xf] %v1245
        %1374 = vst [vmem:[%s4 + $0x14c] sm:$0xf] %v1246
        %1375 = vst [vmem:[%s4 + $0x150] sm:$0xf] %v1247
        %1376 = vst [vmem:[%s4 + $0x154] sm:$0xf] %v1248
        %1377 = vst [vmem:[%s4 + $0x158] sm:$0xf] %v1249
        %1378 = vst [vmem:[%s4 + $0x15c] sm:$0xf] %v1250
        %1379 = vst [vmem:[%s4 + $0x160] sm:$0xf] %v1251
        %1380 = vst [vmem:[%s4 + $0x164] sm:$0xf] %v1252
        %1381 = vst [vmem:[%s4 + $0x168] sm:$0xf] %v1253
        %1382 = vst [vmem:[%s4 + $0x16c] sm:$0xf] %v1254
        %1383 = vst [vmem:[%s4 + $0x170] sm:$0xf] %v1255
        %1384 = vst [vmem:[%s4 + $0x174] sm:$0xf] %v1256
        %1385 = vst [vmem:[%s4 + $0x178] sm:$0xf] %v1257
        %1386 = vst [vmem:[%s4 + $0x17c] sm:$0xf] %v1258
        %1387 = vst [vmem:[%s4 + $0x180] sm:$0xf] %v1259
        %1388 = vst [vmem:[%s4 + $0x184] sm:$0xf] %v1260
        %1389 = vst [vmem:[%s4 + $0x188] sm:$0xf] %v1261
        %1390 = vst [vmem:[%s4 + $0x18c] sm:$0xf] %v1262
        %1391 = vst [vmem:[%s4 + $0x190] sm:$0xf] %v1263
        %1392 = vst [vmem:[%s4 + $0x194] sm:$0xf] %v1264
        %1393 = vst [vmem:[%s4 + $0x198] sm:$0xf] %v1265
        %1394 = vst [vmem:[%s4 + $0x19c] sm:$0xf] %v1266
        %1395 = vst [vmem:[%s4 + $0x1a0] sm:$0xf] %v1267
        %1396 = vst [vmem:[%s4 + $0x1a4] sm:$0xf] %v1268
        %1397 = vst [vmem:[%s4 + $0x1a8] sm:$0xf] %v1269
        %1398 = vst [vmem:[%s4 + $0x1ac] sm:$0xf] %v1270
        %1399 = vst [vmem:[%s4 + $0x1b0] sm:$0xf] %v1271
        %1400 = vst [vmem:[%s4 + $0x1b4] sm:$0xf] %v1272
        %1401 = vst [vmem:[%s4 + $0x1b8] sm:$0xf] %v1273
        %1402 = vst [vmem:[%s4 + $0x1bc] sm:$0xf] %v1274
        %1403 = vst [vmem:[%s4 + $0x1c0] sm:$0xf] %v1275
        %1404 = vst [vmem:[%s4 + $0x1c4] sm:$0xf] %v1276
        %1405 = vst [vmem:[%s4 + $0x1c8] sm:$0xf] %v1277
        %1406 = vst [vmem:[%s4 + $0x1cc] sm:$0xf] %v1278
        %1407 = vst [vmem:[%s4 + $0x1d0] sm:$0xf] %v1279
        %1408 = vst [vmem:[%s4 + $0x1d4] sm:$0xf] %v1280
        %1409 = vst [vmem:[%s4 + $0x1d8] sm:$0xf] %v1281
        %1410 = vst [vmem:[%s4 + $0x1dc] sm:$0xf] %v1282
        %1411 = vst [vmem:[%s4 + $0x1e0] sm:$0xf] %v1283
        %1412 = vst [vmem:[%s4 + $0x1e4] sm:$0xf] %v1284
        %1413 = vst [vmem:[%s4 + $0x1e8] sm:$0xf] %v1285
        %1414 = vst [vmem:[%s4 + $0x1ec] sm:$0xf] %v1286
        %1415 = vst [vmem:[%s4 + $0x1f0] sm:$0xf] %v1287
        %1416 = vst [vmem:[%s4 + $0x1f4] sm:$0xf] %v1288
        %1417 = vst [vmem:[%s4 + $0x1f8] sm:$0xf] %v1289
        %1418 = vst [vmem:[%s4 + $0x1fc] sm:$0xf] %v1290
      $region44: #{resnet_forward.10} parent=35 // pred_fallthru
        _
      // Predicated region
      $region45: #{resnet_forward.10} parent=35 // pred_check
        %p1419 = pneg %p117
      $region46: #{resnet_forward.10} parent=35 // pred_check_branch
        %1421 = sbr.rel (%p1419) target = $region48
      $region47: #{resnet_forward.10} parent=35 // pred_region
        _
      $region48: #{resnet_forward.10} parent=35 // pred_fallthru
        _
      // Predicated region
      $region49: #{resnet_forward.10} parent=35 // pred_check
        %p1422 = pneg %p117
      $region50: #{resnet_forward.10} parent=35 // pred_check_branch
        %1424 = sbr.rel (%p1422) target = $region52
      $region51: #{resnet_forward.10} parent=35 // pred_region
        _
      $region52: #{resnet_forward.10} parent=35 // pred_fallthru
        _
    $region36: #{resnet_forward.10} parent=5 // pred_fallthru
      _
    %p1425 = scmp.le.s32.totalorder 2, %s10
    // Predicated region
    $region53: #{resnet_forward.10} parent=5 // pred_check
      %p1426 = pneg %p1425
    $region54: #{resnet_forward.10} parent=5 // pred_check_branch
      %1428 = sbr.rel (%p1426) target = $region56
    $region55: #{resnet_forward.10} parent=5 // pred_region
      %s1429 = ssub.s32 %s10, 2
    $region56: #{resnet_forward.10} parent=5 // pred_fallthru
      _
  $region6: #{resnet_forward.10} parent=0 // loop_footer
    %s14 = sadd.s32 1, %s10
  $region7: #{resnet_forward.10} parent=0 // loop_footer_branch
    %9 = sbr.rel target = $region3
  $region8: #{resnet_forward.10} parent=0 // loop_exit
    _

// kernel: resnet_forward.11
$region0: #{resnet_forward.11}
  #allocation0 [shape = 'u32[]', space=smem, size = 0x4, offset = 0x4, fixed_abs, tag = 'smem constant byte address 0x4 - core index']
  #allocation1 [shape = 'u32[72,128]{1,0:T(1,128)}', space=vmem, size = 0x9000, scoped, tag = 'internal scratch']
  #allocation2 [shape = 'f32[4,256,128]{2,1,0:T(8,128)}', space=vmem, size = 0x80000, scoped, tag = 'scratch operand']
  #allocation3 [shape = 'f32[1,128]{1,0:T(1,128)}', space=vmem, size = 0x200, scoped, tag = 'scratch operand']
  #allocation4 [shape = 'f32[1,128]{1,0:T(1,128)}', space=vmem, size = 0x200, scoped, tag = 'scratch operand']
  %s0 = inlined_call_operand.vmem [shape: bf16[1024,256], index: 0, kind: input, shape index: {}]
  %s1 = inlined_call_operand.vmem [shape: bf16[256,128], index: 1, kind: input, shape index: {}]
  %s2 = inlined_call_operand.vmem [shape: f32[1,128], index: 2, kind: input, shape index: {}]
  %s3 = inlined_call_operand.vmem [shape: f32[1,128], index: 3, kind: input, shape index: {}]
  %s4 = inlined_call_operand.vmem [shape: bf16[4,256,128], index: 4, kind: output, shape index: {}]
  %s5 = sld [smem:[#allocation0]]
  $region57: #{resnet_forward.11} parent=0
    _
  %s7 = ssub.s32 1, %s5
  %s8 = scalar_select 0, %s7, %s5
  loop: start=0, step=1, limit=6
  $region2: #{resnet_forward.11} parent=0 // loop_pre_header
    _
  $region3: #{resnet_forward.11} parent=0 // loop_header
    %s10 = sphi 0, %s14
    %p11 = scmp.ge.s32.totalorder %s10, 6
    %s20 = sphi 0, %s22
    %s23 = sphi 0, %s20
    %s24 = sphi 0, %s23
    %s40 = sphi 0, %s24
    %s44 = sphi 0, %s44
    %s46 = sphi 0, %s44
    %s47 = sphi 0, %s46
    %s61 = sphi 0, %s47
    %s65 = sphi 0, %s65
    %s67 = sphi 0, %s65
    %s68 = sphi 0, %s67
    %s82 = sphi 0, %s68
    %s86 = sphi 0, %s86
    %s88 = sphi 0, %s86
    %s89 = sphi 0, %s88
    %s103 = sphi 0, %s89
    %s107 = sphi 0, %s107
    %s109 = sphi 0, %s107
    %s110 = sphi 0, %s109
    %s124 = sphi 0, %s110
  $region4: #{resnet_forward.11} parent=0 // loop_header_branch
    %13 = sbr.rel (%p11) target = $region8
  $region5: #{resnet_forward.11} parent=0 // loop_body
    %s15 = ssub.s32 %s10, 1
    %s16 = ssub.s32 %s10, 2
    %s17 = sadd.s32 %s10, 1
    %s18 = ssub.s32 %s10, %s17
    %p19 = scmp.eq.s32.totalorder %s18, 0
    %s21 = sadd.s32 %s20, 1
    %s22 = scalar_select %p19, %s20, %s21
    %p25 = pneg %p19
    %p26 = scmp.eq.s32.totalorder %s10, 3
    %p27 = por %p25, %p26
    %p28 = scmp.ne.s32.totalorder %s20, %s23
    %p29 = scmp.eq.s32.totalorder %s10, 0
    %p30 = por %p28, %p29
    %p31 = scmp.ne.s32.totalorder %s20, %s23
    %p32 = scmp.eq.s32.totalorder %s15, 3
    %p33 = por %p31, %p32
    %p34 = scmp.ne.s32.totalorder %s23, %s24
    %p35 = scmp.eq.s32.totalorder %s15, 0
    %p36 = por %p34, %p35
    %p37 = scmp.ne.s32.totalorder %s23, %s24
    %p38 = scmp.eq.s32.totalorder %s16, 3
    %p39 = por %p37, %p38
    %p41 = scmp.ne.s32.totalorder %s24, %s40
    %p42 = scmp.eq.s32.totalorder %s16, 0
    %p43 = por %p41, %p42
    %s45 = sadd.s32 %s44, 1
    %p48 = scmp.eq.s32.totalorder %s10, 3
    %p49 = scmp.ne.s32.totalorder %s44, %s46
    %p50 = scmp.eq.s32.totalorder %s10, 0
    %p51 = por %p49, %p50
    %p52 = scmp.ne.s32.totalorder %s44, %s46
    %p53 = scmp.eq.s32.totalorder %s15, 3
    %p54 = por %p52, %p53
    %p55 = scmp.ne.s32.totalorder %s46, %s47
    %p56 = scmp.eq.s32.totalorder %s15, 0
    %p57 = por %p55, %p56
    %p58 = scmp.ne.s32.totalorder %s46, %s47
    %p59 = scmp.eq.s32.totalorder %s16, 3
    %p60 = por %p58, %p59
    %p62 = scmp.ne.s32.totalorder %s47, %s61
    %p63 = scmp.eq.s32.totalorder %s16, 0
    %p64 = por %p62, %p63
    %s66 = sadd.s32 %s65, 1
    %p69 = scmp.eq.s32.totalorder %s10, 3
    %p70 = scmp.ne.s32.totalorder %s65, %s67
    %p71 = scmp.eq.s32.totalorder %s10, 0
    %p72 = por %p70, %p71
    %p73 = scmp.ne.s32.totalorder %s65, %s67
    %p74 = scmp.eq.s32.totalorder %s15, 3
    %p75 = por %p73, %p74
    %p76 = scmp.ne.s32.totalorder %s67, %s68
    %p77 = scmp.eq.s32.totalorder %s15, 0
    %p78 = por %p76, %p77
    %p79 = scmp.ne.s32.totalorder %s67, %s68
    %p80 = scmp.eq.s32.totalorder %s16, 3
    %p81 = por %p79, %p80
    %p83 = scmp.ne.s32.totalorder %s68, %s82
    %p84 = scmp.eq.s32.totalorder %s16, 0
    %p85 = por %p83, %p84
    %s87 = sadd.s32 %s86, 1
    %p90 = scmp.eq.s32.totalorder %s10, 3
    %p91 = scmp.ne.s32.totalorder %s86, %s88
    %p92 = scmp.eq.s32.totalorder %s10, 0
    %p93 = por %p91, %p92
    %p94 = scmp.ne.s32.totalorder %s86, %s88
    %p95 = scmp.eq.s32.totalorder %s15, 3
    %p96 = por %p94, %p95
    %p97 = scmp.ne.s32.totalorder %s88, %s89
    %p98 = scmp.eq.s32.totalorder %s15, 0
    %p99 = por %p97, %p98
    %p100 = scmp.ne.s32.totalorder %s88, %s89
    %p101 = scmp.eq.s32.totalorder %s16, 3
    %p102 = por %p100, %p101
    %p104 = scmp.ne.s32.totalorder %s89, %s103
    %p105 = scmp.eq.s32.totalorder %s16, 0
    %p106 = por %p104, %p105
    %s108 = sadd.s32 %s107, 1
    %p111 = scmp.eq.s32.totalorder %s10, 3
    %p112 = scmp.ne.s32.totalorder %s107, %s109
    %p113 = scmp.eq.s32.totalorder %s10, 0
    %p114 = por %p112, %p113
    %p115 = scmp.ne.s32.totalorder %s107, %s109
    %p116 = scmp.eq.s32.totalorder %s15, 3
    %p117 = por %p115, %p116
    %p118 = scmp.ne.s32.totalorder %s109, %s110
    %p119 = scmp.eq.s32.totalorder %s15, 0
    %p120 = por %p118, %p119
    %p121 = scmp.ne.s32.totalorder %s109, %s110
    %p122 = scmp.eq.s32.totalorder %s16, 3
    %p123 = por %p121, %p122
    %p125 = scmp.ne.s32.totalorder %s110, %s124
    %p126 = scmp.eq.s32.totalorder %s16, 0
    %p127 = por %p125, %p126
    %p128 = scmp.le.s32.totalorder 1, %s10
    %p129 = scmp.lt.s32.totalorder %s10, 5
    %p130 = pnand %p128, %p129
    %p131 = pneg %p130
    // Predicated region
    $region9: #{resnet_forward.11} parent=5 // pred_check
      _
    $region10: #{resnet_forward.11} parent=5 // pred_check_branch
      %133 = sbr.rel (%p130) target = $region12
    $region11: #{resnet_forward.11} parent=5 // pred_region
      %s134 = ssub.s32 %s10, 1
      // Predicated region
      $region13: #{resnet_forward.11} parent=11 // pred_check
        %p135 = pneg %p57
      $region14: #{resnet_forward.11} parent=11 // pred_check_branch
        %137 = sbr.rel (%p135) target = $region16
      $region15: #{resnet_forward.11} parent=11 // pred_region
        _
      $region16: #{resnet_forward.11} parent=11 // pred_fallthru
        _
      // Predicated region
      $region17: #{resnet_forward.11} parent=11 // pred_check
        %p138 = pneg %p78
      $region18: #{resnet_forward.11} parent=11 // pred_check_branch
        %140 = sbr.rel (%p138) target = $region20
      $region19: #{resnet_forward.11} parent=11 // pred_region
        _
      $region20: #{resnet_forward.11} parent=11 // pred_fallthru
        _
      // Predicated region
      $region21: #{resnet_forward.11} parent=11 // pred_check
        %p141 = pneg %p99
      $region22: #{resnet_forward.11} parent=11 // pred_check_branch
        %143 = sbr.rel (%p141) target = $region24
      $region23: #{resnet_forward.11} parent=11 // pred_region
        _
      $region24: #{resnet_forward.11} parent=11 // pred_fallthru
        _
    $region12: #{resnet_forward.11} parent=5 // pred_fallthru
      _
    %p144 = scmp.lt.s32.totalorder %s10, 4
    // Predicated region
    $region25: #{resnet_forward.11} parent=5 // pred_check
      %p145 = pneg %p144
    $region26: #{resnet_forward.11} parent=5 // pred_check_branch
      %147 = sbr.rel (%p145) target = $region28
    $region27: #{resnet_forward.11} parent=5 // pred_region
      // Predicated region
      $region29: #{resnet_forward.11} parent=27 // pred_check
        %p148 = pneg %p30
      $region30: #{resnet_forward.11} parent=27 // pred_check_branch
        %150 = sbr.rel (%p148) target = $region32
      $region31: #{resnet_forward.11} parent=27 // pred_region
        %s151 = smul.u32 32, %s10
        %p152 = scmp.lt.s32.totalorder %s151, 127
        %s153 = scalar_select %p152, %s151, 127
        %s154 = smul.addr %s153, 2
        %s155 = smul.addr %s154, 4
        %s156 = scalar_lea.vmem %s0, %s155
        %s157 = smul.u32 32, %s10
      $region32: #{resnet_forward.11} parent=27 // pred_fallthru
        _
    $region28: #{resnet_forward.11} parent=5 // pred_fallthru
      _
    %p158 = scmp.le.s32.totalorder 1, %s10
    %p159 = scmp.lt.s32.totalorder %s10, 5
    %p160 = pnand %p158, %p159
    %p161 = pneg %p160
    // Predicated region
    $region33: #{resnet_forward.11} parent=5 // pred_check
      _
    $region34: #{resnet_forward.11} parent=5 // pred_check_branch
      %163 = sbr.rel (%p160) target = $region36
    $region35: #{resnet_forward.11} parent=5 // pred_region
      %s164 = ssub.s32 %s10, 1
      %s165 = smul.u32 32, %s15
      %p166 = scmp.lt.s32.totalorder %s165, 127
      %s167 = scalar_select %p166, %s165, 127
      %s168 = smul.addr %s167, 2
      %s169 = smul.addr %s168, 4
      %s170 = scalar_lea.vmem %s0, %s169
      %p171 = pneg %p36
      %p172 = pneg %p33
      %p173 = pneg %p57
      %p174 = pneg %p54
      %p175 = pneg %p78
      %p176 = pneg %p75
      %p177 = pneg %p99
      %p178 = pneg %p96
      %p179 = pneg %p120
      %p180 = pneg %p117
      %s181 = smul.u32 32, %s15
      %p182 = scmp.lt.s32.totalorder %s181, 127
      %s183 = scalar_select %p182, %s181, 127
      %s184 = smul.addr %s183, 2
      %s185 = smul.addr %s184, 4
      %s186 = scalar_lea.vmem %s0, %s185
      %s187 = smul.u32 32, %s15
      %p188 = scmp.eq.s32.totalorder %s15, 0
      // Predicated region
      $region37: #{resnet_forward.11} parent=35 // pred_check
        %p189 = pneg %p188
      $region38: #{resnet_forward.11} parent=35 // pred_check_branch
        %191 = sbr.rel (%p189) target = $region40
      $region39: #{resnet_forward.11} parent=35 // pred_region
        %192 = vst [vmem:[#allocation3] sm:$0x1] 0.0
        %193 = vst [vmem:[#allocation4] sm:$0x1] 0.0
      $region40: #{resnet_forward.11} parent=35 // pred_fallthru
        _
      %v194 = vld [vmem:[%s186] sm:$0xff]
      %v195 = vld [vmem:[%s186 + $0x8] sm:$0xff]
      %v196 = vld [vmem:[%s186 + $0x10] sm:$0xff]
      %v197 = vld [vmem:[%s186 + $0x18] sm:$0xff]
      %v198 = vld [vmem:[%s186 + $0x20] sm:$0xff]
      %v199 = vld [vmem:[%s186 + $0x28] sm:$0xff]
      %v200 = vld [vmem:[%s186 + $0x30] sm:$0xff]
      %v201 = vld [vmem:[%s186 + $0x38] sm:$0xff]
      %v202 = vld [vmem:[%s186 + $0x40] sm:$0xff]
      %v203 = vld [vmem:[%s186 + $0x48] sm:$0xff]
      %v204 = vld [vmem:[%s186 + $0x50] sm:$0xff]
      %v205 = vld [vmem:[%s186 + $0x58] sm:$0xff]
      %v206 = vld [vmem:[%s186 + $0x60] sm:$0xff]
      %v207 = vld [vmem:[%s186 + $0x68] sm:$0xff]
      %v208 = vld [vmem:[%s186 + $0x70] sm:$0xff]
      %v209 = vld [vmem:[%s186 + $0x78] sm:$0xff]
      %v210 = vld [vmem:[%s186 + $0x80] sm:$0xff]
      %v211 = vld [vmem:[%s186 + $0x88] sm:$0xff]
      %v212 = vld [vmem:[%s186 + $0x90] sm:$0xff]
      %v213 = vld [vmem:[%s186 + $0x98] sm:$0xff]
      %v214 = vld [vmem:[%s186 + $0xa0] sm:$0xff]
      %v215 = vld [vmem:[%s186 + $0xa8] sm:$0xff]
      %v216 = vld [vmem:[%s186 + $0xb0] sm:$0xff]
      %v217 = vld [vmem:[%s186 + $0xb8] sm:$0xff]
      %v218 = vld [vmem:[%s186 + $0xc0] sm:$0xff]
      %v219 = vld [vmem:[%s186 + $0xc8] sm:$0xff]
      %v220 = vld [vmem:[%s186 + $0xd0] sm:$0xff]
      %v221 = vld [vmem:[%s186 + $0xd8] sm:$0xff]
      %v222 = vld [vmem:[%s186 + $0xe0] sm:$0xff]
      %v223 = vld [vmem:[%s186 + $0xe8] sm:$0xff]
      %v224 = vld [vmem:[%s186 + $0xf0] sm:$0xff]
      %v225 = vld [vmem:[%s186 + $0xf8] sm:$0xff]
      %v226 = vld [vmem:[%s1] sm:$0xf]
      %v227 = vld [vmem:[%s1 + $0x4] sm:$0xf]
      %v228 = vld [vmem:[%s1 + $0x8] sm:$0xf]
      %v229 = vld [vmem:[%s1 + $0xc] sm:$0xf]
      %v230 = vld [vmem:[%s1 + $0x10] sm:$0xf]
      %v231 = vld [vmem:[%s1 + $0x14] sm:$0xf]
      %v232 = vld [vmem:[%s1 + $0x18] sm:$0xf]
      %v233 = vld [vmem:[%s1 + $0x1c] sm:$0xf]
      %v234 = vld [vmem:[%s1 + $0x20] sm:$0xf]
      %v235 = vld [vmem:[%s1 + $0x24] sm:$0xf]
      %v236 = vld [vmem:[%s1 + $0x28] sm:$0xf]
      %v237 = vld [vmem:[%s1 + $0x2c] sm:$0xf]
      %v238 = vld [vmem:[%s1 + $0x30] sm:$0xf]
      %v239 = vld [vmem:[%s1 + $0x34] sm:$0xf]
      %v240 = vld [vmem:[%s1 + $0x38] sm:$0xf]
      %v241 = vld [vmem:[%s1 + $0x3c] sm:$0xf]
      %v242 = vld [vmem:[%s1 + $0x40] sm:$0xf]
      %v243 = vld [vmem:[%s1 + $0x44] sm:$0xf]
      %v244 = vld [vmem:[%s1 + $0x48] sm:$0xf]
      %v245 = vld [vmem:[%s1 + $0x4c] sm:$0xf]
      %v246 = vld [vmem:[%s1 + $0x50] sm:$0xf]
      %v247 = vld [vmem:[%s1 + $0x54] sm:$0xf]
      %v248 = vld [vmem:[%s1 + $0x58] sm:$0xf]
      %v249 = vld [vmem:[%s1 + $0x5c] sm:$0xf]
      %v250 = vld [vmem:[%s1 + $0x60] sm:$0xf]
      %v251 = vld [vmem:[%s1 + $0x64] sm:$0xf]
      %v252 = vld [vmem:[%s1 + $0x68] sm:$0xf]
      %v253 = vld [vmem:[%s1 + $0x6c] sm:$0xf]
      %v254 = vld [vmem:[%s1 + $0x70] sm:$0xf]
      %v255 = vld [vmem:[%s1 + $0x74] sm:$0xf]
      %v256 = vld [vmem:[%s1 + $0x78] sm:$0xf]
      %v257 = vld [vmem:[%s1 + $0x7c] sm:$0xf]
      %v290 = vunpack.c.l.b16 %v194
      %v291 = vunpack.c.h.b16 %v194
      %v292 = vunpack.c.l.b16 %v195
      %v293 = vunpack.c.h.b16 %v195
      %v294 = vunpack.c.l.b16 %v196
      %v295 = vunpack.c.h.b16 %v196
      %v296 = vunpack.c.l.b16 %v197
      %v297 = vunpack.c.h.b16 %v197
      %v298 = vunpack.c.l.b16 %v198
      %v299 = vunpack.c.h.b16 %v198
      %v300 = vunpack.c.l.b16 %v199
      %v301 = vunpack.c.h.b16 %v199
      %v302 = vunpack.c.l.b16 %v200
      %v303 = vunpack.c.h.b16 %v200
      %v304 = vunpack.c.l.b16 %v201
      %v305 = vunpack.c.h.b16 %v201
      %v306 = vunpack.c.l.b16 %v202
      %v307 = vunpack.c.h.b16 %v202
      %v308 = vunpack.c.l.b16 %v203
      %v309 = vunpack.c.h.b16 %v203
      %v310 = vunpack.c.l.b16 %v204
      %v311 = vunpack.c.h.b16 %v204
      %v312 = vunpack.c.l.b16 %v205
      %v313 = vunpack.c.h.b16 %v205
      %v314 = vunpack.c.l.b16 %v206
      %v315 = vunpack.c.h.b16 %v206
      %v316 = vunpack.c.l.b16 %v207
      %v317 = vunpack.c.h.b16 %v207
      %v318 = vunpack.c.l.b16 %v208
      %v319 = vunpack.c.h.b16 %v208
      %v320 = vunpack.c.l.b16 %v209
      %v321 = vunpack.c.h.b16 %v209
      %v322 = vunpack.c.l.b16 %v210
      %v323 = vunpack.c.h.b16 %v210
      %v324 = vunpack.c.l.b16 %v211
      %v325 = vunpack.c.h.b16 %v211
      %v326 = vunpack.c.l.b16 %v212
      %v327 = vunpack.c.h.b16 %v212
      %v328 = vunpack.c.l.b16 %v213
      %v329 = vunpack.c.h.b16 %v213
      %v330 = vunpack.c.l.b16 %v214
      %v331 = vunpack.c.h.b16 %v214
      %v332 = vunpack.c.l.b16 %v215
      %v333 = vunpack.c.h.b16 %v215
      %v334 = vunpack.c.l.b16 %v216
      %v335 = vunpack.c.h.b16 %v216
      %v336 = vunpack.c.l.b16 %v217
      %v337 = vunpack.c.h.b16 %v217
      %v338 = vunpack.c.l.b16 %v218
      %v339 = vunpack.c.h.b16 %v218
      %v340 = vunpack.c.l.b16 %v219
      %v341 = vunpack.c.h.b16 %v219
      %v342 = vunpack.c.l.b16 %v220
      %v343 = vunpack.c.h.b16 %v220
      %v344 = vunpack.c.l.b16 %v221
      %v345 = vunpack.c.h.b16 %v221
      %v346 = vunpack.c.l.b16 %v222
      %v347 = vunpack.c.h.b16 %v222
      %v348 = vunpack.c.l.b16 %v223
      %v349 = vunpack.c.h.b16 %v223
      %v350 = vunpack.c.l.b16 %v224
      %v351 = vunpack.c.h.b16 %v224
      %v352 = vunpack.c.l.b16 %v225
      %v353 = vunpack.c.h.b16 %v225
      %v354 = vpack.c.b16 %v292, %v290
      %v355 = vpack.c.b16 %v293, %v291
      %v356 = vpack.c.b16 %v296, %v294
      %v357 = vpack.c.b16 %v297, %v295
      %v358 = vpack.c.b16 %v300, %v298
      %v359 = vpack.c.b16 %v301, %v299
      %v360 = vpack.c.b16 %v304, %v302
      %v361 = vpack.c.b16 %v305, %v303
      %v362 = vpack.c.b16 %v308, %v306
      %v363 = vpack.c.b16 %v309, %v307
      %v364 = vpack.c.b16 %v312, %v310
      %v365 = vpack.c.b16 %v313, %v311
      %v366 = vpack.c.b16 %v316, %v314
      %v367 = vpack.c.b16 %v317, %v315
      %v368 = vpack.c.b16 %v320, %v318
      %v369 = vpack.c.b16 %v321, %v319
      %v370 = vpack.c.b16 %v324, %v322
      %v371 = vpack.c.b16 %v325, %v323
      %v372 = vpack.c.b16 %v328, %v326
      %v373 = vpack.c.b16 %v329, %v327
      %v374 = vpack.c.b16 %v332, %v330
      %v375 = vpack.c.b16 %v333, %v331
      %v376 = vpack.c.b16 %v336, %v334
      %v377 = vpack.c.b16 %v337, %v335
      %v378 = vpack.c.b16 %v340, %v338
      %v379 = vpack.c.b16 %v341, %v339
      %v380 = vpack.c.b16 %v344, %v342
      %v381 = vpack.c.b16 %v345, %v343
      %v382 = vpack.c.b16 %v348, %v346
      %v383 = vpack.c.b16 %v349, %v347
      %v384 = vpack.c.b16 %v352, %v350
      %v385 = vpack.c.b16 %v353, %v351
      %v450 = vunpack.c.l.b16 %v226
      %v451 = vunpack.c.l.b16 %v227
      %v452 = vunpack.c.l.b16 %v228
      %v453 = vunpack.c.l.b16 %v229
      %v454 = vunpack.c.l.b16 %v230
      %v455 = vunpack.c.l.b16 %v231
      %v456 = vunpack.c.l.b16 %v232
      %v457 = vunpack.c.l.b16 %v233
      %v458 = vunpack.c.l.b16 %v234
      %v459 = vunpack.c.l.b16 %v235
      %v460 = vunpack.c.l.b16 %v236
      %v461 = vunpack.c.l.b16 %v237
      %v462 = vunpack.c.l.b16 %v238
      %v463 = vunpack.c.l.b16 %v239
      %v464 = vunpack.c.l.b16 %v240
      %v465 = vunpack.c.l.b16 %v241
      %v466 = vunpack.c.l.b16 %v242
      %v467 = vunpack.c.l.b16 %v243
      %v468 = vunpack.c.l.b16 %v244
      %v469 = vunpack.c.l.b16 %v245
      %v470 = vunpack.c.l.b16 %v246
      %v471 = vunpack.c.l.b16 %v247
      %v472 = vunpack.c.l.b16 %v248
      %v473 = vunpack.c.l.b16 %v249
      %v474 = vunpack.c.l.b16 %v250
      %v475 = vunpack.c.l.b16 %v251
      %v476 = vunpack.c.l.b16 %v252
      %v477 = vunpack.c.l.b16 %v253
      %v478 = vunpack.c.l.b16 %v254
      %v479 = vunpack.c.l.b16 %v255
      %v480 = vunpack.c.l.b16 %v256
      %v481 = vunpack.c.l.b16 %v257
      %v482 = vpack.c.b16 %v451, %v450
      %v483 = vpack.c.b16 %v453, %v452
      %v484 = vpack.c.b16 %v455, %v454
      %v485 = vpack.c.b16 %v457, %v456
      %v486 = vpack.c.b16 %v459, %v458
      %v487 = vpack.c.b16 %v461, %v460
      %v488 = vpack.c.b16 %v463, %v462
      %v489 = vpack.c.b16 %v465, %v464
      %v490 = vpack.c.b16 %v467, %v466
      %v491 = vpack.c.b16 %v469, %v468
      %v492 = vpack.c.b16 %v471, %v470
      %v493 = vpack.c.b16 %v473, %v472
      %v494 = vpack.c.b16 %v475, %v474
      %v495 = vpack.c.b16 %v477, %v476
      %v496 = vpack.c.b16 %v479, %v478
      %v497 = vpack.c.b16 %v481, %v480
      %514 = vmatpush.bf16.msra.mxu0 %v489
      %515 = vmatpush.bf16.msra.mxu0 %v488
      %516 = vmatpush.bf16.msra.mxu0 %v487
      %517 = vmatpush.bf16.msra.mxu0 %v486
      %518 = vmatpush.bf16.msra.mxu0 %v485
      %519 = vmatpush.bf16.msra.mxu0 %v484
      %520 = vmatpush.bf16.msra.mxu0 %v483
      %521 = vmatpush.bf16.msra.mxu0 %v482
      %522 = vmatmul.bf16.gmra.mxu0 %v354
      %v523 = vpop.f32.mrf.mxu0
      %v524 = vadd.f32 0.0, %v523
      %v525 = vpop.f32.mrf.mxu0
      %v526 = vadd.f32 0.0, %v525
      %527 = vmatmul.bf16.gmra.mxu0 %v356
      %v528 = vpop.f32.mrf.mxu0
      %v529 = vadd.f32 0.0, %v528
      %v530 = vpop.f32.mrf.mxu0
      %v531 = vadd.f32 0.0, %v530
      %532 = vmatmul.bf16.gmra.mxu0 %v358
      %v533 = vpop.f32.mrf.mxu0
      %v534 = vadd.f32 0.0, %v533
      %v535 = vpop.f32.mrf.mxu0
      %v536 = vadd.f32 0.0, %v535
      %537 = vmatmul.bf16.gmra.mxu0 %v360
      %v538 = vpop.f32.mrf.mxu0
      %v539 = vadd.f32 0.0, %v538
      %v540 = vpop.f32.mrf.mxu0
      %v541 = vadd.f32 0.0, %v540
      %542 = vmatmul.bf16.gmra.mxu0 %v362
      %v543 = vpop.f32.mrf.mxu0
      %v544 = vadd.f32 0.0, %v543
      %v545 = vpop.f32.mrf.mxu0
      %v546 = vadd.f32 0.0, %v545
      %547 = vmatmul.bf16.gmra.mxu0 %v364
      %v548 = vpop.f32.mrf.mxu0
      %v549 = vadd.f32 0.0, %v548
      %v550 = vpop.f32.mrf.mxu0
      %v551 = vadd.f32 0.0, %v550
      %552 = vmatmul.bf16.gmra.mxu0 %v366
      %v553 = vpop.f32.mrf.mxu0
      %v554 = vadd.f32 0.0, %v553
      %v555 = vpop.f32.mrf.mxu0
      %v556 = vadd.f32 0.0, %v555
      %557 = vmatmul.bf16.gmra.mxu0 %v368
      %v558 = vpop.f32.mrf.mxu0
      %v559 = vadd.f32 0.0, %v558
      %v560 = vpop.f32.mrf.mxu0
      %v561 = vadd.f32 0.0, %v560
      %562 = vmatmul.bf16.gmra.mxu0 %v370
      %v563 = vpop.f32.mrf.mxu0
      %v564 = vadd.f32 0.0, %v563
      %v565 = vpop.f32.mrf.mxu0
      %v566 = vadd.f32 0.0, %v565
      %567 = vmatmul.bf16.gmra.mxu0 %v372
      %v568 = vpop.f32.mrf.mxu0
      %v569 = vadd.f32 0.0, %v568
      %v570 = vpop.f32.mrf.mxu0
      %v571 = vadd.f32 0.0, %v570
      %572 = vmatmul.bf16.gmra.mxu0 %v374
      %v573 = vpop.f32.mrf.mxu0
      %v574 = vadd.f32 0.0, %v573
      %v575 = vpop.f32.mrf.mxu0
      %v576 = vadd.f32 0.0, %v575
      %577 = vmatmul.bf16.gmra.mxu0 %v376
      %v578 = vpop.f32.mrf.mxu0
      %v579 = vadd.f32 0.0, %v578
      %v580 = vpop.f32.mrf.mxu0
      %v581 = vadd.f32 0.0, %v580
      %582 = vmatmul.bf16.gmra.mxu0 %v378
      %v583 = vpop.f32.mrf.mxu0
      %v584 = vadd.f32 0.0, %v583
      %v585 = vpop.f32.mrf.mxu0
      %v586 = vadd.f32 0.0, %v585
      %587 = vmatmul.bf16.gmra.mxu0 %v380
      %v588 = vpop.f32.mrf.mxu0
      %v589 = vadd.f32 0.0, %v588
      %v590 = vpop.f32.mrf.mxu0
      %v591 = vadd.f32 0.0, %v590
      %592 = vmatmul.bf16.gmra.mxu0 %v382
      %v593 = vpop.f32.mrf.mxu0
      %v594 = vadd.f32 0.0, %v593
      %v595 = vpop.f32.mrf.mxu0
      %v596 = vadd.f32 0.0, %v595
      %597 = vmatmul.bf16.gmra.mxu0 %v384
      %v598 = vpop.f32.mrf.mxu0
      %v599 = vadd.f32 0.0, %v598
      %v600 = vpop.f32.mrf.mxu0
      %v601 = vadd.f32 0.0, %v600
      %602 = vdwg.mxu0
      %603 = vmatpush.bf16.msra.mxu0 %v497
      %604 = vmatpush.bf16.msra.mxu0 %v496
      %605 = vmatpush.bf16.msra.mxu0 %v495
      %606 = vmatpush.bf16.msra.mxu0 %v494
      %607 = vmatpush.bf16.msra.mxu0 %v493
      %608 = vmatpush.bf16.msra.mxu0 %v492
      %609 = vmatpush.bf16.msra.mxu0 %v491
      %610 = vmatpush.bf16.msra.mxu0 %v490
      %611 = vmatmul.bf16.gmra.mxu0 %v355
      %v612 = vpop.f32.mrf.mxu0
      %v613 = vadd.f32 %v524, %v612
      %v614 = vpop.f32.mrf.mxu0
      %v615 = vadd.f32 %v526, %v614
      %616 = vmatmul.bf16.gmra.mxu0 %v357
      %v617 = vpop.f32.mrf.mxu0
      %v618 = vadd.f32 %v529, %v617
      %v619 = vpop.f32.mrf.mxu0
      %v620 = vadd.f32 %v531, %v619
      %621 = vmatmul.bf16.gmra.mxu0 %v359
      %v622 = vpop.f32.mrf.mxu0
      %v623 = vadd.f32 %v534, %v622
      %v624 = vpop.f32.mrf.mxu0
      %v625 = vadd.f32 %v536, %v624
      %626 = vmatmul.bf16.gmra.mxu0 %v361
      %v627 = vpop.f32.mrf.mxu0
      %v628 = vadd.f32 %v539, %v627
      %v629 = vpop.f32.mrf.mxu0
      %v630 = vadd.f32 %v541, %v629
      %631 = vmatmul.bf16.gmra.mxu0 %v363
      %v632 = vpop.f32.mrf.mxu0
      %v633 = vadd.f32 %v544, %v632
      %v634 = vpop.f32.mrf.mxu0
      %v635 = vadd.f32 %v546, %v634
      %636 = vmatmul.bf16.gmra.mxu0 %v365
      %v637 = vpop.f32.mrf.mxu0
      %v638 = vadd.f32 %v549, %v637
      %v639 = vpop.f32.mrf.mxu0
      %v640 = vadd.f32 %v551, %v639
      %641 = vmatmul.bf16.gmra.mxu0 %v367
      %v642 = vpop.f32.mrf.mxu0
      %v643 = vadd.f32 %v554, %v642
      %v644 = vpop.f32.mrf.mxu0
      %v645 = vadd.f32 %v556, %v644
      %646 = vmatmul.bf16.gmra.mxu0 %v369
      %v647 = vpop.f32.mrf.mxu0
      %v648 = vadd.f32 %v559, %v647
      %v649 = vpop.f32.mrf.mxu0
      %v650 = vadd.f32 %v561, %v649
      %651 = vmatmul.bf16.gmra.mxu0 %v371
      %v652 = vpop.f32.mrf.mxu0
      %v653 = vadd.f32 %v564, %v652
      %v654 = vpop.f32.mrf.mxu0
      %v655 = vadd.f32 %v566, %v654
      %656 = vmatmul.bf16.gmra.mxu0 %v373
      %v657 = vpop.f32.mrf.mxu0
      %v658 = vadd.f32 %v569, %v657
      %v659 = vpop.f32.mrf.mxu0
      %v660 = vadd.f32 %v571, %v659
      %661 = vmatmul.bf16.gmra.mxu0 %v375
      %v662 = vpop.f32.mrf.mxu0
      %v663 = vadd.f32 %v574, %v662
      %v664 = vpop.f32.mrf.mxu0
      %v665 = vadd.f32 %v576, %v664
      %666 = vmatmul.bf16.gmra.mxu0 %v377
      %v667 = vpop.f32.mrf.mxu0
      %v668 = vadd.f32 %v579, %v667
      %v669 = vpop.f32.mrf.mxu0
      %v670 = vadd.f32 %v581, %v669
      %671 = vmatmul.bf16.gmra.mxu0 %v379
      %v672 = vpop.f32.mrf.mxu0
      %v673 = vadd.f32 %v584, %v672
      %v674 = vpop.f32.mrf.mxu0
      %v675 = vadd.f32 %v586, %v674
      %676 = vmatmul.bf16.gmra.mxu0 %v381
      %v677 = vpop.f32.mrf.mxu0
      %v678 = vadd.f32 %v589, %v677
      %v679 = vpop.f32.mrf.mxu0
      %v680 = vadd.f32 %v591, %v679
      %681 = vmatmul.bf16.gmra.mxu0 %v383
      %v682 = vpop.f32.mrf.mxu0
      %v683 = vadd.f32 %v594, %v682
      %v684 = vpop.f32.mrf.mxu0
      %v685 = vadd.f32 %v596, %v684
      %686 = vmatmul.bf16.gmra.mxu0 %v385
      %v687 = vpop.f32.mrf.mxu0
      %v688 = vadd.f32 %v599, %v687
      %v689 = vpop.f32.mrf.mxu0
      %v690 = vadd.f32 %v601, %v689
      %691 = vdwg.mxu0
      %s692 = smul.u32 %s15, 256
      %s693 = scalar_lea.vmem [#allocation2], %s692
      %694 = vst [vmem:[%s693] sm:$0xff] %v613
      %695 = vst [vmem:[%s693 + $0x8] sm:$0xff] %v615
      %696 = vst [vmem:[%s693 + $0x10] sm:$0xff] %v618
      %697 = vst [vmem:[%s693 + $0x18] sm:$0xff] %v620
      %698 = vst [vmem:[%s693 + $0x20] sm:$0xff] %v623
      %699 = vst [vmem:[%s693 + $0x28] sm:$0xff] %v625
      %700 = vst [vmem:[%s693 + $0x30] sm:$0xff] %v628
      %701 = vst [vmem:[%s693 + $0x38] sm:$0xff] %v630
      %702 = vst [vmem:[%s693 + $0x40] sm:$0xff] %v633
      %703 = vst [vmem:[%s693 + $0x48] sm:$0xff] %v635
      %704 = vst [vmem:[%s693 + $0x50] sm:$0xff] %v638
      %705 = vst [vmem:[%s693 + $0x58] sm:$0xff] %v640
      %706 = vst [vmem:[%s693 + $0x60] sm:$0xff] %v643
      %707 = vst [vmem:[%s693 + $0x68] sm:$0xff] %v645
      %708 = vst [vmem:[%s693 + $0x70] sm:$0xff] %v648
      %709 = vst [vmem:[%s693 + $0x78] sm:$0xff] %v650
      %710 = vst [vmem:[%s693 + $0x80] sm:$0xff] %v653
      %711 = vst [vmem:[%s693 + $0x88] sm:$0xff] %v655
      %712 = vst [vmem:[%s693 + $0x90] sm:$0xff] %v658
      %713 = vst [vmem:[%s693 + $0x98] sm:$0xff] %v660
      %714 = vst [vmem:[%s693 + $0xa0] sm:$0xff] %v663
      %715 = vst [vmem:[%s693 + $0xa8] sm:$0xff] %v665
      %716 = vst [vmem:[%s693 + $0xb0] sm:$0xff] %v668
      %717 = vst [vmem:[%s693 + $0xb8] sm:$0xff] %v670
      %718 = vst [vmem:[%s693 + $0xc0] sm:$0xff] %v673
      %719 = vst [vmem:[%s693 + $0xc8] sm:$0xff] %v675
      %720 = vst [vmem:[%s693 + $0xd0] sm:$0xff] %v678
      %721 = vst [vmem:[%s693 + $0xd8] sm:$0xff] %v680
      %722 = vst [vmem:[%s693 + $0xe0] sm:$0xff] %v683
      %723 = vst [vmem:[%s693 + $0xe8] sm:$0xff] %v685
      %724 = vst [vmem:[%s693 + $0xf0] sm:$0xff] %v688
      %725 = vst [vmem:[%s693 + $0xf8] sm:$0xff] %v690
      %v726 = vld [vmem:[#allocation3] sm:$0x1]
      %v727 = vadd.f32 %v613, %v615
      %v728 = vadd.f32 %v727, %v618
      %v729 = vadd.f32 %v728, %v620
      %v730 = vadd.f32 %v729, %v623
      %v731 = vadd.f32 %v730, %v625
      %v732 = vadd.f32 %v731, %v628
      %v733 = vadd.f32 %v732, %v630
      %v734 = vadd.f32 %v733, %v633
      %v735 = vadd.f32 %v734, %v635
      %v736 = vadd.f32 %v735, %v638
      %v737 = vadd.f32 %v736, %v640
      %v738 = vadd.f32 %v737, %v643
      %v739 = vadd.f32 %v738, %v645
      %v740 = vadd.f32 %v739, %v648
      %v741 = vadd.f32 %v740, %v650
      %v742 = vadd.f32 %v741, %v653
      %v743 = vadd.f32 %v742, %v655
      %v744 = vadd.f32 %v743, %v658
      %v745 = vadd.f32 %v744, %v660
      %v746 = vadd.f32 %v745, %v663
      %v747 = vadd.f32 %v746, %v665
      %v748 = vadd.f32 %v747, %v668
      %v749 = vadd.f32 %v748, %v670
      %v750 = vadd.f32 %v749, %v673
      %v751 = vadd.f32 %v750, %v675
      %v752 = vadd.f32 %v751, %v678
      %v753 = vadd.f32 %v752, %v680
      %v754 = vadd.f32 %v753, %v683
      %v755 = vadd.f32 %v754, %v685
      %v756 = vadd.f32 %v755, %v688
      %v757 = vadd.f32 %v756, %v690
      %v758 = vrot.slane %v757, 4
      %v759 = vadd.f32 %v757, %v758
      %v760 = vrot.slane %v759, 2
      %v761 = vadd.f32 %v759, %v760
      %v762 = vrot.slane %v761, 1
      %v763 = vadd.f32 %v761, %v762
      %v764 = vadd.f32 %v726, %v763
      %765 = vst [vmem:[#allocation3] sm:$0x1] %v764
      %v766 = vld [vmem:[#allocation4] sm:$0x1]
      %v767 = vmul.f32 %v613, %v613
      %v768 = vmul.f32 %v615, %v615
      %v769 = vmul.f32 %v618, %v618
      %v770 = vmul.f32 %v620, %v620
      %v771 = vmul.f32 %v623, %v623
      %v772 = vmul.f32 %v625, %v625
      %v773 = vmul.f32 %v628, %v628
      %v774 = vmul.f32 %v630, %v630
      %v775 = vmul.f32 %v633, %v633
      %v776 = vmul.f32 %v635, %v635
      %v777 = vmul.f32 %v638, %v638
      %v778 = vmul.f32 %v640, %v640
      %v779 = vmul.f32 %v643, %v643
      %v780 = vmul.f32 %v645, %v645
      %v781 = vmul.f32 %v648, %v648
      %v782 = vmul.f32 %v650, %v650
      %v783 = vmul.f32 %v653, %v653
      %v784 = vmul.f32 %v655, %v655
      %v785 = vmul.f32 %v658, %v658
      %v786 = vmul.f32 %v660, %v660
      %v787 = vmul.f32 %v663, %v663
      %v788 = vmul.f32 %v665, %v665
      %v789 = vmul.f32 %v668, %v668
      %v790 = vmul.f32 %v670, %v670
      %v791 = vmul.f32 %v673, %v673
      %v792 = vmul.f32 %v675, %v675
      %v793 = vmul.f32 %v678, %v678
      %v794 = vmul.f32 %v680, %v680
      %v795 = vmul.f32 %v683, %v683
      %v796 = vmul.f32 %v685, %v685
      %v797 = vmul.f32 %v688, %v688
      %v798 = vmul.f32 %v690, %v690
      %v799 = vadd.f32 %v767, %v768
      %v800 = vadd.f32 %v799, %v769
      %v801 = vadd.f32 %v800, %v770
      %v802 = vadd.f32 %v801, %v771
      %v803 = vadd.f32 %v802, %v772
      %v804 = vadd.f32 %v803, %v773
      %v805 = vadd.f32 %v804, %v774
      %v806 = vadd.f32 %v805, %v775
      %v807 = vadd.f32 %v806, %v776
      %v808 = vadd.f32 %v807, %v777
      %v809 = vadd.f32 %v808, %v778
      %v810 = vadd.f32 %v809, %v779
      %v811 = vadd.f32 %v810, %v780
      %v812 = vadd.f32 %v811, %v781
      %v813 = vadd.f32 %v812, %v782
      %v814 = vadd.f32 %v813, %v783
      %v815 = vadd.f32 %v814, %v784
      %v816 = vadd.f32 %v815, %v785
      %v817 = vadd.f32 %v816, %v786
      %v818 = vadd.f32 %v817, %v787
      %v819 = vadd.f32 %v818, %v788
      %v820 = vadd.f32 %v819, %v789
      %v821 = vadd.f32 %v820, %v790
      %v822 = vadd.f32 %v821, %v791
      %v823 = vadd.f32 %v822, %v792
      %v824 = vadd.f32 %v823, %v793
      %v825 = vadd.f32 %v824, %v794
      %v826 = vadd.f32 %v825, %v795
      %v827 = vadd.f32 %v826, %v796
      %v828 = vadd.f32 %v827, %v797
      %v829 = vadd.f32 %v828, %v798
      %v830 = vrot.slane %v829, 4
      %v831 = vadd.f32 %v829, %v830
      %v832 = vrot.slane %v831, 2
      %v833 = vadd.f32 %v831, %v832
      %v834 = vrot.slane %v833, 1
      %v835 = vadd.f32 %v833, %v834
      %v836 = vadd.f32 %v766, %v835
      %837 = vst [vmem:[#allocation4] sm:$0x1] %v836
      %p838 = scmp.eq.s32.totalorder %s15, 3
      // Predicated region
      $region41: #{resnet_forward.11} parent=35 // pred_check
        %p839 = pneg %p838
      $region42: #{resnet_forward.11} parent=35 // pred_check_branch
        %841 = sbr.rel (%p839) target = $region44
      $region43: #{resnet_forward.11} parent=35 // pred_region
        %v842 = vld [vmem:[#allocation3] sm:$0x1]
        %v843 = vmul.f32 %v842, 0.0009765625
        %v844 = vld [vmem:[#allocation4] sm:$0x1]
        %v845 = vmul.f32 %v844, 0.0009765625
        %v846 = vmul.f32 %v843, %v843
        %v847 = vsub.f32 %v845, %v846
        %v848 = vmax.f32 %v847, 0.0
        %v849 = vadd.f32 %v848, 1e-05
        %v850 = vrsqrt.pop %v849
        %v851 = vmul.f32 %v850, %v849
        %v852 = vmul.f32 %v851, %v850
        %v853 = vmul.f32 0.5, %v852
        %v854 = vsub.f32 1.5, %v853
        %v855 = vmul.f32 %v850, %v854
        %vm856 = vweird.f32 %v849
        %vm857 = vweird.f32 %v850
        %vm858 = vmor %vm856, %vm857
        %v859 = vsel %vm858, %v850, %v855
        %v860 = vld [vmem:[%s2] sm:$0x1]
        %v861 = vmul.f32 %v859, %v860
        %v862 = vld [vmem:[%s3] sm:$0x1]
        %v863 = vmul.f32 %v843, %v861
        %v864 = vsub.f32 %v862, %v863
        %v865 = vld [vmem:[#allocation2] sm:$0xff]
        %v866 = vld [vmem:[#allocation2 + $0x8] sm:$0xff]
        %v867 = vld [vmem:[#allocation2 + $0x10] sm:$0xff]
        %v868 = vld [vmem:[#allocation2 + $0x18] sm:$0xff]
        %v869 = vld [vmem:[#allocation2 + $0x20] sm:$0xff]
        %v870 = vld [vmem:[#allocation2 + $0x28] sm:$0xff]
        %v871 = vld [vmem:[#allocation2 + $0x30] sm:$0xff]
        %v872 = vld [vmem:[#allocation2 + $0x38] sm:$0xff]
        %v873 = vld [vmem:[#allocation2 + $0x40] sm:$0xff]
        %v874 = vld [vmem:[#allocation2 + $0x48] sm:$0xff]
        %v875 = vld [vmem:[#allocation2 + $0x50] sm:$0xff]
        %v876 = vld [vmem:[#allocation2 + $0x58] sm:$0xff]
        %v877 = vld [vmem:[#allocation2 + $0x60] sm:$0xff]
        %v878 = vld [vmem:[#allocation2 + $0x68] sm:$0xff]
        %v879 = vld [vmem:[#allocation2 + $0x70] sm:$0xff]
        %v880 = vld [vmem:[#allocation2 + $0x78] sm:$0xff]
        %v881 = vld [vmem:[#allocation2 + $0x80] sm:$0xff]
        %v882 = vld [vmem:[#allocation2 + $0x88] sm:$0xff]
        %v883 = vld [vmem:[#allocation2 + $0x90] sm:$0xff]
        %v884 = vld [vmem:[#allocation2 + $0x98] sm:$0xff]
        %v885 = vld [vmem:[#allocation2 + $0xa0] sm:$0xff]
        %v886 = vld [vmem:[#allocation2 + $0xa8] sm:$0xff]
        %v887 = vld [vmem:[#allocation2 + $0xb0] sm:$0xff]
        %v888 = vld [vmem:[#allocation2 + $0xb8] sm:$0xff]
        %v889 = vld [vmem:[#allocation2 + $0xc0] sm:$0xff]
        %v890 = vld [vmem:[#allocation2 + $0xc8] sm:$0xff]
        %v891 = vld [vmem:[#allocation2 + $0xd0] sm:$0xff]
        %v892 = vld [vmem:[#allocation2 + $0xd8] sm:$0xff]
        %v893 = vld [vmem:[#allocation2 + $0xe0] sm:$0xff]
        %v894 = vld [vmem:[#allocation2 + $0xe8] sm:$0xff]
        %v895 = vld [vmem:[#allocation2 + $0xf0] sm:$0xff]
        %v896 = vld [vmem:[#allocation2 + $0xf8] sm:$0xff]
        %v897 = vld [vmem:[#allocation2 + $0x100] sm:$0xff]
        %v898 = vld [vmem:[#allocation2 + $0x108] sm:$0xff]
        %v899 = vld [vmem:[#allocation2 + $0x110] sm:$0xff]
        %v900 = vld [vmem:[#allocation2 + $0x118] sm:$0xff]
        %v901 = vld [vmem:[#allocation2 + $0x120] sm:$0xff]
        %v902 = vld [vmem:[#allocation2 + $0x128] sm:$0xff]
        %v903 = vld [vmem:[#allocation2 + $0x130] sm:$0xff]
        %v904 = vld [vmem:[#allocation2 + $0x138] sm:$0xff]
        %v905 = vld [vmem:[#allocation2 + $0x140] sm:$0xff]
        %v906 = vld [vmem:[#allocation2 + $0x148] sm:$0xff]
        %v907 = vld [vmem:[#allocation2 + $0x150] sm:$0xff]
        %v908 = vld [vmem:[#allocation2 + $0x158] sm:$0xff]
        %v909 = vld [vmem:[#allocation2 + $0x160] sm:$0xff]
        %v910 = vld [vmem:[#allocation2 + $0x168] sm:$0xff]
        %v911 = vld [vmem:[#allocation2 + $0x170] sm:$0xff]
        %v912 = vld [vmem:[#allocation2 + $0x178] sm:$0xff]
        %v913 = vld [vmem:[#allocation2 + $0x180] sm:$0xff]
        %v914 = vld [vmem:[#allocation2 + $0x188] sm:$0xff]
        %v915 = vld [vmem:[#allocation2 + $0x190] sm:$0xff]
        %v916 = vld [vmem:[#allocation2 + $0x198] sm:$0xff]
        %v917 = vld [vmem:[#allocation2 + $0x1a0] sm:$0xff]
        %v918 = vld [vmem:[#allocation2 + $0x1a8] sm:$0xff]
        %v919 = vld [vmem:[#allocation2 + $0x1b0] sm:$0xff]
        %v920 = vld [vmem:[#allocation2 + $0x1b8] sm:$0xff]
        %v921 = vld [vmem:[#allocation2 + $0x1c0] sm:$0xff]
        %v922 = vld [vmem:[#allocation2 + $0x1c8] sm:$0xff]
        %v923 = vld [vmem:[#allocation2 + $0x1d0] sm:$0xff]
        %v924 = vld [vmem:[#allocation2 + $0x1d8] sm:$0xff]
        %v925 = vld [vmem:[#allocation2 + $0x1e0] sm:$0xff]
        %v926 = vld [vmem:[#allocation2 + $0x1e8] sm:$0xff]
        %v927 = vld [vmem:[#allocation2 + $0x1f0] sm:$0xff]
        %v928 = vld [vmem:[#allocation2 + $0x1f8] sm:$0xff]
        %v929 = vld [vmem:[#allocation2 + $0x200] sm:$0xff]
        %v930 = vld [vmem:[#allocation2 + $0x208] sm:$0xff]
        %v931 = vld [vmem:[#allocation2 + $0x210] sm:$0xff]
        %v932 = vld [vmem:[#allocation2 + $0x218] sm:$0xff]
        %v933 = vld [vmem:[#allocation2 + $0x220] sm:$0xff]
        %v934 = vld [vmem:[#allocation2 + $0x228] sm:$0xff]
        %v935 = vld [vmem:[#allocation2 + $0x230] sm:$0xff]
        %v936 = vld [vmem:[#allocation2 + $0x238] sm:$0xff]
        %v937 = vld [vmem:[#allocation2 + $0x240] sm:$0xff]
        %v938 = vld [vmem:[#allocation2 + $0x248] sm:$0xff]
        %v939 = vld [vmem:[#allocation2 + $0x250] sm:$0xff]
        %v940 = vld [vmem:[#allocation2 + $0x258] sm:$0xff]
        %v941 = vld [vmem:[#allocation2 + $0x260] sm:$0xff]
        %v942 = vld [vmem:[#allocation2 + $0x268] sm:$0xff]
        %v943 = vld [vmem:[#allocation2 + $0x270] sm:$0xff]
        %v944 = vld [vmem:[#allocation2 + $0x278] sm:$0xff]
        %v945 = vld [vmem:[#allocation2 + $0x280] sm:$0xff]
        %v946 = vld [vmem:[#allocation2 + $0x288] sm:$0xff]
        %v947 = vld [vmem:[#allocation2 + $0x290] sm:$0xff]
        %v948 = vld [vmem:[#allocation2 + $0x298] sm:$0xff]
        %v949 = vld [vmem:[#allocation2 + $0x2a0] sm:$0xff]
        %v950 = vld [vmem:[#allocation2 + $0x2a8] sm:$0xff]
        %v951 = vld [vmem:[#allocation2 + $0x2b0] sm:$0xff]
        %v952 = vld [vmem:[#allocation2 + $0x2b8] sm:$0xff]
        %v953 = vld [vmem:[#allocation2 + $0x2c0] sm:$0xff]
        %v954 = vld [vmem:[#allocation2 + $0x2c8] sm:$0xff]
        %v955 = vld [vmem:[#allocation2 + $0x2d0] sm:$0xff]
        %v956 = vld [vmem:[#allocation2 + $0x2d8] sm:$0xff]
        %v957 = vld [vmem:[#allocation2 + $0x2e0] sm:$0xff]
        %v958 = vld [vmem:[#allocation2 + $0x2e8] sm:$0xff]
        %v959 = vld [vmem:[#allocation2 + $0x2f0] sm:$0xff]
        %v960 = vld [vmem:[#allocation2 + $0x2f8] sm:$0xff]
        %v961 = vld [vmem:[#allocation2 + $0x300] sm:$0xff]
        %v962 = vld [vmem:[#allocation2 + $0x308] sm:$0xff]
        %v963 = vld [vmem:[#allocation2 + $0x310] sm:$0xff]
        %v964 = vld [vmem:[#allocation2 + $0x318] sm:$0xff]
        %v965 = vld [vmem:[#allocation2 + $0x320] sm:$0xff]
        %v966 = vld [vmem:[#allocation2 + $0x328] sm:$0xff]
        %v967 = vld [vmem:[#allocation2 + $0x330] sm:$0xff]
        %v968 = vld [vmem:[#allocation2 + $0x338] sm:$0xff]
        %v969 = vld [vmem:[#allocation2 + $0x340] sm:$0xff]
        %v970 = vld [vmem:[#allocation2 + $0x348] sm:$0xff]
        %v971 = vld [vmem:[#allocation2 + $0x350] sm:$0xff]
        %v972 = vld [vmem:[#allocation2 + $0x358] sm:$0xff]
        %v973 = vld [vmem:[#allocation2 + $0x360] sm:$0xff]
        %v974 = vld [vmem:[#allocation2 + $0x368] sm:$0xff]
        %v975 = vld [vmem:[#allocation2 + $0x370] sm:$0xff]
        %v976 = vld [vmem:[#allocation2 + $0x378] sm:$0xff]
        %v977 = vld [vmem:[#allocation2 + $0x380] sm:$0xff]
        %v978 = vld [vmem:[#allocation2 + $0x388] sm:$0xff]
        %v979 = vld [vmem:[#allocation2 + $0x390] sm:$0xff]
        %v980 = vld [vmem:[#allocation2 + $0x398] sm:$0xff]
        %v981 = vld [vmem:[#allocation2 + $0x3a0] sm:$0xff]
        %v982 = vld [vmem:[#allocation2 + $0x3a8] sm:$0xff]
        %v983 = vld [vmem:[#allocation2 + $0x3b0] sm:$0xff]
        %v984 = vld [vmem:[#allocation2 + $0x3b8] sm:$0xff]
        %v985 = vld [vmem:[#allocation2 + $0x3c0] sm:$0xff]
        %v986 = vld [vmem:[#allocation2 + $0x3c8] sm:$0xff]
        %v987 = vld [vmem:[#allocation2 + $0x3d0] sm:$0xff]
        %v988 = vld [vmem:[#allocation2 + $0x3d8] sm:$0xff]
        %v989 = vld [vmem:[#allocation2 + $0x3e0] sm:$0xff]
        %v990 = vld [vmem:[#allocation2 + $0x3e8] sm:$0xff]
        %v991 = vld [vmem:[#allocation2 + $0x3f0] sm:$0xff]
        %v992 = vld [vmem:[#allocation2 + $0x3f8] sm:$0xff]
        %v994 = vperm.slane %v861, 0
        %v996 = vmul.f32 %v865, %v994
        %v997 = vmul.f32 %v866, %v994
        %v998 = vmul.f32 %v867, %v994
        %v999 = vmul.f32 %v868, %v994
        %v1000 = vmul.f32 %v869, %v994
        %v1001 = vmul.f32 %v870, %v994
        %v1002 = vmul.f32 %v871, %v994
        %v1003 = vmul.f32 %v872, %v994
        %v1004 = vmul.f32 %v873, %v994
        %v1005 = vmul.f32 %v874, %v994
        %v1006 = vmul.f32 %v875, %v994
        %v1007 = vmul.f32 %v876, %v994
        %v1008 = vmul.f32 %v877, %v994
        %v1009 = vmul.f32 %v878, %v994
        %v1010 = vmul.f32 %v879, %v994
        %v1011 = vmul.f32 %v880, %v994
        %v1012 = vmul.f32 %v881, %v994
        %v1013 = vmul.f32 %v882, %v994
        %v1014 = vmul.f32 %v883, %v994
        %v1015 = vmul.f32 %v884, %v994
        %v1016 = vmul.f32 %v885, %v994
        %v1017 = vmul.f32 %v886, %v994
        %v1018 = vmul.f32 %v887, %v994
        %v1019 = vmul.f32 %v888, %v994
        %v1020 = vmul.f32 %v889, %v994
        %v1021 = vmul.f32 %v890, %v994
        %v1022 = vmul.f32 %v891, %v994
        %v1023 = vmul.f32 %v892, %v994
        %v1024 = vmul.f32 %v893, %v994
        %v1025 = vmul.f32 %v894, %v994
        %v1026 = vmul.f32 %v895, %v994
        %v1027 = vmul.f32 %v896, %v994
        %v1028 = vmul.f32 %v897, %v994
        %v1029 = vmul.f32 %v898, %v994
        %v1030 = vmul.f32 %v899, %v994
        %v1031 = vmul.f32 %v900, %v994
        %v1032 = vmul.f32 %v901, %v994
        %v1033 = vmul.f32 %v902, %v994
        %v1034 = vmul.f32 %v903, %v994
        %v1035 = vmul.f32 %v904, %v994
        %v1036 = vmul.f32 %v905, %v994
        %v1037 = vmul.f32 %v906, %v994
        %v1038 = vmul.f32 %v907, %v994
        %v1039 = vmul.f32 %v908, %v994
        %v1040 = vmul.f32 %v909, %v994
        %v1041 = vmul.f32 %v910, %v994
        %v1042 = vmul.f32 %v911, %v994
        %v1043 = vmul.f32 %v912, %v994
        %v1044 = vmul.f32 %v913, %v994
        %v1045 = vmul.f32 %v914, %v994
        %v1046 = vmul.f32 %v915, %v994
        %v1047 = vmul.f32 %v916, %v994
        %v1048 = vmul.f32 %v917, %v994
        %v1049 = vmul.f32 %v918, %v994
        %v1050 = vmul.f32 %v919, %v994
        %v1051 = vmul.f32 %v920, %v994
        %v1052 = vmul.f32 %v921, %v994
        %v1053 = vmul.f32 %v922, %v994
        %v1054 = vmul.f32 %v923, %v994
        %v1055 = vmul.f32 %v924, %v994
        %v1056 = vmul.f32 %v925, %v994
        %v1057 = vmul.f32 %v926, %v994
        %v1058 = vmul.f32 %v927, %v994
        %v1059 = vmul.f32 %v928, %v994
        %v1060 = vmul.f32 %v929, %v994
        %v1061 = vmul.f32 %v930, %v994
        %v1062 = vmul.f32 %v931, %v994
        %v1063 = vmul.f32 %v932, %v994
        %v1064 = vmul.f32 %v933, %v994
        %v1065 = vmul.f32 %v934, %v994
        %v1066 = vmul.f32 %v935, %v994
        %v1067 = vmul.f32 %v936, %v994
        %v1068 = vmul.f32 %v937, %v994
        %v1069 = vmul.f32 %v938, %v994
        %v1070 = vmul.f32 %v939, %v994
        %v1071 = vmul.f32 %v940, %v994
        %v1072 = vmul.f32 %v941, %v994
        %v1073 = vmul.f32 %v942, %v994
        %v1074 = vmul.f32 %v943, %v994
        %v1075 = vmul.f32 %v944, %v994
        %v1076 = vmul.f32 %v945, %v994
        %v1077 = vmul.f32 %v946, %v994
        %v1078 = vmul.f32 %v947, %v994
        %v1079 = vmul.f32 %v948, %v994
        %v1080 = vmul.f32 %v949, %v994
        %v1081 = vmul.f32 %v950, %v994
        %v1082 = vmul.f32 %v951, %v994
        %v1083 = vmul.f32 %v952, %v994
        %v1084 = vmul.f32 %v953, %v994
        %v1085 = vmul.f32 %v954, %v994
        %v1086 = vmul.f32 %v955, %v994
        %v1087 = vmul.f32 %v956, %v994
        %v1088 = vmul.f32 %v957, %v994
        %v1089 = vmul.f32 %v958, %v994
        %v1090 = vmul.f32 %v959, %v994
        %v1091 = vmul.f32 %v960, %v994
        %v1092 = vmul.f32 %v961, %v994
        %v1093 = vmul.f32 %v962, %v994
        %v1094 = vmul.f32 %v963, %v994
        %v1095 = vmul.f32 %v964, %v994
        %v1096 = vmul.f32 %v965, %v994
        %v1097 = vmul.f32 %v966, %v994
        %v1098 = vmul.f32 %v967, %v994
        %v1099 = vmul.f32 %v968, %v994
        %v1100 = vmul.f32 %v969, %v994
        %v1101 = vmul.f32 %v970, %v994
        %v1102 = vmul.f32 %v971, %v994
        %v1103 = vmul.f32 %v972, %v994
        %v1104 = vmul.f32 %v973, %v994
        %v1105 = vmul.f32 %v974, %v994
        %v1106 = vmul.f32 %v975, %v994
        %v1107 = vmul.f32 %v976, %v994
        %v1108 = vmul.f32 %v977, %v994
        %v1109 = vmul.f32 %v978, %v994
        %v1110 = vmul.f32 %v979, %v994
        %v1111 = vmul.f32 %v980, %v994
        %v1112 = vmul.f32 %v981, %v994
        %v1113 = vmul.f32 %v982, %v994
        %v1114 = vmul.f32 %v983, %v994
        %v1115 = vmul.f32 %v984, %v994
        %v1116 = vmul.f32 %v985, %v994
        %v1117 = vmul.f32 %v986, %v994
        %v1118 = vmul.f32 %v987, %v994
        %v1119 = vmul.f32 %v988, %v994
        %v1120 = vmul.f32 %v989, %v994
        %v1121 = vmul.f32 %v990, %v994
        %v1122 = vmul.f32 %v991, %v994
        %v1123 = vmul.f32 %v992, %v994
        %v1125 = vperm.slane %v864, 0
        %v1127 = vadd.f32 %v996, %v1125
        %v1128 = vadd.f32 %v997, %v1125
        %v1129 = vadd.f32 %v998, %v1125
        %v1130 = vadd.f32 %v999, %v1125
        %v1131 = vadd.f32 %v1000, %v1125
        %v1132 = vadd.f32 %v1001, %v1125
        %v1133 = vadd.f32 %v1002, %v1125
        %v1134 = vadd.f32 %v1003, %v1125
        %v1135 = vadd.f32 %v1004, %v1125
        %v1136 = vadd.f32 %v1005, %v1125
        %v1137 = vadd.f32 %v1006, %v1125
        %v1138 = vadd.f32 %v1007, %v1125
        %v1139 = vadd.f32 %v1008, %v1125
        %v1140 = vadd.f32 %v1009, %v1125
        %v1141 = vadd.f32 %v1010, %v1125
        %v1142 = vadd.f32 %v1011, %v1125
        %v1143 = vadd.f32 %v1012, %v1125
        %v1144 = vadd.f32 %v1013, %v1125
        %v1145 = vadd.f32 %v1014, %v1125
        %v1146 = vadd.f32 %v1015, %v1125
        %v1147 = vadd.f32 %v1016, %v1125
        %v1148 = vadd.f32 %v1017, %v1125
        %v1149 = vadd.f32 %v1018, %v1125
        %v1150 = vadd.f32 %v1019, %v1125
        %v1151 = vadd.f32 %v1020, %v1125
        %v1152 = vadd.f32 %v1021, %v1125
        %v1153 = vadd.f32 %v1022, %v1125
        %v1154 = vadd.f32 %v1023, %v1125
        %v1155 = vadd.f32 %v1024, %v1125
        %v1156 = vadd.f32 %v1025, %v1125
        %v1157 = vadd.f32 %v1026, %v1125
        %v1158 = vadd.f32 %v1027, %v1125
        %v1159 = vadd.f32 %v1028, %v1125
        %v1160 = vadd.f32 %v1029, %v1125
        %v1161 = vadd.f32 %v1030, %v1125
        %v1162 = vadd.f32 %v1031, %v1125
        %v1163 = vadd.f32 %v1032, %v1125
        %v1164 = vadd.f32 %v1033, %v1125
        %v1165 = vadd.f32 %v1034, %v1125
        %v1166 = vadd.f32 %v1035, %v1125
        %v1167 = vadd.f32 %v1036, %v1125
        %v1168 = vadd.f32 %v1037, %v1125
        %v1169 = vadd.f32 %v1038, %v1125
        %v1170 = vadd.f32 %v1039, %v1125
        %v1171 = vadd.f32 %v1040, %v1125
        %v1172 = vadd.f32 %v1041, %v1125
        %v1173 = vadd.f32 %v1042, %v1125
        %v1174 = vadd.f32 %v1043, %v1125
        %v1175 = vadd.f32 %v1044, %v1125
        %v1176 = vadd.f32 %v1045, %v1125
        %v1177 = vadd.f32 %v1046, %v1125
        %v1178 = vadd.f32 %v1047, %v1125
        %v1179 = vadd.f32 %v1048, %v1125
        %v1180 = vadd.f32 %v1049, %v1125
        %v1181 = vadd.f32 %v1050, %v1125
        %v1182 = vadd.f32 %v1051, %v1125
        %v1183 = vadd.f32 %v1052, %v1125
        %v1184 = vadd.f32 %v1053, %v1125
        %v1185 = vadd.f32 %v1054, %v1125
        %v1186 = vadd.f32 %v1055, %v1125
        %v1187 = vadd.f32 %v1056, %v1125
        %v1188 = vadd.f32 %v1057, %v1125
        %v1189 = vadd.f32 %v1058, %v1125
        %v1190 = vadd.f32 %v1059, %v1125
        %v1191 = vadd.f32 %v1060, %v1125
        %v1192 = vadd.f32 %v1061, %v1125
        %v1193 = vadd.f32 %v1062, %v1125
        %v1194 = vadd.f32 %v1063, %v1125
        %v1195 = vadd.f32 %v1064, %v1125
        %v1196 = vadd.f32 %v1065, %v1125
        %v1197 = vadd.f32 %v1066, %v1125
        %v1198 = vadd.f32 %v1067, %v1125
        %v1199 = vadd.f32 %v1068, %v1125
        %v1200 = vadd.f32 %v1069, %v1125
        %v1201 = vadd.f32 %v1070, %v1125
        %v1202 = vadd.f32 %v1071, %v1125
        %v1203 = vadd.f32 %v1072, %v1125
        %v1204 = vadd.f32 %v1073, %v1125
        %v1205 = vadd.f32 %v1074, %v1125
        %v1206 = vadd.f32 %v1075, %v1125
        %v1207 = vadd.f32 %v1076, %v1125
        %v1208 = vadd.f32 %v1077, %v1125
        %v1209 = vadd.f32 %v1078, %v1125
        %v1210 = vadd.f32 %v1079, %v1125
        %v1211 = vadd.f32 %v1080, %v1125
        %v1212 = vadd.f32 %v1081, %v1125
        %v1213 = vadd.f32 %v1082, %v1125
        %v1214 = vadd.f32 %v1083, %v1125
        %v1215 = vadd.f32 %v1084, %v1125
        %v1216 = vadd.f32 %v1085, %v1125
        %v1217 = vadd.f32 %v1086, %v1125
        %v1218 = vadd.f32 %v1087, %v1125
        %v1219 = vadd.f32 %v1088, %v1125
        %v1220 = vadd.f32 %v1089, %v1125
        %v1221 = vadd.f32 %v1090, %v1125
        %v1222 = vadd.f32 %v1091, %v1125
        %v1223 = vadd.f32 %v1092, %v1125
        %v1224 = vadd.f32 %v1093, %v1125
        %v1225 = vadd.f32 %v1094, %v1125
        %v1226 = vadd.f32 %v1095, %v1125
        %v1227 = vadd.f32 %v1096, %v1125
        %v1228 = vadd.f32 %v1097, %v1125
        %v1229 = vadd.f32 %v1098, %v1125
        %v1230 = vadd.f32 %v1099, %v1125
        %v1231 = vadd.f32 %v1100, %v1125
        %v1232 = vadd.f32 %v1101, %v1125
        %v1233 = vadd.f32 %v1102, %v1125
        %v1234 = vadd.f32 %v1103, %v1125
        %v1235 = vadd.f32 %v1104, %v1125
        %v1236 = vadd.f32 %v1105, %v1125
        %v1237 = vadd.f32 %v1106, %v1125
        %v1238 = vadd.f32 %v1107, %v1125
        %v1239 = vadd.f32 %v1108, %v1125
        %v1240 = vadd.f32 %v1109, %v1125
        %v1241 = vadd.f32 %v1110, %v1125
        %v1242 = vadd.f32 %v1111, %v1125
        %v1243 = vadd.f32 %v1112, %v1125
        %v1244 = vadd.f32 %v1113, %v1125
        %v1245 = vadd.f32 %v1114, %v1125
        %v1246 = vadd.f32 %v1115, %v1125
        %v1247 = vadd.f32 %v1116, %v1125
        %v1248 = vadd.f32 %v1117, %v1125
        %v1249 = vadd.f32 %v1118, %v1125
        %v1250 = vadd.f32 %v1119, %v1125
        %v1251 = vadd.f32 %v1120, %v1125
        %v1252 = vadd.f32 %v1121, %v1125
        %v1253 = vadd.f32 %v1122, %v1125
        %v1254 = vadd.f32 %v1123, %v1125
        %v1255 = vmax.f32 %v1127, 0.0
        %v1256 = vmax.f32 %v1128, 0.0
        %v1257 = vmax.f32 %v1129, 0.0
        %v1258 = vmax.f32 %v1130, 0.0
        %v1259 = vmax.f32 %v1131, 0.0
        %v1260 = vmax.f32 %v1132, 0.0
        %v1261 = vmax.f32 %v1133, 0.0
        %v1262 = vmax.f32 %v1134, 0.0
        %v1263 = vmax.f32 %v1135, 0.0
        %v1264 = vmax.f32 %v1136, 0.0
        %v1265 = vmax.f32 %v1137, 0.0
        %v1266 = vmax.f32 %v1138, 0.0
        %v1267 = vmax.f32 %v1139, 0.0
        %v1268 = vmax.f32 %v1140, 0.0
        %v1269 = vmax.f32 %v1141, 0.0
        %v1270 = vmax.f32 %v1142, 0.0
        %v1271 = vmax.f32 %v1143, 0.0
        %v1272 = vmax.f32 %v1144, 0.0
        %v1273 = vmax.f32 %v1145, 0.0
        %v1274 = vmax.f32 %v1146, 0.0
        %v1275 = vmax.f32 %v1147, 0.0
        %v1276 = vmax.f32 %v1148, 0.0
        %v1277 = vmax.f32 %v1149, 0.0
        %v1278 = vmax.f32 %v1150, 0.0
        %v1279 = vmax.f32 %v1151, 0.0
        %v1280 = vmax.f32 %v1152, 0.0
        %v1281 = vmax.f32 %v1153, 0.0
        %v1282 = vmax.f32 %v1154, 0.0
        %v1283 = vmax.f32 %v1155, 0.0
        %v1284 = vmax.f32 %v1156, 0.0
        %v1285 = vmax.f32 %v1157, 0.0
        %v1286 = vmax.f32 %v1158, 0.0
        %v1287 = vmax.f32 %v1159, 0.0
        %v1288 = vmax.f32 %v1160, 0.0
        %v1289 = vmax.f32 %v1161, 0.0
        %v1290 = vmax.f32 %v1162, 0.0
        %v1291 = vmax.f32 %v1163, 0.0
        %v1292 = vmax.f32 %v1164, 0.0
        %v1293 = vmax.f32 %v1165, 0.0
        %v1294 = vmax.f32 %v1166, 0.0
        %v1295 = vmax.f32 %v1167, 0.0
        %v1296 = vmax.f32 %v1168, 0.0
        %v1297 = vmax.f32 %v1169, 0.0
        %v1298 = vmax.f32 %v1170, 0.0
        %v1299 = vmax.f32 %v1171, 0.0
        %v1300 = vmax.f32 %v1172, 0.0
        %v1301 = vmax.f32 %v1173, 0.0
        %v1302 = vmax.f32 %v1174, 0.0
        %v1303 = vmax.f32 %v1175, 0.0
        %v1304 = vmax.f32 %v1176, 0.0
        %v1305 = vmax.f32 %v1177, 0.0
        %v1306 = vmax.f32 %v1178, 0.0
        %v1307 = vmax.f32 %v1179, 0.0
        %v1308 = vmax.f32 %v1180, 0.0
        %v1309 = vmax.f32 %v1181, 0.0
        %v1310 = vmax.f32 %v1182, 0.0
        %v1311 = vmax.f32 %v1183, 0.0
        %v1312 = vmax.f32 %v1184, 0.0
        %v1313 = vmax.f32 %v1185, 0.0
        %v1314 = vmax.f32 %v1186, 0.0
        %v1315 = vmax.f32 %v1187, 0.0
        %v1316 = vmax.f32 %v1188, 0.0
        %v1317 = vmax.f32 %v1189, 0.0
        %v1318 = vmax.f32 %v1190, 0.0
        %v1319 = vmax.f32 %v1191, 0.0
        %v1320 = vmax.f32 %v1192, 0.0
        %v1321 = vmax.f32 %v1193, 0.0
        %v1322 = vmax.f32 %v1194, 0.0
        %v1323 = vmax.f32 %v1195, 0.0
        %v1324 = vmax.f32 %v1196, 0.0
        %v1325 = vmax.f32 %v1197, 0.0
        %v1326 = vmax.f32 %v1198, 0.0
        %v1327 = vmax.f32 %v1199, 0.0
        %v1328 = vmax.f32 %v1200, 0.0
        %v1329 = vmax.f32 %v1201, 0.0
        %v1330 = vmax.f32 %v1202, 0.0
        %v1331 = vmax.f32 %v1203, 0.0
        %v1332 = vmax.f32 %v1204, 0.0
        %v1333 = vmax.f32 %v1205, 0.0
        %v1334 = vmax.f32 %v1206, 0.0
        %v1335 = vmax.f32 %v1207, 0.0
        %v1336 = vmax.f32 %v1208, 0.0
        %v1337 = vmax.f32 %v1209, 0.0
        %v1338 = vmax.f32 %v1210, 0.0
        %v1339 = vmax.f32 %v1211, 0.0
        %v1340 = vmax.f32 %v1212, 0.0
        %v1341 = vmax.f32 %v1213, 0.0
        %v1342 = vmax.f32 %v1214, 0.0
        %v1343 = vmax.f32 %v1215, 0.0
        %v1344 = vmax.f32 %v1216, 0.0
        %v1345 = vmax.f32 %v1217, 0.0
        %v1346 = vmax.f32 %v1218, 0.0
        %v1347 = vmax.f32 %v1219, 0.0
        %v1348 = vmax.f32 %v1220, 0.0
        %v1349 = vmax.f32 %v1221, 0.0
        %v1350 = vmax.f32 %v1222, 0.0
        %v1351 = vmax.f32 %v1223, 0.0
        %v1352 = vmax.f32 %v1224, 0.0
        %v1353 = vmax.f32 %v1225, 0.0
        %v1354 = vmax.f32 %v1226, 0.0
        %v1355 = vmax.f32 %v1227, 0.0
        %v1356 = vmax.f32 %v1228, 0.0
        %v1357 = vmax.f32 %v1229, 0.0
        %v1358 = vmax.f32 %v1230, 0.0
        %v1359 = vmax.f32 %v1231, 0.0
        %v1360 = vmax.f32 %v1232, 0.0
        %v1361 = vmax.f32 %v1233, 0.0
        %v1362 = vmax.f32 %v1234, 0.0
        %v1363 = vmax.f32 %v1235, 0.0
        %v1364 = vmax.f32 %v1236, 0.0
        %v1365 = vmax.f32 %v1237, 0.0
        %v1366 = vmax.f32 %v1238, 0.0
        %v1367 = vmax.f32 %v1239, 0.0
        %v1368 = vmax.f32 %v1240, 0.0
        %v1369 = vmax.f32 %v1241, 0.0
        %v1370 = vmax.f32 %v1242, 0.0
        %v1371 = vmax.f32 %v1243, 0.0
        %v1372 = vmax.f32 %v1244, 0.0
        %v1373 = vmax.f32 %v1245, 0.0
        %v1374 = vmax.f32 %v1246, 0.0
        %v1375 = vmax.f32 %v1247, 0.0
        %v1376 = vmax.f32 %v1248, 0.0
        %v1377 = vmax.f32 %v1249, 0.0
        %v1378 = vmax.f32 %v1250, 0.0
        %v1379 = vmax.f32 %v1251, 0.0
        %v1380 = vmax.f32 %v1252, 0.0
        %v1381 = vmax.f32 %v1253, 0.0
        %v1382 = vmax.f32 %v1254, 0.0
        %v1383 = vpack.c.bf16 %v1255, %v1255
        %v1384 = vpack.c.bf16 %v1256, %v1256
        %v1385 = vpack.c.bf16 %v1257, %v1257
        %v1386 = vpack.c.bf16 %v1258, %v1258
        %v1387 = vpack.c.bf16 %v1259, %v1259
        %v1388 = vpack.c.bf16 %v1260, %v1260
        %v1389 = vpack.c.bf16 %v1261, %v1261
        %v1390 = vpack.c.bf16 %v1262, %v1262
        %v1391 = vpack.c.bf16 %v1263, %v1263
        %v1392 = vpack.c.bf16 %v1264, %v1264
        %v1393 = vpack.c.bf16 %v1265, %v1265
        %v1394 = vpack.c.bf16 %v1266, %v1266
        %v1395 = vpack.c.bf16 %v1267, %v1267
        %v1396 = vpack.c.bf16 %v1268, %v1268
        %v1397 = vpack.c.bf16 %v1269, %v1269
        %v1398 = vpack.c.bf16 %v1270, %v1270
        %v1399 = vpack.c.bf16 %v1271, %v1271
        %v1400 = vpack.c.bf16 %v1272, %v1272
        %v1401 = vpack.c.bf16 %v1273, %v1273
        %v1402 = vpack.c.bf16 %v1274, %v1274
        %v1403 = vpack.c.bf16 %v1275, %v1275
        %v1404 = vpack.c.bf16 %v1276, %v1276
        %v1405 = vpack.c.bf16 %v1277, %v1277
        %v1406 = vpack.c.bf16 %v1278, %v1278
        %v1407 = vpack.c.bf16 %v1279, %v1279
        %v1408 = vpack.c.bf16 %v1280, %v1280
        %v1409 = vpack.c.bf16 %v1281, %v1281
        %v1410 = vpack.c.bf16 %v1282, %v1282
        %v1411 = vpack.c.bf16 %v1283, %v1283
        %v1412 = vpack.c.bf16 %v1284, %v1284
        %v1413 = vpack.c.bf16 %v1285, %v1285
        %v1414 = vpack.c.bf16 %v1286, %v1286
        %v1415 = vpack.c.bf16 %v1287, %v1287
        %v1416 = vpack.c.bf16 %v1288, %v1288
        %v1417 = vpack.c.bf16 %v1289, %v1289
        %v1418 = vpack.c.bf16 %v1290, %v1290
        %v1419 = vpack.c.bf16 %v1291, %v1291
        %v1420 = vpack.c.bf16 %v1292, %v1292
        %v1421 = vpack.c.bf16 %v1293, %v1293
        %v1422 = vpack.c.bf16 %v1294, %v1294
        %v1423 = vpack.c.bf16 %v1295, %v1295
        %v1424 = vpack.c.bf16 %v1296, %v1296
        %v1425 = vpack.c.bf16 %v1297, %v1297
        %v1426 = vpack.c.bf16 %v1298, %v1298
        %v1427 = vpack.c.bf16 %v1299, %v1299
        %v1428 = vpack.c.bf16 %v1300, %v1300
        %v1429 = vpack.c.bf16 %v1301, %v1301
        %v1430 = vpack.c.bf16 %v1302, %v1302
        %v1431 = vpack.c.bf16 %v1303, %v1303
        %v1432 = vpack.c.bf16 %v1304, %v1304
        %v1433 = vpack.c.bf16 %v1305, %v1305
        %v1434 = vpack.c.bf16 %v1306, %v1306
        %v1435 = vpack.c.bf16 %v1307, %v1307
        %v1436 = vpack.c.bf16 %v1308, %v1308
        %v1437 = vpack.c.bf16 %v1309, %v1309
        %v1438 = vpack.c.bf16 %v1310, %v1310
        %v1439 = vpack.c.bf16 %v1311, %v1311
        %v1440 = vpack.c.bf16 %v1312, %v1312
        %v1441 = vpack.c.bf16 %v1313, %v1313
        %v1442 = vpack.c.bf16 %v1314, %v1314
        %v1443 = vpack.c.bf16 %v1315, %v1315
        %v1444 = vpack.c.bf16 %v1316, %v1316
        %v1445 = vpack.c.bf16 %v1317, %v1317
        %v1446 = vpack.c.bf16 %v1318, %v1318
        %v1447 = vpack.c.bf16 %v1319, %v1319
        %v1448 = vpack.c.bf16 %v1320, %v1320
        %v1449 = vpack.c.bf16 %v1321, %v1321
        %v1450 = vpack.c.bf16 %v1322, %v1322
        %v1451 = vpack.c.bf16 %v1323, %v1323
        %v1452 = vpack.c.bf16 %v1324, %v1324
        %v1453 = vpack.c.bf16 %v1325, %v1325
        %v1454 = vpack.c.bf16 %v1326, %v1326
        %v1455 = vpack.c.bf16 %v1327, %v1327
        %v1456 = vpack.c.bf16 %v1328, %v1328
        %v1457 = vpack.c.bf16 %v1329, %v1329
        %v1458 = vpack.c.bf16 %v1330, %v1330
        %v1459 = vpack.c.bf16 %v1331, %v1331
        %v1460 = vpack.c.bf16 %v1332, %v1332
        %v1461 = vpack.c.bf16 %v1333, %v1333
        %v1462 = vpack.c.bf16 %v1334, %v1334
        %v1463 = vpack.c.bf16 %v1335, %v1335
        %v1464 = vpack.c.bf16 %v1336, %v1336
        %v1465 = vpack.c.bf16 %v1337, %v1337
        %v1466 = vpack.c.bf16 %v1338, %v1338
        %v1467 = vpack.c.bf16 %v1339, %v1339
        %v1468 = vpack.c.bf16 %v1340, %v1340
        %v1469 = vpack.c.bf16 %v1341, %v1341
        %v1470 = vpack.c.bf16 %v1342, %v1342
        %v1471 = vpack.c.bf16 %v1343, %v1343
        %v1472 = vpack.c.bf16 %v1344, %v1344
        %v1473 = vpack.c.bf16 %v1345, %v1345
        %v1474 = vpack.c.bf16 %v1346, %v1346
        %v1475 = vpack.c.bf16 %v1347, %v1347
        %v1476 = vpack.c.bf16 %v1348, %v1348
        %v1477 = vpack.c.bf16 %v1349, %v1349
        %v1478 = vpack.c.bf16 %v1350, %v1350
        %v1479 = vpack.c.bf16 %v1351, %v1351
        %v1480 = vpack.c.bf16 %v1352, %v1352
        %v1481 = vpack.c.bf16 %v1353, %v1353
        %v1482 = vpack.c.bf16 %v1354, %v1354
        %v1483 = vpack.c.bf16 %v1355, %v1355
        %v1484 = vpack.c.bf16 %v1356, %v1356
        %v1485 = vpack.c.bf16 %v1357, %v1357
        %v1486 = vpack.c.bf16 %v1358, %v1358
        %v1487 = vpack.c.bf16 %v1359, %v1359
        %v1488 = vpack.c.bf16 %v1360, %v1360
        %v1489 = vpack.c.bf16 %v1361, %v1361
        %v1490 = vpack.c.bf16 %v1362, %v1362
        %v1491 = vpack.c.bf16 %v1363, %v1363
        %v1492 = vpack.c.bf16 %v1364, %v1364
        %v1493 = vpack.c.bf16 %v1365, %v1365
        %v1494 = vpack.c.bf16 %v1366, %v1366
        %v1495 = vpack.c.bf16 %v1367, %v1367
        %v1496 = vpack.c.bf16 %v1368, %v1368
        %v1497 = vpack.c.bf16 %v1369, %v1369
        %v1498 = vpack.c.bf16 %v1370, %v1370
        %v1499 = vpack.c.bf16 %v1371, %v1371
        %v1500 = vpack.c.bf16 %v1372, %v1372
        %v1501 = vpack.c.bf16 %v1373, %v1373
        %v1502 = vpack.c.bf16 %v1374, %v1374
        %v1503 = vpack.c.bf16 %v1375, %v1375
        %v1504 = vpack.c.bf16 %v1376, %v1376
        %v1505 = vpack.c.bf16 %v1377, %v1377
        %v1506 = vpack.c.bf16 %v1378, %v1378
        %v1507 = vpack.c.bf16 %v1379, %v1379
        %v1508 = vpack.c.bf16 %v1380, %v1380
        %v1509 = vpack.c.bf16 %v1381, %v1381
        %v1510 = vpack.c.bf16 %v1382, %v1382
        %1511 = vst [vmem:[%s4] sm:$0xf] %v1383
        %1512 = vst [vmem:[%s4 + $0x4] sm:$0xf] %v1384
        %1513 = vst [vmem:[%s4 + $0x8] sm:$0xf] %v1385
        %1514 = vst [vmem:[%s4 + $0xc] sm:$0xf] %v1386
        %1515 = vst [vmem:[%s4 + $0x10] sm:$0xf] %v1387
        %1516 = vst [vmem:[%s4 + $0x14] sm:$0xf] %v1388
        %1517 = vst [vmem:[%s4 + $0x18] sm:$0xf] %v1389
        %1518 = vst [vmem:[%s4 + $0x1c] sm:$0xf] %v1390
        %1519 = vst [vmem:[%s4 + $0x20] sm:$0xf] %v1391
        %1520 = vst [vmem:[%s4 + $0x24] sm:$0xf] %v1392
        %1521 = vst [vmem:[%s4 + $0x28] sm:$0xf] %v1393
        %1522 = vst [vmem:[%s4 + $0x2c] sm:$0xf] %v1394
        %1523 = vst [vmem:[%s4 + $0x30] sm:$0xf] %v1395
        %1524 = vst [vmem:[%s4 + $0x34] sm:$0xf] %v1396
        %1525 = vst [vmem:[%s4 + $0x38] sm:$0xf] %v1397
        %1526 = vst [vmem:[%s4 + $0x3c] sm:$0xf] %v1398
        %1527 = vst [vmem:[%s4 + $0x40] sm:$0xf] %v1399
        %1528 = vst [vmem:[%s4 + $0x44] sm:$0xf] %v1400
        %1529 = vst [vmem:[%s4 + $0x48] sm:$0xf] %v1401
        %1530 = vst [vmem:[%s4 + $0x4c] sm:$0xf] %v1402
        %1531 = vst [vmem:[%s4 + $0x50] sm:$0xf] %v1403
        %1532 = vst [vmem:[%s4 + $0x54] sm:$0xf] %v1404
        %1533 = vst [vmem:[%s4 + $0x58] sm:$0xf] %v1405
        %1534 = vst [vmem:[%s4 + $0x5c] sm:$0xf] %v1406
        %1535 = vst [vmem:[%s4 + $0x60] sm:$0xf] %v1407
        %1536 = vst [vmem:[%s4 + $0x64] sm:$0xf] %v1408
        %1537 = vst [vmem:[%s4 + $0x68] sm:$0xf] %v1409
        %1538 = vst [vmem:[%s4 + $0x6c] sm:$0xf] %v1410
        %1539 = vst [vmem:[%s4 + $0x70] sm:$0xf] %v1411
        %1540 = vst [vmem:[%s4 + $0x74] sm:$0xf] %v1412
        %1541 = vst [vmem:[%s4 + $0x78] sm:$0xf] %v1413
        %1542 = vst [vmem:[%s4 + $0x7c] sm:$0xf] %v1414
        %1543 = vst [vmem:[%s4 + $0x80] sm:$0xf] %v1415
        %1544 = vst [vmem:[%s4 + $0x84] sm:$0xf] %v1416
        %1545 = vst [vmem:[%s4 + $0x88] sm:$0xf] %v1417
        %1546 = vst [vmem:[%s4 + $0x8c] sm:$0xf] %v1418
        %1547 = vst [vmem:[%s4 + $0x90] sm:$0xf] %v1419
        %1548 = vst [vmem:[%s4 + $0x94] sm:$0xf] %v1420
        %1549 = vst [vmem:[%s4 + $0x98] sm:$0xf] %v1421
        %1550 = vst [vmem:[%s4 + $0x9c] sm:$0xf] %v1422
        %1551 = vst [vmem:[%s4 + $0xa0] sm:$0xf] %v1423
        %1552 = vst [vmem:[%s4 + $0xa4] sm:$0xf] %v1424
        %1553 = vst [vmem:[%s4 + $0xa8] sm:$0xf] %v1425
        %1554 = vst [vmem:[%s4 + $0xac] sm:$0xf] %v1426
        %1555 = vst [vmem:[%s4 + $0xb0] sm:$0xf] %v1427
        %1556 = vst [vmem:[%s4 + $0xb4] sm:$0xf] %v1428
        %1557 = vst [vmem:[%s4 + $0xb8] sm:$0xf] %v1429
        %1558 = vst [vmem:[%s4 + $0xbc] sm:$0xf] %v1430
        %1559 = vst [vmem:[%s4 + $0xc0] sm:$0xf] %v1431
        %1560 = vst [vmem:[%s4 + $0xc4] sm:$0xf] %v1432
        %1561 = vst [vmem:[%s4 + $0xc8] sm:$0xf] %v1433
        %1562 = vst [vmem:[%s4 + $0xcc] sm:$0xf] %v1434
        %1563 = vst [vmem:[%s4 + $0xd0] sm:$0xf] %v1435
        %1564 = vst [vmem:[%s4 + $0xd4] sm:$0xf] %v1436
        %1565 = vst [vmem:[%s4 + $0xd8] sm:$0xf] %v1437
        %1566 = vst [vmem:[%s4 + $0xdc] sm:$0xf] %v1438
        %1567 = vst [vmem:[%s4 + $0xe0] sm:$0xf] %v1439
        %1568 = vst [vmem:[%s4 + $0xe4] sm:$0xf] %v1440
        %1569 = vst [vmem:[%s4 + $0xe8] sm:$0xf] %v1441
        %1570 = vst [vmem:[%s4 + $0xec] sm:$0xf] %v1442
        %1571 = vst [vmem:[%s4 + $0xf0] sm:$0xf] %v1443
        %1572 = vst [vmem:[%s4 + $0xf4] sm:$0xf] %v1444
        %1573 = vst [vmem:[%s4 + $0xf8] sm:$0xf] %v1445
        %1574 = vst [vmem:[%s4 + $0xfc] sm:$0xf] %v1446
        %1575 = vst [vmem:[%s4 + $0x100] sm:$0xf] %v1447
        %1576 = vst [vmem:[%s4 + $0x104] sm:$0xf] %v1448
        %1577 = vst [vmem:[%s4 + $0x108] sm:$0xf] %v1449
        %1578 = vst [vmem:[%s4 + $0x10c] sm:$0xf] %v1450
        %1579 = vst [vmem:[%s4 + $0x110] sm:$0xf] %v1451
        %1580 = vst [vmem:[%s4 + $0x114] sm:$0xf] %v1452
        %1581 = vst [vmem:[%s4 + $0x118] sm:$0xf] %v1453
        %1582 = vst [vmem:[%s4 + $0x11c] sm:$0xf] %v1454
        %1583 = vst [vmem:[%s4 + $0x120] sm:$0xf] %v1455
        %1584 = vst [vmem:[%s4 + $0x124] sm:$0xf] %v1456
        %1585 = vst [vmem:[%s4 + $0x128] sm:$0xf] %v1457
        %1586 = vst [vmem:[%s4 + $0x12c] sm:$0xf] %v1458
        %1587 = vst [vmem:[%s4 + $0x130] sm:$0xf] %v1459
        %1588 = vst [vmem:[%s4 + $0x134] sm:$0xf] %v1460
        %1589 = vst [vmem:[%s4 + $0x138] sm:$0xf] %v1461
        %1590 = vst [vmem:[%s4 + $0x13c] sm:$0xf] %v1462
        %1591 = vst [vmem:[%s4 + $0x140] sm:$0xf] %v1463
        %1592 = vst [vmem:[%s4 + $0x144] sm:$0xf] %v1464
        %1593 = vst [vmem:[%s4 + $0x148] sm:$0xf] %v1465
        %1594 = vst [vmem:[%s4 + $0x14c] sm:$0xf] %v1466
        %1595 = vst [vmem:[%s4 + $0x150] sm:$0xf] %v1467
        %1596 = vst [vmem:[%s4 + $0x154] sm:$0xf] %v1468
        %1597 = vst [vmem:[%s4 + $0x158] sm:$0xf] %v1469
        %1598 = vst [vmem:[%s4 + $0x15c] sm:$0xf] %v1470
        %1599 = vst [vmem:[%s4 + $0x160] sm:$0xf] %v1471
        %1600 = vst [vmem:[%s4 + $0x164] sm:$0xf] %v1472
        %1601 = vst [vmem:[%s4 + $0x168] sm:$0xf] %v1473
        %1602 = vst [vmem:[%s4 + $0x16c] sm:$0xf] %v1474
        %1603 = vst [vmem:[%s4 + $0x170] sm:$0xf] %v1475
        %1604 = vst [vmem:[%s4 + $0x174] sm:$0xf] %v1476
        %1605 = vst [vmem:[%s4 + $0x178] sm:$0xf] %v1477
        %1606 = vst [vmem:[%s4 + $0x17c] sm:$0xf] %v1478
        %1607 = vst [vmem:[%s4 + $0x180] sm:$0xf] %v1479
        %1608 = vst [vmem:[%s4 + $0x184] sm:$0xf] %v1480
        %1609 = vst [vmem:[%s4 + $0x188] sm:$0xf] %v1481
        %1610 = vst [vmem:[%s4 + $0x18c] sm:$0xf] %v1482
        %1611 = vst [vmem:[%s4 + $0x190] sm:$0xf] %v1483
        %1612 = vst [vmem:[%s4 + $0x194] sm:$0xf] %v1484
        %1613 = vst [vmem:[%s4 + $0x198] sm:$0xf] %v1485
        %1614 = vst [vmem:[%s4 + $0x19c] sm:$0xf] %v1486
        %1615 = vst [vmem:[%s4 + $0x1a0] sm:$0xf] %v1487
        %1616 = vst [vmem:[%s4 + $0x1a4] sm:$0xf] %v1488
        %1617 = vst [vmem:[%s4 + $0x1a8] sm:$0xf] %v1489
        %1618 = vst [vmem:[%s4 + $0x1ac] sm:$0xf] %v1490
        %1619 = vst [vmem:[%s4 + $0x1b0] sm:$0xf] %v1491
        %1620 = vst [vmem:[%s4 + $0x1b4] sm:$0xf] %v1492
        %1621 = vst [vmem:[%s4 + $0x1b8] sm:$0xf] %v1493
        %1622 = vst [vmem:[%s4 + $0x1bc] sm:$0xf] %v1494
        %1623 = vst [vmem:[%s4 + $0x1c0] sm:$0xf] %v1495
        %1624 = vst [vmem:[%s4 + $0x1c4] sm:$0xf] %v1496
        %1625 = vst [vmem:[%s4 + $0x1c8] sm:$0xf] %v1497
        %1626 = vst [vmem:[%s4 + $0x1cc] sm:$0xf] %v1498
        %1627 = vst [vmem:[%s4 + $0x1d0] sm:$0xf] %v1499
        %1628 = vst [vmem:[%s4 + $0x1d4] sm:$0xf] %v1500
        %1629 = vst [vmem:[%s4 + $0x1d8] sm:$0xf] %v1501
        %1630 = vst [vmem:[%s4 + $0x1dc] sm:$0xf] %v1502
        %1631 = vst [vmem:[%s4 + $0x1e0] sm:$0xf] %v1503
        %1632 = vst [vmem:[%s4 + $0x1e4] sm:$0xf] %v1504
        %1633 = vst [vmem:[%s4 + $0x1e8] sm:$0xf] %v1505
        %1634 = vst [vmem:[%s4 + $0x1ec] sm:$0xf] %v1506
        %1635 = vst [vmem:[%s4 + $0x1f0] sm:$0xf] %v1507
        %1636 = vst [vmem:[%s4 + $0x1f4] sm:$0xf] %v1508
        %1637 = vst [vmem:[%s4 + $0x1f8] sm:$0xf] %v1509
        %1638 = vst [vmem:[%s4 + $0x1fc] sm:$0xf] %v1510
      $region44: #{resnet_forward.11} parent=35 // pred_fallthru
        _
      // Predicated region
      $region45: #{resnet_forward.11} parent=35 // pred_check
        %p1639 = pneg %p117
      $region46: #{resnet_forward.11} parent=35 // pred_check_branch
        %1641 = sbr.rel (%p1639) target = $region48
      $region47: #{resnet_forward.11} parent=35 // pred_region
        _
      $region48: #{resnet_forward.11} parent=35 // pred_fallthru
        _
      // Predicated region
      $region49: #{resnet_forward.11} parent=35 // pred_check
        %p1642 = pneg %p117
      $region50: #{resnet_forward.11} parent=35 // pred_check_branch
        %1644 = sbr.rel (%p1642) target = $region52
      $region51: #{resnet_forward.11} parent=35 // pred_region
        _
      $region52: #{resnet_forward.11} parent=35 // pred_fallthru
        _
    $region36: #{resnet_forward.11} parent=5 // pred_fallthru
      _
    %p1645 = scmp.le.s32.totalorder 2, %s10
    // Predicated region
    $region53: #{resnet_forward.11} parent=5 // pred_check
      %p1646 = pneg %p1645
    $region54: #{resnet_forward.11} parent=5 // pred_check_branch
      %1648 = sbr.rel (%p1646) target = $region56
    $region55: #{resnet_forward.11} parent=5 // pred_region
      %s1649 = ssub.s32 %s10, 2
    $region56: #{resnet_forward.11} parent=5 // pred_fallthru
      _
  $region6: #{resnet_forward.11} parent=0 // loop_footer
    %s14 = sadd.s32 1, %s10
  $region7: #{resnet_forward.11} parent=0 // loop_footer_branch
    %9 = sbr.rel target = $region3
  $region8: #{resnet_forward.11} parent=0 // loop_exit
    _

// kernel: resnet_forward.12
$region0: #{resnet_forward.12}
  #allocation0 [shape = 'u32[]', space=smem, size = 0x4, offset = 0x4, fixed_abs, tag = 'smem constant byte address 0x4 - core index']
  #allocation1 [shape = 'u32[72,128]{1,0:T(1,128)}', space=vmem, size = 0x9000, scoped, tag = 'internal scratch']
  #allocation2 [shape = 'f32[4,256,128]{2,1,0:T(8,128)}', space=vmem, size = 0x80000, scoped, tag = 'scratch operand']
  #allocation3 [shape = 'f32[1,128]{1,0:T(1,128)}', space=vmem, size = 0x200, scoped, tag = 'scratch operand']
  #allocation4 [shape = 'f32[1,128]{1,0:T(1,128)}', space=vmem, size = 0x200, scoped, tag = 'scratch operand']
  %s0 = inlined_call_operand.vmem [shape: bf16[1024,256], index: 0, kind: input, shape index: {}]
  %s1 = inlined_call_operand.vmem [shape: bf16[256,128], index: 1, kind: input, shape index: {}]
  %s2 = inlined_call_operand.vmem [shape: f32[1,128], index: 2, kind: input, shape index: {}]
  %s3 = inlined_call_operand.vmem [shape: f32[1,128], index: 3, kind: input, shape index: {}]
  %s4 = inlined_call_operand.vmem [shape: bf16[4,256,128], index: 4, kind: input, shape index: {}]
  %s5 = inlined_call_operand.vmem [shape: bf16[4,256,128], index: 5, kind: output, shape index: {}]
  %s6 = sld [smem:[#allocation0]]
  $region61: #{resnet_forward.12} parent=0
    _
  %s8 = ssub.s32 1, %s6
  %s9 = scalar_select 0, %s8, %s6
  loop: start=0, step=1, limit=6
  $region2: #{resnet_forward.12} parent=0 // loop_pre_header
    _
  $region3: #{resnet_forward.12} parent=0 // loop_header
    %s11 = sphi 0, %s15
    %p12 = scmp.ge.s32.totalorder %s11, 6
    %s21 = sphi 0, %s23
    %s24 = sphi 0, %s21
    %s25 = sphi 0, %s24
    %s41 = sphi 0, %s25
    %s45 = sphi 0, %s45
    %s47 = sphi 0, %s45
    %s48 = sphi 0, %s47
    %s62 = sphi 0, %s48
    %s66 = sphi 0, %s66
    %s68 = sphi 0, %s66
    %s69 = sphi 0, %s68
    %s83 = sphi 0, %s69
    %s87 = sphi 0, %s87
    %s89 = sphi 0, %s87
    %s90 = sphi 0, %s89
    %s104 = sphi 0, %s90
    %s108 = sphi 0, %s108
    %s110 = sphi 0, %s108
    %s111 = sphi 0, %s110
    %s125 = sphi 0, %s111
    %s129 = sphi 0, %s129
    %s131 = sphi 0, %s129
    %s132 = sphi 0, %s131
    %s146 = sphi 0, %s132
  $region4: #{resnet_forward.12} parent=0 // loop_header_branch
    %14 = sbr.rel (%p12) target = $region8
  $region5: #{resnet_forward.12} parent=0 // loop_body
    %s16 = ssub.s32 %s11, 1
    %s17 = ssub.s32 %s11, 2
    %s18 = sadd.s32 %s11, 1
    %s19 = ssub.s32 %s11, %s18
    %p20 = scmp.eq.s32.totalorder %s19, 0
    %s22 = sadd.s32 %s21, 1
    %s23 = scalar_select %p20, %s21, %s22
    %p26 = pneg %p20
    %p27 = scmp.eq.s32.totalorder %s11, 3
    %p28 = por %p26, %p27
    %p29 = scmp.ne.s32.totalorder %s21, %s24
    %p30 = scmp.eq.s32.totalorder %s11, 0
    %p31 = por %p29, %p30
    %p32 = scmp.ne.s32.totalorder %s21, %s24
    %p33 = scmp.eq.s32.totalorder %s16, 3
    %p34 = por %p32, %p33
    %p35 = scmp.ne.s32.totalorder %s24, %s25
    %p36 = scmp.eq.s32.totalorder %s16, 0
    %p37 = por %p35, %p36
    %p38 = scmp.ne.s32.totalorder %s24, %s25
    %p39 = scmp.eq.s32.totalorder %s17, 3
    %p40 = por %p38, %p39
    %p42 = scmp.ne.s32.totalorder %s25, %s41
    %p43 = scmp.eq.s32.totalorder %s17, 0
    %p44 = por %p42, %p43
    %s46 = sadd.s32 %s45, 1
    %p49 = scmp.eq.s32.totalorder %s11, 3
    %p50 = scmp.ne.s32.totalorder %s45, %s47
    %p51 = scmp.eq.s32.totalorder %s11, 0
    %p52 = por %p50, %p51
    %p53 = scmp.ne.s32.totalorder %s45, %s47
    %p54 = scmp.eq.s32.totalorder %s16, 3
    %p55 = por %p53, %p54
    %p56 = scmp.ne.s32.totalorder %s47, %s48
    %p57 = scmp.eq.s32.totalorder %s16, 0
    %p58 = por %p56, %p57
    %p59 = scmp.ne.s32.totalorder %s47, %s48
    %p60 = scmp.eq.s32.totalorder %s17, 3
    %p61 = por %p59, %p60
    %p63 = scmp.ne.s32.totalorder %s48, %s62
    %p64 = scmp.eq.s32.totalorder %s17, 0
    %p65 = por %p63, %p64
    %s67 = sadd.s32 %s66, 1
    %p70 = scmp.eq.s32.totalorder %s11, 3
    %p71 = scmp.ne.s32.totalorder %s66, %s68
    %p72 = scmp.eq.s32.totalorder %s11, 0
    %p73 = por %p71, %p72
    %p74 = scmp.ne.s32.totalorder %s66, %s68
    %p75 = scmp.eq.s32.totalorder %s16, 3
    %p76 = por %p74, %p75
    %p77 = scmp.ne.s32.totalorder %s68, %s69
    %p78 = scmp.eq.s32.totalorder %s16, 0
    %p79 = por %p77, %p78
    %p80 = scmp.ne.s32.totalorder %s68, %s69
    %p81 = scmp.eq.s32.totalorder %s17, 3
    %p82 = por %p80, %p81
    %p84 = scmp.ne.s32.totalorder %s69, %s83
    %p85 = scmp.eq.s32.totalorder %s17, 0
    %p86 = por %p84, %p85
    %s88 = sadd.s32 %s87, 1
    %p91 = scmp.eq.s32.totalorder %s11, 3
    %p92 = scmp.ne.s32.totalorder %s87, %s89
    %p93 = scmp.eq.s32.totalorder %s11, 0
    %p94 = por %p92, %p93
    %p95 = scmp.ne.s32.totalorder %s87, %s89
    %p96 = scmp.eq.s32.totalorder %s16, 3
    %p97 = por %p95, %p96
    %p98 = scmp.ne.s32.totalorder %s89, %s90
    %p99 = scmp.eq.s32.totalorder %s16, 0
    %p100 = por %p98, %p99
    %p101 = scmp.ne.s32.totalorder %s89, %s90
    %p102 = scmp.eq.s32.totalorder %s17, 3
    %p103 = por %p101, %p102
    %p105 = scmp.ne.s32.totalorder %s90, %s104
    %p106 = scmp.eq.s32.totalorder %s17, 0
    %p107 = por %p105, %p106
    %s109 = sadd.s32 %s108, 1
    %p112 = scmp.eq.s32.totalorder %s11, 3
    %p113 = scmp.ne.s32.totalorder %s108, %s110
    %p114 = scmp.eq.s32.totalorder %s11, 0
    %p115 = por %p113, %p114
    %p116 = scmp.ne.s32.totalorder %s108, %s110
    %p117 = scmp.eq.s32.totalorder %s16, 3
    %p118 = por %p116, %p117
    %p119 = scmp.ne.s32.totalorder %s110, %s111
    %p120 = scmp.eq.s32.totalorder %s16, 0
    %p121 = por %p119, %p120
    %p122 = scmp.ne.s32.totalorder %s110, %s111
    %p123 = scmp.eq.s32.totalorder %s17, 3
    %p124 = por %p122, %p123
    %p126 = scmp.ne.s32.totalorder %s111, %s125
    %p127 = scmp.eq.s32.totalorder %s17, 0
    %p128 = por %p126, %p127
    %s130 = sadd.s32 %s129, 1
    %p133 = scmp.eq.s32.totalorder %s11, 3
    %p134 = scmp.ne.s32.totalorder %s129, %s131
    %p135 = scmp.eq.s32.totalorder %s11, 0
    %p136 = por %p134, %p135
    %p137 = scmp.ne.s32.totalorder %s129, %s131
    %p138 = scmp.eq.s32.totalorder %s16, 3
    %p139 = por %p137, %p138
    %p140 = scmp.ne.s32.totalorder %s131, %s132
    %p141 = scmp.eq.s32.totalorder %s16, 0
    %p142 = por %p140, %p141
    %p143 = scmp.ne.s32.totalorder %s131, %s132
    %p144 = scmp.eq.s32.totalorder %s17, 3
    %p145 = por %p143, %p144
    %p147 = scmp.ne.s32.totalorder %s132, %s146
    %p148 = scmp.eq.s32.totalorder %s17, 0
    %p149 = por %p147, %p148
    %p150 = scmp.le.s32.totalorder 1, %s11
    %p151 = scmp.lt.s32.totalorder %s11, 5
    %p152 = pnand %p150, %p151
    %p153 = pneg %p152
    // Predicated region
    $region9: #{resnet_forward.12} parent=5 // pred_check
      _
    $region10: #{resnet_forward.12} parent=5 // pred_check_branch
      %155 = sbr.rel (%p152) target = $region12
    $region11: #{resnet_forward.12} parent=5 // pred_region
      %s156 = ssub.s32 %s11, 1
      // Predicated region
      $region13: #{resnet_forward.12} parent=11 // pred_check
        %p157 = pneg %p58
      $region14: #{resnet_forward.12} parent=11 // pred_check_branch
        %159 = sbr.rel (%p157) target = $region16
      $region15: #{resnet_forward.12} parent=11 // pred_region
        _
      $region16: #{resnet_forward.12} parent=11 // pred_fallthru
        _
      // Predicated region
      $region17: #{resnet_forward.12} parent=11 // pred_check
        %p160 = pneg %p79
      $region18: #{resnet_forward.12} parent=11 // pred_check_branch
        %162 = sbr.rel (%p160) target = $region20
      $region19: #{resnet_forward.12} parent=11 // pred_region
        _
      $region20: #{resnet_forward.12} parent=11 // pred_fallthru
        _
      // Predicated region
      $region21: #{resnet_forward.12} parent=11 // pred_check
        %p163 = pneg %p100
      $region22: #{resnet_forward.12} parent=11 // pred_check_branch
        %165 = sbr.rel (%p163) target = $region24
      $region23: #{resnet_forward.12} parent=11 // pred_region
        _
      $region24: #{resnet_forward.12} parent=11 // pred_fallthru
        _
      // Predicated region
      $region25: #{resnet_forward.12} parent=11 // pred_check
        %p166 = pneg %p121
      $region26: #{resnet_forward.12} parent=11 // pred_check_branch
        %168 = sbr.rel (%p166) target = $region28
      $region27: #{resnet_forward.12} parent=11 // pred_region
        _
      $region28: #{resnet_forward.12} parent=11 // pred_fallthru
        _
    $region12: #{resnet_forward.12} parent=5 // pred_fallthru
      _
    %p169 = scmp.lt.s32.totalorder %s11, 4
    // Predicated region
    $region29: #{resnet_forward.12} parent=5 // pred_check
      %p170 = pneg %p169
    $region30: #{resnet_forward.12} parent=5 // pred_check_branch
      %172 = sbr.rel (%p170) target = $region32
    $region31: #{resnet_forward.12} parent=5 // pred_region
      // Predicated region
      $region33: #{resnet_forward.12} parent=31 // pred_check
        %p173 = pneg %p31
      $region34: #{resnet_forward.12} parent=31 // pred_check_branch
        %175 = sbr.rel (%p173) target = $region36
      $region35: #{resnet_forward.12} parent=31 // pred_region
        %s176 = smul.u32 32, %s11
        %p177 = scmp.lt.s32.totalorder %s176, 127
        %s178 = scalar_select %p177, %s176, 127
        %s179 = smul.addr %s178, 2
        %s180 = smul.addr %s179, 4
        %s181 = scalar_lea.vmem %s0, %s180
        %s182 = smul.u32 32, %s11
      $region36: #{resnet_forward.12} parent=31 // pred_fallthru
        _
    $region32: #{resnet_forward.12} parent=5 // pred_fallthru
      _
    %p183 = scmp.le.s32.totalorder 1, %s11
    %p184 = scmp.lt.s32.totalorder %s11, 5
    %p185 = pnand %p183, %p184
    %p186 = pneg %p185
    // Predicated region
    $region37: #{resnet_forward.12} parent=5 // pred_check
      _
    $region38: #{resnet_forward.12} parent=5 // pred_check_branch
      %188 = sbr.rel (%p185) target = $region40
    $region39: #{resnet_forward.12} parent=5 // pred_region
      %s189 = ssub.s32 %s11, 1
      %s190 = smul.u32 32, %s16
      %p191 = scmp.lt.s32.totalorder %s190, 127
      %s192 = scalar_select %p191, %s190, 127
      %s193 = smul.addr %s192, 2
      %s194 = smul.addr %s193, 4
      %s195 = scalar_lea.vmem %s0, %s194
      %p196 = pneg %p37
      %p197 = pneg %p34
      %p198 = pneg %p58
      %p199 = pneg %p55
      %p200 = pneg %p79
      %p201 = pneg %p76
      %p202 = pneg %p100
      %p203 = pneg %p97
      %p204 = pneg %p121
      %p205 = pneg %p118
      %p206 = pneg %p142
      %p207 = pneg %p139
      %s208 = smul.u32 32, %s16
      %p209 = scmp.lt.s32.totalorder %s208, 127
      %s210 = scalar_select %p209, %s208, 127
      %s211 = smul.addr %s210, 2
      %s212 = smul.addr %s211, 4
      %s213 = scalar_lea.vmem %s0, %s212
      %s214 = smul.u32 32, %s16
      %p215 = scmp.eq.s32.totalorder %s16, 0
      // Predicated region
      $region41: #{resnet_forward.12} parent=39 // pred_check
        %p216 = pneg %p215
      $region42: #{resnet_forward.12} parent=39 // pred_check_branch
        %218 = sbr.rel (%p216) target = $region44
      $region43: #{resnet_forward.12} parent=39 // pred_region
        %219 = vst [vmem:[#allocation3] sm:$0x1] 0.0
        %220 = vst [vmem:[#allocation4] sm:$0x1] 0.0
      $region44: #{resnet_forward.12} parent=39 // pred_fallthru
        _
      %v221 = vld [vmem:[%s213] sm:$0xff]
      %v222 = vld [vmem:[%s213 + $0x8] sm:$0xff]
      %v223 = vld [vmem:[%s213 + $0x10] sm:$0xff]
      %v224 = vld [vmem:[%s213 + $0x18] sm:$0xff]
      %v225 = vld [vmem:[%s213 + $0x20] sm:$0xff]
      %v226 = vld [vmem:[%s213 + $0x28] sm:$0xff]
      %v227 = vld [vmem:[%s213 + $0x30] sm:$0xff]
      %v228 = vld [vmem:[%s213 + $0x38] sm:$0xff]
      %v229 = vld [vmem:[%s213 + $0x40] sm:$0xff]
      %v230 = vld [vmem:[%s213 + $0x48] sm:$0xff]
      %v231 = vld [vmem:[%s213 + $0x50] sm:$0xff]
      %v232 = vld [vmem:[%s213 + $0x58] sm:$0xff]
      %v233 = vld [vmem:[%s213 + $0x60] sm:$0xff]
      %v234 = vld [vmem:[%s213 + $0x68] sm:$0xff]
      %v235 = vld [vmem:[%s213 + $0x70] sm:$0xff]
      %v236 = vld [vmem:[%s213 + $0x78] sm:$0xff]
      %v237 = vld [vmem:[%s213 + $0x80] sm:$0xff]
      %v238 = vld [vmem:[%s213 + $0x88] sm:$0xff]
      %v239 = vld [vmem:[%s213 + $0x90] sm:$0xff]
      %v240 = vld [vmem:[%s213 + $0x98] sm:$0xff]
      %v241 = vld [vmem:[%s213 + $0xa0] sm:$0xff]
      %v242 = vld [vmem:[%s213 + $0xa8] sm:$0xff]
      %v243 = vld [vmem:[%s213 + $0xb0] sm:$0xff]
      %v244 = vld [vmem:[%s213 + $0xb8] sm:$0xff]
      %v245 = vld [vmem:[%s213 + $0xc0] sm:$0xff]
      %v246 = vld [vmem:[%s213 + $0xc8] sm:$0xff]
      %v247 = vld [vmem:[%s213 + $0xd0] sm:$0xff]
      %v248 = vld [vmem:[%s213 + $0xd8] sm:$0xff]
      %v249 = vld [vmem:[%s213 + $0xe0] sm:$0xff]
      %v250 = vld [vmem:[%s213 + $0xe8] sm:$0xff]
      %v251 = vld [vmem:[%s213 + $0xf0] sm:$0xff]
      %v252 = vld [vmem:[%s213 + $0xf8] sm:$0xff]
      %v253 = vld [vmem:[%s1] sm:$0xf]
      %v254 = vld [vmem:[%s1 + $0x4] sm:$0xf]
      %v255 = vld [vmem:[%s1 + $0x8] sm:$0xf]
      %v256 = vld [vmem:[%s1 + $0xc] sm:$0xf]
      %v257 = vld [vmem:[%s1 + $0x10] sm:$0xf]
      %v258 = vld [vmem:[%s1 + $0x14] sm:$0xf]
      %v259 = vld [vmem:[%s1 + $0x18] sm:$0xf]
      %v260 = vld [vmem:[%s1 + $0x1c] sm:$0xf]
      %v261 = vld [vmem:[%s1 + $0x20] sm:$0xf]
      %v262 = vld [vmem:[%s1 + $0x24] sm:$0xf]
      %v263 = vld [vmem:[%s1 + $0x28] sm:$0xf]
      %v264 = vld [vmem:[%s1 + $0x2c] sm:$0xf]
      %v265 = vld [vmem:[%s1 + $0x30] sm:$0xf]
      %v266 = vld [vmem:[%s1 + $0x34] sm:$0xf]
      %v267 = vld [vmem:[%s1 + $0x38] sm:$0xf]
      %v268 = vld [vmem:[%s1 + $0x3c] sm:$0xf]
      %v269 = vld [vmem:[%s1 + $0x40] sm:$0xf]
      %v270 = vld [vmem:[%s1 + $0x44] sm:$0xf]
      %v271 = vld [vmem:[%s1 + $0x48] sm:$0xf]
      %v272 = vld [vmem:[%s1 + $0x4c] sm:$0xf]
      %v273 = vld [vmem:[%s1 + $0x50] sm:$0xf]
      %v274 = vld [vmem:[%s1 + $0x54] sm:$0xf]
      %v275 = vld [vmem:[%s1 + $0x58] sm:$0xf]
      %v276 = vld [vmem:[%s1 + $0x5c] sm:$0xf]
      %v277 = vld [vmem:[%s1 + $0x60] sm:$0xf]
      %v278 = vld [vmem:[%s1 + $0x64] sm:$0xf]
      %v279 = vld [vmem:[%s1 + $0x68] sm:$0xf]
      %v280 = vld [vmem:[%s1 + $0x6c] sm:$0xf]
      %v281 = vld [vmem:[%s1 + $0x70] sm:$0xf]
      %v282 = vld [vmem:[%s1 + $0x74] sm:$0xf]
      %v283 = vld [vmem:[%s1 + $0x78] sm:$0xf]
      %v284 = vld [vmem:[%s1 + $0x7c] sm:$0xf]
      %v317 = vunpack.c.l.b16 %v221
      %v318 = vunpack.c.h.b16 %v221
      %v319 = vunpack.c.l.b16 %v222
      %v320 = vunpack.c.h.b16 %v222
      %v321 = vunpack.c.l.b16 %v223
      %v322 = vunpack.c.h.b16 %v223
      %v323 = vunpack.c.l.b16 %v224
      %v324 = vunpack.c.h.b16 %v224
      %v325 = vunpack.c.l.b16 %v225
      %v326 = vunpack.c.h.b16 %v225
      %v327 = vunpack.c.l.b16 %v226
      %v328 = vunpack.c.h.b16 %v226
      %v329 = vunpack.c.l.b16 %v227
      %v330 = vunpack.c.h.b16 %v227
      %v331 = vunpack.c.l.b16 %v228
      %v332 = vunpack.c.h.b16 %v228
      %v333 = vunpack.c.l.b16 %v229
      %v334 = vunpack.c.h.b16 %v229
      %v335 = vunpack.c.l.b16 %v230
      %v336 = vunpack.c.h.b16 %v230
      %v337 = vunpack.c.l.b16 %v231
      %v338 = vunpack.c.h.b16 %v231
      %v339 = vunpack.c.l.b16 %v232
      %v340 = vunpack.c.h.b16 %v232
      %v341 = vunpack.c.l.b16 %v233
      %v342 = vunpack.c.h.b16 %v233
      %v343 = vunpack.c.l.b16 %v234
      %v344 = vunpack.c.h.b16 %v234
      %v345 = vunpack.c.l.b16 %v235
      %v346 = vunpack.c.h.b16 %v235
      %v347 = vunpack.c.l.b16 %v236
      %v348 = vunpack.c.h.b16 %v236
      %v349 = vunpack.c.l.b16 %v237
      %v350 = vunpack.c.h.b16 %v237
      %v351 = vunpack.c.l.b16 %v238
      %v352 = vunpack.c.h.b16 %v238
      %v353 = vunpack.c.l.b16 %v239
      %v354 = vunpack.c.h.b16 %v239
      %v355 = vunpack.c.l.b16 %v240
      %v356 = vunpack.c.h.b16 %v240
      %v357 = vunpack.c.l.b16 %v241
      %v358 = vunpack.c.h.b16 %v241
      %v359 = vunpack.c.l.b16 %v242
      %v360 = vunpack.c.h.b16 %v242
      %v361 = vunpack.c.l.b16 %v243
      %v362 = vunpack.c.h.b16 %v243
      %v363 = vunpack.c.l.b16 %v244
      %v364 = vunpack.c.h.b16 %v244
      %v365 = vunpack.c.l.b16 %v245
      %v366 = vunpack.c.h.b16 %v245
      %v367 = vunpack.c.l.b16 %v246
      %v368 = vunpack.c.h.b16 %v246
      %v369 = vunpack.c.l.b16 %v247
      %v370 = vunpack.c.h.b16 %v247
      %v371 = vunpack.c.l.b16 %v248
      %v372 = vunpack.c.h.b16 %v248
      %v373 = vunpack.c.l.b16 %v249
      %v374 = vunpack.c.h.b16 %v249
      %v375 = vunpack.c.l.b16 %v250
      %v376 = vunpack.c.h.b16 %v250
      %v377 = vunpack.c.l.b16 %v251
      %v378 = vunpack.c.h.b16 %v251
      %v379 = vunpack.c.l.b16 %v252
      %v380 = vunpack.c.h.b16 %v252
      %v381 = vpack.c.b16 %v319, %v317
      %v382 = vpack.c.b16 %v320, %v318
      %v383 = vpack.c.b16 %v323, %v321
      %v384 = vpack.c.b16 %v324, %v322
      %v385 = vpack.c.b16 %v327, %v325
      %v386 = vpack.c.b16 %v328, %v326
      %v387 = vpack.c.b16 %v331, %v329
      %v388 = vpack.c.b16 %v332, %v330
      %v389 = vpack.c.b16 %v335, %v333
      %v390 = vpack.c.b16 %v336, %v334
      %v391 = vpack.c.b16 %v339, %v337
      %v392 = vpack.c.b16 %v340, %v338
      %v393 = vpack.c.b16 %v343, %v341
      %v394 = vpack.c.b16 %v344, %v342
      %v395 = vpack.c.b16 %v347, %v345
      %v396 = vpack.c.b16 %v348, %v346
      %v397 = vpack.c.b16 %v351, %v349
      %v398 = vpack.c.b16 %v352, %v350
      %v399 = vpack.c.b16 %v355, %v353
      %v400 = vpack.c.b16 %v356, %v354
      %v401 = vpack.c.b16 %v359, %v357
      %v402 = vpack.c.b16 %v360, %v358
      %v403 = vpack.c.b16 %v363, %v361
      %v404 = vpack.c.b16 %v364, %v362
      %v405 = vpack.c.b16 %v367, %v365
      %v406 = vpack.c.b16 %v368, %v366
      %v407 = vpack.c.b16 %v371, %v369
      %v408 = vpack.c.b16 %v372, %v370
      %v409 = vpack.c.b16 %v375, %v373
      %v410 = vpack.c.b16 %v376, %v374
      %v411 = vpack.c.b16 %v379, %v377
      %v412 = vpack.c.b16 %v380, %v378
      %v477 = vunpack.c.l.b16 %v253
      %v478 = vunpack.c.l.b16 %v254
      %v479 = vunpack.c.l.b16 %v255
      %v480 = vunpack.c.l.b16 %v256
      %v481 = vunpack.c.l.b16 %v257
      %v482 = vunpack.c.l.b16 %v258
      %v483 = vunpack.c.l.b16 %v259
      %v484 = vunpack.c.l.b16 %v260
      %v485 = vunpack.c.l.b16 %v261
      %v486 = vunpack.c.l.b16 %v262
      %v487 = vunpack.c.l.b16 %v263
      %v488 = vunpack.c.l.b16 %v264
      %v489 = vunpack.c.l.b16 %v265
      %v490 = vunpack.c.l.b16 %v266
      %v491 = vunpack.c.l.b16 %v267
      %v492 = vunpack.c.l.b16 %v268
      %v493 = vunpack.c.l.b16 %v269
      %v494 = vunpack.c.l.b16 %v270
      %v495 = vunpack.c.l.b16 %v271
      %v496 = vunpack.c.l.b16 %v272
      %v497 = vunpack.c.l.b16 %v273
      %v498 = vunpack.c.l.b16 %v274
      %v499 = vunpack.c.l.b16 %v275
      %v500 = vunpack.c.l.b16 %v276
      %v501 = vunpack.c.l.b16 %v277
      %v502 = vunpack.c.l.b16 %v278
      %v503 = vunpack.c.l.b16 %v279
      %v504 = vunpack.c.l.b16 %v280
      %v505 = vunpack.c.l.b16 %v281
      %v506 = vunpack.c.l.b16 %v282
      %v507 = vunpack.c.l.b16 %v283
      %v508 = vunpack.c.l.b16 %v284
      %v509 = vpack.c.b16 %v478, %v477
      %v510 = vpack.c.b16 %v480, %v479
      %v511 = vpack.c.b16 %v482, %v481
      %v512 = vpack.c.b16 %v484, %v483
      %v513 = vpack.c.b16 %v486, %v485
      %v514 = vpack.c.b16 %v488, %v487
      %v515 = vpack.c.b16 %v490, %v489
      %v516 = vpack.c.b16 %v492, %v491
      %v517 = vpack.c.b16 %v494, %v493
      %v518 = vpack.c.b16 %v496, %v495
      %v519 = vpack.c.b16 %v498, %v497
      %v520 = vpack.c.b16 %v500, %v499
      %v521 = vpack.c.b16 %v502, %v501
      %v522 = vpack.c.b16 %v504, %v503
      %v523 = vpack.c.b16 %v506, %v505
      %v524 = vpack.c.b16 %v508, %v507
      %541 = vmatpush.bf16.msra.mxu0 %v516
      %542 = vmatpush.bf16.msra.mxu0 %v515
      %543 = vmatpush.bf16.msra.mxu0 %v514
      %544 = vmatpush.bf16.msra.mxu0 %v513
      %545 = vmatpush.bf16.msra.mxu0 %v512
      %546 = vmatpush.bf16.msra.mxu0 %v511
      %547 = vmatpush.bf16.msra.mxu0 %v510
      %548 = vmatpush.bf16.msra.mxu0 %v509
      %549 = vmatmul.bf16.gmra.mxu0 %v381
      %v550 = vpop.f32.mrf.mxu0
      %v551 = vadd.f32 0.0, %v550
      %v552 = vpop.f32.mrf.mxu0
      %v553 = vadd.f32 0.0, %v552
      %554 = vmatmul.bf16.gmra.mxu0 %v383
      %v555 = vpop.f32.mrf.mxu0
      %v556 = vadd.f32 0.0, %v555
      %v557 = vpop.f32.mrf.mxu0
      %v558 = vadd.f32 0.0, %v557
      %559 = vmatmul.bf16.gmra.mxu0 %v385
      %v560 = vpop.f32.mrf.mxu0
      %v561 = vadd.f32 0.0, %v560
      %v562 = vpop.f32.mrf.mxu0
      %v563 = vadd.f32 0.0, %v562
      %564 = vmatmul.bf16.gmra.mxu0 %v387
      %v565 = vpop.f32.mrf.mxu0
      %v566 = vadd.f32 0.0, %v565
      %v567 = vpop.f32.mrf.mxu0
      %v568 = vadd.f32 0.0, %v567
      %569 = vmatmul.bf16.gmra.mxu0 %v389
      %v570 = vpop.f32.mrf.mxu0
      %v571 = vadd.f32 0.0, %v570
      %v572 = vpop.f32.mrf.mxu0
      %v573 = vadd.f32 0.0, %v572
      %574 = vmatmul.bf16.gmra.mxu0 %v391
      %v575 = vpop.f32.mrf.mxu0
      %v576 = vadd.f32 0.0, %v575
      %v577 = vpop.f32.mrf.mxu0
      %v578 = vadd.f32 0.0, %v577
      %579 = vmatmul.bf16.gmra.mxu0 %v393
      %v580 = vpop.f32.mrf.mxu0
      %v581 = vadd.f32 0.0, %v580
      %v582 = vpop.f32.mrf.mxu0
      %v583 = vadd.f32 0.0, %v582
      %584 = vmatmul.bf16.gmra.mxu0 %v395
      %v585 = vpop.f32.mrf.mxu0
      %v586 = vadd.f32 0.0, %v585
      %v587 = vpop.f32.mrf.mxu0
      %v588 = vadd.f32 0.0, %v587
      %589 = vmatmul.bf16.gmra.mxu0 %v397
      %v590 = vpop.f32.mrf.mxu0
      %v591 = vadd.f32 0.0, %v590
      %v592 = vpop.f32.mrf.mxu0
      %v593 = vadd.f32 0.0, %v592
      %594 = vmatmul.bf16.gmra.mxu0 %v399
      %v595 = vpop.f32.mrf.mxu0
      %v596 = vadd.f32 0.0, %v595
      %v597 = vpop.f32.mrf.mxu0
      %v598 = vadd.f32 0.0, %v597
      %599 = vmatmul.bf16.gmra.mxu0 %v401
      %v600 = vpop.f32.mrf.mxu0
      %v601 = vadd.f32 0.0, %v600
      %v602 = vpop.f32.mrf.mxu0
      %v603 = vadd.f32 0.0, %v602
      %604 = vmatmul.bf16.gmra.mxu0 %v403
      %v605 = vpop.f32.mrf.mxu0
      %v606 = vadd.f32 0.0, %v605
      %v607 = vpop.f32.mrf.mxu0
      %v608 = vadd.f32 0.0, %v607
      %609 = vmatmul.bf16.gmra.mxu0 %v405
      %v610 = vpop.f32.mrf.mxu0
      %v611 = vadd.f32 0.0, %v610
      %v612 = vpop.f32.mrf.mxu0
      %v613 = vadd.f32 0.0, %v612
      %614 = vmatmul.bf16.gmra.mxu0 %v407
      %v615 = vpop.f32.mrf.mxu0
      %v616 = vadd.f32 0.0, %v615
      %v617 = vpop.f32.mrf.mxu0
      %v618 = vadd.f32 0.0, %v617
      %619 = vmatmul.bf16.gmra.mxu0 %v409
      %v620 = vpop.f32.mrf.mxu0
      %v621 = vadd.f32 0.0, %v620
      %v622 = vpop.f32.mrf.mxu0
      %v623 = vadd.f32 0.0, %v622
      %624 = vmatmul.bf16.gmra.mxu0 %v411
      %v625 = vpop.f32.mrf.mxu0
      %v626 = vadd.f32 0.0, %v625
      %v627 = vpop.f32.mrf.mxu0
      %v628 = vadd.f32 0.0, %v627
      %629 = vdwg.mxu0
      %630 = vmatpush.bf16.msra.mxu0 %v524
      %631 = vmatpush.bf16.msra.mxu0 %v523
      %632 = vmatpush.bf16.msra.mxu0 %v522
      %633 = vmatpush.bf16.msra.mxu0 %v521
      %634 = vmatpush.bf16.msra.mxu0 %v520
      %635 = vmatpush.bf16.msra.mxu0 %v519
      %636 = vmatpush.bf16.msra.mxu0 %v518
      %637 = vmatpush.bf16.msra.mxu0 %v517
      %638 = vmatmul.bf16.gmra.mxu0 %v382
      %v639 = vpop.f32.mrf.mxu0
      %v640 = vadd.f32 %v551, %v639
      %v641 = vpop.f32.mrf.mxu0
      %v642 = vadd.f32 %v553, %v641
      %643 = vmatmul.bf16.gmra.mxu0 %v384
      %v644 = vpop.f32.mrf.mxu0
      %v645 = vadd.f32 %v556, %v644
      %v646 = vpop.f32.mrf.mxu0
      %v647 = vadd.f32 %v558, %v646
      %648 = vmatmul.bf16.gmra.mxu0 %v386
      %v649 = vpop.f32.mrf.mxu0
      %v650 = vadd.f32 %v561, %v649
      %v651 = vpop.f32.mrf.mxu0
      %v652 = vadd.f32 %v563, %v651
      %653 = vmatmul.bf16.gmra.mxu0 %v388
      %v654 = vpop.f32.mrf.mxu0
      %v655 = vadd.f32 %v566, %v654
      %v656 = vpop.f32.mrf.mxu0
      %v657 = vadd.f32 %v568, %v656
      %658 = vmatmul.bf16.gmra.mxu0 %v390
      %v659 = vpop.f32.mrf.mxu0
      %v660 = vadd.f32 %v571, %v659
      %v661 = vpop.f32.mrf.mxu0
      %v662 = vadd.f32 %v573, %v661
      %663 = vmatmul.bf16.gmra.mxu0 %v392
      %v664 = vpop.f32.mrf.mxu0
      %v665 = vadd.f32 %v576, %v664
      %v666 = vpop.f32.mrf.mxu0
      %v667 = vadd.f32 %v578, %v666
      %668 = vmatmul.bf16.gmra.mxu0 %v394
      %v669 = vpop.f32.mrf.mxu0
      %v670 = vadd.f32 %v581, %v669
      %v671 = vpop.f32.mrf.mxu0
      %v672 = vadd.f32 %v583, %v671
      %673 = vmatmul.bf16.gmra.mxu0 %v396
      %v674 = vpop.f32.mrf.mxu0
      %v675 = vadd.f32 %v586, %v674
      %v676 = vpop.f32.mrf.mxu0
      %v677 = vadd.f32 %v588, %v676
      %678 = vmatmul.bf16.gmra.mxu0 %v398
      %v679 = vpop.f32.mrf.mxu0
      %v680 = vadd.f32 %v591, %v679
      %v681 = vpop.f32.mrf.mxu0
      %v682 = vadd.f32 %v593, %v681
      %683 = vmatmul.bf16.gmra.mxu0 %v400
      %v684 = vpop.f32.mrf.mxu0
      %v685 = vadd.f32 %v596, %v684
      %v686 = vpop.f32.mrf.mxu0
      %v687 = vadd.f32 %v598, %v686
      %688 = vmatmul.bf16.gmra.mxu0 %v402
      %v689 = vpop.f32.mrf.mxu0
      %v690 = vadd.f32 %v601, %v689
      %v691 = vpop.f32.mrf.mxu0
      %v692 = vadd.f32 %v603, %v691
      %693 = vmatmul.bf16.gmra.mxu0 %v404
      %v694 = vpop.f32.mrf.mxu0
      %v695 = vadd.f32 %v606, %v694
      %v696 = vpop.f32.mrf.mxu0
      %v697 = vadd.f32 %v608, %v696
      %698 = vmatmul.bf16.gmra.mxu0 %v406
      %v699 = vpop.f32.mrf.mxu0
      %v700 = vadd.f32 %v611, %v699
      %v701 = vpop.f32.mrf.mxu0
      %v702 = vadd.f32 %v613, %v701
      %703 = vmatmul.bf16.gmra.mxu0 %v408
      %v704 = vpop.f32.mrf.mxu0
      %v705 = vadd.f32 %v616, %v704
      %v706 = vpop.f32.mrf.mxu0
      %v707 = vadd.f32 %v618, %v706
      %708 = vmatmul.bf16.gmra.mxu0 %v410
      %v709 = vpop.f32.mrf.mxu0
      %v710 = vadd.f32 %v621, %v709
      %v711 = vpop.f32.mrf.mxu0
      %v712 = vadd.f32 %v623, %v711
      %713 = vmatmul.bf16.gmra.mxu0 %v412
      %v714 = vpop.f32.mrf.mxu0
      %v715 = vadd.f32 %v626, %v714
      %v716 = vpop.f32.mrf.mxu0
      %v717 = vadd.f32 %v628, %v716
      %718 = vdwg.mxu0
      %s719 = smul.u32 %s16, 256
      %s720 = scalar_lea.vmem [#allocation2], %s719
      %721 = vst [vmem:[%s720] sm:$0xff] %v640
      %722 = vst [vmem:[%s720 + $0x8] sm:$0xff] %v642
      %723 = vst [vmem:[%s720 + $0x10] sm:$0xff] %v645
      %724 = vst [vmem:[%s720 + $0x18] sm:$0xff] %v647
      %725 = vst [vmem:[%s720 + $0x20] sm:$0xff] %v650
      %726 = vst [vmem:[%s720 + $0x28] sm:$0xff] %v652
      %727 = vst [vmem:[%s720 + $0x30] sm:$0xff] %v655
      %728 = vst [vmem:[%s720 + $0x38] sm:$0xff] %v657
      %729 = vst [vmem:[%s720 + $0x40] sm:$0xff] %v660
      %730 = vst [vmem:[%s720 + $0x48] sm:$0xff] %v662
      %731 = vst [vmem:[%s720 + $0x50] sm:$0xff] %v665
      %732 = vst [vmem:[%s720 + $0x58] sm:$0xff] %v667
      %733 = vst [vmem:[%s720 + $0x60] sm:$0xff] %v670
      %734 = vst [vmem:[%s720 + $0x68] sm:$0xff] %v672
      %735 = vst [vmem:[%s720 + $0x70] sm:$0xff] %v675
      %736 = vst [vmem:[%s720 + $0x78] sm:$0xff] %v677
      %737 = vst [vmem:[%s720 + $0x80] sm:$0xff] %v680
      %738 = vst [vmem:[%s720 + $0x88] sm:$0xff] %v682
      %739 = vst [vmem:[%s720 + $0x90] sm:$0xff] %v685
      %740 = vst [vmem:[%s720 + $0x98] sm:$0xff] %v687
      %741 = vst [vmem:[%s720 + $0xa0] sm:$0xff] %v690
      %742 = vst [vmem:[%s720 + $0xa8] sm:$0xff] %v692
      %743 = vst [vmem:[%s720 + $0xb0] sm:$0xff] %v695
      %744 = vst [vmem:[%s720 + $0xb8] sm:$0xff] %v697
      %745 = vst [vmem:[%s720 + $0xc0] sm:$0xff] %v700
      %746 = vst [vmem:[%s720 + $0xc8] sm:$0xff] %v702
      %747 = vst [vmem:[%s720 + $0xd0] sm:$0xff] %v705
      %748 = vst [vmem:[%s720 + $0xd8] sm:$0xff] %v707
      %749 = vst [vmem:[%s720 + $0xe0] sm:$0xff] %v710
      %750 = vst [vmem:[%s720 + $0xe8] sm:$0xff] %v712
      %751 = vst [vmem:[%s720 + $0xf0] sm:$0xff] %v715
      %752 = vst [vmem:[%s720 + $0xf8] sm:$0xff] %v717
      %v753 = vld [vmem:[#allocation3] sm:$0x1]
      %v754 = vadd.f32 %v640, %v642
      %v755 = vadd.f32 %v754, %v645
      %v756 = vadd.f32 %v755, %v647
      %v757 = vadd.f32 %v756, %v650
      %v758 = vadd.f32 %v757, %v652
      %v759 = vadd.f32 %v758, %v655
      %v760 = vadd.f32 %v759, %v657
      %v761 = vadd.f32 %v760, %v660
      %v762 = vadd.f32 %v761, %v662
      %v763 = vadd.f32 %v762, %v665
      %v764 = vadd.f32 %v763, %v667
      %v765 = vadd.f32 %v764, %v670
      %v766 = vadd.f32 %v765, %v672
      %v767 = vadd.f32 %v766, %v675
      %v768 = vadd.f32 %v767, %v677
      %v769 = vadd.f32 %v768, %v680
      %v770 = vadd.f32 %v769, %v682
      %v771 = vadd.f32 %v770, %v685
      %v772 = vadd.f32 %v771, %v687
      %v773 = vadd.f32 %v772, %v690
      %v774 = vadd.f32 %v773, %v692
      %v775 = vadd.f32 %v774, %v695
      %v776 = vadd.f32 %v775, %v697
      %v777 = vadd.f32 %v776, %v700
      %v778 = vadd.f32 %v777, %v702
      %v779 = vadd.f32 %v778, %v705
      %v780 = vadd.f32 %v779, %v707
      %v781 = vadd.f32 %v780, %v710
      %v782 = vadd.f32 %v781, %v712
      %v783 = vadd.f32 %v782, %v715
      %v784 = vadd.f32 %v783, %v717
      %v785 = vrot.slane %v784, 4
      %v786 = vadd.f32 %v784, %v785
      %v787 = vrot.slane %v786, 2
      %v788 = vadd.f32 %v786, %v787
      %v789 = vrot.slane %v788, 1
      %v790 = vadd.f32 %v788, %v789
      %v791 = vadd.f32 %v753, %v790
      %792 = vst [vmem:[#allocation3] sm:$0x1] %v791
      %v793 = vld [vmem:[#allocation4] sm:$0x1]
      %v794 = vmul.f32 %v640, %v640
      %v795 = vmul.f32 %v642, %v642
      %v796 = vmul.f32 %v645, %v645
      %v797 = vmul.f32 %v647, %v647
      %v798 = vmul.f32 %v650, %v650
      %v799 = vmul.f32 %v652, %v652
      %v800 = vmul.f32 %v655, %v655
      %v801 = vmul.f32 %v657, %v657
      %v802 = vmul.f32 %v660, %v660
      %v803 = vmul.f32 %v662, %v662
      %v804 = vmul.f32 %v665, %v665
      %v805 = vmul.f32 %v667, %v667
      %v806 = vmul.f32 %v670, %v670
      %v807 = vmul.f32 %v672, %v672
      %v808 = vmul.f32 %v675, %v675
      %v809 = vmul.f32 %v677, %v677
      %v810 = vmul.f32 %v680, %v680
      %v811 = vmul.f32 %v682, %v682
      %v812 = vmul.f32 %v685, %v685
      %v813 = vmul.f32 %v687, %v687
      %v814 = vmul.f32 %v690, %v690
      %v815 = vmul.f32 %v692, %v692
      %v816 = vmul.f32 %v695, %v695
      %v817 = vmul.f32 %v697, %v697
      %v818 = vmul.f32 %v700, %v700
      %v819 = vmul.f32 %v702, %v702
      %v820 = vmul.f32 %v705, %v705
      %v821 = vmul.f32 %v707, %v707
      %v822 = vmul.f32 %v710, %v710
      %v823 = vmul.f32 %v712, %v712
      %v824 = vmul.f32 %v715, %v715
      %v825 = vmul.f32 %v717, %v717
      %v826 = vadd.f32 %v794, %v795
      %v827 = vadd.f32 %v826, %v796
      %v828 = vadd.f32 %v827, %v797
      %v829 = vadd.f32 %v828, %v798
      %v830 = vadd.f32 %v829, %v799
      %v831 = vadd.f32 %v830, %v800
      %v832 = vadd.f32 %v831, %v801
      %v833 = vadd.f32 %v832, %v802
      %v834 = vadd.f32 %v833, %v803
      %v835 = vadd.f32 %v834, %v804
      %v836 = vadd.f32 %v835, %v805
      %v837 = vadd.f32 %v836, %v806
      %v838 = vadd.f32 %v837, %v807
      %v839 = vadd.f32 %v838, %v808
      %v840 = vadd.f32 %v839, %v809
      %v841 = vadd.f32 %v840, %v810
      %v842 = vadd.f32 %v841, %v811
      %v843 = vadd.f32 %v842, %v812
      %v844 = vadd.f32 %v843, %v813
      %v845 = vadd.f32 %v844, %v814
      %v846 = vadd.f32 %v845, %v815
      %v847 = vadd.f32 %v846, %v816
      %v848 = vadd.f32 %v847, %v817
      %v849 = vadd.f32 %v848, %v818
      %v850 = vadd.f32 %v849, %v819
      %v851 = vadd.f32 %v850, %v820
      %v852 = vadd.f32 %v851, %v821
      %v853 = vadd.f32 %v852, %v822
      %v854 = vadd.f32 %v853, %v823
      %v855 = vadd.f32 %v854, %v824
      %v856 = vadd.f32 %v855, %v825
      %v857 = vrot.slane %v856, 4
      %v858 = vadd.f32 %v856, %v857
      %v859 = vrot.slane %v858, 2
      %v860 = vadd.f32 %v858, %v859
      %v861 = vrot.slane %v860, 1
      %v862 = vadd.f32 %v860, %v861
      %v863 = vadd.f32 %v793, %v862
      %864 = vst [vmem:[#allocation4] sm:$0x1] %v863
      %p865 = scmp.eq.s32.totalorder %s16, 3
      // Predicated region
      $region45: #{resnet_forward.12} parent=39 // pred_check
        %p866 = pneg %p865
      $region46: #{resnet_forward.12} parent=39 // pred_check_branch
        %868 = sbr.rel (%p866) target = $region48
      $region47: #{resnet_forward.12} parent=39 // pred_region
        %v869 = vld [vmem:[#allocation3] sm:$0x1]
        %v870 = vmul.f32 %v869, 0.0009765625
        %v871 = vld [vmem:[#allocation4] sm:$0x1]
        %v872 = vmul.f32 %v871, 0.0009765625
        %v873 = vmul.f32 %v870, %v870
        %v874 = vsub.f32 %v872, %v873
        %v875 = vmax.f32 %v874, 0.0
        %v876 = vadd.f32 %v875, 1e-05
        %v877 = vrsqrt.pop %v876
        %v878 = vmul.f32 %v877, %v876
        %v879 = vmul.f32 %v878, %v877
        %v880 = vmul.f32 0.5, %v879
        %v881 = vsub.f32 1.5, %v880
        %v882 = vmul.f32 %v877, %v881
        %vm883 = vweird.f32 %v876
        %vm884 = vweird.f32 %v877
        %vm885 = vmor %vm883, %vm884
        %v886 = vsel %vm885, %v877, %v882
        %v887 = vld [vmem:[%s2] sm:$0x1]
        %v888 = vmul.f32 %v886, %v887
        %v889 = vld [vmem:[%s3] sm:$0x1]
        %v890 = vmul.f32 %v870, %v888
        %v891 = vsub.f32 %v889, %v890
        %v892 = vld [vmem:[#allocation2] sm:$0xff]
        %v893 = vld [vmem:[#allocation2 + $0x8] sm:$0xff]
        %v894 = vld [vmem:[#allocation2 + $0x10] sm:$0xff]
        %v895 = vld [vmem:[#allocation2 + $0x18] sm:$0xff]
        %v896 = vld [vmem:[#allocation2 + $0x20] sm:$0xff]
        %v897 = vld [vmem:[#allocation2 + $0x28] sm:$0xff]
        %v898 = vld [vmem:[#allocation2 + $0x30] sm:$0xff]
        %v899 = vld [vmem:[#allocation2 + $0x38] sm:$0xff]
        %v900 = vld [vmem:[#allocation2 + $0x40] sm:$0xff]
        %v901 = vld [vmem:[#allocation2 + $0x48] sm:$0xff]
        %v902 = vld [vmem:[#allocation2 + $0x50] sm:$0xff]
        %v903 = vld [vmem:[#allocation2 + $0x58] sm:$0xff]
        %v904 = vld [vmem:[#allocation2 + $0x60] sm:$0xff]
        %v905 = vld [vmem:[#allocation2 + $0x68] sm:$0xff]
        %v906 = vld [vmem:[#allocation2 + $0x70] sm:$0xff]
        %v907 = vld [vmem:[#allocation2 + $0x78] sm:$0xff]
        %v908 = vld [vmem:[#allocation2 + $0x80] sm:$0xff]
        %v909 = vld [vmem:[#allocation2 + $0x88] sm:$0xff]
        %v910 = vld [vmem:[#allocation2 + $0x90] sm:$0xff]
        %v911 = vld [vmem:[#allocation2 + $0x98] sm:$0xff]
        %v912 = vld [vmem:[#allocation2 + $0xa0] sm:$0xff]
        %v913 = vld [vmem:[#allocation2 + $0xa8] sm:$0xff]
        %v914 = vld [vmem:[#allocation2 + $0xb0] sm:$0xff]
        %v915 = vld [vmem:[#allocation2 + $0xb8] sm:$0xff]
        %v916 = vld [vmem:[#allocation2 + $0xc0] sm:$0xff]
        %v917 = vld [vmem:[#allocation2 + $0xc8] sm:$0xff]
        %v918 = vld [vmem:[#allocation2 + $0xd0] sm:$0xff]
        %v919 = vld [vmem:[#allocation2 + $0xd8] sm:$0xff]
        %v920 = vld [vmem:[#allocation2 + $0xe0] sm:$0xff]
        %v921 = vld [vmem:[#allocation2 + $0xe8] sm:$0xff]
        %v922 = vld [vmem:[#allocation2 + $0xf0] sm:$0xff]
        %v923 = vld [vmem:[#allocation2 + $0xf8] sm:$0xff]
        %v924 = vld [vmem:[#allocation2 + $0x100] sm:$0xff]
        %v925 = vld [vmem:[#allocation2 + $0x108] sm:$0xff]
        %v926 = vld [vmem:[#allocation2 + $0x110] sm:$0xff]
        %v927 = vld [vmem:[#allocation2 + $0x118] sm:$0xff]
        %v928 = vld [vmem:[#allocation2 + $0x120] sm:$0xff]
        %v929 = vld [vmem:[#allocation2 + $0x128] sm:$0xff]
        %v930 = vld [vmem:[#allocation2 + $0x130] sm:$0xff]
        %v931 = vld [vmem:[#allocation2 + $0x138] sm:$0xff]
        %v932 = vld [vmem:[#allocation2 + $0x140] sm:$0xff]
        %v933 = vld [vmem:[#allocation2 + $0x148] sm:$0xff]
        %v934 = vld [vmem:[#allocation2 + $0x150] sm:$0xff]
        %v935 = vld [vmem:[#allocation2 + $0x158] sm:$0xff]
        %v936 = vld [vmem:[#allocation2 + $0x160] sm:$0xff]
        %v937 = vld [vmem:[#allocation2 + $0x168] sm:$0xff]
        %v938 = vld [vmem:[#allocation2 + $0x170] sm:$0xff]
        %v939 = vld [vmem:[#allocation2 + $0x178] sm:$0xff]
        %v940 = vld [vmem:[#allocation2 + $0x180] sm:$0xff]
        %v941 = vld [vmem:[#allocation2 + $0x188] sm:$0xff]
        %v942 = vld [vmem:[#allocation2 + $0x190] sm:$0xff]
        %v943 = vld [vmem:[#allocation2 + $0x198] sm:$0xff]
        %v944 = vld [vmem:[#allocation2 + $0x1a0] sm:$0xff]
        %v945 = vld [vmem:[#allocation2 + $0x1a8] sm:$0xff]
        %v946 = vld [vmem:[#allocation2 + $0x1b0] sm:$0xff]
        %v947 = vld [vmem:[#allocation2 + $0x1b8] sm:$0xff]
        %v948 = vld [vmem:[#allocation2 + $0x1c0] sm:$0xff]
        %v949 = vld [vmem:[#allocation2 + $0x1c8] sm:$0xff]
        %v950 = vld [vmem:[#allocation2 + $0x1d0] sm:$0xff]
        %v951 = vld [vmem:[#allocation2 + $0x1d8] sm:$0xff]
        %v952 = vld [vmem:[#allocation2 + $0x1e0] sm:$0xff]
        %v953 = vld [vmem:[#allocation2 + $0x1e8] sm:$0xff]
        %v954 = vld [vmem:[#allocation2 + $0x1f0] sm:$0xff]
        %v955 = vld [vmem:[#allocation2 + $0x1f8] sm:$0xff]
        %v956 = vld [vmem:[#allocation2 + $0x200] sm:$0xff]
        %v957 = vld [vmem:[#allocation2 + $0x208] sm:$0xff]
        %v958 = vld [vmem:[#allocation2 + $0x210] sm:$0xff]
        %v959 = vld [vmem:[#allocation2 + $0x218] sm:$0xff]
        %v960 = vld [vmem:[#allocation2 + $0x220] sm:$0xff]
        %v961 = vld [vmem:[#allocation2 + $0x228] sm:$0xff]
        %v962 = vld [vmem:[#allocation2 + $0x230] sm:$0xff]
        %v963 = vld [vmem:[#allocation2 + $0x238] sm:$0xff]
        %v964 = vld [vmem:[#allocation2 + $0x240] sm:$0xff]
        %v965 = vld [vmem:[#allocation2 + $0x248] sm:$0xff]
        %v966 = vld [vmem:[#allocation2 + $0x250] sm:$0xff]
        %v967 = vld [vmem:[#allocation2 + $0x258] sm:$0xff]
        %v968 = vld [vmem:[#allocation2 + $0x260] sm:$0xff]
        %v969 = vld [vmem:[#allocation2 + $0x268] sm:$0xff]
        %v970 = vld [vmem:[#allocation2 + $0x270] sm:$0xff]
        %v971 = vld [vmem:[#allocation2 + $0x278] sm:$0xff]
        %v972 = vld [vmem:[#allocation2 + $0x280] sm:$0xff]
        %v973 = vld [vmem:[#allocation2 + $0x288] sm:$0xff]
        %v974 = vld [vmem:[#allocation2 + $0x290] sm:$0xff]
        %v975 = vld [vmem:[#allocation2 + $0x298] sm:$0xff]
        %v976 = vld [vmem:[#allocation2 + $0x2a0] sm:$0xff]
        %v977 = vld [vmem:[#allocation2 + $0x2a8] sm:$0xff]
        %v978 = vld [vmem:[#allocation2 + $0x2b0] sm:$0xff]
        %v979 = vld [vmem:[#allocation2 + $0x2b8] sm:$0xff]
        %v980 = vld [vmem:[#allocation2 + $0x2c0] sm:$0xff]
        %v981 = vld [vmem:[#allocation2 + $0x2c8] sm:$0xff]
        %v982 = vld [vmem:[#allocation2 + $0x2d0] sm:$0xff]
        %v983 = vld [vmem:[#allocation2 + $0x2d8] sm:$0xff]
        %v984 = vld [vmem:[#allocation2 + $0x2e0] sm:$0xff]
        %v985 = vld [vmem:[#allocation2 + $0x2e8] sm:$0xff]
        %v986 = vld [vmem:[#allocation2 + $0x2f0] sm:$0xff]
        %v987 = vld [vmem:[#allocation2 + $0x2f8] sm:$0xff]
        %v988 = vld [vmem:[#allocation2 + $0x300] sm:$0xff]
        %v989 = vld [vmem:[#allocation2 + $0x308] sm:$0xff]
        %v990 = vld [vmem:[#allocation2 + $0x310] sm:$0xff]
        %v991 = vld [vmem:[#allocation2 + $0x318] sm:$0xff]
        %v992 = vld [vmem:[#allocation2 + $0x320] sm:$0xff]
        %v993 = vld [vmem:[#allocation2 + $0x328] sm:$0xff]
        %v994 = vld [vmem:[#allocation2 + $0x330] sm:$0xff]
        %v995 = vld [vmem:[#allocation2 + $0x338] sm:$0xff]
        %v996 = vld [vmem:[#allocation2 + $0x340] sm:$0xff]
        %v997 = vld [vmem:[#allocation2 + $0x348] sm:$0xff]
        %v998 = vld [vmem:[#allocation2 + $0x350] sm:$0xff]
        %v999 = vld [vmem:[#allocation2 + $0x358] sm:$0xff]
        %v1000 = vld [vmem:[#allocation2 + $0x360] sm:$0xff]
        %v1001 = vld [vmem:[#allocation2 + $0x368] sm:$0xff]
        %v1002 = vld [vmem:[#allocation2 + $0x370] sm:$0xff]
        %v1003 = vld [vmem:[#allocation2 + $0x378] sm:$0xff]
        %v1004 = vld [vmem:[#allocation2 + $0x380] sm:$0xff]
        %v1005 = vld [vmem:[#allocation2 + $0x388] sm:$0xff]
        %v1006 = vld [vmem:[#allocation2 + $0x390] sm:$0xff]
        %v1007 = vld [vmem:[#allocation2 + $0x398] sm:$0xff]
        %v1008 = vld [vmem:[#allocation2 + $0x3a0] sm:$0xff]
        %v1009 = vld [vmem:[#allocation2 + $0x3a8] sm:$0xff]
        %v1010 = vld [vmem:[#allocation2 + $0x3b0] sm:$0xff]
        %v1011 = vld [vmem:[#allocation2 + $0x3b8] sm:$0xff]
        %v1012 = vld [vmem:[#allocation2 + $0x3c0] sm:$0xff]
        %v1013 = vld [vmem:[#allocation2 + $0x3c8] sm:$0xff]
        %v1014 = vld [vmem:[#allocation2 + $0x3d0] sm:$0xff]
        %v1015 = vld [vmem:[#allocation2 + $0x3d8] sm:$0xff]
        %v1016 = vld [vmem:[#allocation2 + $0x3e0] sm:$0xff]
        %v1017 = vld [vmem:[#allocation2 + $0x3e8] sm:$0xff]
        %v1018 = vld [vmem:[#allocation2 + $0x3f0] sm:$0xff]
        %v1019 = vld [vmem:[#allocation2 + $0x3f8] sm:$0xff]
        %v1021 = vperm.slane %v888, 0
        %v1023 = vmul.f32 %v892, %v1021
        %v1024 = vmul.f32 %v893, %v1021
        %v1025 = vmul.f32 %v894, %v1021
        %v1026 = vmul.f32 %v895, %v1021
        %v1027 = vmul.f32 %v896, %v1021
        %v1028 = vmul.f32 %v897, %v1021
        %v1029 = vmul.f32 %v898, %v1021
        %v1030 = vmul.f32 %v899, %v1021
        %v1031 = vmul.f32 %v900, %v1021
        %v1032 = vmul.f32 %v901, %v1021
        %v1033 = vmul.f32 %v902, %v1021
        %v1034 = vmul.f32 %v903, %v1021
        %v1035 = vmul.f32 %v904, %v1021
        %v1036 = vmul.f32 %v905, %v1021
        %v1037 = vmul.f32 %v906, %v1021
        %v1038 = vmul.f32 %v907, %v1021
        %v1039 = vmul.f32 %v908, %v1021
        %v1040 = vmul.f32 %v909, %v1021
        %v1041 = vmul.f32 %v910, %v1021
        %v1042 = vmul.f32 %v911, %v1021
        %v1043 = vmul.f32 %v912, %v1021
        %v1044 = vmul.f32 %v913, %v1021
        %v1045 = vmul.f32 %v914, %v1021
        %v1046 = vmul.f32 %v915, %v1021
        %v1047 = vmul.f32 %v916, %v1021
        %v1048 = vmul.f32 %v917, %v1021
        %v1049 = vmul.f32 %v918, %v1021
        %v1050 = vmul.f32 %v919, %v1021
        %v1051 = vmul.f32 %v920, %v1021
        %v1052 = vmul.f32 %v921, %v1021
        %v1053 = vmul.f32 %v922, %v1021
        %v1054 = vmul.f32 %v923, %v1021
        %v1055 = vmul.f32 %v924, %v1021
        %v1056 = vmul.f32 %v925, %v1021
        %v1057 = vmul.f32 %v926, %v1021
        %v1058 = vmul.f32 %v927, %v1021
        %v1059 = vmul.f32 %v928, %v1021
        %v1060 = vmul.f32 %v929, %v1021
        %v1061 = vmul.f32 %v930, %v1021
        %v1062 = vmul.f32 %v931, %v1021
        %v1063 = vmul.f32 %v932, %v1021
        %v1064 = vmul.f32 %v933, %v1021
        %v1065 = vmul.f32 %v934, %v1021
        %v1066 = vmul.f32 %v935, %v1021
        %v1067 = vmul.f32 %v936, %v1021
        %v1068 = vmul.f32 %v937, %v1021
        %v1069 = vmul.f32 %v938, %v1021
        %v1070 = vmul.f32 %v939, %v1021
        %v1071 = vmul.f32 %v940, %v1021
        %v1072 = vmul.f32 %v941, %v1021
        %v1073 = vmul.f32 %v942, %v1021
        %v1074 = vmul.f32 %v943, %v1021
        %v1075 = vmul.f32 %v944, %v1021
        %v1076 = vmul.f32 %v945, %v1021
        %v1077 = vmul.f32 %v946, %v1021
        %v1078 = vmul.f32 %v947, %v1021
        %v1079 = vmul.f32 %v948, %v1021
        %v1080 = vmul.f32 %v949, %v1021
        %v1081 = vmul.f32 %v950, %v1021
        %v1082 = vmul.f32 %v951, %v1021
        %v1083 = vmul.f32 %v952, %v1021
        %v1084 = vmul.f32 %v953, %v1021
        %v1085 = vmul.f32 %v954, %v1021
        %v1086 = vmul.f32 %v955, %v1021
        %v1087 = vmul.f32 %v956, %v1021
        %v1088 = vmul.f32 %v957, %v1021
        %v1089 = vmul.f32 %v958, %v1021
        %v1090 = vmul.f32 %v959, %v1021
        %v1091 = vmul.f32 %v960, %v1021
        %v1092 = vmul.f32 %v961, %v1021
        %v1093 = vmul.f32 %v962, %v1021
        %v1094 = vmul.f32 %v963, %v1021
        %v1095 = vmul.f32 %v964, %v1021
        %v1096 = vmul.f32 %v965, %v1021
        %v1097 = vmul.f32 %v966, %v1021
        %v1098 = vmul.f32 %v967, %v1021
        %v1099 = vmul.f32 %v968, %v1021
        %v1100 = vmul.f32 %v969, %v1021
        %v1101 = vmul.f32 %v970, %v1021
        %v1102 = vmul.f32 %v971, %v1021
        %v1103 = vmul.f32 %v972, %v1021
        %v1104 = vmul.f32 %v973, %v1021
        %v1105 = vmul.f32 %v974, %v1021
        %v1106 = vmul.f32 %v975, %v1021
        %v1107 = vmul.f32 %v976, %v1021
        %v1108 = vmul.f32 %v977, %v1021
        %v1109 = vmul.f32 %v978, %v1021
        %v1110 = vmul.f32 %v979, %v1021
        %v1111 = vmul.f32 %v980, %v1021
        %v1112 = vmul.f32 %v981, %v1021
        %v1113 = vmul.f32 %v982, %v1021
        %v1114 = vmul.f32 %v983, %v1021
        %v1115 = vmul.f32 %v984, %v1021
        %v1116 = vmul.f32 %v985, %v1021
        %v1117 = vmul.f32 %v986, %v1021
        %v1118 = vmul.f32 %v987, %v1021
        %v1119 = vmul.f32 %v988, %v1021
        %v1120 = vmul.f32 %v989, %v1021
        %v1121 = vmul.f32 %v990, %v1021
        %v1122 = vmul.f32 %v991, %v1021
        %v1123 = vmul.f32 %v992, %v1021
        %v1124 = vmul.f32 %v993, %v1021
        %v1125 = vmul.f32 %v994, %v1021
        %v1126 = vmul.f32 %v995, %v1021
        %v1127 = vmul.f32 %v996, %v1021
        %v1128 = vmul.f32 %v997, %v1021
        %v1129 = vmul.f32 %v998, %v1021
        %v1130 = vmul.f32 %v999, %v1021
        %v1131 = vmul.f32 %v1000, %v1021
        %v1132 = vmul.f32 %v1001, %v1021
        %v1133 = vmul.f32 %v1002, %v1021
        %v1134 = vmul.f32 %v1003, %v1021
        %v1135 = vmul.f32 %v1004, %v1021
        %v1136 = vmul.f32 %v1005, %v1021
        %v1137 = vmul.f32 %v1006, %v1021
        %v1138 = vmul.f32 %v1007, %v1021
        %v1139 = vmul.f32 %v1008, %v1021
        %v1140 = vmul.f32 %v1009, %v1021
        %v1141 = vmul.f32 %v1010, %v1021
        %v1142 = vmul.f32 %v1011, %v1021
        %v1143 = vmul.f32 %v1012, %v1021
        %v1144 = vmul.f32 %v1013, %v1021
        %v1145 = vmul.f32 %v1014, %v1021
        %v1146 = vmul.f32 %v1015, %v1021
        %v1147 = vmul.f32 %v1016, %v1021
        %v1148 = vmul.f32 %v1017, %v1021
        %v1149 = vmul.f32 %v1018, %v1021
        %v1150 = vmul.f32 %v1019, %v1021
        %v1152 = vperm.slane %v891, 0
        %v1154 = vadd.f32 %v1023, %v1152
        %v1155 = vadd.f32 %v1024, %v1152
        %v1156 = vadd.f32 %v1025, %v1152
        %v1157 = vadd.f32 %v1026, %v1152
        %v1158 = vadd.f32 %v1027, %v1152
        %v1159 = vadd.f32 %v1028, %v1152
        %v1160 = vadd.f32 %v1029, %v1152
        %v1161 = vadd.f32 %v1030, %v1152
        %v1162 = vadd.f32 %v1031, %v1152
        %v1163 = vadd.f32 %v1032, %v1152
        %v1164 = vadd.f32 %v1033, %v1152
        %v1165 = vadd.f32 %v1034, %v1152
        %v1166 = vadd.f32 %v1035, %v1152
        %v1167 = vadd.f32 %v1036, %v1152
        %v1168 = vadd.f32 %v1037, %v1152
        %v1169 = vadd.f32 %v1038, %v1152
        %v1170 = vadd.f32 %v1039, %v1152
        %v1171 = vadd.f32 %v1040, %v1152
        %v1172 = vadd.f32 %v1041, %v1152
        %v1173 = vadd.f32 %v1042, %v1152
        %v1174 = vadd.f32 %v1043, %v1152
        %v1175 = vadd.f32 %v1044, %v1152
        %v1176 = vadd.f32 %v1045, %v1152
        %v1177 = vadd.f32 %v1046, %v1152
        %v1178 = vadd.f32 %v1047, %v1152
        %v1179 = vadd.f32 %v1048, %v1152
        %v1180 = vadd.f32 %v1049, %v1152
        %v1181 = vadd.f32 %v1050, %v1152
        %v1182 = vadd.f32 %v1051, %v1152
        %v1183 = vadd.f32 %v1052, %v1152
        %v1184 = vadd.f32 %v1053, %v1152
        %v1185 = vadd.f32 %v1054, %v1152
        %v1186 = vadd.f32 %v1055, %v1152
        %v1187 = vadd.f32 %v1056, %v1152
        %v1188 = vadd.f32 %v1057, %v1152
        %v1189 = vadd.f32 %v1058, %v1152
        %v1190 = vadd.f32 %v1059, %v1152
        %v1191 = vadd.f32 %v1060, %v1152
        %v1192 = vadd.f32 %v1061, %v1152
        %v1193 = vadd.f32 %v1062, %v1152
        %v1194 = vadd.f32 %v1063, %v1152
        %v1195 = vadd.f32 %v1064, %v1152
        %v1196 = vadd.f32 %v1065, %v1152
        %v1197 = vadd.f32 %v1066, %v1152
        %v1198 = vadd.f32 %v1067, %v1152
        %v1199 = vadd.f32 %v1068, %v1152
        %v1200 = vadd.f32 %v1069, %v1152
        %v1201 = vadd.f32 %v1070, %v1152
        %v1202 = vadd.f32 %v1071, %v1152
        %v1203 = vadd.f32 %v1072, %v1152
        %v1204 = vadd.f32 %v1073, %v1152
        %v1205 = vadd.f32 %v1074, %v1152
        %v1206 = vadd.f32 %v1075, %v1152
        %v1207 = vadd.f32 %v1076, %v1152
        %v1208 = vadd.f32 %v1077, %v1152
        %v1209 = vadd.f32 %v1078, %v1152
        %v1210 = vadd.f32 %v1079, %v1152
        %v1211 = vadd.f32 %v1080, %v1152
        %v1212 = vadd.f32 %v1081, %v1152
        %v1213 = vadd.f32 %v1082, %v1152
        %v1214 = vadd.f32 %v1083, %v1152
        %v1215 = vadd.f32 %v1084, %v1152
        %v1216 = vadd.f32 %v1085, %v1152
        %v1217 = vadd.f32 %v1086, %v1152
        %v1218 = vadd.f32 %v1087, %v1152
        %v1219 = vadd.f32 %v1088, %v1152
        %v1220 = vadd.f32 %v1089, %v1152
        %v1221 = vadd.f32 %v1090, %v1152
        %v1222 = vadd.f32 %v1091, %v1152
        %v1223 = vadd.f32 %v1092, %v1152
        %v1224 = vadd.f32 %v1093, %v1152
        %v1225 = vadd.f32 %v1094, %v1152
        %v1226 = vadd.f32 %v1095, %v1152
        %v1227 = vadd.f32 %v1096, %v1152
        %v1228 = vadd.f32 %v1097, %v1152
        %v1229 = vadd.f32 %v1098, %v1152
        %v1230 = vadd.f32 %v1099, %v1152
        %v1231 = vadd.f32 %v1100, %v1152
        %v1232 = vadd.f32 %v1101, %v1152
        %v1233 = vadd.f32 %v1102, %v1152
        %v1234 = vadd.f32 %v1103, %v1152
        %v1235 = vadd.f32 %v1104, %v1152
        %v1236 = vadd.f32 %v1105, %v1152
        %v1237 = vadd.f32 %v1106, %v1152
        %v1238 = vadd.f32 %v1107, %v1152
        %v1239 = vadd.f32 %v1108, %v1152
        %v1240 = vadd.f32 %v1109, %v1152
        %v1241 = vadd.f32 %v1110, %v1152
        %v1242 = vadd.f32 %v1111, %v1152
        %v1243 = vadd.f32 %v1112, %v1152
        %v1244 = vadd.f32 %v1113, %v1152
        %v1245 = vadd.f32 %v1114, %v1152
        %v1246 = vadd.f32 %v1115, %v1152
        %v1247 = vadd.f32 %v1116, %v1152
        %v1248 = vadd.f32 %v1117, %v1152
        %v1249 = vadd.f32 %v1118, %v1152
        %v1250 = vadd.f32 %v1119, %v1152
        %v1251 = vadd.f32 %v1120, %v1152
        %v1252 = vadd.f32 %v1121, %v1152
        %v1253 = vadd.f32 %v1122, %v1152
        %v1254 = vadd.f32 %v1123, %v1152
        %v1255 = vadd.f32 %v1124, %v1152
        %v1256 = vadd.f32 %v1125, %v1152
        %v1257 = vadd.f32 %v1126, %v1152
        %v1258 = vadd.f32 %v1127, %v1152
        %v1259 = vadd.f32 %v1128, %v1152
        %v1260 = vadd.f32 %v1129, %v1152
        %v1261 = vadd.f32 %v1130, %v1152
        %v1262 = vadd.f32 %v1131, %v1152
        %v1263 = vadd.f32 %v1132, %v1152
        %v1264 = vadd.f32 %v1133, %v1152
        %v1265 = vadd.f32 %v1134, %v1152
        %v1266 = vadd.f32 %v1135, %v1152
        %v1267 = vadd.f32 %v1136, %v1152
        %v1268 = vadd.f32 %v1137, %v1152
        %v1269 = vadd.f32 %v1138, %v1152
        %v1270 = vadd.f32 %v1139, %v1152
        %v1271 = vadd.f32 %v1140, %v1152
        %v1272 = vadd.f32 %v1141, %v1152
        %v1273 = vadd.f32 %v1142, %v1152
        %v1274 = vadd.f32 %v1143, %v1152
        %v1275 = vadd.f32 %v1144, %v1152
        %v1276 = vadd.f32 %v1145, %v1152
        %v1277 = vadd.f32 %v1146, %v1152
        %v1278 = vadd.f32 %v1147, %v1152
        %v1279 = vadd.f32 %v1148, %v1152
        %v1280 = vadd.f32 %v1149, %v1152
        %v1281 = vadd.f32 %v1150, %v1152
        %v1282 = vld [vmem:[%s4] sm:$0xf]
        %v1283 = vld [vmem:[%s4 + $0x4] sm:$0xf]
        %v1284 = vld [vmem:[%s4 + $0x8] sm:$0xf]
        %v1285 = vld [vmem:[%s4 + $0xc] sm:$0xf]
        %v1286 = vld [vmem:[%s4 + $0x10] sm:$0xf]
        %v1287 = vld [vmem:[%s4 + $0x14] sm:$0xf]
        %v1288 = vld [vmem:[%s4 + $0x18] sm:$0xf]
        %v1289 = vld [vmem:[%s4 + $0x1c] sm:$0xf]
        %v1290 = vld [vmem:[%s4 + $0x20] sm:$0xf]
        %v1291 = vld [vmem:[%s4 + $0x24] sm:$0xf]
        %v1292 = vld [vmem:[%s4 + $0x28] sm:$0xf]
        %v1293 = vld [vmem:[%s4 + $0x2c] sm:$0xf]
        %v1294 = vld [vmem:[%s4 + $0x30] sm:$0xf]
        %v1295 = vld [vmem:[%s4 + $0x34] sm:$0xf]
        %v1296 = vld [vmem:[%s4 + $0x38] sm:$0xf]
        %v1297 = vld [vmem:[%s4 + $0x3c] sm:$0xf]
        %v1298 = vld [vmem:[%s4 + $0x40] sm:$0xf]
        %v1299 = vld [vmem:[%s4 + $0x44] sm:$0xf]
        %v1300 = vld [vmem:[%s4 + $0x48] sm:$0xf]
        %v1301 = vld [vmem:[%s4 + $0x4c] sm:$0xf]
        %v1302 = vld [vmem:[%s4 + $0x50] sm:$0xf]
        %v1303 = vld [vmem:[%s4 + $0x54] sm:$0xf]
        %v1304 = vld [vmem:[%s4 + $0x58] sm:$0xf]
        %v1305 = vld [vmem:[%s4 + $0x5c] sm:$0xf]
        %v1306 = vld [vmem:[%s4 + $0x60] sm:$0xf]
        %v1307 = vld [vmem:[%s4 + $0x64] sm:$0xf]
        %v1308 = vld [vmem:[%s4 + $0x68] sm:$0xf]
        %v1309 = vld [vmem:[%s4 + $0x6c] sm:$0xf]
        %v1310 = vld [vmem:[%s4 + $0x70] sm:$0xf]
        %v1311 = vld [vmem:[%s4 + $0x74] sm:$0xf]
        %v1312 = vld [vmem:[%s4 + $0x78] sm:$0xf]
        %v1313 = vld [vmem:[%s4 + $0x7c] sm:$0xf]
        %v1314 = vld [vmem:[%s4 + $0x80] sm:$0xf]
        %v1315 = vld [vmem:[%s4 + $0x84] sm:$0xf]
        %v1316 = vld [vmem:[%s4 + $0x88] sm:$0xf]
        %v1317 = vld [vmem:[%s4 + $0x8c] sm:$0xf]
        %v1318 = vld [vmem:[%s4 + $0x90] sm:$0xf]
        %v1319 = vld [vmem:[%s4 + $0x94] sm:$0xf]
        %v1320 = vld [vmem:[%s4 + $0x98] sm:$0xf]
        %v1321 = vld [vmem:[%s4 + $0x9c] sm:$0xf]
        %v1322 = vld [vmem:[%s4 + $0xa0] sm:$0xf]
        %v1323 = vld [vmem:[%s4 + $0xa4] sm:$0xf]
        %v1324 = vld [vmem:[%s4 + $0xa8] sm:$0xf]
        %v1325 = vld [vmem:[%s4 + $0xac] sm:$0xf]
        %v1326 = vld [vmem:[%s4 + $0xb0] sm:$0xf]
        %v1327 = vld [vmem:[%s4 + $0xb4] sm:$0xf]
        %v1328 = vld [vmem:[%s4 + $0xb8] sm:$0xf]
        %v1329 = vld [vmem:[%s4 + $0xbc] sm:$0xf]
        %v1330 = vld [vmem:[%s4 + $0xc0] sm:$0xf]
        %v1331 = vld [vmem:[%s4 + $0xc4] sm:$0xf]
        %v1332 = vld [vmem:[%s4 + $0xc8] sm:$0xf]
        %v1333 = vld [vmem:[%s4 + $0xcc] sm:$0xf]
        %v1334 = vld [vmem:[%s4 + $0xd0] sm:$0xf]
        %v1335 = vld [vmem:[%s4 + $0xd4] sm:$0xf]
        %v1336 = vld [vmem:[%s4 + $0xd8] sm:$0xf]
        %v1337 = vld [vmem:[%s4 + $0xdc] sm:$0xf]
        %v1338 = vld [vmem:[%s4 + $0xe0] sm:$0xf]
        %v1339 = vld [vmem:[%s4 + $0xe4] sm:$0xf]
        %v1340 = vld [vmem:[%s4 + $0xe8] sm:$0xf]
        %v1341 = vld [vmem:[%s4 + $0xec] sm:$0xf]
        %v1342 = vld [vmem:[%s4 + $0xf0] sm:$0xf]
        %v1343 = vld [vmem:[%s4 + $0xf4] sm:$0xf]
        %v1344 = vld [vmem:[%s4 + $0xf8] sm:$0xf]
        %v1345 = vld [vmem:[%s4 + $0xfc] sm:$0xf]
        %v1346 = vld [vmem:[%s4 + $0x100] sm:$0xf]
        %v1347 = vld [vmem:[%s4 + $0x104] sm:$0xf]
        %v1348 = vld [vmem:[%s4 + $0x108] sm:$0xf]
        %v1349 = vld [vmem:[%s4 + $0x10c] sm:$0xf]
        %v1350 = vld [vmem:[%s4 + $0x110] sm:$0xf]
        %v1351 = vld [vmem:[%s4 + $0x114] sm:$0xf]
        %v1352 = vld [vmem:[%s4 + $0x118] sm:$0xf]
        %v1353 = vld [vmem:[%s4 + $0x11c] sm:$0xf]
        %v1354 = vld [vmem:[%s4 + $0x120] sm:$0xf]
        %v1355 = vld [vmem:[%s4 + $0x124] sm:$0xf]
        %v1356 = vld [vmem:[%s4 + $0x128] sm:$0xf]
        %v1357 = vld [vmem:[%s4 + $0x12c] sm:$0xf]
        %v1358 = vld [vmem:[%s4 + $0x130] sm:$0xf]
        %v1359 = vld [vmem:[%s4 + $0x134] sm:$0xf]
        %v1360 = vld [vmem:[%s4 + $0x138] sm:$0xf]
        %v1361 = vld [vmem:[%s4 + $0x13c] sm:$0xf]
        %v1362 = vld [vmem:[%s4 + $0x140] sm:$0xf]
        %v1363 = vld [vmem:[%s4 + $0x144] sm:$0xf]
        %v1364 = vld [vmem:[%s4 + $0x148] sm:$0xf]
        %v1365 = vld [vmem:[%s4 + $0x14c] sm:$0xf]
        %v1366 = vld [vmem:[%s4 + $0x150] sm:$0xf]
        %v1367 = vld [vmem:[%s4 + $0x154] sm:$0xf]
        %v1368 = vld [vmem:[%s4 + $0x158] sm:$0xf]
        %v1369 = vld [vmem:[%s4 + $0x15c] sm:$0xf]
        %v1370 = vld [vmem:[%s4 + $0x160] sm:$0xf]
        %v1371 = vld [vmem:[%s4 + $0x164] sm:$0xf]
        %v1372 = vld [vmem:[%s4 + $0x168] sm:$0xf]
        %v1373 = vld [vmem:[%s4 + $0x16c] sm:$0xf]
        %v1374 = vld [vmem:[%s4 + $0x170] sm:$0xf]
        %v1375 = vld [vmem:[%s4 + $0x174] sm:$0xf]
        %v1376 = vld [vmem:[%s4 + $0x178] sm:$0xf]
        %v1377 = vld [vmem:[%s4 + $0x17c] sm:$0xf]
        %v1378 = vld [vmem:[%s4 + $0x180] sm:$0xf]
        %v1379 = vld [vmem:[%s4 + $0x184] sm:$0xf]
        %v1380 = vld [vmem:[%s4 + $0x188] sm:$0xf]
        %v1381 = vld [vmem:[%s4 + $0x18c] sm:$0xf]
        %v1382 = vld [vmem:[%s4 + $0x190] sm:$0xf]
        %v1383 = vld [vmem:[%s4 + $0x194] sm:$0xf]
        %v1384 = vld [vmem:[%s4 + $0x198] sm:$0xf]
        %v1385 = vld [vmem:[%s4 + $0x19c] sm:$0xf]
        %v1386 = vld [vmem:[%s4 + $0x1a0] sm:$0xf]
        %v1387 = vld [vmem:[%s4 + $0x1a4] sm:$0xf]
        %v1388 = vld [vmem:[%s4 + $0x1a8] sm:$0xf]
        %v1389 = vld [vmem:[%s4 + $0x1ac] sm:$0xf]
        %v1390 = vld [vmem:[%s4 + $0x1b0] sm:$0xf]
        %v1391 = vld [vmem:[%s4 + $0x1b4] sm:$0xf]
        %v1392 = vld [vmem:[%s4 + $0x1b8] sm:$0xf]
        %v1393 = vld [vmem:[%s4 + $0x1bc] sm:$0xf]
        %v1394 = vld [vmem:[%s4 + $0x1c0] sm:$0xf]
        %v1395 = vld [vmem:[%s4 + $0x1c4] sm:$0xf]
        %v1396 = vld [vmem:[%s4 + $0x1c8] sm:$0xf]
        %v1397 = vld [vmem:[%s4 + $0x1cc] sm:$0xf]
        %v1398 = vld [vmem:[%s4 + $0x1d0] sm:$0xf]
        %v1399 = vld [vmem:[%s4 + $0x1d4] sm:$0xf]
        %v1400 = vld [vmem:[%s4 + $0x1d8] sm:$0xf]
        %v1401 = vld [vmem:[%s4 + $0x1dc] sm:$0xf]
        %v1402 = vld [vmem:[%s4 + $0x1e0] sm:$0xf]
        %v1403 = vld [vmem:[%s4 + $0x1e4] sm:$0xf]
        %v1404 = vld [vmem:[%s4 + $0x1e8] sm:$0xf]
        %v1405 = vld [vmem:[%s4 + $0x1ec] sm:$0xf]
        %v1406 = vld [vmem:[%s4 + $0x1f0] sm:$0xf]
        %v1407 = vld [vmem:[%s4 + $0x1f4] sm:$0xf]
        %v1408 = vld [vmem:[%s4 + $0x1f8] sm:$0xf]
        %v1409 = vld [vmem:[%s4 + $0x1fc] sm:$0xf]
        %v1410 = vunpack.c.l.bf16 %v1282
        %v1411 = vunpack.c.l.bf16 %v1283
        %v1412 = vunpack.c.l.bf16 %v1284
        %v1413 = vunpack.c.l.bf16 %v1285
        %v1414 = vunpack.c.l.bf16 %v1286
        %v1415 = vunpack.c.l.bf16 %v1287
        %v1416 = vunpack.c.l.bf16 %v1288
        %v1417 = vunpack.c.l.bf16 %v1289
        %v1418 = vunpack.c.l.bf16 %v1290
        %v1419 = vunpack.c.l.bf16 %v1291
        %v1420 = vunpack.c.l.bf16 %v1292
        %v1421 = vunpack.c.l.bf16 %v1293
        %v1422 = vunpack.c.l.bf16 %v1294
        %v1423 = vunpack.c.l.bf16 %v1295
        %v1424 = vunpack.c.l.bf16 %v1296
        %v1425 = vunpack.c.l.bf16 %v1297
        %v1426 = vunpack.c.l.bf16 %v1298
        %v1427 = vunpack.c.l.bf16 %v1299
        %v1428 = vunpack.c.l.bf16 %v1300
        %v1429 = vunpack.c.l.bf16 %v1301
        %v1430 = vunpack.c.l.bf16 %v1302
        %v1431 = vunpack.c.l.bf16 %v1303
        %v1432 = vunpack.c.l.bf16 %v1304
        %v1433 = vunpack.c.l.bf16 %v1305
        %v1434 = vunpack.c.l.bf16 %v1306
        %v1435 = vunpack.c.l.bf16 %v1307
        %v1436 = vunpack.c.l.bf16 %v1308
        %v1437 = vunpack.c.l.bf16 %v1309
        %v1438 = vunpack.c.l.bf16 %v1310
        %v1439 = vunpack.c.l.bf16 %v1311
        %v1440 = vunpack.c.l.bf16 %v1312
        %v1441 = vunpack.c.l.bf16 %v1313
        %v1442 = vunpack.c.l.bf16 %v1314
        %v1443 = vunpack.c.l.bf16 %v1315
        %v1444 = vunpack.c.l.bf16 %v1316
        %v1445 = vunpack.c.l.bf16 %v1317
        %v1446 = vunpack.c.l.bf16 %v1318
        %v1447 = vunpack.c.l.bf16 %v1319
        %v1448 = vunpack.c.l.bf16 %v1320
        %v1449 = vunpack.c.l.bf16 %v1321
        %v1450 = vunpack.c.l.bf16 %v1322
        %v1451 = vunpack.c.l.bf16 %v1323
        %v1452 = vunpack.c.l.bf16 %v1324
        %v1453 = vunpack.c.l.bf16 %v1325
        %v1454 = vunpack.c.l.bf16 %v1326
        %v1455 = vunpack.c.l.bf16 %v1327
        %v1456 = vunpack.c.l.bf16 %v1328
        %v1457 = vunpack.c.l.bf16 %v1329
        %v1458 = vunpack.c.l.bf16 %v1330
        %v1459 = vunpack.c.l.bf16 %v1331
        %v1460 = vunpack.c.l.bf16 %v1332
        %v1461 = vunpack.c.l.bf16 %v1333
        %v1462 = vunpack.c.l.bf16 %v1334
        %v1463 = vunpack.c.l.bf16 %v1335
        %v1464 = vunpack.c.l.bf16 %v1336
        %v1465 = vunpack.c.l.bf16 %v1337
        %v1466 = vunpack.c.l.bf16 %v1338
        %v1467 = vunpack.c.l.bf16 %v1339
        %v1468 = vunpack.c.l.bf16 %v1340
        %v1469 = vunpack.c.l.bf16 %v1341
        %v1470 = vunpack.c.l.bf16 %v1342
        %v1471 = vunpack.c.l.bf16 %v1343
        %v1472 = vunpack.c.l.bf16 %v1344
        %v1473 = vunpack.c.l.bf16 %v1345
        %v1474 = vunpack.c.l.bf16 %v1346
        %v1475 = vunpack.c.l.bf16 %v1347
        %v1476 = vunpack.c.l.bf16 %v1348
        %v1477 = vunpack.c.l.bf16 %v1349
        %v1478 = vunpack.c.l.bf16 %v1350
        %v1479 = vunpack.c.l.bf16 %v1351
        %v1480 = vunpack.c.l.bf16 %v1352
        %v1481 = vunpack.c.l.bf16 %v1353
        %v1482 = vunpack.c.l.bf16 %v1354
        %v1483 = vunpack.c.l.bf16 %v1355
        %v1484 = vunpack.c.l.bf16 %v1356
        %v1485 = vunpack.c.l.bf16 %v1357
        %v1486 = vunpack.c.l.bf16 %v1358
        %v1487 = vunpack.c.l.bf16 %v1359
        %v1488 = vunpack.c.l.bf16 %v1360
        %v1489 = vunpack.c.l.bf16 %v1361
        %v1490 = vunpack.c.l.bf16 %v1362
        %v1491 = vunpack.c.l.bf16 %v1363
        %v1492 = vunpack.c.l.bf16 %v1364
        %v1493 = vunpack.c.l.bf16 %v1365
        %v1494 = vunpack.c.l.bf16 %v1366
        %v1495 = vunpack.c.l.bf16 %v1367
        %v1496 = vunpack.c.l.bf16 %v1368
        %v1497 = vunpack.c.l.bf16 %v1369
        %v1498 = vunpack.c.l.bf16 %v1370
        %v1499 = vunpack.c.l.bf16 %v1371
        %v1500 = vunpack.c.l.bf16 %v1372
        %v1501 = vunpack.c.l.bf16 %v1373
        %v1502 = vunpack.c.l.bf16 %v1374
        %v1503 = vunpack.c.l.bf16 %v1375
        %v1504 = vunpack.c.l.bf16 %v1376
        %v1505 = vunpack.c.l.bf16 %v1377
        %v1506 = vunpack.c.l.bf16 %v1378
        %v1507 = vunpack.c.l.bf16 %v1379
        %v1508 = vunpack.c.l.bf16 %v1380
        %v1509 = vunpack.c.l.bf16 %v1381
        %v1510 = vunpack.c.l.bf16 %v1382
        %v1511 = vunpack.c.l.bf16 %v1383
        %v1512 = vunpack.c.l.bf16 %v1384
        %v1513 = vunpack.c.l.bf16 %v1385
        %v1514 = vunpack.c.l.bf16 %v1386
        %v1515 = vunpack.c.l.bf16 %v1387
        %v1516 = vunpack.c.l.bf16 %v1388
        %v1517 = vunpack.c.l.bf16 %v1389
        %v1518 = vunpack.c.l.bf16 %v1390
        %v1519 = vunpack.c.l.bf16 %v1391
        %v1520 = vunpack.c.l.bf16 %v1392
        %v1521 = vunpack.c.l.bf16 %v1393
        %v1522 = vunpack.c.l.bf16 %v1394
        %v1523 = vunpack.c.l.bf16 %v1395
        %v1524 = vunpack.c.l.bf16 %v1396
        %v1525 = vunpack.c.l.bf16 %v1397
        %v1526 = vunpack.c.l.bf16 %v1398
        %v1527 = vunpack.c.l.bf16 %v1399
        %v1528 = vunpack.c.l.bf16 %v1400
        %v1529 = vunpack.c.l.bf16 %v1401
        %v1530 = vunpack.c.l.bf16 %v1402
        %v1531 = vunpack.c.l.bf16 %v1403
        %v1532 = vunpack.c.l.bf16 %v1404
        %v1533 = vunpack.c.l.bf16 %v1405
        %v1534 = vunpack.c.l.bf16 %v1406
        %v1535 = vunpack.c.l.bf16 %v1407
        %v1536 = vunpack.c.l.bf16 %v1408
        %v1537 = vunpack.c.l.bf16 %v1409
        %v1538 = vadd.f32 %v1154, %v1410
        %v1539 = vadd.f32 %v1155, %v1411
        %v1540 = vadd.f32 %v1156, %v1412
        %v1541 = vadd.f32 %v1157, %v1413
        %v1542 = vadd.f32 %v1158, %v1414
        %v1543 = vadd.f32 %v1159, %v1415
        %v1544 = vadd.f32 %v1160, %v1416
        %v1545 = vadd.f32 %v1161, %v1417
        %v1546 = vadd.f32 %v1162, %v1418
        %v1547 = vadd.f32 %v1163, %v1419
        %v1548 = vadd.f32 %v1164, %v1420
        %v1549 = vadd.f32 %v1165, %v1421
        %v1550 = vadd.f32 %v1166, %v1422
        %v1551 = vadd.f32 %v1167, %v1423
        %v1552 = vadd.f32 %v1168, %v1424
        %v1553 = vadd.f32 %v1169, %v1425
        %v1554 = vadd.f32 %v1170, %v1426
        %v1555 = vadd.f32 %v1171, %v1427
        %v1556 = vadd.f32 %v1172, %v1428
        %v1557 = vadd.f32 %v1173, %v1429
        %v1558 = vadd.f32 %v1174, %v1430
        %v1559 = vadd.f32 %v1175, %v1431
        %v1560 = vadd.f32 %v1176, %v1432
        %v1561 = vadd.f32 %v1177, %v1433
        %v1562 = vadd.f32 %v1178, %v1434
        %v1563 = vadd.f32 %v1179, %v1435
        %v1564 = vadd.f32 %v1180, %v1436
        %v1565 = vadd.f32 %v1181, %v1437
        %v1566 = vadd.f32 %v1182, %v1438
        %v1567 = vadd.f32 %v1183, %v1439
        %v1568 = vadd.f32 %v1184, %v1440
        %v1569 = vadd.f32 %v1185, %v1441
        %v1570 = vadd.f32 %v1186, %v1442
        %v1571 = vadd.f32 %v1187, %v1443
        %v1572 = vadd.f32 %v1188, %v1444
        %v1573 = vadd.f32 %v1189, %v1445
        %v1574 = vadd.f32 %v1190, %v1446
        %v1575 = vadd.f32 %v1191, %v1447
        %v1576 = vadd.f32 %v1192, %v1448
        %v1577 = vadd.f32 %v1193, %v1449
        %v1578 = vadd.f32 %v1194, %v1450
        %v1579 = vadd.f32 %v1195, %v1451
        %v1580 = vadd.f32 %v1196, %v1452
        %v1581 = vadd.f32 %v1197, %v1453
        %v1582 = vadd.f32 %v1198, %v1454
        %v1583 = vadd.f32 %v1199, %v1455
        %v1584 = vadd.f32 %v1200, %v1456
        %v1585 = vadd.f32 %v1201, %v1457
        %v1586 = vadd.f32 %v1202, %v1458
        %v1587 = vadd.f32 %v1203, %v1459
        %v1588 = vadd.f32 %v1204, %v1460
        %v1589 = vadd.f32 %v1205, %v1461
        %v1590 = vadd.f32 %v1206, %v1462
        %v1591 = vadd.f32 %v1207, %v1463
        %v1592 = vadd.f32 %v1208, %v1464
        %v1593 = vadd.f32 %v1209, %v1465
        %v1594 = vadd.f32 %v1210, %v1466
        %v1595 = vadd.f32 %v1211, %v1467
        %v1596 = vadd.f32 %v1212, %v1468
        %v1597 = vadd.f32 %v1213, %v1469
        %v1598 = vadd.f32 %v1214, %v1470
        %v1599 = vadd.f32 %v1215, %v1471
        %v1600 = vadd.f32 %v1216, %v1472
        %v1601 = vadd.f32 %v1217, %v1473
        %v1602 = vadd.f32 %v1218, %v1474
        %v1603 = vadd.f32 %v1219, %v1475
        %v1604 = vadd.f32 %v1220, %v1476
        %v1605 = vadd.f32 %v1221, %v1477
        %v1606 = vadd.f32 %v1222, %v1478
        %v1607 = vadd.f32 %v1223, %v1479
        %v1608 = vadd.f32 %v1224, %v1480
        %v1609 = vadd.f32 %v1225, %v1481
        %v1610 = vadd.f32 %v1226, %v1482
        %v1611 = vadd.f32 %v1227, %v1483
        %v1612 = vadd.f32 %v1228, %v1484
        %v1613 = vadd.f32 %v1229, %v1485
        %v1614 = vadd.f32 %v1230, %v1486
        %v1615 = vadd.f32 %v1231, %v1487
        %v1616 = vadd.f32 %v1232, %v1488
        %v1617 = vadd.f32 %v1233, %v1489
        %v1618 = vadd.f32 %v1234, %v1490
        %v1619 = vadd.f32 %v1235, %v1491
        %v1620 = vadd.f32 %v1236, %v1492
        %v1621 = vadd.f32 %v1237, %v1493
        %v1622 = vadd.f32 %v1238, %v1494
        %v1623 = vadd.f32 %v1239, %v1495
        %v1624 = vadd.f32 %v1240, %v1496
        %v1625 = vadd.f32 %v1241, %v1497
        %v1626 = vadd.f32 %v1242, %v1498
        %v1627 = vadd.f32 %v1243, %v1499
        %v1628 = vadd.f32 %v1244, %v1500
        %v1629 = vadd.f32 %v1245, %v1501
        %v1630 = vadd.f32 %v1246, %v1502
        %v1631 = vadd.f32 %v1247, %v1503
        %v1632 = vadd.f32 %v1248, %v1504
        %v1633 = vadd.f32 %v1249, %v1505
        %v1634 = vadd.f32 %v1250, %v1506
        %v1635 = vadd.f32 %v1251, %v1507
        %v1636 = vadd.f32 %v1252, %v1508
        %v1637 = vadd.f32 %v1253, %v1509
        %v1638 = vadd.f32 %v1254, %v1510
        %v1639 = vadd.f32 %v1255, %v1511
        %v1640 = vadd.f32 %v1256, %v1512
        %v1641 = vadd.f32 %v1257, %v1513
        %v1642 = vadd.f32 %v1258, %v1514
        %v1643 = vadd.f32 %v1259, %v1515
        %v1644 = vadd.f32 %v1260, %v1516
        %v1645 = vadd.f32 %v1261, %v1517
        %v1646 = vadd.f32 %v1262, %v1518
        %v1647 = vadd.f32 %v1263, %v1519
        %v1648 = vadd.f32 %v1264, %v1520
        %v1649 = vadd.f32 %v1265, %v1521
        %v1650 = vadd.f32 %v1266, %v1522
        %v1651 = vadd.f32 %v1267, %v1523
        %v1652 = vadd.f32 %v1268, %v1524
        %v1653 = vadd.f32 %v1269, %v1525
        %v1654 = vadd.f32 %v1270, %v1526
        %v1655 = vadd.f32 %v1271, %v1527
        %v1656 = vadd.f32 %v1272, %v1528
        %v1657 = vadd.f32 %v1273, %v1529
        %v1658 = vadd.f32 %v1274, %v1530
        %v1659 = vadd.f32 %v1275, %v1531
        %v1660 = vadd.f32 %v1276, %v1532
        %v1661 = vadd.f32 %v1277, %v1533
        %v1662 = vadd.f32 %v1278, %v1534
        %v1663 = vadd.f32 %v1279, %v1535
        %v1664 = vadd.f32 %v1280, %v1536
        %v1665 = vadd.f32 %v1281, %v1537
        %v1666 = vmax.f32 %v1538, 0.0
        %v1667 = vmax.f32 %v1539, 0.0
        %v1668 = vmax.f32 %v1540, 0.0
        %v1669 = vmax.f32 %v1541, 0.0
        %v1670 = vmax.f32 %v1542, 0.0
        %v1671 = vmax.f32 %v1543, 0.0
        %v1672 = vmax.f32 %v1544, 0.0
        %v1673 = vmax.f32 %v1545, 0.0
        %v1674 = vmax.f32 %v1546, 0.0
        %v1675 = vmax.f32 %v1547, 0.0
        %v1676 = vmax.f32 %v1548, 0.0
        %v1677 = vmax.f32 %v1549, 0.0
        %v1678 = vmax.f32 %v1550, 0.0
        %v1679 = vmax.f32 %v1551, 0.0
        %v1680 = vmax.f32 %v1552, 0.0
        %v1681 = vmax.f32 %v1553, 0.0
        %v1682 = vmax.f32 %v1554, 0.0
        %v1683 = vmax.f32 %v1555, 0.0
        %v1684 = vmax.f32 %v1556, 0.0
        %v1685 = vmax.f32 %v1557, 0.0
        %v1686 = vmax.f32 %v1558, 0.0
        %v1687 = vmax.f32 %v1559, 0.0
        %v1688 = vmax.f32 %v1560, 0.0
        %v1689 = vmax.f32 %v1561, 0.0
        %v1690 = vmax.f32 %v1562, 0.0
        %v1691 = vmax.f32 %v1563, 0.0
        %v1692 = vmax.f32 %v1564, 0.0
        %v1693 = vmax.f32 %v1565, 0.0
        %v1694 = vmax.f32 %v1566, 0.0
        %v1695 = vmax.f32 %v1567, 0.0
        %v1696 = vmax.f32 %v1568, 0.0
        %v1697 = vmax.f32 %v1569, 0.0
        %v1698 = vmax.f32 %v1570, 0.0
        %v1699 = vmax.f32 %v1571, 0.0
        %v1700 = vmax.f32 %v1572, 0.0
        %v1701 = vmax.f32 %v1573, 0.0
        %v1702 = vmax.f32 %v1574, 0.0
        %v1703 = vmax.f32 %v1575, 0.0
        %v1704 = vmax.f32 %v1576, 0.0
        %v1705 = vmax.f32 %v1577, 0.0
        %v1706 = vmax.f32 %v1578, 0.0
        %v1707 = vmax.f32 %v1579, 0.0
        %v1708 = vmax.f32 %v1580, 0.0
        %v1709 = vmax.f32 %v1581, 0.0
        %v1710 = vmax.f32 %v1582, 0.0
        %v1711 = vmax.f32 %v1583, 0.0
        %v1712 = vmax.f32 %v1584, 0.0
        %v1713 = vmax.f32 %v1585, 0.0
        %v1714 = vmax.f32 %v1586, 0.0
        %v1715 = vmax.f32 %v1587, 0.0
        %v1716 = vmax.f32 %v1588, 0.0
        %v1717 = vmax.f32 %v1589, 0.0
        %v1718 = vmax.f32 %v1590, 0.0
        %v1719 = vmax.f32 %v1591, 0.0
        %v1720 = vmax.f32 %v1592, 0.0
        %v1721 = vmax.f32 %v1593, 0.0
        %v1722 = vmax.f32 %v1594, 0.0
        %v1723 = vmax.f32 %v1595, 0.0
        %v1724 = vmax.f32 %v1596, 0.0
        %v1725 = vmax.f32 %v1597, 0.0
        %v1726 = vmax.f32 %v1598, 0.0
        %v1727 = vmax.f32 %v1599, 0.0
        %v1728 = vmax.f32 %v1600, 0.0
        %v1729 = vmax.f32 %v1601, 0.0
        %v1730 = vmax.f32 %v1602, 0.0
        %v1731 = vmax.f32 %v1603, 0.0
        %v1732 = vmax.f32 %v1604, 0.0
        %v1733 = vmax.f32 %v1605, 0.0
        %v1734 = vmax.f32 %v1606, 0.0
        %v1735 = vmax.f32 %v1607, 0.0
        %v1736 = vmax.f32 %v1608, 0.0
        %v1737 = vmax.f32 %v1609, 0.0
        %v1738 = vmax.f32 %v1610, 0.0
        %v1739 = vmax.f32 %v1611, 0.0
        %v1740 = vmax.f32 %v1612, 0.0
        %v1741 = vmax.f32 %v1613, 0.0
        %v1742 = vmax.f32 %v1614, 0.0
        %v1743 = vmax.f32 %v1615, 0.0
        %v1744 = vmax.f32 %v1616, 0.0
        %v1745 = vmax.f32 %v1617, 0.0
        %v1746 = vmax.f32 %v1618, 0.0
        %v1747 = vmax.f32 %v1619, 0.0
        %v1748 = vmax.f32 %v1620, 0.0
        %v1749 = vmax.f32 %v1621, 0.0
        %v1750 = vmax.f32 %v1622, 0.0
        %v1751 = vmax.f32 %v1623, 0.0
        %v1752 = vmax.f32 %v1624, 0.0
        %v1753 = vmax.f32 %v1625, 0.0
        %v1754 = vmax.f32 %v1626, 0.0
        %v1755 = vmax.f32 %v1627, 0.0
        %v1756 = vmax.f32 %v1628, 0.0
        %v1757 = vmax.f32 %v1629, 0.0
        %v1758 = vmax.f32 %v1630, 0.0
        %v1759 = vmax.f32 %v1631, 0.0
        %v1760 = vmax.f32 %v1632, 0.0
        %v1761 = vmax.f32 %v1633, 0.0
        %v1762 = vmax.f32 %v1634, 0.0
        %v1763 = vmax.f32 %v1635, 0.0
        %v1764 = vmax.f32 %v1636, 0.0
        %v1765 = vmax.f32 %v1637, 0.0
        %v1766 = vmax.f32 %v1638, 0.0
        %v1767 = vmax.f32 %v1639, 0.0
        %v1768 = vmax.f32 %v1640, 0.0
        %v1769 = vmax.f32 %v1641, 0.0
        %v1770 = vmax.f32 %v1642, 0.0
        %v1771 = vmax.f32 %v1643, 0.0
        %v1772 = vmax.f32 %v1644, 0.0
        %v1773 = vmax.f32 %v1645, 0.0
        %v1774 = vmax.f32 %v1646, 0.0
        %v1775 = vmax.f32 %v1647, 0.0
        %v1776 = vmax.f32 %v1648, 0.0
        %v1777 = vmax.f32 %v1649, 0.0
        %v1778 = vmax.f32 %v1650, 0.0
        %v1779 = vmax.f32 %v1651, 0.0
        %v1780 = vmax.f32 %v1652, 0.0
        %v1781 = vmax.f32 %v1653, 0.0
        %v1782 = vmax.f32 %v1654, 0.0
        %v1783 = vmax.f32 %v1655, 0.0
        %v1784 = vmax.f32 %v1656, 0.0
        %v1785 = vmax.f32 %v1657, 0.0
        %v1786 = vmax.f32 %v1658, 0.0
        %v1787 = vmax.f32 %v1659, 0.0
        %v1788 = vmax.f32 %v1660, 0.0
        %v1789 = vmax.f32 %v1661, 0.0
        %v1790 = vmax.f32 %v1662, 0.0
        %v1791 = vmax.f32 %v1663, 0.0
        %v1792 = vmax.f32 %v1664, 0.0
        %v1793 = vmax.f32 %v1665, 0.0
        %v1794 = vpack.c.bf16 %v1666, %v1666
        %v1795 = vpack.c.bf16 %v1667, %v1667
        %v1796 = vpack.c.bf16 %v1668, %v1668
        %v1797 = vpack.c.bf16 %v1669, %v1669
        %v1798 = vpack.c.bf16 %v1670, %v1670
        %v1799 = vpack.c.bf16 %v1671, %v1671
        %v1800 = vpack.c.bf16 %v1672, %v1672
        %v1801 = vpack.c.bf16 %v1673, %v1673
        %v1802 = vpack.c.bf16 %v1674, %v1674
        %v1803 = vpack.c.bf16 %v1675, %v1675
        %v1804 = vpack.c.bf16 %v1676, %v1676
        %v1805 = vpack.c.bf16 %v1677, %v1677
        %v1806 = vpack.c.bf16 %v1678, %v1678
        %v1807 = vpack.c.bf16 %v1679, %v1679
        %v1808 = vpack.c.bf16 %v1680, %v1680
        %v1809 = vpack.c.bf16 %v1681, %v1681
        %v1810 = vpack.c.bf16 %v1682, %v1682
        %v1811 = vpack.c.bf16 %v1683, %v1683
        %v1812 = vpack.c.bf16 %v1684, %v1684
        %v1813 = vpack.c.bf16 %v1685, %v1685
        %v1814 = vpack.c.bf16 %v1686, %v1686
        %v1815 = vpack.c.bf16 %v1687, %v1687
        %v1816 = vpack.c.bf16 %v1688, %v1688
        %v1817 = vpack.c.bf16 %v1689, %v1689
        %v1818 = vpack.c.bf16 %v1690, %v1690
        %v1819 = vpack.c.bf16 %v1691, %v1691
        %v1820 = vpack.c.bf16 %v1692, %v1692
        %v1821 = vpack.c.bf16 %v1693, %v1693
        %v1822 = vpack.c.bf16 %v1694, %v1694
        %v1823 = vpack.c.bf16 %v1695, %v1695
        %v1824 = vpack.c.bf16 %v1696, %v1696
        %v1825 = vpack.c.bf16 %v1697, %v1697
        %v1826 = vpack.c.bf16 %v1698, %v1698
        %v1827 = vpack.c.bf16 %v1699, %v1699
        %v1828 = vpack.c.bf16 %v1700, %v1700
        %v1829 = vpack.c.bf16 %v1701, %v1701
        %v1830 = vpack.c.bf16 %v1702, %v1702
        %v1831 = vpack.c.bf16 %v1703, %v1703
        %v1832 = vpack.c.bf16 %v1704, %v1704
        %v1833 = vpack.c.bf16 %v1705, %v1705
        %v1834 = vpack.c.bf16 %v1706, %v1706
        %v1835 = vpack.c.bf16 %v1707, %v1707
        %v1836 = vpack.c.bf16 %v1708, %v1708
        %v1837 = vpack.c.bf16 %v1709, %v1709
        %v1838 = vpack.c.bf16 %v1710, %v1710
        %v1839 = vpack.c.bf16 %v1711, %v1711
        %v1840 = vpack.c.bf16 %v1712, %v1712
        %v1841 = vpack.c.bf16 %v1713, %v1713
        %v1842 = vpack.c.bf16 %v1714, %v1714
        %v1843 = vpack.c.bf16 %v1715, %v1715
        %v1844 = vpack.c.bf16 %v1716, %v1716
        %v1845 = vpack.c.bf16 %v1717, %v1717
        %v1846 = vpack.c.bf16 %v1718, %v1718
        %v1847 = vpack.c.bf16 %v1719, %v1719
        %v1848 = vpack.c.bf16 %v1720, %v1720
        %v1849 = vpack.c.bf16 %v1721, %v1721
        %v1850 = vpack.c.bf16 %v1722, %v1722
        %v1851 = vpack.c.bf16 %v1723, %v1723
        %v1852 = vpack.c.bf16 %v1724, %v1724
        %v1853 = vpack.c.bf16 %v1725, %v1725
        %v1854 = vpack.c.bf16 %v1726, %v1726
        %v1855 = vpack.c.bf16 %v1727, %v1727
        %v1856 = vpack.c.bf16 %v1728, %v1728
        %v1857 = vpack.c.bf16 %v1729, %v1729
        %v1858 = vpack.c.bf16 %v1730, %v1730
        %v1859 = vpack.c.bf16 %v1731, %v1731
        %v1860 = vpack.c.bf16 %v1732, %v1732
        %v1861 = vpack.c.bf16 %v1733, %v1733
        %v1862 = vpack.c.bf16 %v1734, %v1734
        %v1863 = vpack.c.bf16 %v1735, %v1735
        %v1864 = vpack.c.bf16 %v1736, %v1736
        %v1865 = vpack.c.bf16 %v1737, %v1737
        %v1866 = vpack.c.bf16 %v1738, %v1738
        %v1867 = vpack.c.bf16 %v1739, %v1739
        %v1868 = vpack.c.bf16 %v1740, %v1740
        %v1869 = vpack.c.bf16 %v1741, %v1741
        %v1870 = vpack.c.bf16 %v1742, %v1742
        %v1871 = vpack.c.bf16 %v1743, %v1743
        %v1872 = vpack.c.bf16 %v1744, %v1744
        %v1873 = vpack.c.bf16 %v1745, %v1745
        %v1874 = vpack.c.bf16 %v1746, %v1746
        %v1875 = vpack.c.bf16 %v1747, %v1747
        %v1876 = vpack.c.bf16 %v1748, %v1748
        %v1877 = vpack.c.bf16 %v1749, %v1749
        %v1878 = vpack.c.bf16 %v1750, %v1750
        %v1879 = vpack.c.bf16 %v1751, %v1751
        %v1880 = vpack.c.bf16 %v1752, %v1752
        %v1881 = vpack.c.bf16 %v1753, %v1753
        %v1882 = vpack.c.bf16 %v1754, %v1754
        %v1883 = vpack.c.bf16 %v1755, %v1755
        %v1884 = vpack.c.bf16 %v1756, %v1756
        %v1885 = vpack.c.bf16 %v1757, %v1757
        %v1886 = vpack.c.bf16 %v1758, %v1758
        %v1887 = vpack.c.bf16 %v1759, %v1759
        %v1888 = vpack.c.bf16 %v1760, %v1760
        %v1889 = vpack.c.bf16 %v1761, %v1761
        %v1890 = vpack.c.bf16 %v1762, %v1762
        %v1891 = vpack.c.bf16 %v1763, %v1763
        %v1892 = vpack.c.bf16 %v1764, %v1764
        %v1893 = vpack.c.bf16 %v1765, %v1765
        %v1894 = vpack.c.bf16 %v1766, %v1766
        %v1895 = vpack.c.bf16 %v1767, %v1767
        %v1896 = vpack.c.bf16 %v1768, %v1768
        %v1897 = vpack.c.bf16 %v1769, %v1769
        %v1898 = vpack.c.bf16 %v1770, %v1770
        %v1899 = vpack.c.bf16 %v1771, %v1771
        %v1900 = vpack.c.bf16 %v1772, %v1772
        %v1901 = vpack.c.bf16 %v1773, %v1773
        %v1902 = vpack.c.bf16 %v1774, %v1774
        %v1903 = vpack.c.bf16 %v1775, %v1775
        %v1904 = vpack.c.bf16 %v1776, %v1776
        %v1905 = vpack.c.bf16 %v1777, %v1777
        %v1906 = vpack.c.bf16 %v1778, %v1778
        %v1907 = vpack.c.bf16 %v1779, %v1779
        %v1908 = vpack.c.bf16 %v1780, %v1780
        %v1909 = vpack.c.bf16 %v1781, %v1781
        %v1910 = vpack.c.bf16 %v1782, %v1782
        %v1911 = vpack.c.bf16 %v1783, %v1783
        %v1912 = vpack.c.bf16 %v1784, %v1784
        %v1913 = vpack.c.bf16 %v1785, %v1785
        %v1914 = vpack.c.bf16 %v1786, %v1786
        %v1915 = vpack.c.bf16 %v1787, %v1787
        %v1916 = vpack.c.bf16 %v1788, %v1788
        %v1917 = vpack.c.bf16 %v1789, %v1789
        %v1918 = vpack.c.bf16 %v1790, %v1790
        %v1919 = vpack.c.bf16 %v1791, %v1791
        %v1920 = vpack.c.bf16 %v1792, %v1792
        %v1921 = vpack.c.bf16 %v1793, %v1793
        %1922 = vst [vmem:[%s5] sm:$0xf] %v1794
        %1923 = vst [vmem:[%s5 + $0x4] sm:$0xf] %v1795
        %1924 = vst [vmem:[%s5 + $0x8] sm:$0xf] %v1796
        %1925 = vst [vmem:[%s5 + $0xc] sm:$0xf] %v1797
        %1926 = vst [vmem:[%s5 + $0x10] sm:$0xf] %v1798
        %1927 = vst [vmem:[%s5 + $0x14] sm:$0xf] %v1799
        %1928 = vst [vmem:[%s5 + $0x18] sm:$0xf] %v1800
        %1929 = vst [vmem:[%s5 + $0x1c] sm:$0xf] %v1801
        %1930 = vst [vmem:[%s5 + $0x20] sm:$0xf] %v1802
        %1931 = vst [vmem:[%s5 + $0x24] sm:$0xf] %v1803
        %1932 = vst [vmem:[%s5 + $0x28] sm:$0xf] %v1804
        %1933 = vst [vmem:[%s5 + $0x2c] sm:$0xf] %v1805
        %1934 = vst [vmem:[%s5 + $0x30] sm:$0xf] %v1806
        %1935 = vst [vmem:[%s5 + $0x34] sm:$0xf] %v1807
        %1936 = vst [vmem:[%s5 + $0x38] sm:$0xf] %v1808
        %1937 = vst [vmem:[%s5 + $0x3c] sm:$0xf] %v1809
        %1938 = vst [vmem:[%s5 + $0x40] sm:$0xf] %v1810
        %1939 = vst [vmem:[%s5 + $0x44] sm:$0xf] %v1811
        %1940 = vst [vmem:[%s5 + $0x48] sm:$0xf] %v1812
        %1941 = vst [vmem:[%s5 + $0x4c] sm:$0xf] %v1813
        %1942 = vst [vmem:[%s5 + $0x50] sm:$0xf] %v1814
        %1943 = vst [vmem:[%s5 + $0x54] sm:$0xf] %v1815
        %1944 = vst [vmem:[%s5 + $0x58] sm:$0xf] %v1816
        %1945 = vst [vmem:[%s5 + $0x5c] sm:$0xf] %v1817
        %1946 = vst [vmem:[%s5 + $0x60] sm:$0xf] %v1818
        %1947 = vst [vmem:[%s5 + $0x64] sm:$0xf] %v1819
        %1948 = vst [vmem:[%s5 + $0x68] sm:$0xf] %v1820
        %1949 = vst [vmem:[%s5 + $0x6c] sm:$0xf] %v1821
        %1950 = vst [vmem:[%s5 + $0x70] sm:$0xf] %v1822
        %1951 = vst [vmem:[%s5 + $0x74] sm:$0xf] %v1823
        %1952 = vst [vmem:[%s5 + $0x78] sm:$0xf] %v1824
        %1953 = vst [vmem:[%s5 + $0x7c] sm:$0xf] %v1825
        %1954 = vst [vmem:[%s5 + $0x80] sm:$0xf] %v1826
        %1955 = vst [vmem:[%s5 + $0x84] sm:$0xf] %v1827
        %1956 = vst [vmem:[%s5 + $0x88] sm:$0xf] %v1828
        %1957 = vst [vmem:[%s5 + $0x8c] sm:$0xf] %v1829
        %1958 = vst [vmem:[%s5 + $0x90] sm:$0xf] %v1830
        %1959 = vst [vmem:[%s5 + $0x94] sm:$0xf] %v1831
        %1960 = vst [vmem:[%s5 + $0x98] sm:$0xf] %v1832
        %1961 = vst [vmem:[%s5 + $0x9c] sm:$0xf] %v1833
        %1962 = vst [vmem:[%s5 + $0xa0] sm:$0xf] %v1834
        %1963 = vst [vmem:[%s5 + $0xa4] sm:$0xf] %v1835
        %1964 = vst [vmem:[%s5 + $0xa8] sm:$0xf] %v1836
        %1965 = vst [vmem:[%s5 + $0xac] sm:$0xf] %v1837
        %1966 = vst [vmem:[%s5 + $0xb0] sm:$0xf] %v1838
        %1967 = vst [vmem:[%s5 + $0xb4] sm:$0xf] %v1839
        %1968 = vst [vmem:[%s5 + $0xb8] sm:$0xf] %v1840
        %1969 = vst [vmem:[%s5 + $0xbc] sm:$0xf] %v1841
        %1970 = vst [vmem:[%s5 + $0xc0] sm:$0xf] %v1842
        %1971 = vst [vmem:[%s5 + $0xc4] sm:$0xf] %v1843
        %1972 = vst [vmem:[%s5 + $0xc8] sm:$0xf] %v1844
        %1973 = vst [vmem:[%s5 + $0xcc] sm:$0xf] %v1845
        %1974 = vst [vmem:[%s5 + $0xd0] sm:$0xf] %v1846
        %1975 = vst [vmem:[%s5 + $0xd4] sm:$0xf] %v1847
        %1976 = vst [vmem:[%s5 + $0xd8] sm:$0xf] %v1848
        %1977 = vst [vmem:[%s5 + $0xdc] sm:$0xf] %v1849
        %1978 = vst [vmem:[%s5 + $0xe0] sm:$0xf] %v1850
        %1979 = vst [vmem:[%s5 + $0xe4] sm:$0xf] %v1851
        %1980 = vst [vmem:[%s5 + $0xe8] sm:$0xf] %v1852
        %1981 = vst [vmem:[%s5 + $0xec] sm:$0xf] %v1853
        %1982 = vst [vmem:[%s5 + $0xf0] sm:$0xf] %v1854
        %1983 = vst [vmem:[%s5 + $0xf4] sm:$0xf] %v1855
        %1984 = vst [vmem:[%s5 + $0xf8] sm:$0xf] %v1856
        %1985 = vst [vmem:[%s5 + $0xfc] sm:$0xf] %v1857
        %1986 = vst [vmem:[%s5 + $0x100] sm:$0xf] %v1858
        %1987 = vst [vmem:[%s5 + $0x104] sm:$0xf] %v1859
        %1988 = vst [vmem:[%s5 + $0x108] sm:$0xf] %v1860
        %1989 = vst [vmem:[%s5 + $0x10c] sm:$0xf] %v1861
        %1990 = vst [vmem:[%s5 + $0x110] sm:$0xf] %v1862
        %1991 = vst [vmem:[%s5 + $0x114] sm:$0xf] %v1863
        %1992 = vst [vmem:[%s5 + $0x118] sm:$0xf] %v1864
        %1993 = vst [vmem:[%s5 + $0x11c] sm:$0xf] %v1865
        %1994 = vst [vmem:[%s5 + $0x120] sm:$0xf] %v1866
        %1995 = vst [vmem:[%s5 + $0x124] sm:$0xf] %v1867
        %1996 = vst [vmem:[%s5 + $0x128] sm:$0xf] %v1868
        %1997 = vst [vmem:[%s5 + $0x12c] sm:$0xf] %v1869
        %1998 = vst [vmem:[%s5 + $0x130] sm:$0xf] %v1870
        %1999 = vst [vmem:[%s5 + $0x134] sm:$0xf] %v1871
        %2000 = vst [vmem:[%s5 + $0x138] sm:$0xf] %v1872
        %2001 = vst [vmem:[%s5 + $0x13c] sm:$0xf] %v1873
        %2002 = vst [vmem:[%s5 + $0x140] sm:$0xf] %v1874
        %2003 = vst [vmem:[%s5 + $0x144] sm:$0xf] %v1875
        %2004 = vst [vmem:[%s5 + $0x148] sm:$0xf] %v1876
        %2005 = vst [vmem:[%s5 + $0x14c] sm:$0xf] %v1877
        %2006 = vst [vmem:[%s5 + $0x150] sm:$0xf] %v1878
        %2007 = vst [vmem:[%s5 + $0x154] sm:$0xf] %v1879
        %2008 = vst [vmem:[%s5 + $0x158] sm:$0xf] %v1880
        %2009 = vst [vmem:[%s5 + $0x15c] sm:$0xf] %v1881
        %2010 = vst [vmem:[%s5 + $0x160] sm:$0xf] %v1882
        %2011 = vst [vmem:[%s5 + $0x164] sm:$0xf] %v1883
        %2012 = vst [vmem:[%s5 + $0x168] sm:$0xf] %v1884
        %2013 = vst [vmem:[%s5 + $0x16c] sm:$0xf] %v1885
        %2014 = vst [vmem:[%s5 + $0x170] sm:$0xf] %v1886
        %2015 = vst [vmem:[%s5 + $0x174] sm:$0xf] %v1887
        %2016 = vst [vmem:[%s5 + $0x178] sm:$0xf] %v1888
        %2017 = vst [vmem:[%s5 + $0x17c] sm:$0xf] %v1889
        %2018 = vst [vmem:[%s5 + $0x180] sm:$0xf] %v1890
        %2019 = vst [vmem:[%s5 + $0x184] sm:$0xf] %v1891
        %2020 = vst [vmem:[%s5 + $0x188] sm:$0xf] %v1892
        %2021 = vst [vmem:[%s5 + $0x18c] sm:$0xf] %v1893
        %2022 = vst [vmem:[%s5 + $0x190] sm:$0xf] %v1894
        %2023 = vst [vmem:[%s5 + $0x194] sm:$0xf] %v1895
        %2024 = vst [vmem:[%s5 + $0x198] sm:$0xf] %v1896
        %2025 = vst [vmem:[%s5 + $0x19c] sm:$0xf] %v1897
        %2026 = vst [vmem:[%s5 + $0x1a0] sm:$0xf] %v1898
        %2027 = vst [vmem:[%s5 + $0x1a4] sm:$0xf] %v1899
        %2028 = vst [vmem:[%s5 + $0x1a8] sm:$0xf] %v1900
        %2029 = vst [vmem:[%s5 + $0x1ac] sm:$0xf] %v1901
        %2030 = vst [vmem:[%s5 + $0x1b0] sm:$0xf] %v1902
        %2031 = vst [vmem:[%s5 + $0x1b4] sm:$0xf] %v1903
        %2032 = vst [vmem:[%s5 + $0x1b8] sm:$0xf] %v1904
        %2033 = vst [vmem:[%s5 + $0x1bc] sm:$0xf] %v1905
        %2034 = vst [vmem:[%s5 + $0x1c0] sm:$0xf] %v1906
        %2035 = vst [vmem:[%s5 + $0x1c4] sm:$0xf] %v1907
        %2036 = vst [vmem:[%s5 + $0x1c8] sm:$0xf] %v1908
        %2037 = vst [vmem:[%s5 + $0x1cc] sm:$0xf] %v1909
        %2038 = vst [vmem:[%s5 + $0x1d0] sm:$0xf] %v1910
        %2039 = vst [vmem:[%s5 + $0x1d4] sm:$0xf] %v1911
        %2040 = vst [vmem:[%s5 + $0x1d8] sm:$0xf] %v1912
        %2041 = vst [vmem:[%s5 + $0x1dc] sm:$0xf] %v1913
        %2042 = vst [vmem:[%s5 + $0x1e0] sm:$0xf] %v1914
        %2043 = vst [vmem:[%s5 + $0x1e4] sm:$0xf] %v1915
        %2044 = vst [vmem:[%s5 + $0x1e8] sm:$0xf] %v1916
        %2045 = vst [vmem:[%s5 + $0x1ec] sm:$0xf] %v1917
        %2046 = vst [vmem:[%s5 + $0x1f0] sm:$0xf] %v1918
        %2047 = vst [vmem:[%s5 + $0x1f4] sm:$0xf] %v1919
        %2048 = vst [vmem:[%s5 + $0x1f8] sm:$0xf] %v1920
        %2049 = vst [vmem:[%s5 + $0x1fc] sm:$0xf] %v1921
      $region48: #{resnet_forward.12} parent=39 // pred_fallthru
        _
      // Predicated region
      $region49: #{resnet_forward.12} parent=39 // pred_check
        %p2050 = pneg %p139
      $region50: #{resnet_forward.12} parent=39 // pred_check_branch
        %2052 = sbr.rel (%p2050) target = $region52
      $region51: #{resnet_forward.12} parent=39 // pred_region
        _
      $region52: #{resnet_forward.12} parent=39 // pred_fallthru
        _
      // Predicated region
      $region53: #{resnet_forward.12} parent=39 // pred_check
        %p2053 = pneg %p139
      $region54: #{resnet_forward.12} parent=39 // pred_check_branch
        %2055 = sbr.rel (%p2053) target = $region56
      $region55: #{resnet_forward.12} parent=39 // pred_region
        _
      $region56: #{resnet_forward.12} parent=39 // pred_fallthru
        _
    $region40: #{resnet_forward.12} parent=5 // pred_fallthru
      _
    %p2056 = scmp.le.s32.totalorder 2, %s11
    // Predicated region
    $region57: #{resnet_forward.12} parent=5 // pred_check
      %p2057 = pneg %p2056
    $region58: #{resnet_forward.12} parent=5 // pred_check_branch
      %2059 = sbr.rel (%p2057) target = $region60
    $region59: #{resnet_forward.12} parent=5 // pred_region
      %s2060 = ssub.s32 %s11, 2
    $region60: #{resnet_forward.12} parent=5 // pred_fallthru
      _
  $region6: #{resnet_forward.12} parent=0 // loop_footer
    %s15 = sadd.s32 1, %s11
  $region7: #{resnet_forward.12} parent=0 // loop_footer_branch
    %10 = sbr.rel target = $region3
  $region8: #{resnet_forward.12} parent=0 // loop_exit
    _

// kernel: resnet_forward.13
$region0: #{resnet_forward.13}
  #allocation0 [shape = 'u32[]', space=smem, size = 0x4, offset = 0x4, fixed_abs, tag = 'smem constant byte address 0x4 - core index']
  #allocation1 [shape = 'u32[72,128]{1,0:T(1,128)}', space=vmem, size = 0x9000, scoped, tag = 'internal scratch']
  #allocation2 [shape = 'f32[4,64,128]{2,1,0:T(8,128)}', space=vmem, size = 0x20000, scoped, tag = 'scratch operand']
  #allocation3 [shape = 'f32[1,128]{1,0:T(1,128)}', space=vmem, size = 0x200, scoped, tag = 'scratch operand']
  #allocation4 [shape = 'f32[1,128]{1,0:T(1,128)}', space=vmem, size = 0x200, scoped, tag = 'scratch operand']
  %s0 = inlined_call_operand.vmem [shape: bf16[256,256], index: 0, kind: input, shape index: {}]
  %s1 = inlined_call_operand.vmem [shape: bf16[256,128], index: 1, kind: input, shape index: {}]
  %s2 = inlined_call_operand.vmem [shape: f32[1,128], index: 2, kind: input, shape index: {}]
  %s3 = inlined_call_operand.vmem [shape: f32[1,128], index: 3, kind: input, shape index: {}]
  %s4 = inlined_call_operand.vmem [shape: bf16[4,64,128], index: 4, kind: output, shape index: {}]
  %s5 = sld [smem:[#allocation0]]
  $region57: #{resnet_forward.13} parent=0
    _
  %s7 = ssub.s32 1, %s5
  %s8 = scalar_select 0, %s7, %s5
  loop: start=0, step=1, limit=6
  $region2: #{resnet_forward.13} parent=0 // loop_pre_header
    _
  $region3: #{resnet_forward.13} parent=0 // loop_header
    %s10 = sphi 0, %s14
    %p11 = scmp.ge.s32.totalorder %s10, 6
    %s20 = sphi 0, %s22
    %s23 = sphi 0, %s20
    %s24 = sphi 0, %s23
    %s40 = sphi 0, %s24
    %s44 = sphi 0, %s44
    %s46 = sphi 0, %s44
    %s47 = sphi 0, %s46
    %s61 = sphi 0, %s47
    %s65 = sphi 0, %s65
    %s67 = sphi 0, %s65
    %s68 = sphi 0, %s67
    %s82 = sphi 0, %s68
    %s86 = sphi 0, %s86
    %s88 = sphi 0, %s86
    %s89 = sphi 0, %s88
    %s103 = sphi 0, %s89
    %s107 = sphi 0, %s107
    %s109 = sphi 0, %s107
    %s110 = sphi 0, %s109
    %s124 = sphi 0, %s110
  $region4: #{resnet_forward.13} parent=0 // loop_header_branch
    %13 = sbr.rel (%p11) target = $region8
  $region5: #{resnet_forward.13} parent=0 // loop_body
    %s15 = ssub.s32 %s10, 1
    %s16 = ssub.s32 %s10, 2
    %s17 = sadd.s32 %s10, 1
    %s18 = ssub.s32 %s10, %s17
    %p19 = scmp.eq.s32.totalorder %s18, 0
    %s21 = sadd.s32 %s20, 1
    %s22 = scalar_select %p19, %s20, %s21
    %p25 = pneg %p19
    %p26 = scmp.eq.s32.totalorder %s10, 3
    %p27 = por %p25, %p26
    %p28 = scmp.ne.s32.totalorder %s20, %s23
    %p29 = scmp.eq.s32.totalorder %s10, 0
    %p30 = por %p28, %p29
    %p31 = scmp.ne.s32.totalorder %s20, %s23
    %p32 = scmp.eq.s32.totalorder %s15, 3
    %p33 = por %p31, %p32
    %p34 = scmp.ne.s32.totalorder %s23, %s24
    %p35 = scmp.eq.s32.totalorder %s15, 0
    %p36 = por %p34, %p35
    %p37 = scmp.ne.s32.totalorder %s23, %s24
    %p38 = scmp.eq.s32.totalorder %s16, 3
    %p39 = por %p37, %p38
    %p41 = scmp.ne.s32.totalorder %s24, %s40
    %p42 = scmp.eq.s32.totalorder %s16, 0
    %p43 = por %p41, %p42
    %s45 = sadd.s32 %s44, 1
    %p48 = scmp.eq.s32.totalorder %s10, 3
    %p49 = scmp.ne.s32.totalorder %s44, %s46
    %p50 = scmp.eq.s32.totalorder %s10, 0
    %p51 = por %p49, %p50
    %p52 = scmp.ne.s32.totalorder %s44, %s46
    %p53 = scmp.eq.s32.totalorder %s15, 3
    %p54 = por %p52, %p53
    %p55 = scmp.ne.s32.totalorder %s46, %s47
    %p56 = scmp.eq.s32.totalorder %s15, 0
    %p57 = por %p55, %p56
    %p58 = scmp.ne.s32.totalorder %s46, %s47
    %p59 = scmp.eq.s32.totalorder %s16, 3
    %p60 = por %p58, %p59
    %p62 = scmp.ne.s32.totalorder %s47, %s61
    %p63 = scmp.eq.s32.totalorder %s16, 0
    %p64 = por %p62, %p63
    %s66 = sadd.s32 %s65, 1
    %p69 = scmp.eq.s32.totalorder %s10, 3
    %p70 = scmp.ne.s32.totalorder %s65, %s67
    %p71 = scmp.eq.s32.totalorder %s10, 0
    %p72 = por %p70, %p71
    %p73 = scmp.ne.s32.totalorder %s65, %s67
    %p74 = scmp.eq.s32.totalorder %s15, 3
    %p75 = por %p73, %p74
    %p76 = scmp.ne.s32.totalorder %s67, %s68
    %p77 = scmp.eq.s32.totalorder %s15, 0
    %p78 = por %p76, %p77
    %p79 = scmp.ne.s32.totalorder %s67, %s68
    %p80 = scmp.eq.s32.totalorder %s16, 3
    %p81 = por %p79, %p80
    %p83 = scmp.ne.s32.totalorder %s68, %s82
    %p84 = scmp.eq.s32.totalorder %s16, 0
    %p85 = por %p83, %p84
    %s87 = sadd.s32 %s86, 1
    %p90 = scmp.eq.s32.totalorder %s10, 3
    %p91 = scmp.ne.s32.totalorder %s86, %s88
    %p92 = scmp.eq.s32.totalorder %s10, 0
    %p93 = por %p91, %p92
    %p94 = scmp.ne.s32.totalorder %s86, %s88
    %p95 = scmp.eq.s32.totalorder %s15, 3
    %p96 = por %p94, %p95
    %p97 = scmp.ne.s32.totalorder %s88, %s89
    %p98 = scmp.eq.s32.totalorder %s15, 0
    %p99 = por %p97, %p98
    %p100 = scmp.ne.s32.totalorder %s88, %s89
    %p101 = scmp.eq.s32.totalorder %s16, 3
    %p102 = por %p100, %p101
    %p104 = scmp.ne.s32.totalorder %s89, %s103
    %p105 = scmp.eq.s32.totalorder %s16, 0
    %p106 = por %p104, %p105
    %s108 = sadd.s32 %s107, 1
    %p111 = scmp.eq.s32.totalorder %s10, 3
    %p112 = scmp.ne.s32.totalorder %s107, %s109
    %p113 = scmp.eq.s32.totalorder %s10, 0
    %p114 = por %p112, %p113
    %p115 = scmp.ne.s32.totalorder %s107, %s109
    %p116 = scmp.eq.s32.totalorder %s15, 3
    %p117 = por %p115, %p116
    %p118 = scmp.ne.s32.totalorder %s109, %s110
    %p119 = scmp.eq.s32.totalorder %s15, 0
    %p120 = por %p118, %p119
    %p121 = scmp.ne.s32.totalorder %s109, %s110
    %p122 = scmp.eq.s32.totalorder %s16, 3
    %p123 = por %p121, %p122
    %p125 = scmp.ne.s32.totalorder %s110, %s124
    %p126 = scmp.eq.s32.totalorder %s16, 0
    %p127 = por %p125, %p126
    %p128 = scmp.le.s32.totalorder 1, %s10
    %p129 = scmp.lt.s32.totalorder %s10, 5
    %p130 = pnand %p128, %p129
    %p131 = pneg %p130
    // Predicated region
    $region9: #{resnet_forward.13} parent=5 // pred_check
      _
    $region10: #{resnet_forward.13} parent=5 // pred_check_branch
      %133 = sbr.rel (%p130) target = $region12
    $region11: #{resnet_forward.13} parent=5 // pred_region
      %s134 = ssub.s32 %s10, 1
      // Predicated region
      $region13: #{resnet_forward.13} parent=11 // pred_check
        %p135 = pneg %p57
      $region14: #{resnet_forward.13} parent=11 // pred_check_branch
        %137 = sbr.rel (%p135) target = $region16
      $region15: #{resnet_forward.13} parent=11 // pred_region
        _
      $region16: #{resnet_forward.13} parent=11 // pred_fallthru
        _
      // Predicated region
      $region17: #{resnet_forward.13} parent=11 // pred_check
        %p138 = pneg %p78
      $region18: #{resnet_forward.13} parent=11 // pred_check_branch
        %140 = sbr.rel (%p138) target = $region20
      $region19: #{resnet_forward.13} parent=11 // pred_region
        _
      $region20: #{resnet_forward.13} parent=11 // pred_fallthru
        _
      // Predicated region
      $region21: #{resnet_forward.13} parent=11 // pred_check
        %p141 = pneg %p99
      $region22: #{resnet_forward.13} parent=11 // pred_check_branch
        %143 = sbr.rel (%p141) target = $region24
      $region23: #{resnet_forward.13} parent=11 // pred_region
        _
      $region24: #{resnet_forward.13} parent=11 // pred_fallthru
        _
    $region12: #{resnet_forward.13} parent=5 // pred_fallthru
      _
    %p144 = scmp.lt.s32.totalorder %s10, 4
    // Predicated region
    $region25: #{resnet_forward.13} parent=5 // pred_check
      %p145 = pneg %p144
    $region26: #{resnet_forward.13} parent=5 // pred_check_branch
      %147 = sbr.rel (%p145) target = $region28
    $region27: #{resnet_forward.13} parent=5 // pred_region
      // Predicated region
      $region29: #{resnet_forward.13} parent=27 // pred_check
        %p148 = pneg %p30
      $region30: #{resnet_forward.13} parent=27 // pred_check_branch
        %150 = sbr.rel (%p148) target = $region32
      $region31: #{resnet_forward.13} parent=27 // pred_region
        %s151 = smul.u32 8, %s10
        %p152 = scmp.lt.s32.totalorder %s151, 31
        %s153 = scalar_select %p152, %s151, 31
        %s154 = smul.addr %s153, 2
        %s155 = smul.addr %s154, 4
        %s156 = scalar_lea.vmem %s0, %s155
        %s157 = smul.u32 8, %s10
      $region32: #{resnet_forward.13} parent=27 // pred_fallthru
        _
    $region28: #{resnet_forward.13} parent=5 // pred_fallthru
      _
    %p158 = scmp.le.s32.totalorder 1, %s10
    %p159 = scmp.lt.s32.totalorder %s10, 5
    %p160 = pnand %p158, %p159
    %p161 = pneg %p160
    // Predicated region
    $region33: #{resnet_forward.13} parent=5 // pred_check
      _
    $region34: #{resnet_forward.13} parent=5 // pred_check_branch
      %163 = sbr.rel (%p160) target = $region36
    $region35: #{resnet_forward.13} parent=5 // pred_region
      %s164 = ssub.s32 %s10, 1
      %s165 = smul.u32 8, %s15
      %p166 = scmp.lt.s32.totalorder %s165, 31
      %s167 = scalar_select %p166, %s165, 31
      %s168 = smul.addr %s167, 2
      %s169 = smul.addr %s168, 4
      %s170 = scalar_lea.vmem %s0, %s169
      %p171 = pneg %p36
      %p172 = pneg %p33
      %p173 = pneg %p57
      %p174 = pneg %p54
      %p175 = pneg %p78
      %p176 = pneg %p75
      %p177 = pneg %p99
      %p178 = pneg %p96
      %p179 = pneg %p120
      %p180 = pneg %p117
      %s181 = smul.u32 8, %s15
      %p182 = scmp.lt.s32.totalorder %s181, 31
      %s183 = scalar_select %p182, %s181, 31
      %s184 = smul.addr %s183, 2
      %s185 = smul.addr %s184, 4
      %s186 = scalar_lea.vmem %s0, %s185
      %s187 = smul.u32 8, %s15
      %p188 = scmp.eq.s32.totalorder %s15, 0
      // Predicated region
      $region37: #{resnet_forward.13} parent=35 // pred_check
        %p189 = pneg %p188
      $region38: #{resnet_forward.13} parent=35 // pred_check_branch
        %191 = sbr.rel (%p189) target = $region40
      $region39: #{resnet_forward.13} parent=35 // pred_region
        %192 = vst [vmem:[#allocation3] sm:$0x1] 0.0
        %193 = vst [vmem:[#allocation4] sm:$0x1] 0.0
      $region40: #{resnet_forward.13} parent=35 // pred_fallthru
        _
      %v194 = vld [vmem:[%s186] sm:$0xff]
      %v195 = vld [vmem:[%s186 + $0x8] sm:$0xff]
      %v196 = vld [vmem:[%s186 + $0x10] sm:$0xff]
      %v197 = vld [vmem:[%s186 + $0x18] sm:$0xff]
      %v198 = vld [vmem:[%s186 + $0x20] sm:$0xff]
      %v199 = vld [vmem:[%s186 + $0x28] sm:$0xff]
      %v200 = vld [vmem:[%s186 + $0x30] sm:$0xff]
      %v201 = vld [vmem:[%s186 + $0x38] sm:$0xff]
      %v202 = vld [vmem:[%s1] sm:$0xf]
      %v203 = vld [vmem:[%s1 + $0x4] sm:$0xf]
      %v204 = vld [vmem:[%s1 + $0x8] sm:$0xf]
      %v205 = vld [vmem:[%s1 + $0xc] sm:$0xf]
      %v206 = vld [vmem:[%s1 + $0x10] sm:$0xf]
      %v207 = vld [vmem:[%s1 + $0x14] sm:$0xf]
      %v208 = vld [vmem:[%s1 + $0x18] sm:$0xf]
      %v209 = vld [vmem:[%s1 + $0x1c] sm:$0xf]
      %v210 = vld [vmem:[%s1 + $0x20] sm:$0xf]
      %v211 = vld [vmem:[%s1 + $0x24] sm:$0xf]
      %v212 = vld [vmem:[%s1 + $0x28] sm:$0xf]
      %v213 = vld [vmem:[%s1 + $0x2c] sm:$0xf]
      %v214 = vld [vmem:[%s1 + $0x30] sm:$0xf]
      %v215 = vld [vmem:[%s1 + $0x34] sm:$0xf]
      %v216 = vld [vmem:[%s1 + $0x38] sm:$0xf]
      %v217 = vld [vmem:[%s1 + $0x3c] sm:$0xf]
      %v218 = vld [vmem:[%s1 + $0x40] sm:$0xf]
      %v219 = vld [vmem:[%s1 + $0x44] sm:$0xf]
      %v220 = vld [vmem:[%s1 + $0x48] sm:$0xf]
      %v221 = vld [vmem:[%s1 + $0x4c] sm:$0xf]
      %v222 = vld [vmem:[%s1 + $0x50] sm:$0xf]
      %v223 = vld [vmem:[%s1 + $0x54] sm:$0xf]
      %v224 = vld [vmem:[%s1 + $0x58] sm:$0xf]
      %v225 = vld [vmem:[%s1 + $0x5c] sm:$0xf]
      %v226 = vld [vmem:[%s1 + $0x60] sm:$0xf]
      %v227 = vld [vmem:[%s1 + $0x64] sm:$0xf]
      %v228 = vld [vmem:[%s1 + $0x68] sm:$0xf]
      %v229 = vld [vmem:[%s1 + $0x6c] sm:$0xf]
      %v230 = vld [vmem:[%s1 + $0x70] sm:$0xf]
      %v231 = vld [vmem:[%s1 + $0x74] sm:$0xf]
      %v232 = vld [vmem:[%s1 + $0x78] sm:$0xf]
      %v233 = vld [vmem:[%s1 + $0x7c] sm:$0xf]
      %v242 = vunpack.c.l.b16 %v194
      %v243 = vunpack.c.h.b16 %v194
      %v244 = vunpack.c.l.b16 %v195
      %v245 = vunpack.c.h.b16 %v195
      %v246 = vunpack.c.l.b16 %v196
      %v247 = vunpack.c.h.b16 %v196
      %v248 = vunpack.c.l.b16 %v197
      %v249 = vunpack.c.h.b16 %v197
      %v250 = vunpack.c.l.b16 %v198
      %v251 = vunpack.c.h.b16 %v198
      %v252 = vunpack.c.l.b16 %v199
      %v253 = vunpack.c.h.b16 %v199
      %v254 = vunpack.c.l.b16 %v200
      %v255 = vunpack.c.h.b16 %v200
      %v256 = vunpack.c.l.b16 %v201
      %v257 = vunpack.c.h.b16 %v201
      %v258 = vpack.c.b16 %v244, %v242
      %v259 = vpack.c.b16 %v245, %v243
      %v260 = vpack.c.b16 %v248, %v246
      %v261 = vpack.c.b16 %v249, %v247
      %v262 = vpack.c.b16 %v252, %v250
      %v263 = vpack.c.b16 %v253, %v251
      %v264 = vpack.c.b16 %v256, %v254
      %v265 = vpack.c.b16 %v257, %v255
      %v306 = vunpack.c.l.b16 %v202
      %v307 = vunpack.c.l.b16 %v203
      %v308 = vunpack.c.l.b16 %v204
      %v309 = vunpack.c.l.b16 %v205
      %v310 = vunpack.c.l.b16 %v206
      %v311 = vunpack.c.l.b16 %v207
      %v312 = vunpack.c.l.b16 %v208
      %v313 = vunpack.c.l.b16 %v209
      %v314 = vunpack.c.l.b16 %v210
      %v315 = vunpack.c.l.b16 %v211
      %v316 = vunpack.c.l.b16 %v212
      %v317 = vunpack.c.l.b16 %v213
      %v318 = vunpack.c.l.b16 %v214
      %v319 = vunpack.c.l.b16 %v215
      %v320 = vunpack.c.l.b16 %v216
      %v321 = vunpack.c.l.b16 %v217
      %v322 = vunpack.c.l.b16 %v218
      %v323 = vunpack.c.l.b16 %v219
      %v324 = vunpack.c.l.b16 %v220
      %v325 = vunpack.c.l.b16 %v221
      %v326 = vunpack.c.l.b16 %v222
      %v327 = vunpack.c.l.b16 %v223
      %v328 = vunpack.c.l.b16 %v224
      %v329 = vunpack.c.l.b16 %v225
      %v330 = vunpack.c.l.b16 %v226
      %v331 = vunpack.c.l.b16 %v227
      %v332 = vunpack.c.l.b16 %v228
      %v333 = vunpack.c.l.b16 %v229
      %v334 = vunpack.c.l.b16 %v230
      %v335 = vunpack.c.l.b16 %v231
      %v336 = vunpack.c.l.b16 %v232
      %v337 = vunpack.c.l.b16 %v233
      %v338 = vpack.c.b16 %v307, %v306
      %v339 = vpack.c.b16 %v309, %v308
      %v340 = vpack.c.b16 %v311, %v310
      %v341 = vpack.c.b16 %v313, %v312
      %v342 = vpack.c.b16 %v315, %v314
      %v343 = vpack.c.b16 %v317, %v316
      %v344 = vpack.c.b16 %v319, %v318
      %v345 = vpack.c.b16 %v321, %v320
      %v346 = vpack.c.b16 %v323, %v322
      %v347 = vpack.c.b16 %v325, %v324
      %v348 = vpack.c.b16 %v327, %v326
      %v349 = vpack.c.b16 %v329, %v328
      %v350 = vpack.c.b16 %v331, %v330
      %v351 = vpack.c.b16 %v333, %v332
      %v352 = vpack.c.b16 %v335, %v334
      %v353 = vpack.c.b16 %v337, %v336
      %370 = vmatpush.bf16.msra.mxu0 %v345
      %371 = vmatpush.bf16.msra.mxu0 %v344
      %372 = vmatpush.bf16.msra.mxu0 %v343
      %373 = vmatpush.bf16.msra.mxu0 %v342
      %374 = vmatpush.bf16.msra.mxu0 %v341
      %375 = vmatpush.bf16.msra.mxu0 %v340
      %376 = vmatpush.bf16.msra.mxu0 %v339
      %377 = vmatpush.bf16.msra.mxu0 %v338
      %378 = vmatmul.bf16.gmra.mxu0 %v258
      %v379 = vpop.f32.mrf.mxu0
      %v380 = vadd.f32 0.0, %v379
      %v381 = vpop.f32.mrf.mxu0
      %v382 = vadd.f32 0.0, %v381
      %383 = vmatmul.bf16.gmra.mxu0 %v260
      %v384 = vpop.f32.mrf.mxu0
      %v385 = vadd.f32 0.0, %v384
      %v386 = vpop.f32.mrf.mxu0
      %v387 = vadd.f32 0.0, %v386
      %388 = vmatmul.bf16.gmra.mxu0 %v262
      %v389 = vpop.f32.mrf.mxu0
      %v390 = vadd.f32 0.0, %v389
      %v391 = vpop.f32.mrf.mxu0
      %v392 = vadd.f32 0.0, %v391
      %393 = vmatmul.bf16.gmra.mxu0 %v264
      %v394 = vpop.f32.mrf.mxu0
      %v395 = vadd.f32 0.0, %v394
      %v396 = vpop.f32.mrf.mxu0
      %v397 = vadd.f32 0.0, %v396
      %398 = vdwg.mxu0
      %399 = vmatpush.bf16.msra.mxu0 %v353
      %400 = vmatpush.bf16.msra.mxu0 %v352
      %401 = vmatpush.bf16.msra.mxu0 %v351
      %402 = vmatpush.bf16.msra.mxu0 %v350
      %403 = vmatpush.bf16.msra.mxu0 %v349
      %404 = vmatpush.bf16.msra.mxu0 %v348
      %405 = vmatpush.bf16.msra.mxu0 %v347
      %406 = vmatpush.bf16.msra.mxu0 %v346
      %407 = vmatmul.bf16.gmra.mxu0 %v259
      %v408 = vpop.f32.mrf.mxu0
      %v409 = vadd.f32 %v380, %v408
      %v410 = vpop.f32.mrf.mxu0
      %v411 = vadd.f32 %v382, %v410
      %412 = vmatmul.bf16.gmra.mxu0 %v261
      %v413 = vpop.f32.mrf.mxu0
      %v414 = vadd.f32 %v385, %v413
      %v415 = vpop.f32.mrf.mxu0
      %v416 = vadd.f32 %v387, %v415
      %417 = vmatmul.bf16.gmra.mxu0 %v263
      %v418 = vpop.f32.mrf.mxu0
      %v419 = vadd.f32 %v390, %v418
      %v420 = vpop.f32.mrf.mxu0
      %v421 = vadd.f32 %v392, %v420
      %422 = vmatmul.bf16.gmra.mxu0 %v265
      %v423 = vpop.f32.mrf.mxu0
      %v424 = vadd.f32 %v395, %v423
      %v425 = vpop.f32.mrf.mxu0
      %v426 = vadd.f32 %v397, %v425
      %427 = vdwg.mxu0
      %s428 = smul.u32 %s15, 64
      %s429 = scalar_lea.vmem [#allocation2], %s428
      %430 = vst [vmem:[%s429] sm:$0xff] %v409
      %431 = vst [vmem:[%s429 + $0x8] sm:$0xff] %v411
      %432 = vst [vmem:[%s429 + $0x10] sm:$0xff] %v414
      %433 = vst [vmem:[%s429 + $0x18] sm:$0xff] %v416
      %434 = vst [vmem:[%s429 + $0x20] sm:$0xff] %v419
      %435 = vst [vmem:[%s429 + $0x28] sm:$0xff] %v421
      %436 = vst [vmem:[%s429 + $0x30] sm:$0xff] %v424
      %437 = vst [vmem:[%s429 + $0x38] sm:$0xff] %v426
      %v438 = vld [vmem:[#allocation3] sm:$0x1]
      %v439 = vadd.f32 %v409, %v411
      %v440 = vadd.f32 %v439, %v414
      %v441 = vadd.f32 %v440, %v416
      %v442 = vadd.f32 %v441, %v419
      %v443 = vadd.f32 %v442, %v421
      %v444 = vadd.f32 %v443, %v424
      %v445 = vadd.f32 %v444, %v426
      %v446 = vrot.slane %v445, 4
      %v447 = vadd.f32 %v445, %v446
      %v448 = vrot.slane %v447, 2
      %v449 = vadd.f32 %v447, %v448
      %v450 = vrot.slane %v449, 1
      %v451 = vadd.f32 %v449, %v450
      %v452 = vadd.f32 %v438, %v451
      %453 = vst [vmem:[#allocation3] sm:$0x1] %v452
      %v454 = vld [vmem:[#allocation4] sm:$0x1]
      %v455 = vmul.f32 %v409, %v409
      %v456 = vmul.f32 %v411, %v411
      %v457 = vmul.f32 %v414, %v414
      %v458 = vmul.f32 %v416, %v416
      %v459 = vmul.f32 %v419, %v419
      %v460 = vmul.f32 %v421, %v421
      %v461 = vmul.f32 %v424, %v424
      %v462 = vmul.f32 %v426, %v426
      %v463 = vadd.f32 %v455, %v456
      %v464 = vadd.f32 %v463, %v457
      %v465 = vadd.f32 %v464, %v458
      %v466 = vadd.f32 %v465, %v459
      %v467 = vadd.f32 %v466, %v460
      %v468 = vadd.f32 %v467, %v461
      %v469 = vadd.f32 %v468, %v462
      %v470 = vrot.slane %v469, 4
      %v471 = vadd.f32 %v469, %v470
      %v472 = vrot.slane %v471, 2
      %v473 = vadd.f32 %v471, %v472
      %v474 = vrot.slane %v473, 1
      %v475 = vadd.f32 %v473, %v474
      %v476 = vadd.f32 %v454, %v475
      %477 = vst [vmem:[#allocation4] sm:$0x1] %v476
      %p478 = scmp.eq.s32.totalorder %s15, 3
      // Predicated region
      $region41: #{resnet_forward.13} parent=35 // pred_check
        %p479 = pneg %p478
      $region42: #{resnet_forward.13} parent=35 // pred_check_branch
        %481 = sbr.rel (%p479) target = $region44
      $region43: #{resnet_forward.13} parent=35 // pred_region
        %v482 = vld [vmem:[#allocation3] sm:$0x1]
        %v483 = vmul.f32 %v482, 0.00390625
        %v484 = vld [vmem:[#allocation4] sm:$0x1]
        %v485 = vmul.f32 %v484, 0.00390625
        %v486 = vmul.f32 %v483, %v483
        %v487 = vsub.f32 %v485, %v486
        %v488 = vmax.f32 %v487, 0.0
        %v489 = vadd.f32 %v488, 1e-05
        %v490 = vrsqrt.pop %v489
        %v491 = vmul.f32 %v490, %v489
        %v492 = vmul.f32 %v491, %v490
        %v493 = vmul.f32 0.5, %v492
        %v494 = vsub.f32 1.5, %v493
        %v495 = vmul.f32 %v490, %v494
        %vm496 = vweird.f32 %v489
        %vm497 = vweird.f32 %v490
        %vm498 = vmor %vm496, %vm497
        %v499 = vsel %vm498, %v490, %v495
        %v500 = vld [vmem:[%s2] sm:$0x1]
        %v501 = vmul.f32 %v499, %v500
        %v502 = vld [vmem:[%s3] sm:$0x1]
        %v503 = vmul.f32 %v483, %v501
        %v504 = vsub.f32 %v502, %v503
        %v505 = vld [vmem:[#allocation2] sm:$0xff]
        %v506 = vld [vmem:[#allocation2 + $0x8] sm:$0xff]
        %v507 = vld [vmem:[#allocation2 + $0x10] sm:$0xff]
        %v508 = vld [vmem:[#allocation2 + $0x18] sm:$0xff]
        %v509 = vld [vmem:[#allocation2 + $0x20] sm:$0xff]
        %v510 = vld [vmem:[#allocation2 + $0x28] sm:$0xff]
        %v511 = vld [vmem:[#allocation2 + $0x30] sm:$0xff]
        %v512 = vld [vmem:[#allocation2 + $0x38] sm:$0xff]
        %v513 = vld [vmem:[#allocation2 + $0x40] sm:$0xff]
        %v514 = vld [vmem:[#allocation2 + $0x48] sm:$0xff]
        %v515 = vld [vmem:[#allocation2 + $0x50] sm:$0xff]
        %v516 = vld [vmem:[#allocation2 + $0x58] sm:$0xff]
        %v517 = vld [vmem:[#allocation2 + $0x60] sm:$0xff]
        %v518 = vld [vmem:[#allocation2 + $0x68] sm:$0xff]
        %v519 = vld [vmem:[#allocation2 + $0x70] sm:$0xff]
        %v520 = vld [vmem:[#allocation2 + $0x78] sm:$0xff]
        %v521 = vld [vmem:[#allocation2 + $0x80] sm:$0xff]
        %v522 = vld [vmem:[#allocation2 + $0x88] sm:$0xff]
        %v523 = vld [vmem:[#allocation2 + $0x90] sm:$0xff]
        %v524 = vld [vmem:[#allocation2 + $0x98] sm:$0xff]
        %v525 = vld [vmem:[#allocation2 + $0xa0] sm:$0xff]
        %v526 = vld [vmem:[#allocation2 + $0xa8] sm:$0xff]
        %v527 = vld [vmem:[#allocation2 + $0xb0] sm:$0xff]
        %v528 = vld [vmem:[#allocation2 + $0xb8] sm:$0xff]
        %v529 = vld [vmem:[#allocation2 + $0xc0] sm:$0xff]
        %v530 = vld [vmem:[#allocation2 + $0xc8] sm:$0xff]
        %v531 = vld [vmem:[#allocation2 + $0xd0] sm:$0xff]
        %v532 = vld [vmem:[#allocation2 + $0xd8] sm:$0xff]
        %v533 = vld [vmem:[#allocation2 + $0xe0] sm:$0xff]
        %v534 = vld [vmem:[#allocation2 + $0xe8] sm:$0xff]
        %v535 = vld [vmem:[#allocation2 + $0xf0] sm:$0xff]
        %v536 = vld [vmem:[#allocation2 + $0xf8] sm:$0xff]
        %v538 = vperm.slane %v501, 0
        %v540 = vmul.f32 %v505, %v538
        %v541 = vmul.f32 %v506, %v538
        %v542 = vmul.f32 %v507, %v538
        %v543 = vmul.f32 %v508, %v538
        %v544 = vmul.f32 %v509, %v538
        %v545 = vmul.f32 %v510, %v538
        %v546 = vmul.f32 %v511, %v538
        %v547 = vmul.f32 %v512, %v538
        %v548 = vmul.f32 %v513, %v538
        %v549 = vmul.f32 %v514, %v538
        %v550 = vmul.f32 %v515, %v538
        %v551 = vmul.f32 %v516, %v538
        %v552 = vmul.f32 %v517, %v538
        %v553 = vmul.f32 %v518, %v538
        %v554 = vmul.f32 %v519, %v538
        %v555 = vmul.f32 %v520, %v538
        %v556 = vmul.f32 %v521, %v538
        %v557 = vmul.f32 %v522, %v538
        %v558 = vmul.f32 %v523, %v538
        %v559 = vmul.f32 %v524, %v538
        %v560 = vmul.f32 %v525, %v538
        %v561 = vmul.f32 %v526, %v538
        %v562 = vmul.f32 %v527, %v538
        %v563 = vmul.f32 %v528, %v538
        %v564 = vmul.f32 %v529, %v538
        %v565 = vmul.f32 %v530, %v538
        %v566 = vmul.f32 %v531, %v538
        %v567 = vmul.f32 %v532, %v538
        %v568 = vmul.f32 %v533, %v538
        %v569 = vmul.f32 %v534, %v538
        %v570 = vmul.f32 %v535, %v538
        %v571 = vmul.f32 %v536, %v538
        %v573 = vperm.slane %v504, 0
        %v575 = vadd.f32 %v540, %v573
        %v576 = vadd.f32 %v541, %v573
        %v577 = vadd.f32 %v542, %v573
        %v578 = vadd.f32 %v543, %v573
        %v579 = vadd.f32 %v544, %v573
        %v580 = vadd.f32 %v545, %v573
        %v581 = vadd.f32 %v546, %v573
        %v582 = vadd.f32 %v547, %v573
        %v583 = vadd.f32 %v548, %v573
        %v584 = vadd.f32 %v549, %v573
        %v585 = vadd.f32 %v550, %v573
        %v586 = vadd.f32 %v551, %v573
        %v587 = vadd.f32 %v552, %v573
        %v588 = vadd.f32 %v553, %v573
        %v589 = vadd.f32 %v554, %v573
        %v590 = vadd.f32 %v555, %v573
        %v591 = vadd.f32 %v556, %v573
        %v592 = vadd.f32 %v557, %v573
        %v593 = vadd.f32 %v558, %v573
        %v594 = vadd.f32 %v559, %v573
        %v595 = vadd.f32 %v560, %v573
        %v596 = vadd.f32 %v561, %v573
        %v597 = vadd.f32 %v562, %v573
        %v598 = vadd.f32 %v563, %v573
        %v599 = vadd.f32 %v564, %v573
        %v600 = vadd.f32 %v565, %v573
        %v601 = vadd.f32 %v566, %v573
        %v602 = vadd.f32 %v567, %v573
        %v603 = vadd.f32 %v568, %v573
        %v604 = vadd.f32 %v569, %v573
        %v605 = vadd.f32 %v570, %v573
        %v606 = vadd.f32 %v571, %v573
        %v607 = vmax.f32 %v575, 0.0
        %v608 = vmax.f32 %v576, 0.0
        %v609 = vmax.f32 %v577, 0.0
        %v610 = vmax.f32 %v578, 0.0
        %v611 = vmax.f32 %v579, 0.0
        %v612 = vmax.f32 %v580, 0.0
        %v613 = vmax.f32 %v581, 0.0
        %v614 = vmax.f32 %v582, 0.0
        %v615 = vmax.f32 %v583, 0.0
        %v616 = vmax.f32 %v584, 0.0
        %v617 = vmax.f32 %v585, 0.0
        %v618 = vmax.f32 %v586, 0.0
        %v619 = vmax.f32 %v587, 0.0
        %v620 = vmax.f32 %v588, 0.0
        %v621 = vmax.f32 %v589, 0.0
        %v622 = vmax.f32 %v590, 0.0
        %v623 = vmax.f32 %v591, 0.0
        %v624 = vmax.f32 %v592, 0.0
        %v625 = vmax.f32 %v593, 0.0
        %v626 = vmax.f32 %v594, 0.0
        %v627 = vmax.f32 %v595, 0.0
        %v628 = vmax.f32 %v596, 0.0
        %v629 = vmax.f32 %v597, 0.0
        %v630 = vmax.f32 %v598, 0.0
        %v631 = vmax.f32 %v599, 0.0
        %v632 = vmax.f32 %v600, 0.0
        %v633 = vmax.f32 %v601, 0.0
        %v634 = vmax.f32 %v602, 0.0
        %v635 = vmax.f32 %v603, 0.0
        %v636 = vmax.f32 %v604, 0.0
        %v637 = vmax.f32 %v605, 0.0
        %v638 = vmax.f32 %v606, 0.0
        %v639 = vpack.c.bf16 %v607, %v607
        %v640 = vpack.c.bf16 %v608, %v608
        %v641 = vpack.c.bf16 %v609, %v609
        %v642 = vpack.c.bf16 %v610, %v610
        %v643 = vpack.c.bf16 %v611, %v611
        %v644 = vpack.c.bf16 %v612, %v612
        %v645 = vpack.c.bf16 %v613, %v613
        %v646 = vpack.c.bf16 %v614, %v614
        %v647 = vpack.c.bf16 %v615, %v615
        %v648 = vpack.c.bf16 %v616, %v616
        %v649 = vpack.c.bf16 %v617, %v617
        %v650 = vpack.c.bf16 %v618, %v618
        %v651 = vpack.c.bf16 %v619, %v619
        %v652 = vpack.c.bf16 %v620, %v620
        %v653 = vpack.c.bf16 %v621, %v621
        %v654 = vpack.c.bf16 %v622, %v622
        %v655 = vpack.c.bf16 %v623, %v623
        %v656 = vpack.c.bf16 %v624, %v624
        %v657 = vpack.c.bf16 %v625, %v625
        %v658 = vpack.c.bf16 %v626, %v626
        %v659 = vpack.c.bf16 %v627, %v627
        %v660 = vpack.c.bf16 %v628, %v628
        %v661 = vpack.c.bf16 %v629, %v629
        %v662 = vpack.c.bf16 %v630, %v630
        %v663 = vpack.c.bf16 %v631, %v631
        %v664 = vpack.c.bf16 %v632, %v632
        %v665 = vpack.c.bf16 %v633, %v633
        %v666 = vpack.c.bf16 %v634, %v634
        %v667 = vpack.c.bf16 %v635, %v635
        %v668 = vpack.c.bf16 %v636, %v636
        %v669 = vpack.c.bf16 %v637, %v637
        %v670 = vpack.c.bf16 %v638, %v638
        %671 = vst [vmem:[%s4] sm:$0xf] %v639
        %672 = vst [vmem:[%s4 + $0x4] sm:$0xf] %v640
        %673 = vst [vmem:[%s4 + $0x8] sm:$0xf] %v641
        %674 = vst [vmem:[%s4 + $0xc] sm:$0xf] %v642
        %675 = vst [vmem:[%s4 + $0x10] sm:$0xf] %v643
        %676 = vst [vmem:[%s4 + $0x14] sm:$0xf] %v644
        %677 = vst [vmem:[%s4 + $0x18] sm:$0xf] %v645
        %678 = vst [vmem:[%s4 + $0x1c] sm:$0xf] %v646
        %679 = vst [vmem:[%s4 + $0x20] sm:$0xf] %v647
        %680 = vst [vmem:[%s4 + $0x24] sm:$0xf] %v648
        %681 = vst [vmem:[%s4 + $0x28] sm:$0xf] %v649
        %682 = vst [vmem:[%s4 + $0x2c] sm:$0xf] %v650
        %683 = vst [vmem:[%s4 + $0x30] sm:$0xf] %v651
        %684 = vst [vmem:[%s4 + $0x34] sm:$0xf] %v652
        %685 = vst [vmem:[%s4 + $0x38] sm:$0xf] %v653
        %686 = vst [vmem:[%s4 + $0x3c] sm:$0xf] %v654
        %687 = vst [vmem:[%s4 + $0x40] sm:$0xf] %v655
        %688 = vst [vmem:[%s4 + $0x44] sm:$0xf] %v656
        %689 = vst [vmem:[%s4 + $0x48] sm:$0xf] %v657
        %690 = vst [vmem:[%s4 + $0x4c] sm:$0xf] %v658
        %691 = vst [vmem:[%s4 + $0x50] sm:$0xf] %v659
        %692 = vst [vmem:[%s4 + $0x54] sm:$0xf] %v660
        %693 = vst [vmem:[%s4 + $0x58] sm:$0xf] %v661
        %694 = vst [vmem:[%s4 + $0x5c] sm:$0xf] %v662
        %695 = vst [vmem:[%s4 + $0x60] sm:$0xf] %v663
        %696 = vst [vmem:[%s4 + $0x64] sm:$0xf] %v664
        %697 = vst [vmem:[%s4 + $0x68] sm:$0xf] %v665
        %698 = vst [vmem:[%s4 + $0x6c] sm:$0xf] %v666
        %699 = vst [vmem:[%s4 + $0x70] sm:$0xf] %v667
        %700 = vst [vmem:[%s4 + $0x74] sm:$0xf] %v668
        %701 = vst [vmem:[%s4 + $0x78] sm:$0xf] %v669
        %702 = vst [vmem:[%s4 + $0x7c] sm:$0xf] %v670
      $region44: #{resnet_forward.13} parent=35 // pred_fallthru
        _
      // Predicated region
      $region45: #{resnet_forward.13} parent=35 // pred_check
        %p703 = pneg %p117
      $region46: #{resnet_forward.13} parent=35 // pred_check_branch
        %705 = sbr.rel (%p703) target = $region48
      $region47: #{resnet_forward.13} parent=35 // pred_region
        _
      $region48: #{resnet_forward.13} parent=35 // pred_fallthru
        _
      // Predicated region
      $region49: #{resnet_forward.13} parent=35 // pred_check
        %p706 = pneg %p117
      $region50: #{resnet_forward.13} parent=35 // pred_check_branch
        %708 = sbr.rel (%p706) target = $region52
      $region51: #{resnet_forward.13} parent=35 // pred_region
        _
      $region52: #{resnet_forward.13} parent=35 // pred_fallthru
        _
    $region36: #{resnet_forward.13} parent=5 // pred_fallthru
      _
    %p709 = scmp.le.s32.totalorder 2, %s10
    // Predicated region
    $region53: #{resnet_forward.13} parent=5 // pred_check
      %p710 = pneg %p709
    $region54: #{resnet_forward.13} parent=5 // pred_check_branch
      %712 = sbr.rel (%p710) target = $region56
    $region55: #{resnet_forward.13} parent=5 // pred_region
      %s713 = ssub.s32 %s10, 2
    $region56: #{resnet_forward.13} parent=5 // pred_fallthru
      _
  $region6: #{resnet_forward.13} parent=0 // loop_footer
    %s14 = sadd.s32 1, %s10
  $region7: #{resnet_forward.13} parent=0 // loop_footer_branch
    %9 = sbr.rel target = $region3
  $region8: #{resnet_forward.13} parent=0 // loop_exit
    _

// kernel: resnet_forward.14
$region0: #{resnet_forward.14}
  #allocation0 [shape = 'u32[]', space=smem, size = 0x4, offset = 0x4, fixed_abs, tag = 'smem constant byte address 0x4 - core index']
  #allocation1 [shape = 'u32[72,128]{1,0:T(1,128)}', space=vmem, size = 0x9000, scoped, tag = 'internal scratch']
  #allocation2 [shape = 'f32[4,64,128]{2,1,0:T(8,128)}', space=vmem, size = 0x20000, scoped, tag = 'scratch operand']
  #allocation3 [shape = 'f32[1,128]{1,0:T(1,128)}', space=vmem, size = 0x200, scoped, tag = 'scratch operand']
  #allocation4 [shape = 'f32[1,128]{1,0:T(1,128)}', space=vmem, size = 0x200, scoped, tag = 'scratch operand']
  %s0 = inlined_call_operand.vmem [shape: bf16[256,128], index: 0, kind: input, shape index: {}]
  %s1 = inlined_call_operand.vmem [shape: bf16[128,128], index: 1, kind: input, shape index: {}]
  %s2 = inlined_call_operand.vmem [shape: f32[1,128], index: 2, kind: input, shape index: {}]
  %s3 = inlined_call_operand.vmem [shape: f32[1,128], index: 3, kind: input, shape index: {}]
  %s4 = inlined_call_operand.vmem [shape: bf16[4,64,128], index: 4, kind: output, shape index: {}]
  %s5 = sld [smem:[#allocation0]]
  $region57: #{resnet_forward.14} parent=0
    _
  %s7 = ssub.s32 1, %s5
  %s8 = scalar_select 0, %s7, %s5
  loop: start=0, step=1, limit=6
  $region2: #{resnet_forward.14} parent=0 // loop_pre_header
    _
  $region3: #{resnet_forward.14} parent=0 // loop_header
    %s10 = sphi 0, %s14
    %p11 = scmp.ge.s32.totalorder %s10, 6
    %s20 = sphi 0, %s22
    %s23 = sphi 0, %s20
    %s24 = sphi 0, %s23
    %s40 = sphi 0, %s24
    %s44 = sphi 0, %s44
    %s46 = sphi 0, %s44
    %s47 = sphi 0, %s46
    %s61 = sphi 0, %s47
    %s65 = sphi 0, %s65
    %s67 = sphi 0, %s65
    %s68 = sphi 0, %s67
    %s82 = sphi 0, %s68
    %s86 = sphi 0, %s86
    %s88 = sphi 0, %s86
    %s89 = sphi 0, %s88
    %s103 = sphi 0, %s89
    %s107 = sphi 0, %s107
    %s109 = sphi 0, %s107
    %s110 = sphi 0, %s109
    %s124 = sphi 0, %s110
  $region4: #{resnet_forward.14} parent=0 // loop_header_branch
    %13 = sbr.rel (%p11) target = $region8
  $region5: #{resnet_forward.14} parent=0 // loop_body
    %s15 = ssub.s32 %s10, 1
    %s16 = ssub.s32 %s10, 2
    %s17 = sadd.s32 %s10, 1
    %s18 = ssub.s32 %s10, %s17
    %p19 = scmp.eq.s32.totalorder %s18, 0
    %s21 = sadd.s32 %s20, 1
    %s22 = scalar_select %p19, %s20, %s21
    %p25 = pneg %p19
    %p26 = scmp.eq.s32.totalorder %s10, 3
    %p27 = por %p25, %p26
    %p28 = scmp.ne.s32.totalorder %s20, %s23
    %p29 = scmp.eq.s32.totalorder %s10, 0
    %p30 = por %p28, %p29
    %p31 = scmp.ne.s32.totalorder %s20, %s23
    %p32 = scmp.eq.s32.totalorder %s15, 3
    %p33 = por %p31, %p32
    %p34 = scmp.ne.s32.totalorder %s23, %s24
    %p35 = scmp.eq.s32.totalorder %s15, 0
    %p36 = por %p34, %p35
    %p37 = scmp.ne.s32.totalorder %s23, %s24
    %p38 = scmp.eq.s32.totalorder %s16, 3
    %p39 = por %p37, %p38
    %p41 = scmp.ne.s32.totalorder %s24, %s40
    %p42 = scmp.eq.s32.totalorder %s16, 0
    %p43 = por %p41, %p42
    %s45 = sadd.s32 %s44, 1
    %p48 = scmp.eq.s32.totalorder %s10, 3
    %p49 = scmp.ne.s32.totalorder %s44, %s46
    %p50 = scmp.eq.s32.totalorder %s10, 0
    %p51 = por %p49, %p50
    %p52 = scmp.ne.s32.totalorder %s44, %s46
    %p53 = scmp.eq.s32.totalorder %s15, 3
    %p54 = por %p52, %p53
    %p55 = scmp.ne.s32.totalorder %s46, %s47
    %p56 = scmp.eq.s32.totalorder %s15, 0
    %p57 = por %p55, %p56
    %p58 = scmp.ne.s32.totalorder %s46, %s47
    %p59 = scmp.eq.s32.totalorder %s16, 3
    %p60 = por %p58, %p59
    %p62 = scmp.ne.s32.totalorder %s47, %s61
    %p63 = scmp.eq.s32.totalorder %s16, 0
    %p64 = por %p62, %p63
    %s66 = sadd.s32 %s65, 1
    %p69 = scmp.eq.s32.totalorder %s10, 3
    %p70 = scmp.ne.s32.totalorder %s65, %s67
    %p71 = scmp.eq.s32.totalorder %s10, 0
    %p72 = por %p70, %p71
    %p73 = scmp.ne.s32.totalorder %s65, %s67
    %p74 = scmp.eq.s32.totalorder %s15, 3
    %p75 = por %p73, %p74
    %p76 = scmp.ne.s32.totalorder %s67, %s68
    %p77 = scmp.eq.s32.totalorder %s15, 0
    %p78 = por %p76, %p77
    %p79 = scmp.ne.s32.totalorder %s67, %s68
    %p80 = scmp.eq.s32.totalorder %s16, 3
    %p81 = por %p79, %p80
    %p83 = scmp.ne.s32.totalorder %s68, %s82
    %p84 = scmp.eq.s32.totalorder %s16, 0
    %p85 = por %p83, %p84
    %s87 = sadd.s32 %s86, 1
    %p90 = scmp.eq.s32.totalorder %s10, 3
    %p91 = scmp.ne.s32.totalorder %s86, %s88
    %p92 = scmp.eq.s32.totalorder %s10, 0
    %p93 = por %p91, %p92
    %p94 = scmp.ne.s32.totalorder %s86, %s88
    %p95 = scmp.eq.s32.totalorder %s15, 3
    %p96 = por %p94, %p95
    %p97 = scmp.ne.s32.totalorder %s88, %s89
    %p98 = scmp.eq.s32.totalorder %s15, 0
    %p99 = por %p97, %p98
    %p100 = scmp.ne.s32.totalorder %s88, %s89
    %p101 = scmp.eq.s32.totalorder %s16, 3
    %p102 = por %p100, %p101
    %p104 = scmp.ne.s32.totalorder %s89, %s103
    %p105 = scmp.eq.s32.totalorder %s16, 0
    %p106 = por %p104, %p105
    %s108 = sadd.s32 %s107, 1
    %p111 = scmp.eq.s32.totalorder %s10, 3
    %p112 = scmp.ne.s32.totalorder %s107, %s109
    %p113 = scmp.eq.s32.totalorder %s10, 0
    %p114 = por %p112, %p113
    %p115 = scmp.ne.s32.totalorder %s107, %s109
    %p116 = scmp.eq.s32.totalorder %s15, 3
    %p117 = por %p115, %p116
    %p118 = scmp.ne.s32.totalorder %s109, %s110
    %p119 = scmp.eq.s32.totalorder %s15, 0
    %p120 = por %p118, %p119
    %p121 = scmp.ne.s32.totalorder %s109, %s110
    %p122 = scmp.eq.s32.totalorder %s16, 3
    %p123 = por %p121, %p122
    %p125 = scmp.ne.s32.totalorder %s110, %s124
    %p126 = scmp.eq.s32.totalorder %s16, 0
    %p127 = por %p125, %p126
    %p128 = scmp.le.s32.totalorder 1, %s10
    %p129 = scmp.lt.s32.totalorder %s10, 5
    %p130 = pnand %p128, %p129
    %p131 = pneg %p130
    // Predicated region
    $region9: #{resnet_forward.14} parent=5 // pred_check
      _
    $region10: #{resnet_forward.14} parent=5 // pred_check_branch
      %133 = sbr.rel (%p130) target = $region12
    $region11: #{resnet_forward.14} parent=5 // pred_region
      %s134 = ssub.s32 %s10, 1
      // Predicated region
      $region13: #{resnet_forward.14} parent=11 // pred_check
        %p135 = pneg %p57
      $region14: #{resnet_forward.14} parent=11 // pred_check_branch
        %137 = sbr.rel (%p135) target = $region16
      $region15: #{resnet_forward.14} parent=11 // pred_region
        _
      $region16: #{resnet_forward.14} parent=11 // pred_fallthru
        _
      // Predicated region
      $region17: #{resnet_forward.14} parent=11 // pred_check
        %p138 = pneg %p78
      $region18: #{resnet_forward.14} parent=11 // pred_check_branch
        %140 = sbr.rel (%p138) target = $region20
      $region19: #{resnet_forward.14} parent=11 // pred_region
        _
      $region20: #{resnet_forward.14} parent=11 // pred_fallthru
        _
      // Predicated region
      $region21: #{resnet_forward.14} parent=11 // pred_check
        %p141 = pneg %p99
      $region22: #{resnet_forward.14} parent=11 // pred_check_branch
        %143 = sbr.rel (%p141) target = $region24
      $region23: #{resnet_forward.14} parent=11 // pred_region
        _
      $region24: #{resnet_forward.14} parent=11 // pred_fallthru
        _
    $region12: #{resnet_forward.14} parent=5 // pred_fallthru
      _
    %p144 = scmp.lt.s32.totalorder %s10, 4
    // Predicated region
    $region25: #{resnet_forward.14} parent=5 // pred_check
      %p145 = pneg %p144
    $region26: #{resnet_forward.14} parent=5 // pred_check_branch
      %147 = sbr.rel (%p145) target = $region28
    $region27: #{resnet_forward.14} parent=5 // pred_region
      // Predicated region
      $region29: #{resnet_forward.14} parent=27 // pred_check
        %p148 = pneg %p30
      $region30: #{resnet_forward.14} parent=27 // pred_check_branch
        %150 = sbr.rel (%p148) target = $region32
      $region31: #{resnet_forward.14} parent=27 // pred_region
        %s151 = smul.u32 8, %s10
        %p152 = scmp.lt.s32.totalorder %s151, 31
        %s153 = scalar_select %p152, %s151, 31
        %s154 = smul.addr %s153, 4
        %s155 = scalar_lea.vmem %s0, %s154
        %s156 = smul.u32 8, %s10
      $region32: #{resnet_forward.14} parent=27 // pred_fallthru
        _
    $region28: #{resnet_forward.14} parent=5 // pred_fallthru
      _
    %p157 = scmp.le.s32.totalorder 1, %s10
    %p158 = scmp.lt.s32.totalorder %s10, 5
    %p159 = pnand %p157, %p158
    %p160 = pneg %p159
    // Predicated region
    $region33: #{resnet_forward.14} parent=5 // pred_check
      _
    $region34: #{resnet_forward.14} parent=5 // pred_check_branch
      %162 = sbr.rel (%p159) target = $region36
    $region35: #{resnet_forward.14} parent=5 // pred_region
      %s163 = ssub.s32 %s10, 1
      %s164 = smul.u32 8, %s15
      %p165 = scmp.lt.s32.totalorder %s164, 31
      %s166 = scalar_select %p165, %s164, 31
      %s167 = smul.addr %s166, 4
      %s168 = scalar_lea.vmem %s0, %s167
      %p169 = pneg %p36
      %p170 = pneg %p33
      %p171 = pneg %p57
      %p172 = pneg %p54
      %p173 = pneg %p78
      %p174 = pneg %p75
      %p175 = pneg %p99
      %p176 = pneg %p96
      %p177 = pneg %p120
      %p178 = pneg %p117
      %s179 = smul.u32 8, %s15
      %p180 = scmp.lt.s32.totalorder %s179, 31
      %s181 = scalar_select %p180, %s179, 31
      %s182 = smul.addr %s181, 4
      %s183 = scalar_lea.vmem %s0, %s182
      %s184 = smul.u32 8, %s15
      %p185 = scmp.eq.s32.totalorder %s15, 0
      // Predicated region
      $region37: #{resnet_forward.14} parent=35 // pred_check
        %p186 = pneg %p185
      $region38: #{resnet_forward.14} parent=35 // pred_check_branch
        %188 = sbr.rel (%p186) target = $region40
      $region39: #{resnet_forward.14} parent=35 // pred_region
        %189 = vst [vmem:[#allocation3] sm:$0x1] 0.0
        %190 = vst [vmem:[#allocation4] sm:$0x1] 0.0
      $region40: #{resnet_forward.14} parent=35 // pred_fallthru
        _
      %v191 = vld [vmem:[%s183] sm:$0xf]
      %v192 = vld [vmem:[%s183 + $0x4] sm:$0xf]
      %v193 = vld [vmem:[%s183 + $0x8] sm:$0xf]
      %v194 = vld [vmem:[%s183 + $0xc] sm:$0xf]
      %v195 = vld [vmem:[%s183 + $0x10] sm:$0xf]
      %v196 = vld [vmem:[%s183 + $0x14] sm:$0xf]
      %v197 = vld [vmem:[%s183 + $0x18] sm:$0xf]
      %v198 = vld [vmem:[%s183 + $0x1c] sm:$0xf]
      %v199 = vld [vmem:[%s1] sm:$0xf]
      %v200 = vld [vmem:[%s1 + $0x4] sm:$0xf]
      %v201 = vld [vmem:[%s1 + $0x8] sm:$0xf]
      %v202 = vld [vmem:[%s1 + $0xc] sm:$0xf]
      %v203 = vld [vmem:[%s1 + $0x10] sm:$0xf]
      %v204 = vld [vmem:[%s1 + $0x14] sm:$0xf]
      %v205 = vld [vmem:[%s1 + $0x18] sm:$0xf]
      %v206 = vld [vmem:[%s1 + $0x1c] sm:$0xf]
      %v207 = vld [vmem:[%s1 + $0x20] sm:$0xf]
      %v208 = vld [vmem:[%s1 + $0x24] sm:$0xf]
      %v209 = vld [vmem:[%s1 + $0x28] sm:$0xf]
      %v210 = vld [vmem:[%s1 + $0x2c] sm:$0xf]
      %v211 = vld [vmem:[%s1 + $0x30] sm:$0xf]
      %v212 = vld [vmem:[%s1 + $0x34] sm:$0xf]
      %v213 = vld [vmem:[%s1 + $0x38] sm:$0xf]
      %v214 = vld [vmem:[%s1 + $0x3c] sm:$0xf]
      %v223 = vunpack.c.l.b16 %v191
      %v224 = vunpack.c.l.b16 %v192
      %v225 = vunpack.c.l.b16 %v193
      %v226 = vunpack.c.l.b16 %v194
      %v227 = vunpack.c.l.b16 %v195
      %v228 = vunpack.c.l.b16 %v196
      %v229 = vunpack.c.l.b16 %v197
      %v230 = vunpack.c.l.b16 %v198
      %v231 = vpack.c.b16 %v224, %v223
      %v232 = vpack.c.b16 %v226, %v225
      %v233 = vpack.c.b16 %v228, %v227
      %v234 = vpack.c.b16 %v230, %v229
      %v255 = vunpack.c.l.b16 %v199
      %v256 = vunpack.c.l.b16 %v200
      %v257 = vunpack.c.l.b16 %v201
      %v258 = vunpack.c.l.b16 %v202
      %v259 = vunpack.c.l.b16 %v203
      %v260 = vunpack.c.l.b16 %v204
      %v261 = vunpack.c.l.b16 %v205
      %v262 = vunpack.c.l.b16 %v206
      %v263 = vunpack.c.l.b16 %v207
      %v264 = vunpack.c.l.b16 %v208
      %v265 = vunpack.c.l.b16 %v209
      %v266 = vunpack.c.l.b16 %v210
      %v267 = vunpack.c.l.b16 %v211
      %v268 = vunpack.c.l.b16 %v212
      %v269 = vunpack.c.l.b16 %v213
      %v270 = vunpack.c.l.b16 %v214
      %v271 = vpack.c.b16 %v256, %v255
      %v272 = vpack.c.b16 %v258, %v257
      %v273 = vpack.c.b16 %v260, %v259
      %v274 = vpack.c.b16 %v262, %v261
      %v275 = vpack.c.b16 %v264, %v263
      %v276 = vpack.c.b16 %v266, %v265
      %v277 = vpack.c.b16 %v268, %v267
      %v278 = vpack.c.b16 %v270, %v269
      %287 = vmatpush.bf16.msra.mxu0 %v278
      %288 = vmatpush.bf16.msra.mxu0 %v277
      %289 = vmatpush.bf16.msra.mxu0 %v276
      %290 = vmatpush.bf16.msra.mxu0 %v275
      %291 = vmatpush.bf16.msra.mxu0 %v274
      %292 = vmatpush.bf16.msra.mxu0 %v273
      %293 = vmatpush.bf16.msra.mxu0 %v272
      %294 = vmatpush.bf16.msra.mxu0 %v271
      %295 = vmatmul.bf16.gmra.mxu0 %v231
      %v296 = vpop.f32.mrf.mxu0
      %v297 = vadd.f32 0.0, %v296
      %v298 = vpop.f32.mrf.mxu0
      %v299 = vadd.f32 0.0, %v298
      %300 = vmatmul.bf16.gmra.mxu0 %v232
      %v301 = vpop.f32.mrf.mxu0
      %v302 = vadd.f32 0.0, %v301
      %v303 = vpop.f32.mrf.mxu0
      %v304 = vadd.f32 0.0, %v303
      %305 = vmatmul.bf16.gmra.mxu0 %v233
      %v306 = vpop.f32.mrf.mxu0
      %v307 = vadd.f32 0.0, %v306
      %v308 = vpop.f32.mrf.mxu0
      %v309 = vadd.f32 0.0, %v308
      %310 = vmatmul.bf16.gmra.mxu0 %v234
      %v311 = vpop.f32.mrf.mxu0
      %v312 = vadd.f32 0.0, %v311
      %v313 = vpop.f32.mrf.mxu0
      %v314 = vadd.f32 0.0, %v313
      %315 = vdwg.mxu0
      %s316 = smul.u32 %s15, 64
      %s317 = scalar_lea.vmem [#allocation2], %s316
      %318 = vst [vmem:[%s317] sm:$0xff] %v297
      %319 = vst [vmem:[%s317 + $0x8] sm:$0xff] %v299
      %320 = vst [vmem:[%s317 + $0x10] sm:$0xff] %v302
      %321 = vst [vmem:[%s317 + $0x18] sm:$0xff] %v304
      %322 = vst [vmem:[%s317 + $0x20] sm:$0xff] %v307
      %323 = vst [vmem:[%s317 + $0x28] sm:$0xff] %v309
      %324 = vst [vmem:[%s317 + $0x30] sm:$0xff] %v312
      %325 = vst [vmem:[%s317 + $0x38] sm:$0xff] %v314
      %v326 = vld [vmem:[#allocation3] sm:$0x1]
      %v327 = vadd.f32 %v297, %v299
      %v328 = vadd.f32 %v327, %v302
      %v329 = vadd.f32 %v328, %v304
      %v330 = vadd.f32 %v329, %v307
      %v331 = vadd.f32 %v330, %v309
      %v332 = vadd.f32 %v331, %v312
      %v333 = vadd.f32 %v332, %v314
      %v334 = vrot.slane %v333, 4
      %v335 = vadd.f32 %v333, %v334
      %v336 = vrot.slane %v335, 2
      %v337 = vadd.f32 %v335, %v336
      %v338 = vrot.slane %v337, 1
      %v339 = vadd.f32 %v337, %v338
      %v340 = vadd.f32 %v326, %v339
      %341 = vst [vmem:[#allocation3] sm:$0x1] %v340
      %v342 = vld [vmem:[#allocation4] sm:$0x1]
      %v343 = vmul.f32 %v297, %v297
      %v344 = vmul.f32 %v299, %v299
      %v345 = vmul.f32 %v302, %v302
      %v346 = vmul.f32 %v304, %v304
      %v347 = vmul.f32 %v307, %v307
      %v348 = vmul.f32 %v309, %v309
      %v349 = vmul.f32 %v312, %v312
      %v350 = vmul.f32 %v314, %v314
      %v351 = vadd.f32 %v343, %v344
      %v352 = vadd.f32 %v351, %v345
      %v353 = vadd.f32 %v352, %v346
      %v354 = vadd.f32 %v353, %v347
      %v355 = vadd.f32 %v354, %v348
      %v356 = vadd.f32 %v355, %v349
      %v357 = vadd.f32 %v356, %v350
      %v358 = vrot.slane %v357, 4
      %v359 = vadd.f32 %v357, %v358
      %v360 = vrot.slane %v359, 2
      %v361 = vadd.f32 %v359, %v360
      %v362 = vrot.slane %v361, 1
      %v363 = vadd.f32 %v361, %v362
      %v364 = vadd.f32 %v342, %v363
      %365 = vst [vmem:[#allocation4] sm:$0x1] %v364
      %p366 = scmp.eq.s32.totalorder %s15, 3
      // Predicated region
      $region41: #{resnet_forward.14} parent=35 // pred_check
        %p367 = pneg %p366
      $region42: #{resnet_forward.14} parent=35 // pred_check_branch
        %369 = sbr.rel (%p367) target = $region44
      $region43: #{resnet_forward.14} parent=35 // pred_region
        %v370 = vld [vmem:[#allocation3] sm:$0x1]
        %v371 = vmul.f32 %v370, 0.00390625
        %v372 = vld [vmem:[#allocation4] sm:$0x1]
        %v373 = vmul.f32 %v372, 0.00390625
        %v374 = vmul.f32 %v371, %v371
        %v375 = vsub.f32 %v373, %v374
        %v376 = vmax.f32 %v375, 0.0
        %v377 = vadd.f32 %v376, 1e-05
        %v378 = vrsqrt.pop %v377
        %v379 = vmul.f32 %v378, %v377
        %v380 = vmul.f32 %v379, %v378
        %v381 = vmul.f32 0.5, %v380
        %v382 = vsub.f32 1.5, %v381
        %v383 = vmul.f32 %v378, %v382
        %vm384 = vweird.f32 %v377
        %vm385 = vweird.f32 %v378
        %vm386 = vmor %vm384, %vm385
        %v387 = vsel %vm386, %v378, %v383
        %v388 = vld [vmem:[%s2] sm:$0x1]
        %v389 = vmul.f32 %v387, %v388
        %v390 = vld [vmem:[%s3] sm:$0x1]
        %v391 = vmul.f32 %v371, %v389
        %v392 = vsub.f32 %v390, %v391
        %v393 = vld [vmem:[#allocation2] sm:$0xff]
        %v394 = vld [vmem:[#allocation2 + $0x8] sm:$0xff]
        %v395 = vld [vmem:[#allocation2 + $0x10] sm:$0xff]
        %v396 = vld [vmem:[#allocation2 + $0x18] sm:$0xff]
        %v397 = vld [vmem:[#allocation2 + $0x20] sm:$0xff]
        %v398 = vld [vmem:[#allocation2 + $0x28] sm:$0xff]
        %v399 = vld [vmem:[#allocation2 + $0x30] sm:$0xff]
        %v400 = vld [vmem:[#allocation2 + $0x38] sm:$0xff]
        %v401 = vld [vmem:[#allocation2 + $0x40] sm:$0xff]
        %v402 = vld [vmem:[#allocation2 + $0x48] sm:$0xff]
        %v403 = vld [vmem:[#allocation2 + $0x50] sm:$0xff]
        %v404 = vld [vmem:[#allocation2 + $0x58] sm:$0xff]
        %v405 = vld [vmem:[#allocation2 + $0x60] sm:$0xff]
        %v406 = vld [vmem:[#allocation2 + $0x68] sm:$0xff]
        %v407 = vld [vmem:[#allocation2 + $0x70] sm:$0xff]
        %v408 = vld [vmem:[#allocation2 + $0x78] sm:$0xff]
        %v409 = vld [vmem:[#allocation2 + $0x80] sm:$0xff]
        %v410 = vld [vmem:[#allocation2 + $0x88] sm:$0xff]
        %v411 = vld [vmem:[#allocation2 + $0x90] sm:$0xff]
        %v412 = vld [vmem:[#allocation2 + $0x98] sm:$0xff]
        %v413 = vld [vmem:[#allocation2 + $0xa0] sm:$0xff]
        %v414 = vld [vmem:[#allocation2 + $0xa8] sm:$0xff]
        %v415 = vld [vmem:[#allocation2 + $0xb0] sm:$0xff]
        %v416 = vld [vmem:[#allocation2 + $0xb8] sm:$0xff]
        %v417 = vld [vmem:[#allocation2 + $0xc0] sm:$0xff]
        %v418 = vld [vmem:[#allocation2 + $0xc8] sm:$0xff]
        %v419 = vld [vmem:[#allocation2 + $0xd0] sm:$0xff]
        %v420 = vld [vmem:[#allocation2 + $0xd8] sm:$0xff]
        %v421 = vld [vmem:[#allocation2 + $0xe0] sm:$0xff]
        %v422 = vld [vmem:[#allocation2 + $0xe8] sm:$0xff]
        %v423 = vld [vmem:[#allocation2 + $0xf0] sm:$0xff]
        %v424 = vld [vmem:[#allocation2 + $0xf8] sm:$0xff]
        %v426 = vperm.slane %v389, 0
        %v428 = vmul.f32 %v393, %v426
        %v429 = vmul.f32 %v394, %v426
        %v430 = vmul.f32 %v395, %v426
        %v431 = vmul.f32 %v396, %v426
        %v432 = vmul.f32 %v397, %v426
        %v433 = vmul.f32 %v398, %v426
        %v434 = vmul.f32 %v399, %v426
        %v435 = vmul.f32 %v400, %v426
        %v436 = vmul.f32 %v401, %v426
        %v437 = vmul.f32 %v402, %v426
        %v438 = vmul.f32 %v403, %v426
        %v439 = vmul.f32 %v404, %v426
        %v440 = vmul.f32 %v405, %v426
        %v441 = vmul.f32 %v406, %v426
        %v442 = vmul.f32 %v407, %v426
        %v443 = vmul.f32 %v408, %v426
        %v444 = vmul.f32 %v409, %v426
        %v445 = vmul.f32 %v410, %v426
        %v446 = vmul.f32 %v411, %v426
        %v447 = vmul.f32 %v412, %v426
        %v448 = vmul.f32 %v413, %v426
        %v449 = vmul.f32 %v414, %v426
        %v450 = vmul.f32 %v415, %v426
        %v451 = vmul.f32 %v416, %v426
        %v452 = vmul.f32 %v417, %v426
        %v453 = vmul.f32 %v418, %v426
        %v454 = vmul.f32 %v419, %v426
        %v455 = vmul.f32 %v420, %v426
        %v456 = vmul.f32 %v421, %v426
        %v457 = vmul.f32 %v422, %v426
        %v458 = vmul.f32 %v423, %v426
        %v459 = vmul.f32 %v424, %v426
        %v461 = vperm.slane %v392, 0
        %v463 = vadd.f32 %v428, %v461
        %v464 = vadd.f32 %v429, %v461
        %v465 = vadd.f32 %v430, %v461
        %v466 = vadd.f32 %v431, %v461
        %v467 = vadd.f32 %v432, %v461
        %v468 = vadd.f32 %v433, %v461
        %v469 = vadd.f32 %v434, %v461
        %v470 = vadd.f32 %v435, %v461
        %v471 = vadd.f32 %v436, %v461
        %v472 = vadd.f32 %v437, %v461
        %v473 = vadd.f32 %v438, %v461
        %v474 = vadd.f32 %v439, %v461
        %v475 = vadd.f32 %v440, %v461
        %v476 = vadd.f32 %v441, %v461
        %v477 = vadd.f32 %v442, %v461
        %v478 = vadd.f32 %v443, %v461
        %v479 = vadd.f32 %v444, %v461
        %v480 = vadd.f32 %v445, %v461
        %v481 = vadd.f32 %v446, %v461
        %v482 = vadd.f32 %v447, %v461
        %v483 = vadd.f32 %v448, %v461
        %v484 = vadd.f32 %v449, %v461
        %v485 = vadd.f32 %v450, %v461
        %v486 = vadd.f32 %v451, %v461
        %v487 = vadd.f32 %v452, %v461
        %v488 = vadd.f32 %v453, %v461
        %v489 = vadd.f32 %v454, %v461
        %v490 = vadd.f32 %v455, %v461
        %v491 = vadd.f32 %v456, %v461
        %v492 = vadd.f32 %v457, %v461
        %v493 = vadd.f32 %v458, %v461
        %v494 = vadd.f32 %v459, %v461
        %v495 = vpack.c.bf16 %v463, %v463
        %v496 = vpack.c.bf16 %v464, %v464
        %v497 = vpack.c.bf16 %v465, %v465
        %v498 = vpack.c.bf16 %v466, %v466
        %v499 = vpack.c.bf16 %v467, %v467
        %v500 = vpack.c.bf16 %v468, %v468
        %v501 = vpack.c.bf16 %v469, %v469
        %v502 = vpack.c.bf16 %v470, %v470
        %v503 = vpack.c.bf16 %v471, %v471
        %v504 = vpack.c.bf16 %v472, %v472
        %v505 = vpack.c.bf16 %v473, %v473
        %v506 = vpack.c.bf16 %v474, %v474
        %v507 = vpack.c.bf16 %v475, %v475
        %v508 = vpack.c.bf16 %v476, %v476
        %v509 = vpack.c.bf16 %v477, %v477
        %v510 = vpack.c.bf16 %v478, %v478
        %v511 = vpack.c.bf16 %v479, %v479
        %v512 = vpack.c.bf16 %v480, %v480
        %v513 = vpack.c.bf16 %v481, %v481
        %v514 = vpack.c.bf16 %v482, %v482
        %v515 = vpack.c.bf16 %v483, %v483
        %v516 = vpack.c.bf16 %v484, %v484
        %v517 = vpack.c.bf16 %v485, %v485
        %v518 = vpack.c.bf16 %v486, %v486
        %v519 = vpack.c.bf16 %v487, %v487
        %v520 = vpack.c.bf16 %v488, %v488
        %v521 = vpack.c.bf16 %v489, %v489
        %v522 = vpack.c.bf16 %v490, %v490
        %v523 = vpack.c.bf16 %v491, %v491
        %v524 = vpack.c.bf16 %v492, %v492
        %v525 = vpack.c.bf16 %v493, %v493
        %v526 = vpack.c.bf16 %v494, %v494
        %527 = vst [vmem:[%s4] sm:$0xf] %v495
        %528 = vst [vmem:[%s4 + $0x4] sm:$0xf] %v496
        %529 = vst [vmem:[%s4 + $0x8] sm:$0xf] %v497
        %530 = vst [vmem:[%s4 + $0xc] sm:$0xf] %v498
        %531 = vst [vmem:[%s4 + $0x10] sm:$0xf] %v499
        %532 = vst [vmem:[%s4 + $0x14] sm:$0xf] %v500
        %533 = vst [vmem:[%s4 + $0x18] sm:$0xf] %v501
        %534 = vst [vmem:[%s4 + $0x1c] sm:$0xf] %v502
        %535 = vst [vmem:[%s4 + $0x20] sm:$0xf] %v503
        %536 = vst [vmem:[%s4 + $0x24] sm:$0xf] %v504
        %537 = vst [vmem:[%s4 + $0x28] sm:$0xf] %v505
        %538 = vst [vmem:[%s4 + $0x2c] sm:$0xf] %v506
        %539 = vst [vmem:[%s4 + $0x30] sm:$0xf] %v507
        %540 = vst [vmem:[%s4 + $0x34] sm:$0xf] %v508
        %541 = vst [vmem:[%s4 + $0x38] sm:$0xf] %v509
        %542 = vst [vmem:[%s4 + $0x3c] sm:$0xf] %v510
        %543 = vst [vmem:[%s4 + $0x40] sm:$0xf] %v511
        %544 = vst [vmem:[%s4 + $0x44] sm:$0xf] %v512
        %545 = vst [vmem:[%s4 + $0x48] sm:$0xf] %v513
        %546 = vst [vmem:[%s4 + $0x4c] sm:$0xf] %v514
        %547 = vst [vmem:[%s4 + $0x50] sm:$0xf] %v515
        %548 = vst [vmem:[%s4 + $0x54] sm:$0xf] %v516
        %549 = vst [vmem:[%s4 + $0x58] sm:$0xf] %v517
        %550 = vst [vmem:[%s4 + $0x5c] sm:$0xf] %v518
        %551 = vst [vmem:[%s4 + $0x60] sm:$0xf] %v519
        %552 = vst [vmem:[%s4 + $0x64] sm:$0xf] %v520
        %553 = vst [vmem:[%s4 + $0x68] sm:$0xf] %v521
        %554 = vst [vmem:[%s4 + $0x6c] sm:$0xf] %v522
        %555 = vst [vmem:[%s4 + $0x70] sm:$0xf] %v523
        %556 = vst [vmem:[%s4 + $0x74] sm:$0xf] %v524
        %557 = vst [vmem:[%s4 + $0x78] sm:$0xf] %v525
        %558 = vst [vmem:[%s4 + $0x7c] sm:$0xf] %v526
      $region44: #{resnet_forward.14} parent=35 // pred_fallthru
        _
      // Predicated region
      $region45: #{resnet_forward.14} parent=35 // pred_check
        %p559 = pneg %p117
      $region46: #{resnet_forward.14} parent=35 // pred_check_branch
        %561 = sbr.rel (%p559) target = $region48
      $region47: #{resnet_forward.14} parent=35 // pred_region
        _
      $region48: #{resnet_forward.14} parent=35 // pred_fallthru
        _
      // Predicated region
      $region49: #{resnet_forward.14} parent=35 // pred_check
        %p562 = pneg %p117
      $region50: #{resnet_forward.14} parent=35 // pred_check_branch
        %564 = sbr.rel (%p562) target = $region52
      $region51: #{resnet_forward.14} parent=35 // pred_region
        _
      $region52: #{resnet_forward.14} parent=35 // pred_fallthru
        _
    $region36: #{resnet_forward.14} parent=5 // pred_fallthru
      _
    %p565 = scmp.le.s32.totalorder 2, %s10
    // Predicated region
    $region53: #{resnet_forward.14} parent=5 // pred_check
      %p566 = pneg %p565
    $region54: #{resnet_forward.14} parent=5 // pred_check_branch
      %568 = sbr.rel (%p566) target = $region56
    $region55: #{resnet_forward.14} parent=5 // pred_region
      %s569 = ssub.s32 %s10, 2
    $region56: #{resnet_forward.14} parent=5 // pred_fallthru
      _
  $region6: #{resnet_forward.14} parent=0 // loop_footer
    %s14 = sadd.s32 1, %s10
  $region7: #{resnet_forward.14} parent=0 // loop_footer_branch
    %9 = sbr.rel target = $region3
  $region8: #{resnet_forward.14} parent=0 // loop_exit
    _

// kernel: resnet_forward.15
$region0: #{resnet_forward.15}
  #allocation0 [shape = 'u32[]', space=smem, size = 0x4, offset = 0x4, fixed_abs, tag = 'smem constant byte address 0x4 - core index']
  #allocation1 [shape = 'u32[72,128]{1,0:T(1,128)}', space=vmem, size = 0x9000, scoped, tag = 'internal scratch']
  #allocation2 [shape = 'f32[4,64,128]{2,1,0:T(8,128)}', space=vmem, size = 0x20000, scoped, tag = 'scratch operand']
  #allocation3 [shape = 'f32[1,128]{1,0:T(1,128)}', space=vmem, size = 0x200, scoped, tag = 'scratch operand']
  #allocation4 [shape = 'f32[1,128]{1,0:T(1,128)}', space=vmem, size = 0x200, scoped, tag = 'scratch operand']
  %s0 = inlined_call_operand.vmem [shape: bf16[256,384], index: 0, kind: input, shape index: {}]
  %s1 = inlined_call_operand.vmem [shape: bf16[384,128], index: 1, kind: input, shape index: {}]
  %s2 = inlined_call_operand.vmem [shape: f32[1,128], index: 2, kind: input, shape index: {}]
  %s3 = inlined_call_operand.vmem [shape: f32[1,128], index: 3, kind: input, shape index: {}]
  %s4 = inlined_call_operand.vmem [shape: bf16[4,64,128], index: 4, kind: input, shape index: {}]
  %s5 = inlined_call_operand.vmem [shape: bf16[4,64,128], index: 5, kind: output, shape index: {}]
  %s6 = sld [smem:[#allocation0]]
  $region61: #{resnet_forward.15} parent=0
    _
  %s8 = ssub.s32 1, %s6
  %s9 = scalar_select 0, %s8, %s6
  loop: start=0, step=1, limit=6
  $region2: #{resnet_forward.15} parent=0 // loop_pre_header
    _
  $region3: #{resnet_forward.15} parent=0 // loop_header
    %s11 = sphi 0, %s15
    %p12 = scmp.ge.s32.totalorder %s11, 6
    %s21 = sphi 0, %s23
    %s24 = sphi 0, %s21
    %s25 = sphi 0, %s24
    %s41 = sphi 0, %s25
    %s45 = sphi 0, %s45
    %s47 = sphi 0, %s45
    %s48 = sphi 0, %s47
    %s62 = sphi 0, %s48
    %s66 = sphi 0, %s66
    %s68 = sphi 0, %s66
    %s69 = sphi 0, %s68
    %s83 = sphi 0, %s69
    %s87 = sphi 0, %s87
    %s89 = sphi 0, %s87
    %s90 = sphi 0, %s89
    %s104 = sphi 0, %s90
    %s108 = sphi 0, %s108
    %s110 = sphi 0, %s108
    %s111 = sphi 0, %s110
    %s125 = sphi 0, %s111
    %s129 = sphi 0, %s129
    %s131 = sphi 0, %s129
    %s132 = sphi 0, %s131
    %s146 = sphi 0, %s132
  $region4: #{resnet_forward.15} parent=0 // loop_header_branch
    %14 = sbr.rel (%p12) target = $region8
  $region5: #{resnet_forward.15} parent=0 // loop_body
    %s16 = ssub.s32 %s11, 1
    %s17 = ssub.s32 %s11, 2
    %s18 = sadd.s32 %s11, 1
    %s19 = ssub.s32 %s11, %s18
    %p20 = scmp.eq.s32.totalorder %s19, 0
    %s22 = sadd.s32 %s21, 1
    %s23 = scalar_select %p20, %s21, %s22
    %p26 = pneg %p20
    %p27 = scmp.eq.s32.totalorder %s11, 3
    %p28 = por %p26, %p27
    %p29 = scmp.ne.s32.totalorder %s21, %s24
    %p30 = scmp.eq.s32.totalorder %s11, 0
    %p31 = por %p29, %p30
    %p32 = scmp.ne.s32.totalorder %s21, %s24
    %p33 = scmp.eq.s32.totalorder %s16, 3
    %p34 = por %p32, %p33
    %p35 = scmp.ne.s32.totalorder %s24, %s25
    %p36 = scmp.eq.s32.totalorder %s16, 0
    %p37 = por %p35, %p36
    %p38 = scmp.ne.s32.totalorder %s24, %s25
    %p39 = scmp.eq.s32.totalorder %s17, 3
    %p40 = por %p38, %p39
    %p42 = scmp.ne.s32.totalorder %s25, %s41
    %p43 = scmp.eq.s32.totalorder %s17, 0
    %p44 = por %p42, %p43
    %s46 = sadd.s32 %s45, 1
    %p49 = scmp.eq.s32.totalorder %s11, 3
    %p50 = scmp.ne.s32.totalorder %s45, %s47
    %p51 = scmp.eq.s32.totalorder %s11, 0
    %p52 = por %p50, %p51
    %p53 = scmp.ne.s32.totalorder %s45, %s47
    %p54 = scmp.eq.s32.totalorder %s16, 3
    %p55 = por %p53, %p54
    %p56 = scmp.ne.s32.totalorder %s47, %s48
    %p57 = scmp.eq.s32.totalorder %s16, 0
    %p58 = por %p56, %p57
    %p59 = scmp.ne.s32.totalorder %s47, %s48
    %p60 = scmp.eq.s32.totalorder %s17, 3
    %p61 = por %p59, %p60
    %p63 = scmp.ne.s32.totalorder %s48, %s62
    %p64 = scmp.eq.s32.totalorder %s17, 0
    %p65 = por %p63, %p64
    %s67 = sadd.s32 %s66, 1
    %p70 = scmp.eq.s32.totalorder %s11, 3
    %p71 = scmp.ne.s32.totalorder %s66, %s68
    %p72 = scmp.eq.s32.totalorder %s11, 0
    %p73 = por %p71, %p72
    %p74 = scmp.ne.s32.totalorder %s66, %s68
    %p75 = scmp.eq.s32.totalorder %s16, 3
    %p76 = por %p74, %p75
    %p77 = scmp.ne.s32.totalorder %s68, %s69
    %p78 = scmp.eq.s32.totalorder %s16, 0
    %p79 = por %p77, %p78
    %p80 = scmp.ne.s32.totalorder %s68, %s69
    %p81 = scmp.eq.s32.totalorder %s17, 3
    %p82 = por %p80, %p81
    %p84 = scmp.ne.s32.totalorder %s69, %s83
    %p85 = scmp.eq.s32.totalorder %s17, 0
    %p86 = por %p84, %p85
    %s88 = sadd.s32 %s87, 1
    %p91 = scmp.eq.s32.totalorder %s11, 3
    %p92 = scmp.ne.s32.totalorder %s87, %s89
    %p93 = scmp.eq.s32.totalorder %s11, 0
    %p94 = por %p92, %p93
    %p95 = scmp.ne.s32.totalorder %s87, %s89
    %p96 = scmp.eq.s32.totalorder %s16, 3
    %p97 = por %p95, %p96
    %p98 = scmp.ne.s32.totalorder %s89, %s90
    %p99 = scmp.eq.s32.totalorder %s16, 0
    %p100 = por %p98, %p99
    %p101 = scmp.ne.s32.totalorder %s89, %s90
    %p102 = scmp.eq.s32.totalorder %s17, 3
    %p103 = por %p101, %p102
    %p105 = scmp.ne.s32.totalorder %s90, %s104
    %p106 = scmp.eq.s32.totalorder %s17, 0
    %p107 = por %p105, %p106
    %s109 = sadd.s32 %s108, 1
    %p112 = scmp.eq.s32.totalorder %s11, 3
    %p113 = scmp.ne.s32.totalorder %s108, %s110
    %p114 = scmp.eq.s32.totalorder %s11, 0
    %p115 = por %p113, %p114
    %p116 = scmp.ne.s32.totalorder %s108, %s110
    %p117 = scmp.eq.s32.totalorder %s16, 3
    %p118 = por %p116, %p117
    %p119 = scmp.ne.s32.totalorder %s110, %s111
    %p120 = scmp.eq.s32.totalorder %s16, 0
    %p121 = por %p119, %p120
    %p122 = scmp.ne.s32.totalorder %s110, %s111
    %p123 = scmp.eq.s32.totalorder %s17, 3
    %p124 = por %p122, %p123
    %p126 = scmp.ne.s32.totalorder %s111, %s125
    %p127 = scmp.eq.s32.totalorder %s17, 0
    %p128 = por %p126, %p127
    %s130 = sadd.s32 %s129, 1
    %p133 = scmp.eq.s32.totalorder %s11, 3
    %p134 = scmp.ne.s32.totalorder %s129, %s131
    %p135 = scmp.eq.s32.totalorder %s11, 0
    %p136 = por %p134, %p135
    %p137 = scmp.ne.s32.totalorder %s129, %s131
    %p138 = scmp.eq.s32.totalorder %s16, 3
    %p139 = por %p137, %p138
    %p140 = scmp.ne.s32.totalorder %s131, %s132
    %p141 = scmp.eq.s32.totalorder %s16, 0
    %p142 = por %p140, %p141
    %p143 = scmp.ne.s32.totalorder %s131, %s132
    %p144 = scmp.eq.s32.totalorder %s17, 3
    %p145 = por %p143, %p144
    %p147 = scmp.ne.s32.totalorder %s132, %s146
    %p148 = scmp.eq.s32.totalorder %s17, 0
    %p149 = por %p147, %p148
    %p150 = scmp.le.s32.totalorder 1, %s11
    %p151 = scmp.lt.s32.totalorder %s11, 5
    %p152 = pnand %p150, %p151
    %p153 = pneg %p152
    // Predicated region
    $region9: #{resnet_forward.15} parent=5 // pred_check
      _
    $region10: #{resnet_forward.15} parent=5 // pred_check_branch
      %155 = sbr.rel (%p152) target = $region12
    $region11: #{resnet_forward.15} parent=5 // pred_region
      %s156 = ssub.s32 %s11, 1
      // Predicated region
      $region13: #{resnet_forward.15} parent=11 // pred_check
        %p157 = pneg %p58
      $region14: #{resnet_forward.15} parent=11 // pred_check_branch
        %159 = sbr.rel (%p157) target = $region16
      $region15: #{resnet_forward.15} parent=11 // pred_region
        _
      $region16: #{resnet_forward.15} parent=11 // pred_fallthru
        _
      // Predicated region
      $region17: #{resnet_forward.15} parent=11 // pred_check
        %p160 = pneg %p79
      $region18: #{resnet_forward.15} parent=11 // pred_check_branch
        %162 = sbr.rel (%p160) target = $region20
      $region19: #{resnet_forward.15} parent=11 // pred_region
        _
      $region20: #{resnet_forward.15} parent=11 // pred_fallthru
        _
      // Predicated region
      $region21: #{resnet_forward.15} parent=11 // pred_check
        %p163 = pneg %p100
      $region22: #{resnet_forward.15} parent=11 // pred_check_branch
        %165 = sbr.rel (%p163) target = $region24
      $region23: #{resnet_forward.15} parent=11 // pred_region
        _
      $region24: #{resnet_forward.15} parent=11 // pred_fallthru
        _
      // Predicated region
      $region25: #{resnet_forward.15} parent=11 // pred_check
        %p166 = pneg %p121
      $region26: #{resnet_forward.15} parent=11 // pred_check_branch
        %168 = sbr.rel (%p166) target = $region28
      $region27: #{resnet_forward.15} parent=11 // pred_region
        _
      $region28: #{resnet_forward.15} parent=11 // pred_fallthru
        _
    $region12: #{resnet_forward.15} parent=5 // pred_fallthru
      _
    %p169 = scmp.lt.s32.totalorder %s11, 4
    // Predicated region
    $region29: #{resnet_forward.15} parent=5 // pred_check
      %p170 = pneg %p169
    $region30: #{resnet_forward.15} parent=5 // pred_check_branch
      %172 = sbr.rel (%p170) target = $region32
    $region31: #{resnet_forward.15} parent=5 // pred_region
      // Predicated region
      $region33: #{resnet_forward.15} parent=31 // pred_check
        %p173 = pneg %p31
      $region34: #{resnet_forward.15} parent=31 // pred_check_branch
        %175 = sbr.rel (%p173) target = $region36
      $region35: #{resnet_forward.15} parent=31 // pred_region
        %s176 = smul.u32 8, %s11
        %p177 = scmp.lt.s32.totalorder %s176, 31
        %s178 = scalar_select %p177, %s176, 31
        %s179 = smul.addr %s178, 3
        %s180 = smul.addr %s179, 4
        %s181 = scalar_lea.vmem %s0, %s180
        %s182 = smul.u32 8, %s11
      $region36: #{resnet_forward.15} parent=31 // pred_fallthru
        _
    $region32: #{resnet_forward.15} parent=5 // pred_fallthru
      _
    %p183 = scmp.le.s32.totalorder 1, %s11
    %p184 = scmp.lt.s32.totalorder %s11, 5
    %p185 = pnand %p183, %p184
    %p186 = pneg %p185
    // Predicated region
    $region37: #{resnet_forward.15} parent=5 // pred_check
      _
    $region38: #{resnet_forward.15} parent=5 // pred_check_branch
      %188 = sbr.rel (%p185) target = $region40
    $region39: #{resnet_forward.15} parent=5 // pred_region
      %s189 = ssub.s32 %s11, 1
      %s190 = smul.u32 8, %s16
      %p191 = scmp.lt.s32.totalorder %s190, 31
      %s192 = scalar_select %p191, %s190, 31
      %s193 = smul.addr %s192, 3
      %s194 = smul.addr %s193, 4
      %s195 = scalar_lea.vmem %s0, %s194
      %p196 = pneg %p37
      %p197 = pneg %p34
      %p198 = pneg %p58
      %p199 = pneg %p55
      %p200 = pneg %p79
      %p201 = pneg %p76
      %p202 = pneg %p100
      %p203 = pneg %p97
      %p204 = pneg %p121
      %p205 = pneg %p118
      %p206 = pneg %p142
      %p207 = pneg %p139
      %s208 = smul.u32 8, %s16
      %p209 = scmp.lt.s32.totalorder %s208, 31
      %s210 = scalar_select %p209, %s208, 31
      %s211 = smul.addr %s210, 3
      %s212 = smul.addr %s211, 4
      %s213 = scalar_lea.vmem %s0, %s212
      %s214 = smul.u32 8, %s16
      %p215 = scmp.eq.s32.totalorder %s16, 0
      // Predicated region
      $region41: #{resnet_forward.15} parent=39 // pred_check
        %p216 = pneg %p215
      $region42: #{resnet_forward.15} parent=39 // pred_check_branch
        %218 = sbr.rel (%p216) target = $region44
      $region43: #{resnet_forward.15} parent=39 // pred_region
        %219 = vst [vmem:[#allocation3] sm:$0x1] 0.0
        %220 = vst [vmem:[#allocation4] sm:$0x1] 0.0
      $region44: #{resnet_forward.15} parent=39 // pred_fallthru
        _
      %v221 = vld [vmem:[%s213] sm:$0xff]
      %v222 = vld [vmem:[%s213 + $0x8] sm:$0xf]
      %v223 = vld [vmem:[%s213 + $0xc] sm:$0xff]
      %v224 = vld [vmem:[%s213 + $0x14] sm:$0xf]
      %v225 = vld [vmem:[%s213 + $0x18] sm:$0xff]
      %v226 = vld [vmem:[%s213 + $0x20] sm:$0xf]
      %v227 = vld [vmem:[%s213 + $0x24] sm:$0xff]
      %v228 = vld [vmem:[%s213 + $0x2c] sm:$0xf]
      %v229 = vld [vmem:[%s213 + $0x30] sm:$0xff]
      %v230 = vld [vmem:[%s213 + $0x38] sm:$0xf]
      %v231 = vld [vmem:[%s213 + $0x3c] sm:$0xff]
      %v232 = vld [vmem:[%s213 + $0x44] sm:$0xf]
      %v233 = vld [vmem:[%s213 + $0x48] sm:$0xff]
      %v234 = vld [vmem:[%s213 + $0x50] sm:$0xf]
      %v235 = vld [vmem:[%s213 + $0x54] sm:$0xff]
      %v236 = vld [vmem:[%s213 + $0x5c] sm:$0xf]
      %v237 = vld [vmem:[%s1] sm:$0xf]
      %v238 = vld [vmem:[%s1 + $0x4] sm:$0xf]
      %v239 = vld [vmem:[%s1 + $0x8] sm:$0xf]
      %v240 = vld [vmem:[%s1 + $0xc] sm:$0xf]
      %v241 = vld [vmem:[%s1 + $0x10] sm:$0xf]
      %v242 = vld [vmem:[%s1 + $0x14] sm:$0xf]
      %v243 = vld [vmem:[%s1 + $0x18] sm:$0xf]
      %v244 = vld [vmem:[%s1 + $0x1c] sm:$0xf]
      %v245 = vld [vmem:[%s1 + $0x20] sm:$0xf]
      %v246 = vld [vmem:[%s1 + $0x24] sm:$0xf]
      %v247 = vld [vmem:[%s1 + $0x28] sm:$0xf]
      %v248 = vld [vmem:[%s1 + $0x2c] sm:$0xf]
      %v249 = vld [vmem:[%s1 + $0x30] sm:$0xf]
      %v250 = vld [vmem:[%s1 + $0x34] sm:$0xf]
      %v251 = vld [vmem:[%s1 + $0x38] sm:$0xf]
      %v252 = vld [vmem:[%s1 + $0x3c] sm:$0xf]
      %v253 = vld [vmem:[%s1 + $0x40] sm:$0xf]
      %v254 = vld [vmem:[%s1 + $0x44] sm:$0xf]
      %v255 = vld [vmem:[%s1 + $0x48] sm:$0xf]
      %v256 = vld [vmem:[%s1 + $0x4c] sm:$0xf]
      %v257 = vld [vmem:[%s1 + $0x50] sm:$0xf]
      %v258 = vld [vmem:[%s1 + $0x54] sm:$0xf]
      %v259 = vld [vmem:[%s1 + $0x58] sm:$0xf]
      %v260 = vld [vmem:[%s1 + $0x5c] sm:$0xf]
      %v261 = vld [vmem:[%s1 + $0x60] sm:$0xf]
      %v262 = vld [vmem:[%s1 + $0x64] sm:$0xf]
      %v263 = vld [vmem:[%s1 + $0x68] sm:$0xf]
      %v264 = vld [vmem:[%s1 + $0x6c] sm:$0xf]
      %v265 = vld [vmem:[%s1 + $0x70] sm:$0xf]
      %v266 = vld [vmem:[%s1 + $0x74] sm:$0xf]
      %v267 = vld [vmem:[%s1 + $0x78] sm:$0xf]
      %v268 = vld [vmem:[%s1 + $0x7c] sm:$0xf]
      %v269 = vld [vmem:[%s1 + $0x80] sm:$0xf]
      %v270 = vld [vmem:[%s1 + $0x84] sm:$0xf]
      %v271 = vld [vmem:[%s1 + $0x88] sm:$0xf]
      %v272 = vld [vmem:[%s1 + $0x8c] sm:$0xf]
      %v273 = vld [vmem:[%s1 + $0x90] sm:$0xf]
      %v274 = vld [vmem:[%s1 + $0x94] sm:$0xf]
      %v275 = vld [vmem:[%s1 + $0x98] sm:$0xf]
      %v276 = vld [vmem:[%s1 + $0x9c] sm:$0xf]
      %v277 = vld [vmem:[%s1 + $0xa0] sm:$0xf]
      %v278 = vld [vmem:[%s1 + $0xa4] sm:$0xf]
      %v279 = vld [vmem:[%s1 + $0xa8] sm:$0xf]
      %v280 = vld [vmem:[%s1 + $0xac] sm:$0xf]
      %v281 = vld [vmem:[%s1 + $0xb0] sm:$0xf]
      %v282 = vld [vmem:[%s1 + $0xb4] sm:$0xf]
      %v283 = vld [vmem:[%s1 + $0xb8] sm:$0xf]
      %v284 = vld [vmem:[%s1 + $0xbc] sm:$0xf]
      %v301 = vunpack.c.l.b16 %v221
      %v302 = vunpack.c.h.b16 %v221
      %v303 = vunpack.c.l.b16 %v222
      %v304 = vunpack.c.l.b16 %v223
      %v305 = vunpack.c.h.b16 %v223
      %v306 = vunpack.c.l.b16 %v224
      %v307 = vunpack.c.l.b16 %v225
      %v308 = vunpack.c.h.b16 %v225
      %v309 = vunpack.c.l.b16 %v226
      %v310 = vunpack.c.l.b16 %v227
      %v311 = vunpack.c.h.b16 %v227
      %v312 = vunpack.c.l.b16 %v228
      %v313 = vunpack.c.l.b16 %v229
      %v314 = vunpack.c.h.b16 %v229
      %v315 = vunpack.c.l.b16 %v230
      %v316 = vunpack.c.l.b16 %v231
      %v317 = vunpack.c.h.b16 %v231
      %v318 = vunpack.c.l.b16 %v232
      %v319 = vunpack.c.l.b16 %v233
      %v320 = vunpack.c.h.b16 %v233
      %v321 = vunpack.c.l.b16 %v234
      %v322 = vunpack.c.l.b16 %v235
      %v323 = vunpack.c.h.b16 %v235
      %v324 = vunpack.c.l.b16 %v236
      %v325 = vpack.c.b16 %v304, %v301
      %v326 = vpack.c.b16 %v305, %v302
      %v327 = vpack.c.b16 %v306, %v303
      %v328 = vpack.c.b16 %v310, %v307
      %v329 = vpack.c.b16 %v311, %v308
      %v330 = vpack.c.b16 %v312, %v309
      %v331 = vpack.c.b16 %v316, %v313
      %v332 = vpack.c.b16 %v317, %v314
      %v333 = vpack.c.b16 %v318, %v315
      %v334 = vpack.c.b16 %v322, %v319
      %v335 = vpack.c.b16 %v323, %v320
      %v336 = vpack.c.b16 %v324, %v321
      %v397 = vunpack.c.l.b16 %v237
      %v398 = vunpack.c.l.b16 %v238
      %v399 = vunpack.c.l.b16 %v239
      %v400 = vunpack.c.l.b16 %v240
      %v401 = vunpack.c.l.b16 %v241
      %v402 = vunpack.c.l.b16 %v242
      %v403 = vunpack.c.l.b16 %v243
      %v404 = vunpack.c.l.b16 %v244
      %v405 = vunpack.c.l.b16 %v245
      %v406 = vunpack.c.l.b16 %v246
      %v407 = vunpack.c.l.b16 %v247
      %v408 = vunpack.c.l.b16 %v248
      %v409 = vunpack.c.l.b16 %v249
      %v410 = vunpack.c.l.b16 %v250
      %v411 = vunpack.c.l.b16 %v251
      %v412 = vunpack.c.l.b16 %v252
      %v413 = vunpack.c.l.b16 %v253
      %v414 = vunpack.c.l.b16 %v254
      %v415 = vunpack.c.l.b16 %v255
      %v416 = vunpack.c.l.b16 %v256
      %v417 = vunpack.c.l.b16 %v257
      %v418 = vunpack.c.l.b16 %v258
      %v419 = vunpack.c.l.b16 %v259
      %v420 = vunpack.c.l.b16 %v260
      %v421 = vunpack.c.l.b16 %v261
      %v422 = vunpack.c.l.b16 %v262
      %v423 = vunpack.c.l.b16 %v263
      %v424 = vunpack.c.l.b16 %v264
      %v425 = vunpack.c.l.b16 %v265
      %v426 = vunpack.c.l.b16 %v266
      %v427 = vunpack.c.l.b16 %v267
      %v428 = vunpack.c.l.b16 %v268
      %v429 = vunpack.c.l.b16 %v269
      %v430 = vunpack.c.l.b16 %v270
      %v431 = vunpack.c.l.b16 %v271
      %v432 = vunpack.c.l.b16 %v272
      %v433 = vunpack.c.l.b16 %v273
      %v434 = vunpack.c.l.b16 %v274
      %v435 = vunpack.c.l.b16 %v275
      %v436 = vunpack.c.l.b16 %v276
      %v437 = vunpack.c.l.b16 %v277
      %v438 = vunpack.c.l.b16 %v278
      %v439 = vunpack.c.l.b16 %v279
      %v440 = vunpack.c.l.b16 %v280
      %v441 = vunpack.c.l.b16 %v281
      %v442 = vunpack.c.l.b16 %v282
      %v443 = vunpack.c.l.b16 %v283
      %v444 = vunpack.c.l.b16 %v284
      %v445 = vpack.c.b16 %v398, %v397
      %v446 = vpack.c.b16 %v400, %v399
      %v447 = vpack.c.b16 %v402, %v401
      %v448 = vpack.c.b16 %v404, %v403
      %v449 = vpack.c.b16 %v406, %v405
      %v450 = vpack.c.b16 %v408, %v407
      %v451 = vpack.c.b16 %v410, %v409
      %v452 = vpack.c.b16 %v412, %v411
      %v453 = vpack.c.b16 %v414, %v413
      %v454 = vpack.c.b16 %v416, %v415
      %v455 = vpack.c.b16 %v418, %v417
      %v456 = vpack.c.b16 %v420, %v419
      %v457 = vpack.c.b16 %v422, %v421
      %v458 = vpack.c.b16 %v424, %v423
      %v459 = vpack.c.b16 %v426, %v425
      %v460 = vpack.c.b16 %v428, %v427
      %v461 = vpack.c.b16 %v430, %v429
      %v462 = vpack.c.b16 %v432, %v431
      %v463 = vpack.c.b16 %v434, %v433
      %v464 = vpack.c.b16 %v436, %v435
      %v465 = vpack.c.b16 %v438, %v437
      %v466 = vpack.c.b16 %v440, %v439
      %v467 = vpack.c.b16 %v442, %v441
      %v468 = vpack.c.b16 %v444, %v443
      %493 = vmatpush.bf16.msra.mxu0 %v452
      %494 = vmatpush.bf16.msra.mxu0 %v451
      %495 = vmatpush.bf16.msra.mxu0 %v450
      %496 = vmatpush.bf16.msra.mxu0 %v449
      %497 = vmatpush.bf16.msra.mxu0 %v448
      %498 = vmatpush.bf16.msra.mxu0 %v447
      %499 = vmatpush.bf16.msra.mxu0 %v446
      %500 = vmatpush.bf16.msra.mxu0 %v445
      %501 = vmatmul.bf16.gmra.mxu0 %v325
      %v502 = vpop.f32.mrf.mxu0
      %v503 = vadd.f32 0.0, %v502
      %v504 = vpop.f32.mrf.mxu0
      %v505 = vadd.f32 0.0, %v504
      %506 = vmatmul.bf16.gmra.mxu0 %v328
      %v507 = vpop.f32.mrf.mxu0
      %v508 = vadd.f32 0.0, %v507
      %v509 = vpop.f32.mrf.mxu0
      %v510 = vadd.f32 0.0, %v509
      %511 = vmatmul.bf16.gmra.mxu0 %v331
      %v512 = vpop.f32.mrf.mxu0
      %v513 = vadd.f32 0.0, %v512
      %v514 = vpop.f32.mrf.mxu0
      %v515 = vadd.f32 0.0, %v514
      %516 = vmatmul.bf16.gmra.mxu0 %v334
      %v517 = vpop.f32.mrf.mxu0
      %v518 = vadd.f32 0.0, %v517
      %v519 = vpop.f32.mrf.mxu0
      %v520 = vadd.f32 0.0, %v519
      %521 = vdwg.mxu0
      %522 = vmatpush.bf16.msra.mxu0 %v460
      %523 = vmatpush.bf16.msra.mxu0 %v459
      %524 = vmatpush.bf16.msra.mxu0 %v458
      %525 = vmatpush.bf16.msra.mxu0 %v457
      %526 = vmatpush.bf16.msra.mxu0 %v456
      %527 = vmatpush.bf16.msra.mxu0 %v455
      %528 = vmatpush.bf16.msra.mxu0 %v454
      %529 = vmatpush.bf16.msra.mxu0 %v453
      %530 = vmatmul.bf16.gmra.mxu0 %v326
      %v531 = vpop.f32.mrf.mxu0
      %v532 = vadd.f32 %v503, %v531
      %v533 = vpop.f32.mrf.mxu0
      %v534 = vadd.f32 %v505, %v533
      %535 = vmatmul.bf16.gmra.mxu0 %v329
      %v536 = vpop.f32.mrf.mxu0
      %v537 = vadd.f32 %v508, %v536
      %v538 = vpop.f32.mrf.mxu0
      %v539 = vadd.f32 %v510, %v538
      %540 = vmatmul.bf16.gmra.mxu0 %v332
      %v541 = vpop.f32.mrf.mxu0
      %v542 = vadd.f32 %v513, %v541
      %v543 = vpop.f32.mrf.mxu0
      %v544 = vadd.f32 %v515, %v543
      %545 = vmatmul.bf16.gmra.mxu0 %v335
      %v546 = vpop.f32.mrf.mxu0
      %v547 = vadd.f32 %v518, %v546
      %v548 = vpop.f32.mrf.mxu0
      %v549 = vadd.f32 %v520, %v548
      %550 = vdwg.mxu0
      %551 = vmatpush.bf16.msra.mxu0 %v468
      %552 = vmatpush.bf16.msra.mxu0 %v467
      %553 = vmatpush.bf16.msra.mxu0 %v466
      %554 = vmatpush.bf16.msra.mxu0 %v465
      %555 = vmatpush.bf16.msra.mxu0 %v464
      %556 = vmatpush.bf16.msra.mxu0 %v463
      %557 = vmatpush.bf16.msra.mxu0 %v462
      %558 = vmatpush.bf16.msra.mxu0 %v461
      %559 = vmatmul.bf16.gmra.mxu0 %v327
      %v560 = vpop.f32.mrf.mxu0
      %v561 = vadd.f32 %v532, %v560
      %v562 = vpop.f32.mrf.mxu0
      %v563 = vadd.f32 %v534, %v562
      %564 = vmatmul.bf16.gmra.mxu0 %v330
      %v565 = vpop.f32.mrf.mxu0
      %v566 = vadd.f32 %v537, %v565
      %v567 = vpop.f32.mrf.mxu0
      %v568 = vadd.f32 %v539, %v567
      %569 = vmatmul.bf16.gmra.mxu0 %v333
      %v570 = vpop.f32.mrf.mxu0
      %v571 = vadd.f32 %v542, %v570
      %v572 = vpop.f32.mrf.mxu0
      %v573 = vadd.f32 %v544, %v572
      %574 = vmatmul.bf16.gmra.mxu0 %v336
      %v575 = vpop.f32.mrf.mxu0
      %v576 = vadd.f32 %v547, %v575
      %v577 = vpop.f32.mrf.mxu0
      %v578 = vadd.f32 %v549, %v577
      %579 = vdwg.mxu0
      %s580 = smul.u32 %s16, 64
      %s581 = scalar_lea.vmem [#allocation2], %s580
      %582 = vst [vmem:[%s581] sm:$0xff] %v561
      %583 = vst [vmem:[%s581 + $0x8] sm:$0xff] %v563
      %584 = vst [vmem:[%s581 + $0x10] sm:$0xff] %v566
      %585 = vst [vmem:[%s581 + $0x18] sm:$0xff] %v568
      %586 = vst [vmem:[%s581 + $0x20] sm:$0xff] %v571
      %587 = vst [vmem:[%s581 + $0x28] sm:$0xff] %v573
      %588 = vst [vmem:[%s581 + $0x30] sm:$0xff] %v576
      %589 = vst [vmem:[%s581 + $0x38] sm:$0xff] %v578
      %v590 = vld [vmem:[#allocation3] sm:$0x1]
      %v591 = vadd.f32 %v561, %v563
      %v592 = vadd.f32 %v591, %v566
      %v593 = vadd.f32 %v592, %v568
      %v594 = vadd.f32 %v593, %v571
      %v595 = vadd.f32 %v594, %v573
      %v596 = vadd.f32 %v595, %v576
      %v597 = vadd.f32 %v596, %v578
      %v598 = vrot.slane %v597, 4
      %v599 = vadd.f32 %v597, %v598
      %v600 = vrot.slane %v599, 2
      %v601 = vadd.f32 %v599, %v600
      %v602 = vrot.slane %v601, 1
      %v603 = vadd.f32 %v601, %v602
      %v604 = vadd.f32 %v590, %v603
      %605 = vst [vmem:[#allocation3] sm:$0x1] %v604
      %v606 = vld [vmem:[#allocation4] sm:$0x1]
      %v607 = vmul.f32 %v561, %v561
      %v608 = vmul.f32 %v563, %v563
      %v609 = vmul.f32 %v566, %v566
      %v610 = vmul.f32 %v568, %v568
      %v611 = vmul.f32 %v571, %v571
      %v612 = vmul.f32 %v573, %v573
      %v613 = vmul.f32 %v576, %v576
      %v614 = vmul.f32 %v578, %v578
      %v615 = vadd.f32 %v607, %v608
      %v616 = vadd.f32 %v615, %v609
      %v617 = vadd.f32 %v616, %v610
      %v618 = vadd.f32 %v617, %v611
      %v619 = vadd.f32 %v618, %v612
      %v620 = vadd.f32 %v619, %v613
      %v621 = vadd.f32 %v620, %v614
      %v622 = vrot.slane %v621, 4
      %v623 = vadd.f32 %v621, %v622
      %v624 = vrot.slane %v623, 2
      %v625 = vadd.f32 %v623, %v624
      %v626 = vrot.slane %v625, 1
      %v627 = vadd.f32 %v625, %v626
      %v628 = vadd.f32 %v606, %v627
      %629 = vst [vmem:[#allocation4] sm:$0x1] %v628
      %p630 = scmp.eq.s32.totalorder %s16, 3
      // Predicated region
      $region45: #{resnet_forward.15} parent=39 // pred_check
        %p631 = pneg %p630
      $region46: #{resnet_forward.15} parent=39 // pred_check_branch
        %633 = sbr.rel (%p631) target = $region48
      $region47: #{resnet_forward.15} parent=39 // pred_region
        %v634 = vld [vmem:[#allocation3] sm:$0x1]
        %v635 = vmul.f32 %v634, 0.00390625
        %v636 = vld [vmem:[#allocation4] sm:$0x1]
        %v637 = vmul.f32 %v636, 0.00390625
        %v638 = vmul.f32 %v635, %v635
        %v639 = vsub.f32 %v637, %v638
        %v640 = vmax.f32 %v639, 0.0
        %v641 = vadd.f32 %v640, 1e-05
        %v642 = vrsqrt.pop %v641
        %v643 = vmul.f32 %v642, %v641
        %v644 = vmul.f32 %v643, %v642
        %v645 = vmul.f32 0.5, %v644
        %v646 = vsub.f32 1.5, %v645
        %v647 = vmul.f32 %v642, %v646
        %vm648 = vweird.f32 %v641
        %vm649 = vweird.f32 %v642
        %vm650 = vmor %vm648, %vm649
        %v651 = vsel %vm650, %v642, %v647
        %v652 = vld [vmem:[%s2] sm:$0x1]
        %v653 = vmul.f32 %v651, %v652
        %v654 = vld [vmem:[%s3] sm:$0x1]
        %v655 = vmul.f32 %v635, %v653
        %v656 = vsub.f32 %v654, %v655
        %v657 = vld [vmem:[#allocation2] sm:$0xff]
        %v658 = vld [vmem:[#allocation2 + $0x8] sm:$0xff]
        %v659 = vld [vmem:[#allocation2 + $0x10] sm:$0xff]
        %v660 = vld [vmem:[#allocation2 + $0x18] sm:$0xff]
        %v661 = vld [vmem:[#allocation2 + $0x20] sm:$0xff]
        %v662 = vld [vmem:[#allocation2 + $0x28] sm:$0xff]
        %v663 = vld [vmem:[#allocation2 + $0x30] sm:$0xff]
        %v664 = vld [vmem:[#allocation2 + $0x38] sm:$0xff]
        %v665 = vld [vmem:[#allocation2 + $0x40] sm:$0xff]
        %v666 = vld [vmem:[#allocation2 + $0x48] sm:$0xff]
        %v667 = vld [vmem:[#allocation2 + $0x50] sm:$0xff]
        %v668 = vld [vmem:[#allocation2 + $0x58] sm:$0xff]
        %v669 = vld [vmem:[#allocation2 + $0x60] sm:$0xff]
        %v670 = vld [vmem:[#allocation2 + $0x68] sm:$0xff]
        %v671 = vld [vmem:[#allocation2 + $0x70] sm:$0xff]
        %v672 = vld [vmem:[#allocation2 + $0x78] sm:$0xff]
        %v673 = vld [vmem:[#allocation2 + $0x80] sm:$0xff]
        %v674 = vld [vmem:[#allocation2 + $0x88] sm:$0xff]
        %v675 = vld [vmem:[#allocation2 + $0x90] sm:$0xff]
        %v676 = vld [vmem:[#allocation2 + $0x98] sm:$0xff]
        %v677 = vld [vmem:[#allocation2 + $0xa0] sm:$0xff]
        %v678 = vld [vmem:[#allocation2 + $0xa8] sm:$0xff]
        %v679 = vld [vmem:[#allocation2 + $0xb0] sm:$0xff]
        %v680 = vld [vmem:[#allocation2 + $0xb8] sm:$0xff]
        %v681 = vld [vmem:[#allocation2 + $0xc0] sm:$0xff]
        %v682 = vld [vmem:[#allocation2 + $0xc8] sm:$0xff]
        %v683 = vld [vmem:[#allocation2 + $0xd0] sm:$0xff]
        %v684 = vld [vmem:[#allocation2 + $0xd8] sm:$0xff]
        %v685 = vld [vmem:[#allocation2 + $0xe0] sm:$0xff]
        %v686 = vld [vmem:[#allocation2 + $0xe8] sm:$0xff]
        %v687 = vld [vmem:[#allocation2 + $0xf0] sm:$0xff]
        %v688 = vld [vmem:[#allocation2 + $0xf8] sm:$0xff]
        %v690 = vperm.slane %v653, 0
        %v692 = vmul.f32 %v657, %v690
        %v693 = vmul.f32 %v658, %v690
        %v694 = vmul.f32 %v659, %v690
        %v695 = vmul.f32 %v660, %v690
        %v696 = vmul.f32 %v661, %v690
        %v697 = vmul.f32 %v662, %v690
        %v698 = vmul.f32 %v663, %v690
        %v699 = vmul.f32 %v664, %v690
        %v700 = vmul.f32 %v665, %v690
        %v701 = vmul.f32 %v666, %v690
        %v702 = vmul.f32 %v667, %v690
        %v703 = vmul.f32 %v668, %v690
        %v704 = vmul.f32 %v669, %v690
        %v705 = vmul.f32 %v670, %v690
        %v706 = vmul.f32 %v671, %v690
        %v707 = vmul.f32 %v672, %v690
        %v708 = vmul.f32 %v673, %v690
        %v709 = vmul.f32 %v674, %v690
        %v710 = vmul.f32 %v675, %v690
        %v711 = vmul.f32 %v676, %v690
        %v712 = vmul.f32 %v677, %v690
        %v713 = vmul.f32 %v678, %v690
        %v714 = vmul.f32 %v679, %v690
        %v715 = vmul.f32 %v680, %v690
        %v716 = vmul.f32 %v681, %v690
        %v717 = vmul.f32 %v682, %v690
        %v718 = vmul.f32 %v683, %v690
        %v719 = vmul.f32 %v684, %v690
        %v720 = vmul.f32 %v685, %v690
        %v721 = vmul.f32 %v686, %v690
        %v722 = vmul.f32 %v687, %v690
        %v723 = vmul.f32 %v688, %v690
        %v725 = vperm.slane %v656, 0
        %v727 = vadd.f32 %v692, %v725
        %v728 = vadd.f32 %v693, %v725
        %v729 = vadd.f32 %v694, %v725
        %v730 = vadd.f32 %v695, %v725
        %v731 = vadd.f32 %v696, %v725
        %v732 = vadd.f32 %v697, %v725
        %v733 = vadd.f32 %v698, %v725
        %v734 = vadd.f32 %v699, %v725
        %v735 = vadd.f32 %v700, %v725
        %v736 = vadd.f32 %v701, %v725
        %v737 = vadd.f32 %v702, %v725
        %v738 = vadd.f32 %v703, %v725
        %v739 = vadd.f32 %v704, %v725
        %v740 = vadd.f32 %v705, %v725
        %v741 = vadd.f32 %v706, %v725
        %v742 = vadd.f32 %v707, %v725
        %v743 = vadd.f32 %v708, %v725
        %v744 = vadd.f32 %v709, %v725
        %v745 = vadd.f32 %v710, %v725
        %v746 = vadd.f32 %v711, %v725
        %v747 = vadd.f32 %v712, %v725
        %v748 = vadd.f32 %v713, %v725
        %v749 = vadd.f32 %v714, %v725
        %v750 = vadd.f32 %v715, %v725
        %v751 = vadd.f32 %v716, %v725
        %v752 = vadd.f32 %v717, %v725
        %v753 = vadd.f32 %v718, %v725
        %v754 = vadd.f32 %v719, %v725
        %v755 = vadd.f32 %v720, %v725
        %v756 = vadd.f32 %v721, %v725
        %v757 = vadd.f32 %v722, %v725
        %v758 = vadd.f32 %v723, %v725
        %v759 = vld [vmem:[%s4] sm:$0xf]
        %v760 = vld [vmem:[%s4 + $0x4] sm:$0xf]
        %v761 = vld [vmem:[%s4 + $0x8] sm:$0xf]
        %v762 = vld [vmem:[%s4 + $0xc] sm:$0xf]
        %v763 = vld [vmem:[%s4 + $0x10] sm:$0xf]
        %v764 = vld [vmem:[%s4 + $0x14] sm:$0xf]
        %v765 = vld [vmem:[%s4 + $0x18] sm:$0xf]
        %v766 = vld [vmem:[%s4 + $0x1c] sm:$0xf]
        %v767 = vld [vmem:[%s4 + $0x20] sm:$0xf]
        %v768 = vld [vmem:[%s4 + $0x24] sm:$0xf]
        %v769 = vld [vmem:[%s4 + $0x28] sm:$0xf]
        %v770 = vld [vmem:[%s4 + $0x2c] sm:$0xf]
        %v771 = vld [vmem:[%s4 + $0x30] sm:$0xf]
        %v772 = vld [vmem:[%s4 + $0x34] sm:$0xf]
        %v773 = vld [vmem:[%s4 + $0x38] sm:$0xf]
        %v774 = vld [vmem:[%s4 + $0x3c] sm:$0xf]
        %v775 = vld [vmem:[%s4 + $0x40] sm:$0xf]
        %v776 = vld [vmem:[%s4 + $0x44] sm:$0xf]
        %v777 = vld [vmem:[%s4 + $0x48] sm:$0xf]
        %v778 = vld [vmem:[%s4 + $0x4c] sm:$0xf]
        %v779 = vld [vmem:[%s4 + $0x50] sm:$0xf]
        %v780 = vld [vmem:[%s4 + $0x54] sm:$0xf]
        %v781 = vld [vmem:[%s4 + $0x58] sm:$0xf]
        %v782 = vld [vmem:[%s4 + $0x5c] sm:$0xf]
        %v783 = vld [vmem:[%s4 + $0x60] sm:$0xf]
        %v784 = vld [vmem:[%s4 + $0x64] sm:$0xf]
        %v785 = vld [vmem:[%s4 + $0x68] sm:$0xf]
        %v786 = vld [vmem:[%s4 + $0x6c] sm:$0xf]
        %v787 = vld [vmem:[%s4 + $0x70] sm:$0xf]
        %v788 = vld [vmem:[%s4 + $0x74] sm:$0xf]
        %v789 = vld [vmem:[%s4 + $0x78] sm:$0xf]
        %v790 = vld [vmem:[%s4 + $0x7c] sm:$0xf]
        %v791 = vunpack.c.l.bf16 %v759
        %v792 = vunpack.c.l.bf16 %v760
        %v793 = vunpack.c.l.bf16 %v761
        %v794 = vunpack.c.l.bf16 %v762
        %v795 = vunpack.c.l.bf16 %v763
        %v796 = vunpack.c.l.bf16 %v764
        %v797 = vunpack.c.l.bf16 %v765
        %v798 = vunpack.c.l.bf16 %v766
        %v799 = vunpack.c.l.bf16 %v767
        %v800 = vunpack.c.l.bf16 %v768
        %v801 = vunpack.c.l.bf16 %v769
        %v802 = vunpack.c.l.bf16 %v770
        %v803 = vunpack.c.l.bf16 %v771
        %v804 = vunpack.c.l.bf16 %v772
        %v805 = vunpack.c.l.bf16 %v773
        %v806 = vunpack.c.l.bf16 %v774
        %v807 = vunpack.c.l.bf16 %v775
        %v808 = vunpack.c.l.bf16 %v776
        %v809 = vunpack.c.l.bf16 %v777
        %v810 = vunpack.c.l.bf16 %v778
        %v811 = vunpack.c.l.bf16 %v779
        %v812 = vunpack.c.l.bf16 %v780
        %v813 = vunpack.c.l.bf16 %v781
        %v814 = vunpack.c.l.bf16 %v782
        %v815 = vunpack.c.l.bf16 %v783
        %v816 = vunpack.c.l.bf16 %v784
        %v817 = vunpack.c.l.bf16 %v785
        %v818 = vunpack.c.l.bf16 %v786
        %v819 = vunpack.c.l.bf16 %v787
        %v820 = vunpack.c.l.bf16 %v788
        %v821 = vunpack.c.l.bf16 %v789
        %v822 = vunpack.c.l.bf16 %v790
        %v823 = vadd.f32 %v727, %v791
        %v824 = vadd.f32 %v728, %v792
        %v825 = vadd.f32 %v729, %v793
        %v826 = vadd.f32 %v730, %v794
        %v827 = vadd.f32 %v731, %v795
        %v828 = vadd.f32 %v732, %v796
        %v829 = vadd.f32 %v733, %v797
        %v830 = vadd.f32 %v734, %v798
        %v831 = vadd.f32 %v735, %v799
        %v832 = vadd.f32 %v736, %v800
        %v833 = vadd.f32 %v737, %v801
        %v834 = vadd.f32 %v738, %v802
        %v835 = vadd.f32 %v739, %v803
        %v836 = vadd.f32 %v740, %v804
        %v837 = vadd.f32 %v741, %v805
        %v838 = vadd.f32 %v742, %v806
        %v839 = vadd.f32 %v743, %v807
        %v840 = vadd.f32 %v744, %v808
        %v841 = vadd.f32 %v745, %v809
        %v842 = vadd.f32 %v746, %v810
        %v843 = vadd.f32 %v747, %v811
        %v844 = vadd.f32 %v748, %v812
        %v845 = vadd.f32 %v749, %v813
        %v846 = vadd.f32 %v750, %v814
        %v847 = vadd.f32 %v751, %v815
        %v848 = vadd.f32 %v752, %v816
        %v849 = vadd.f32 %v753, %v817
        %v850 = vadd.f32 %v754, %v818
        %v851 = vadd.f32 %v755, %v819
        %v852 = vadd.f32 %v756, %v820
        %v853 = vadd.f32 %v757, %v821
        %v854 = vadd.f32 %v758, %v822
        %v855 = vmax.f32 %v823, 0.0
        %v856 = vmax.f32 %v824, 0.0
        %v857 = vmax.f32 %v825, 0.0
        %v858 = vmax.f32 %v826, 0.0
        %v859 = vmax.f32 %v827, 0.0
        %v860 = vmax.f32 %v828, 0.0
        %v861 = vmax.f32 %v829, 0.0
        %v862 = vmax.f32 %v830, 0.0
        %v863 = vmax.f32 %v831, 0.0
        %v864 = vmax.f32 %v832, 0.0
        %v865 = vmax.f32 %v833, 0.0
        %v866 = vmax.f32 %v834, 0.0
        %v867 = vmax.f32 %v835, 0.0
        %v868 = vmax.f32 %v836, 0.0
        %v869 = vmax.f32 %v837, 0.0
        %v870 = vmax.f32 %v838, 0.0
        %v871 = vmax.f32 %v839, 0.0
        %v872 = vmax.f32 %v840, 0.0
        %v873 = vmax.f32 %v841, 0.0
        %v874 = vmax.f32 %v842, 0.0
        %v875 = vmax.f32 %v843, 0.0
        %v876 = vmax.f32 %v844, 0.0
        %v877 = vmax.f32 %v845, 0.0
        %v878 = vmax.f32 %v846, 0.0
        %v879 = vmax.f32 %v847, 0.0
        %v880 = vmax.f32 %v848, 0.0
        %v881 = vmax.f32 %v849, 0.0
        %v882 = vmax.f32 %v850, 0.0
        %v883 = vmax.f32 %v851, 0.0
        %v884 = vmax.f32 %v852, 0.0
        %v885 = vmax.f32 %v853, 0.0
        %v886 = vmax.f32 %v854, 0.0
        %v887 = vpack.c.bf16 %v855, %v855
        %v888 = vpack.c.bf16 %v856, %v856
        %v889 = vpack.c.bf16 %v857, %v857
        %v890 = vpack.c.bf16 %v858, %v858
        %v891 = vpack.c.bf16 %v859, %v859
        %v892 = vpack.c.bf16 %v860, %v860
        %v893 = vpack.c.bf16 %v861, %v861
        %v894 = vpack.c.bf16 %v862, %v862
        %v895 = vpack.c.bf16 %v863, %v863
        %v896 = vpack.c.bf16 %v864, %v864
        %v897 = vpack.c.bf16 %v865, %v865
        %v898 = vpack.c.bf16 %v866, %v866
        %v899 = vpack.c.bf16 %v867, %v867
        %v900 = vpack.c.bf16 %v868, %v868
        %v901 = vpack.c.bf16 %v869, %v869
        %v902 = vpack.c.bf16 %v870, %v870
        %v903 = vpack.c.bf16 %v871, %v871
        %v904 = vpack.c.bf16 %v872, %v872
        %v905 = vpack.c.bf16 %v873, %v873
        %v906 = vpack.c.bf16 %v874, %v874
        %v907 = vpack.c.bf16 %v875, %v875
        %v908 = vpack.c.bf16 %v876, %v876
        %v909 = vpack.c.bf16 %v877, %v877
        %v910 = vpack.c.bf16 %v878, %v878
        %v911 = vpack.c.bf16 %v879, %v879
        %v912 = vpack.c.bf16 %v880, %v880
        %v913 = vpack.c.bf16 %v881, %v881
        %v914 = vpack.c.bf16 %v882, %v882
        %v915 = vpack.c.bf16 %v883, %v883
        %v916 = vpack.c.bf16 %v884, %v884
        %v917 = vpack.c.bf16 %v885, %v885
        %v918 = vpack.c.bf16 %v886, %v886
        %919 = vst [vmem:[%s5] sm:$0xf] %v887
        %920 = vst [vmem:[%s5 + $0x4] sm:$0xf] %v888
        %921 = vst [vmem:[%s5 + $0x8] sm:$0xf] %v889
        %922 = vst [vmem:[%s5 + $0xc] sm:$0xf] %v890
        %923 = vst [vmem:[%s5 + $0x10] sm:$0xf] %v891
        %924 = vst [vmem:[%s5 + $0x14] sm:$0xf] %v892
        %925 = vst [vmem:[%s5 + $0x18] sm:$0xf] %v893
        %926 = vst [vmem:[%s5 + $0x1c] sm:$0xf] %v894
        %927 = vst [vmem:[%s5 + $0x20] sm:$0xf] %v895
        %928 = vst [vmem:[%s5 + $0x24] sm:$0xf] %v896
        %929 = vst [vmem:[%s5 + $0x28] sm:$0xf] %v897
        %930 = vst [vmem:[%s5 + $0x2c] sm:$0xf] %v898
        %931 = vst [vmem:[%s5 + $0x30] sm:$0xf] %v899
        %932 = vst [vmem:[%s5 + $0x34] sm:$0xf] %v900
        %933 = vst [vmem:[%s5 + $0x38] sm:$0xf] %v901
        %934 = vst [vmem:[%s5 + $0x3c] sm:$0xf] %v902
        %935 = vst [vmem:[%s5 + $0x40] sm:$0xf] %v903
        %936 = vst [vmem:[%s5 + $0x44] sm:$0xf] %v904
        %937 = vst [vmem:[%s5 + $0x48] sm:$0xf] %v905
        %938 = vst [vmem:[%s5 + $0x4c] sm:$0xf] %v906
        %939 = vst [vmem:[%s5 + $0x50] sm:$0xf] %v907
        %940 = vst [vmem:[%s5 + $0x54] sm:$0xf] %v908
        %941 = vst [vmem:[%s5 + $0x58] sm:$0xf] %v909
        %942 = vst [vmem:[%s5 + $0x5c] sm:$0xf] %v910
        %943 = vst [vmem:[%s5 + $0x60] sm:$0xf] %v911
        %944 = vst [vmem:[%s5 + $0x64] sm:$0xf] %v912
        %945 = vst [vmem:[%s5 + $0x68] sm:$0xf] %v913
        %946 = vst [vmem:[%s5 + $0x6c] sm:$0xf] %v914
        %947 = vst [vmem:[%s5 + $0x70] sm:$0xf] %v915
        %948 = vst [vmem:[%s5 + $0x74] sm:$0xf] %v916
        %949 = vst [vmem:[%s5 + $0x78] sm:$0xf] %v917
        %950 = vst [vmem:[%s5 + $0x7c] sm:$0xf] %v918
      $region48: #{resnet_forward.15} parent=39 // pred_fallthru
        _
      // Predicated region
      $region49: #{resnet_forward.15} parent=39 // pred_check
        %p951 = pneg %p139
      $region50: #{resnet_forward.15} parent=39 // pred_check_branch
        %953 = sbr.rel (%p951) target = $region52
      $region51: #{resnet_forward.15} parent=39 // pred_region
        _
      $region52: #{resnet_forward.15} parent=39 // pred_fallthru
        _
      // Predicated region
      $region53: #{resnet_forward.15} parent=39 // pred_check
        %p954 = pneg %p139
      $region54: #{resnet_forward.15} parent=39 // pred_check_branch
        %956 = sbr.rel (%p954) target = $region56
      $region55: #{resnet_forward.15} parent=39 // pred_region
        _
      $region56: #{resnet_forward.15} parent=39 // pred_fallthru
        _
    $region40: #{resnet_forward.15} parent=5 // pred_fallthru
      _
    %p957 = scmp.le.s32.totalorder 2, %s11
    // Predicated region
    $region57: #{resnet_forward.15} parent=5 // pred_check
      %p958 = pneg %p957
    $region58: #{resnet_forward.15} parent=5 // pred_check_branch
      %960 = sbr.rel (%p958) target = $region60
    $region59: #{resnet_forward.15} parent=5 // pred_region
      %s961 = ssub.s32 %s11, 2
    $region60: #{resnet_forward.15} parent=5 // pred_fallthru
      _
  $region6: #{resnet_forward.15} parent=0 // loop_footer
    %s15 = sadd.s32 1, %s11
  $region7: #{resnet_forward.15} parent=0 // loop_footer_branch
    %10 = sbr.rel target = $region3
  $region8: #{resnet_forward.15} parent=0 // loop_exit
    _

// kernel: resnet_forward.16
$region0: #{resnet_forward.16}
  #allocation0 [shape = 'u32[]', space=smem, size = 0x4, offset = 0x4, fixed_abs, tag = 'smem constant byte address 0x4 - core index']
  #allocation1 [shape = 'u32[72,128]{1,0:T(1,128)}', space=vmem, size = 0x9000, scoped, tag = 'internal scratch']
  #allocation2 [shape = 'f32[4,16,128]{2,1,0:T(8,128)}', space=vmem, size = 0x8000, scoped, tag = 'scratch operand']
  #allocation3 [shape = 'f32[1,128]{1,0:T(1,128)}', space=vmem, size = 0x200, scoped, tag = 'scratch operand']
  #allocation4 [shape = 'f32[1,128]{1,0:T(1,128)}', space=vmem, size = 0x200, scoped, tag = 'scratch operand']
  %s0 = inlined_call_operand.vmem [shape: bf16[64,384], index: 0, kind: input, shape index: {}]
  %s1 = inlined_call_operand.vmem [shape: bf16[384,128], index: 1, kind: input, shape index: {}]
  %s2 = inlined_call_operand.vmem [shape: f32[1,128], index: 2, kind: input, shape index: {}]
  %s3 = inlined_call_operand.vmem [shape: f32[1,128], index: 3, kind: input, shape index: {}]
  %s4 = inlined_call_operand.vmem [shape: bf16[4,16,128], index: 4, kind: output, shape index: {}]
  %s5 = sld [smem:[#allocation0]]
  $region57: #{resnet_forward.16} parent=0
    _
  %s7 = ssub.s32 1, %s5
  %s8 = scalar_select 0, %s7, %s5
  loop: start=0, step=1, limit=6
  $region2: #{resnet_forward.16} parent=0 // loop_pre_header
    _
  $region3: #{resnet_forward.16} parent=0 // loop_header
    %s10 = sphi 0, %s14
    %p11 = scmp.ge.s32.totalorder %s10, 6
    %s20 = sphi 0, %s22
    %s23 = sphi 0, %s20
    %s24 = sphi 0, %s23
    %s40 = sphi 0, %s24
    %s44 = sphi 0, %s44
    %s46 = sphi 0, %s44
    %s47 = sphi 0, %s46
    %s61 = sphi 0, %s47
    %s65 = sphi 0, %s65
    %s67 = sphi 0, %s65
    %s68 = sphi 0, %s67
    %s82 = sphi 0, %s68
    %s86 = sphi 0, %s86
    %s88 = sphi 0, %s86
    %s89 = sphi 0, %s88
    %s103 = sphi 0, %s89
    %s107 = sphi 0, %s107
    %s109 = sphi 0, %s107
    %s110 = sphi 0, %s109
    %s124 = sphi 0, %s110
  $region4: #{resnet_forward.16} parent=0 // loop_header_branch
    %13 = sbr.rel (%p11) target = $region8
  $region5: #{resnet_forward.16} parent=0 // loop_body
    %s15 = ssub.s32 %s10, 1
    %s16 = ssub.s32 %s10, 2
    %s17 = sadd.s32 %s10, 1
    %s18 = ssub.s32 %s10, %s17
    %p19 = scmp.eq.s32.totalorder %s18, 0
    %s21 = sadd.s32 %s20, 1
    %s22 = scalar_select %p19, %s20, %s21
    %p25 = pneg %p19
    %p26 = scmp.eq.s32.totalorder %s10, 3
    %p27 = por %p25, %p26
    %p28 = scmp.ne.s32.totalorder %s20, %s23
    %p29 = scmp.eq.s32.totalorder %s10, 0
    %p30 = por %p28, %p29
    %p31 = scmp.ne.s32.totalorder %s20, %s23
    %p32 = scmp.eq.s32.totalorder %s15, 3
    %p33 = por %p31, %p32
    %p34 = scmp.ne.s32.totalorder %s23, %s24
    %p35 = scmp.eq.s32.totalorder %s15, 0
    %p36 = por %p34, %p35
    %p37 = scmp.ne.s32.totalorder %s23, %s24
    %p38 = scmp.eq.s32.totalorder %s16, 3
    %p39 = por %p37, %p38
    %p41 = scmp.ne.s32.totalorder %s24, %s40
    %p42 = scmp.eq.s32.totalorder %s16, 0
    %p43 = por %p41, %p42
    %s45 = sadd.s32 %s44, 1
    %p48 = scmp.eq.s32.totalorder %s10, 3
    %p49 = scmp.ne.s32.totalorder %s44, %s46
    %p50 = scmp.eq.s32.totalorder %s10, 0
    %p51 = por %p49, %p50
    %p52 = scmp.ne.s32.totalorder %s44, %s46
    %p53 = scmp.eq.s32.totalorder %s15, 3
    %p54 = por %p52, %p53
    %p55 = scmp.ne.s32.totalorder %s46, %s47
    %p56 = scmp.eq.s32.totalorder %s15, 0
    %p57 = por %p55, %p56
    %p58 = scmp.ne.s32.totalorder %s46, %s47
    %p59 = scmp.eq.s32.totalorder %s16, 3
    %p60 = por %p58, %p59
    %p62 = scmp.ne.s32.totalorder %s47, %s61
    %p63 = scmp.eq.s32.totalorder %s16, 0
    %p64 = por %p62, %p63
    %s66 = sadd.s32 %s65, 1
    %p69 = scmp.eq.s32.totalorder %s10, 3
    %p70 = scmp.ne.s32.totalorder %s65, %s67
    %p71 = scmp.eq.s32.totalorder %s10, 0
    %p72 = por %p70, %p71
    %p73 = scmp.ne.s32.totalorder %s65, %s67
    %p74 = scmp.eq.s32.totalorder %s15, 3
    %p75 = por %p73, %p74
    %p76 = scmp.ne.s32.totalorder %s67, %s68
    %p77 = scmp.eq.s32.totalorder %s15, 0
    %p78 = por %p76, %p77
    %p79 = scmp.ne.s32.totalorder %s67, %s68
    %p80 = scmp.eq.s32.totalorder %s16, 3
    %p81 = por %p79, %p80
    %p83 = scmp.ne.s32.totalorder %s68, %s82
    %p84 = scmp.eq.s32.totalorder %s16, 0
    %p85 = por %p83, %p84
    %s87 = sadd.s32 %s86, 1
    %p90 = scmp.eq.s32.totalorder %s10, 3
    %p91 = scmp.ne.s32.totalorder %s86, %s88
    %p92 = scmp.eq.s32.totalorder %s10, 0
    %p93 = por %p91, %p92
    %p94 = scmp.ne.s32.totalorder %s86, %s88
    %p95 = scmp.eq.s32.totalorder %s15, 3
    %p96 = por %p94, %p95
    %p97 = scmp.ne.s32.totalorder %s88, %s89
    %p98 = scmp.eq.s32.totalorder %s15, 0
    %p99 = por %p97, %p98
    %p100 = scmp.ne.s32.totalorder %s88, %s89
    %p101 = scmp.eq.s32.totalorder %s16, 3
    %p102 = por %p100, %p101
    %p104 = scmp.ne.s32.totalorder %s89, %s103
    %p105 = scmp.eq.s32.totalorder %s16, 0
    %p106 = por %p104, %p105
    %s108 = sadd.s32 %s107, 1
    %p111 = scmp.eq.s32.totalorder %s10, 3
    %p112 = scmp.ne.s32.totalorder %s107, %s109
    %p113 = scmp.eq.s32.totalorder %s10, 0
    %p114 = por %p112, %p113
    %p115 = scmp.ne.s32.totalorder %s107, %s109
    %p116 = scmp.eq.s32.totalorder %s15, 3
    %p117 = por %p115, %p116
    %p118 = scmp.ne.s32.totalorder %s109, %s110
    %p119 = scmp.eq.s32.totalorder %s15, 0
    %p120 = por %p118, %p119
    %p121 = scmp.ne.s32.totalorder %s109, %s110
    %p122 = scmp.eq.s32.totalorder %s16, 3
    %p123 = por %p121, %p122
    %p125 = scmp.ne.s32.totalorder %s110, %s124
    %p126 = scmp.eq.s32.totalorder %s16, 0
    %p127 = por %p125, %p126
    %p128 = scmp.le.s32.totalorder 1, %s10
    %p129 = scmp.lt.s32.totalorder %s10, 5
    %p130 = pnand %p128, %p129
    %p131 = pneg %p130
    // Predicated region
    $region9: #{resnet_forward.16} parent=5 // pred_check
      _
    $region10: #{resnet_forward.16} parent=5 // pred_check_branch
      %133 = sbr.rel (%p130) target = $region12
    $region11: #{resnet_forward.16} parent=5 // pred_region
      %s134 = ssub.s32 %s10, 1
      // Predicated region
      $region13: #{resnet_forward.16} parent=11 // pred_check
        %p135 = pneg %p57
      $region14: #{resnet_forward.16} parent=11 // pred_check_branch
        %137 = sbr.rel (%p135) target = $region16
      $region15: #{resnet_forward.16} parent=11 // pred_region
        _
      $region16: #{resnet_forward.16} parent=11 // pred_fallthru
        _
      // Predicated region
      $region17: #{resnet_forward.16} parent=11 // pred_check
        %p138 = pneg %p78
      $region18: #{resnet_forward.16} parent=11 // pred_check_branch
        %140 = sbr.rel (%p138) target = $region20
      $region19: #{resnet_forward.16} parent=11 // pred_region
        _
      $region20: #{resnet_forward.16} parent=11 // pred_fallthru
        _
      // Predicated region
      $region21: #{resnet_forward.16} parent=11 // pred_check
        %p141 = pneg %p99
      $region22: #{resnet_forward.16} parent=11 // pred_check_branch
        %143 = sbr.rel (%p141) target = $region24
      $region23: #{resnet_forward.16} parent=11 // pred_region
        _
      $region24: #{resnet_forward.16} parent=11 // pred_fallthru
        _
    $region12: #{resnet_forward.16} parent=5 // pred_fallthru
      _
    %p144 = scmp.lt.s32.totalorder %s10, 4
    // Predicated region
    $region25: #{resnet_forward.16} parent=5 // pred_check
      %p145 = pneg %p144
    $region26: #{resnet_forward.16} parent=5 // pred_check_branch
      %147 = sbr.rel (%p145) target = $region28
    $region27: #{resnet_forward.16} parent=5 // pred_region
      // Predicated region
      $region29: #{resnet_forward.16} parent=27 // pred_check
        %p148 = pneg %p30
      $region30: #{resnet_forward.16} parent=27 // pred_check_branch
        %150 = sbr.rel (%p148) target = $region32
      $region31: #{resnet_forward.16} parent=27 // pred_region
        %s151 = smul.u32 2, %s10
        %p152 = scmp.lt.s32.totalorder %s151, 7
        %s153 = scalar_select %p152, %s151, 7
        %s154 = smul.addr %s153, 3
        %s155 = smul.addr %s154, 4
        %s156 = scalar_lea.vmem %s0, %s155
        %s157 = smul.u32 2, %s10
      $region32: #{resnet_forward.16} parent=27 // pred_fallthru
        _
    $region28: #{resnet_forward.16} parent=5 // pred_fallthru
      _
    %p158 = scmp.le.s32.totalorder 1, %s10
    %p159 = scmp.lt.s32.totalorder %s10, 5
    %p160 = pnand %p158, %p159
    %p161 = pneg %p160
    // Predicated region
    $region33: #{resnet_forward.16} parent=5 // pred_check
      _
    $region34: #{resnet_forward.16} parent=5 // pred_check_branch
      %163 = sbr.rel (%p160) target = $region36
    $region35: #{resnet_forward.16} parent=5 // pred_region
      %s164 = ssub.s32 %s10, 1
      %s165 = smul.u32 2, %s15
      %p166 = scmp.lt.s32.totalorder %s165, 7
      %s167 = scalar_select %p166, %s165, 7
      %s168 = smul.addr %s167, 3
      %s169 = smul.addr %s168, 4
      %s170 = scalar_lea.vmem %s0, %s169
      %p171 = pneg %p36
      %p172 = pneg %p33
      %p173 = pneg %p57
      %p174 = pneg %p54
      %p175 = pneg %p78
      %p176 = pneg %p75
      %p177 = pneg %p99
      %p178 = pneg %p96
      %p179 = pneg %p120
      %p180 = pneg %p117
      %s181 = smul.u32 2, %s15
      %p182 = scmp.lt.s32.totalorder %s181, 7
      %s183 = scalar_select %p182, %s181, 7
      %s184 = smul.addr %s183, 3
      %s185 = smul.addr %s184, 4
      %s186 = scalar_lea.vmem %s0, %s185
      %s187 = smul.u32 2, %s15
      %p188 = scmp.eq.s32.totalorder %s15, 0
      // Predicated region
      $region37: #{resnet_forward.16} parent=35 // pred_check
        %p189 = pneg %p188
      $region38: #{resnet_forward.16} parent=35 // pred_check_branch
        %191 = sbr.rel (%p189) target = $region40
      $region39: #{resnet_forward.16} parent=35 // pred_region
        %192 = vst [vmem:[#allocation3] sm:$0x1] 0.0
        %193 = vst [vmem:[#allocation4] sm:$0x1] 0.0
      $region40: #{resnet_forward.16} parent=35 // pred_fallthru
        _
      %v194 = vld [vmem:[%s186] sm:$0xff]
      %v195 = vld [vmem:[%s186 + $0x8] sm:$0xf]
      %v196 = vld [vmem:[%s186 + $0xc] sm:$0xff]
      %v197 = vld [vmem:[%s186 + $0x14] sm:$0xf]
      %v198 = vld [vmem:[%s1] sm:$0xf]
      %v199 = vld [vmem:[%s1 + $0x4] sm:$0xf]
      %v200 = vld [vmem:[%s1 + $0x8] sm:$0xf]
      %v201 = vld [vmem:[%s1 + $0xc] sm:$0xf]
      %v202 = vld [vmem:[%s1 + $0x10] sm:$0xf]
      %v203 = vld [vmem:[%s1 + $0x14] sm:$0xf]
      %v204 = vld [vmem:[%s1 + $0x18] sm:$0xf]
      %v205 = vld [vmem:[%s1 + $0x1c] sm:$0xf]
      %v206 = vld [vmem:[%s1 + $0x20] sm:$0xf]
      %v207 = vld [vmem:[%s1 + $0x24] sm:$0xf]
      %v208 = vld [vmem:[%s1 + $0x28] sm:$0xf]
      %v209 = vld [vmem:[%s1 + $0x2c] sm:$0xf]
      %v210 = vld [vmem:[%s1 + $0x30] sm:$0xf]
      %v211 = vld [vmem:[%s1 + $0x34] sm:$0xf]
      %v212 = vld [vmem:[%s1 + $0x38] sm:$0xf]
      %v213 = vld [vmem:[%s1 + $0x3c] sm:$0xf]
      %v214 = vld [vmem:[%s1 + $0x40] sm:$0xf]
      %v215 = vld [vmem:[%s1 + $0x44] sm:$0xf]
      %v216 = vld [vmem:[%s1 + $0x48] sm:$0xf]
      %v217 = vld [vmem:[%s1 + $0x4c] sm:$0xf]
      %v218 = vld [vmem:[%s1 + $0x50] sm:$0xf]
      %v219 = vld [vmem:[%s1 + $0x54] sm:$0xf]
      %v220 = vld [vmem:[%s1 + $0x58] sm:$0xf]
      %v221 = vld [vmem:[%s1 + $0x5c] sm:$0xf]
      %v222 = vld [vmem:[%s1 + $0x60] sm:$0xf]
      %v223 = vld [vmem:[%s1 + $0x64] sm:$0xf]
      %v224 = vld [vmem:[%s1 + $0x68] sm:$0xf]
      %v225 = vld [vmem:[%s1 + $0x6c] sm:$0xf]
      %v226 = vld [vmem:[%s1 + $0x70] sm:$0xf]
      %v227 = vld [vmem:[%s1 + $0x74] sm:$0xf]
      %v228 = vld [vmem:[%s1 + $0x78] sm:$0xf]
      %v229 = vld [vmem:[%s1 + $0x7c] sm:$0xf]
      %v230 = vld [vmem:[%s1 + $0x80] sm:$0xf]
      %v231 = vld [vmem:[%s1 + $0x84] sm:$0xf]
      %v232 = vld [vmem:[%s1 + $0x88] sm:$0xf]
      %v233 = vld [vmem:[%s1 + $0x8c] sm:$0xf]
      %v234 = vld [vmem:[%s1 + $0x90] sm:$0xf]
      %v235 = vld [vmem:[%s1 + $0x94] sm:$0xf]
      %v236 = vld [vmem:[%s1 + $0x98] sm:$0xf]
      %v237 = vld [vmem:[%s1 + $0x9c] sm:$0xf]
      %v238 = vld [vmem:[%s1 + $0xa0] sm:$0xf]
      %v239 = vld [vmem:[%s1 + $0xa4] sm:$0xf]
      %v240 = vld [vmem:[%s1 + $0xa8] sm:$0xf]
      %v241 = vld [vmem:[%s1 + $0xac] sm:$0xf]
      %v242 = vld [vmem:[%s1 + $0xb0] sm:$0xf]
      %v243 = vld [vmem:[%s1 + $0xb4] sm:$0xf]
      %v244 = vld [vmem:[%s1 + $0xb8] sm:$0xf]
      %v245 = vld [vmem:[%s1 + $0xbc] sm:$0xf]
      %v250 = vunpack.c.l.b16 %v194
      %v251 = vunpack.c.h.b16 %v194
      %v252 = vunpack.c.l.b16 %v195
      %v253 = vunpack.c.l.b16 %v196
      %v254 = vunpack.c.h.b16 %v196
      %v255 = vunpack.c.l.b16 %v197
      %v256 = vpack.c.b16 %v253, %v250
      %v257 = vpack.c.b16 %v254, %v251
      %v258 = vpack.c.b16 %v255, %v252
      %v310 = vunpack.c.l.b16 %v198
      %v311 = vunpack.c.l.b16 %v199
      %v312 = vunpack.c.l.b16 %v200
      %v313 = vunpack.c.l.b16 %v201
      %v314 = vunpack.c.l.b16 %v202
      %v315 = vunpack.c.l.b16 %v203
      %v316 = vunpack.c.l.b16 %v204
      %v317 = vunpack.c.l.b16 %v205
      %v318 = vunpack.c.l.b16 %v206
      %v319 = vunpack.c.l.b16 %v207
      %v320 = vunpack.c.l.b16 %v208
      %v321 = vunpack.c.l.b16 %v209
      %v322 = vunpack.c.l.b16 %v210
      %v323 = vunpack.c.l.b16 %v211
      %v324 = vunpack.c.l.b16 %v212
      %v325 = vunpack.c.l.b16 %v213
      %v326 = vunpack.c.l.b16 %v214
      %v327 = vunpack.c.l.b16 %v215
      %v328 = vunpack.c.l.b16 %v216
      %v329 = vunpack.c.l.b16 %v217
      %v330 = vunpack.c.l.b16 %v218
      %v331 = vunpack.c.l.b16 %v219
      %v332 = vunpack.c.l.b16 %v220
      %v333 = vunpack.c.l.b16 %v221
      %v334 = vunpack.c.l.b16 %v222
      %v335 = vunpack.c.l.b16 %v223
      %v336 = vunpack.c.l.b16 %v224
      %v337 = vunpack.c.l.b16 %v225
      %v338 = vunpack.c.l.b16 %v226
      %v339 = vunpack.c.l.b16 %v227
      %v340 = vunpack.c.l.b16 %v228
      %v341 = vunpack.c.l.b16 %v229
      %v342 = vunpack.c.l.b16 %v230
      %v343 = vunpack.c.l.b16 %v231
      %v344 = vunpack.c.l.b16 %v232
      %v345 = vunpack.c.l.b16 %v233
      %v346 = vunpack.c.l.b16 %v234
      %v347 = vunpack.c.l.b16 %v235
      %v348 = vunpack.c.l.b16 %v236
      %v349 = vunpack.c.l.b16 %v237
      %v350 = vunpack.c.l.b16 %v238
      %v351 = vunpack.c.l.b16 %v239
      %v352 = vunpack.c.l.b16 %v240
      %v353 = vunpack.c.l.b16 %v241
      %v354 = vunpack.c.l.b16 %v242
      %v355 = vunpack.c.l.b16 %v243
      %v356 = vunpack.c.l.b16 %v244
      %v357 = vunpack.c.l.b16 %v245
      %v358 = vpack.c.b16 %v311, %v310
      %v359 = vpack.c.b16 %v313, %v312
      %v360 = vpack.c.b16 %v315, %v314
      %v361 = vpack.c.b16 %v317, %v316
      %v362 = vpack.c.b16 %v319, %v318
      %v363 = vpack.c.b16 %v321, %v320
      %v364 = vpack.c.b16 %v323, %v322
      %v365 = vpack.c.b16 %v325, %v324
      %v366 = vpack.c.b16 %v327, %v326
      %v367 = vpack.c.b16 %v329, %v328
      %v368 = vpack.c.b16 %v331, %v330
      %v369 = vpack.c.b16 %v333, %v332
      %v370 = vpack.c.b16 %v335, %v334
      %v371 = vpack.c.b16 %v337, %v336
      %v372 = vpack.c.b16 %v339, %v338
      %v373 = vpack.c.b16 %v341, %v340
      %v374 = vpack.c.b16 %v343, %v342
      %v375 = vpack.c.b16 %v345, %v344
      %v376 = vpack.c.b16 %v347, %v346
      %v377 = vpack.c.b16 %v349, %v348
      %v378 = vpack.c.b16 %v351, %v350
      %v379 = vpack.c.b16 %v353, %v352
      %v380 = vpack.c.b16 %v355, %v354
      %v381 = vpack.c.b16 %v357, %v356
      %406 = vmatpush.bf16.msra.mxu0 %v365
      %407 = vmatpush.bf16.msra.mxu0 %v364
      %408 = vmatpush.bf16.msra.mxu0 %v363
      %409 = vmatpush.bf16.msra.mxu0 %v362
      %410 = vmatpush.bf16.msra.mxu0 %v361
      %411 = vmatpush.bf16.msra.mxu0 %v360
      %412 = vmatpush.bf16.msra.mxu0 %v359
      %413 = vmatpush.bf16.msra.mxu0 %v358
      %414 = vmatmul.bf16.gmra.mxu0 %v256
      %v415 = vpop.f32.mrf.mxu0
      %v416 = vadd.f32 0.0, %v415
      %v417 = vpop.f32.mrf.mxu0
      %v418 = vadd.f32 0.0, %v417
      %419 = vdwg.mxu0
      %420 = vmatpush.bf16.msra.mxu0 %v373
      %421 = vmatpush.bf16.msra.mxu0 %v372
      %422 = vmatpush.bf16.msra.mxu0 %v371
      %423 = vmatpush.bf16.msra.mxu0 %v370
      %424 = vmatpush.bf16.msra.mxu0 %v369
      %425 = vmatpush.bf16.msra.mxu0 %v368
      %426 = vmatpush.bf16.msra.mxu0 %v367
      %427 = vmatpush.bf16.msra.mxu0 %v366
      %428 = vmatmul.bf16.gmra.mxu0 %v257
      %v429 = vpop.f32.mrf.mxu0
      %v430 = vadd.f32 %v416, %v429
      %v431 = vpop.f32.mrf.mxu0
      %v432 = vadd.f32 %v418, %v431
      %433 = vdwg.mxu0
      %434 = vmatpush.bf16.msra.mxu0 %v381
      %435 = vmatpush.bf16.msra.mxu0 %v380
      %436 = vmatpush.bf16.msra.mxu0 %v379
      %437 = vmatpush.bf16.msra.mxu0 %v378
      %438 = vmatpush.bf16.msra.mxu0 %v377
      %439 = vmatpush.bf16.msra.mxu0 %v376
      %440 = vmatpush.bf16.msra.mxu0 %v375
      %441 = vmatpush.bf16.msra.mxu0 %v374
      %442 = vmatmul.bf16.gmra.mxu0 %v258
      %v443 = vpop.f32.mrf.mxu0
      %v444 = vadd.f32 %v430, %v443
      %v445 = vpop.f32.mrf.mxu0
      %v446 = vadd.f32 %v432, %v445
      %447 = vdwg.mxu0
      %s448 = smul.u32 %s15, 16
      %s449 = scalar_lea.vmem [#allocation2], %s448
      %450 = vst [vmem:[%s449] sm:$0xff] %v444
      %451 = vst [vmem:[%s449 + $0x8] sm:$0xff] %v446
      %v452 = vld [vmem:[#allocation3] sm:$0x1]
      %v453 = vadd.f32 %v444, %v446
      %v454 = vrot.slane %v453, 4
      %v455 = vadd.f32 %v453, %v454
      %v456 = vrot.slane %v455, 2
      %v457 = vadd.f32 %v455, %v456
      %v458 = vrot.slane %v457, 1
      %v459 = vadd.f32 %v457, %v458
      %v460 = vadd.f32 %v452, %v459
      %461 = vst [vmem:[#allocation3] sm:$0x1] %v460
      %v462 = vld [vmem:[#allocation4] sm:$0x1]
      %v463 = vmul.f32 %v444, %v444
      %v464 = vmul.f32 %v446, %v446
      %v465 = vadd.f32 %v463, %v464
      %v466 = vrot.slane %v465, 4
      %v467 = vadd.f32 %v465, %v466
      %v468 = vrot.slane %v467, 2
      %v469 = vadd.f32 %v467, %v468
      %v470 = vrot.slane %v469, 1
      %v471 = vadd.f32 %v469, %v470
      %v472 = vadd.f32 %v462, %v471
      %473 = vst [vmem:[#allocation4] sm:$0x1] %v472
      %p474 = scmp.eq.s32.totalorder %s15, 3
      // Predicated region
      $region41: #{resnet_forward.16} parent=35 // pred_check
        %p475 = pneg %p474
      $region42: #{resnet_forward.16} parent=35 // pred_check_branch
        %477 = sbr.rel (%p475) target = $region44
      $region43: #{resnet_forward.16} parent=35 // pred_region
        %v478 = vld [vmem:[#allocation3] sm:$0x1]
        %v479 = vmul.f32 %v478, 0.015625
        %v480 = vld [vmem:[#allocation4] sm:$0x1]
        %v481 = vmul.f32 %v480, 0.015625
        %v482 = vmul.f32 %v479, %v479
        %v483 = vsub.f32 %v481, %v482
        %v484 = vmax.f32 %v483, 0.0
        %v485 = vadd.f32 %v484, 1e-05
        %v486 = vrsqrt.pop %v485
        %v487 = vmul.f32 %v486, %v485
        %v488 = vmul.f32 %v487, %v486
        %v489 = vmul.f32 0.5, %v488
        %v490 = vsub.f32 1.5, %v489
        %v491 = vmul.f32 %v486, %v490
        %vm492 = vweird.f32 %v485
        %vm493 = vweird.f32 %v486
        %vm494 = vmor %vm492, %vm493
        %v495 = vsel %vm494, %v486, %v491
        %v496 = vld [vmem:[%s2] sm:$0x1]
        %v497 = vmul.f32 %v495, %v496
        %v498 = vld [vmem:[%s3] sm:$0x1]
        %v499 = vmul.f32 %v479, %v497
        %v500 = vsub.f32 %v498, %v499
        %v501 = vld [vmem:[#allocation2] sm:$0xff]
        %v502 = vld [vmem:[#allocation2 + $0x8] sm:$0xff]
        %v503 = vld [vmem:[#allocation2 + $0x10] sm:$0xff]
        %v504 = vld [vmem:[#allocation2 + $0x18] sm:$0xff]
        %v505 = vld [vmem:[#allocation2 + $0x20] sm:$0xff]
        %v506 = vld [vmem:[#allocation2 + $0x28] sm:$0xff]
        %v507 = vld [vmem:[#allocation2 + $0x30] sm:$0xff]
        %v508 = vld [vmem:[#allocation2 + $0x38] sm:$0xff]
        %v510 = vperm.slane %v497, 0
        %v512 = vmul.f32 %v501, %v510
        %v513 = vmul.f32 %v502, %v510
        %v514 = vmul.f32 %v503, %v510
        %v515 = vmul.f32 %v504, %v510
        %v516 = vmul.f32 %v505, %v510
        %v517 = vmul.f32 %v506, %v510
        %v518 = vmul.f32 %v507, %v510
        %v519 = vmul.f32 %v508, %v510
        %v521 = vperm.slane %v500, 0
        %v523 = vadd.f32 %v512, %v521
        %v524 = vadd.f32 %v513, %v521
        %v525 = vadd.f32 %v514, %v521
        %v526 = vadd.f32 %v515, %v521
        %v527 = vadd.f32 %v516, %v521
        %v528 = vadd.f32 %v517, %v521
        %v529 = vadd.f32 %v518, %v521
        %v530 = vadd.f32 %v519, %v521
        %v531 = vmax.f32 %v523, 0.0
        %v532 = vmax.f32 %v524, 0.0
        %v533 = vmax.f32 %v525, 0.0
        %v534 = vmax.f32 %v526, 0.0
        %v535 = vmax.f32 %v527, 0.0
        %v536 = vmax.f32 %v528, 0.0
        %v537 = vmax.f32 %v529, 0.0
        %v538 = vmax.f32 %v530, 0.0
        %v539 = vpack.c.bf16 %v531, %v531
        %v540 = vpack.c.bf16 %v532, %v532
        %v541 = vpack.c.bf16 %v533, %v533
        %v542 = vpack.c.bf16 %v534, %v534
        %v543 = vpack.c.bf16 %v535, %v535
        %v544 = vpack.c.bf16 %v536, %v536
        %v545 = vpack.c.bf16 %v537, %v537
        %v546 = vpack.c.bf16 %v538, %v538
        %547 = vst [vmem:[%s4] sm:$0xf] %v539
        %548 = vst [vmem:[%s4 + $0x4] sm:$0xf] %v540
        %549 = vst [vmem:[%s4 + $0x8] sm:$0xf] %v541
        %550 = vst [vmem:[%s4 + $0xc] sm:$0xf] %v542
        %551 = vst [vmem:[%s4 + $0x10] sm:$0xf] %v543
        %552 = vst [vmem:[%s4 + $0x14] sm:$0xf] %v544
        %553 = vst [vmem:[%s4 + $0x18] sm:$0xf] %v545
        %554 = vst [vmem:[%s4 + $0x1c] sm:$0xf] %v546
      $region44: #{resnet_forward.16} parent=35 // pred_fallthru
        _
      // Predicated region
      $region45: #{resnet_forward.16} parent=35 // pred_check
        %p555 = pneg %p117
      $region46: #{resnet_forward.16} parent=35 // pred_check_branch
        %557 = sbr.rel (%p555) target = $region48
      $region47: #{resnet_forward.16} parent=35 // pred_region
        _
      $region48: #{resnet_forward.16} parent=35 // pred_fallthru
        _
      // Predicated region
      $region49: #{resnet_forward.16} parent=35 // pred_check
        %p558 = pneg %p117
      $region50: #{resnet_forward.16} parent=35 // pred_check_branch
        %560 = sbr.rel (%p558) target = $region52
      $region51: #{resnet_forward.16} parent=35 // pred_region
        _
      $region52: #{resnet_forward.16} parent=35 // pred_fallthru
        _
    $region36: #{resnet_forward.16} parent=5 // pred_fallthru
      _
    %p561 = scmp.le.s32.totalorder 2, %s10
    // Predicated region
    $region53: #{resnet_forward.16} parent=5 // pred_check
      %p562 = pneg %p561
    $region54: #{resnet_forward.16} parent=5 // pred_check_branch
      %564 = sbr.rel (%p562) target = $region56
    $region55: #{resnet_forward.16} parent=5 // pred_region
      %s565 = ssub.s32 %s10, 2
    $region56: #{resnet_forward.16} parent=5 // pred_fallthru
      _
  $region6: #{resnet_forward.16} parent=0 // loop_footer
    %s14 = sadd.s32 1, %s10
  $region7: #{resnet_forward.16} parent=0 // loop_footer_branch
    %9 = sbr.rel target = $region3
  $region8: #{resnet_forward.16} parent=0 // loop_exit
    _

// kernel: resnet_forward.17
$region0: #{resnet_forward.17}
  #allocation0 [shape = 'u32[]', space=smem, size = 0x4, offset = 0x4, fixed_abs, tag = 'smem constant byte address 0x4 - core index']
  #allocation1 [shape = 'u32[72,128]{1,0:T(1,128)}', space=vmem, size = 0x9000, scoped, tag = 'internal scratch']
  #allocation2 [shape = 'f32[4,16,128]{2,1,0:T(8,128)}', space=vmem, size = 0x8000, scoped, tag = 'scratch operand']
  #allocation3 [shape = 'f32[1,128]{1,0:T(1,128)}', space=vmem, size = 0x200, scoped, tag = 'scratch operand']
  #allocation4 [shape = 'f32[1,128]{1,0:T(1,128)}', space=vmem, size = 0x200, scoped, tag = 'scratch operand']
  %s0 = inlined_call_operand.vmem [shape: bf16[64,128], index: 0, kind: input, shape index: {}]
  %s1 = inlined_call_operand.vmem [shape: bf16[128,128], index: 1, kind: input, shape index: {}]
  %s2 = inlined_call_operand.vmem [shape: f32[1,128], index: 2, kind: input, shape index: {}]
  %s3 = inlined_call_operand.vmem [shape: f32[1,128], index: 3, kind: input, shape index: {}]
  %s4 = inlined_call_operand.vmem [shape: bf16[4,16,128], index: 4, kind: output, shape index: {}]
  %s5 = sld [smem:[#allocation0]]
  $region57: #{resnet_forward.17} parent=0
    _
  %s7 = ssub.s32 1, %s5
  %s8 = scalar_select 0, %s7, %s5
  loop: start=0, step=1, limit=6
  $region2: #{resnet_forward.17} parent=0 // loop_pre_header
    _
  $region3: #{resnet_forward.17} parent=0 // loop_header
    %s10 = sphi 0, %s14
    %p11 = scmp.ge.s32.totalorder %s10, 6
    %s20 = sphi 0, %s22
    %s23 = sphi 0, %s20
    %s24 = sphi 0, %s23
    %s40 = sphi 0, %s24
    %s44 = sphi 0, %s44
    %s46 = sphi 0, %s44
    %s47 = sphi 0, %s46
    %s61 = sphi 0, %s47
    %s65 = sphi 0, %s65
    %s67 = sphi 0, %s65
    %s68 = sphi 0, %s67
    %s82 = sphi 0, %s68
    %s86 = sphi 0, %s86
    %s88 = sphi 0, %s86
    %s89 = sphi 0, %s88
    %s103 = sphi 0, %s89
    %s107 = sphi 0, %s107
    %s109 = sphi 0, %s107
    %s110 = sphi 0, %s109
    %s124 = sphi 0, %s110
  $region4: #{resnet_forward.17} parent=0 // loop_header_branch
    %13 = sbr.rel (%p11) target = $region8
  $region5: #{resnet_forward.17} parent=0 // loop_body
    %s15 = ssub.s32 %s10, 1
    %s16 = ssub.s32 %s10, 2
    %s17 = sadd.s32 %s10, 1
    %s18 = ssub.s32 %s10, %s17
    %p19 = scmp.eq.s32.totalorder %s18, 0
    %s21 = sadd.s32 %s20, 1
    %s22 = scalar_select %p19, %s20, %s21
    %p25 = pneg %p19
    %p26 = scmp.eq.s32.totalorder %s10, 3
    %p27 = por %p25, %p26
    %p28 = scmp.ne.s32.totalorder %s20, %s23
    %p29 = scmp.eq.s32.totalorder %s10, 0
    %p30 = por %p28, %p29
    %p31 = scmp.ne.s32.totalorder %s20, %s23
    %p32 = scmp.eq.s32.totalorder %s15, 3
    %p33 = por %p31, %p32
    %p34 = scmp.ne.s32.totalorder %s23, %s24
    %p35 = scmp.eq.s32.totalorder %s15, 0
    %p36 = por %p34, %p35
    %p37 = scmp.ne.s32.totalorder %s23, %s24
    %p38 = scmp.eq.s32.totalorder %s16, 3
    %p39 = por %p37, %p38
    %p41 = scmp.ne.s32.totalorder %s24, %s40
    %p42 = scmp.eq.s32.totalorder %s16, 0
    %p43 = por %p41, %p42
    %s45 = sadd.s32 %s44, 1
    %p48 = scmp.eq.s32.totalorder %s10, 3
    %p49 = scmp.ne.s32.totalorder %s44, %s46
    %p50 = scmp.eq.s32.totalorder %s10, 0
    %p51 = por %p49, %p50
    %p52 = scmp.ne.s32.totalorder %s44, %s46
    %p53 = scmp.eq.s32.totalorder %s15, 3
    %p54 = por %p52, %p53
    %p55 = scmp.ne.s32.totalorder %s46, %s47
    %p56 = scmp.eq.s32.totalorder %s15, 0
    %p57 = por %p55, %p56
    %p58 = scmp.ne.s32.totalorder %s46, %s47
    %p59 = scmp.eq.s32.totalorder %s16, 3
    %p60 = por %p58, %p59
    %p62 = scmp.ne.s32.totalorder %s47, %s61
    %p63 = scmp.eq.s32.totalorder %s16, 0
    %p64 = por %p62, %p63
    %s66 = sadd.s32 %s65, 1
    %p69 = scmp.eq.s32.totalorder %s10, 3
    %p70 = scmp.ne.s32.totalorder %s65, %s67
    %p71 = scmp.eq.s32.totalorder %s10, 0
    %p72 = por %p70, %p71
    %p73 = scmp.ne.s32.totalorder %s65, %s67
    %p74 = scmp.eq.s32.totalorder %s15, 3
    %p75 = por %p73, %p74
    %p76 = scmp.ne.s32.totalorder %s67, %s68
    %p77 = scmp.eq.s32.totalorder %s15, 0
    %p78 = por %p76, %p77
    %p79 = scmp.ne.s32.totalorder %s67, %s68
    %p80 = scmp.eq.s32.totalorder %s16, 3
    %p81 = por %p79, %p80
    %p83 = scmp.ne.s32.totalorder %s68, %s82
    %p84 = scmp.eq.s32.totalorder %s16, 0
    %p85 = por %p83, %p84
    %s87 = sadd.s32 %s86, 1
    %p90 = scmp.eq.s32.totalorder %s10, 3
    %p91 = scmp.ne.s32.totalorder %s86, %s88
    %p92 = scmp.eq.s32.totalorder %s10, 0
    %p93 = por %p91, %p92
    %p94 = scmp.ne.s32.totalorder %s86, %s88
    %p95 = scmp.eq.s32.totalorder %s15, 3
    %p96 = por %p94, %p95
    %p97 = scmp.ne.s32.totalorder %s88, %s89
    %p98 = scmp.eq.s32.totalorder %s15, 0
    %p99 = por %p97, %p98
    %p100 = scmp.ne.s32.totalorder %s88, %s89
    %p101 = scmp.eq.s32.totalorder %s16, 3
    %p102 = por %p100, %p101
    %p104 = scmp.ne.s32.totalorder %s89, %s103
    %p105 = scmp.eq.s32.totalorder %s16, 0
    %p106 = por %p104, %p105
    %s108 = sadd.s32 %s107, 1
    %p111 = scmp.eq.s32.totalorder %s10, 3
    %p112 = scmp.ne.s32.totalorder %s107, %s109
    %p113 = scmp.eq.s32.totalorder %s10, 0
    %p114 = por %p112, %p113
    %p115 = scmp.ne.s32.totalorder %s107, %s109
    %p116 = scmp.eq.s32.totalorder %s15, 3
    %p117 = por %p115, %p116
    %p118 = scmp.ne.s32.totalorder %s109, %s110
    %p119 = scmp.eq.s32.totalorder %s15, 0
    %p120 = por %p118, %p119
    %p121 = scmp.ne.s32.totalorder %s109, %s110
    %p122 = scmp.eq.s32.totalorder %s16, 3
    %p123 = por %p121, %p122
    %p125 = scmp.ne.s32.totalorder %s110, %s124
    %p126 = scmp.eq.s32.totalorder %s16, 0
    %p127 = por %p125, %p126
    %p128 = scmp.le.s32.totalorder 1, %s10
    %p129 = scmp.lt.s32.totalorder %s10, 5
    %p130 = pnand %p128, %p129
    %p131 = pneg %p130
    // Predicated region
    $region9: #{resnet_forward.17} parent=5 // pred_check
      _
    $region10: #{resnet_forward.17} parent=5 // pred_check_branch
      %133 = sbr.rel (%p130) target = $region12
    $region11: #{resnet_forward.17} parent=5 // pred_region
      %s134 = ssub.s32 %s10, 1
      // Predicated region
      $region13: #{resnet_forward.17} parent=11 // pred_check
        %p135 = pneg %p57
      $region14: #{resnet_forward.17} parent=11 // pred_check_branch
        %137 = sbr.rel (%p135) target = $region16
      $region15: #{resnet_forward.17} parent=11 // pred_region
        _
      $region16: #{resnet_forward.17} parent=11 // pred_fallthru
        _
      // Predicated region
      $region17: #{resnet_forward.17} parent=11 // pred_check
        %p138 = pneg %p78
      $region18: #{resnet_forward.17} parent=11 // pred_check_branch
        %140 = sbr.rel (%p138) target = $region20
      $region19: #{resnet_forward.17} parent=11 // pred_region
        _
      $region20: #{resnet_forward.17} parent=11 // pred_fallthru
        _
      // Predicated region
      $region21: #{resnet_forward.17} parent=11 // pred_check
        %p141 = pneg %p99
      $region22: #{resnet_forward.17} parent=11 // pred_check_branch
        %143 = sbr.rel (%p141) target = $region24
      $region23: #{resnet_forward.17} parent=11 // pred_region
        _
      $region24: #{resnet_forward.17} parent=11 // pred_fallthru
        _
    $region12: #{resnet_forward.17} parent=5 // pred_fallthru
      _
    %p144 = scmp.lt.s32.totalorder %s10, 4
    // Predicated region
    $region25: #{resnet_forward.17} parent=5 // pred_check
      %p145 = pneg %p144
    $region26: #{resnet_forward.17} parent=5 // pred_check_branch
      %147 = sbr.rel (%p145) target = $region28
    $region27: #{resnet_forward.17} parent=5 // pred_region
      // Predicated region
      $region29: #{resnet_forward.17} parent=27 // pred_check
        %p148 = pneg %p30
      $region30: #{resnet_forward.17} parent=27 // pred_check_branch
        %150 = sbr.rel (%p148) target = $region32
      $region31: #{resnet_forward.17} parent=27 // pred_region
        %s151 = smul.u32 2, %s10
        %p152 = scmp.lt.s32.totalorder %s151, 7
        %s153 = scalar_select %p152, %s151, 7
        %s154 = smul.addr %s153, 4
        %s155 = scalar_lea.vmem %s0, %s154
        %s156 = smul.u32 2, %s10
      $region32: #{resnet_forward.17} parent=27 // pred_fallthru
        _
    $region28: #{resnet_forward.17} parent=5 // pred_fallthru
      _
    %p157 = scmp.le.s32.totalorder 1, %s10
    %p158 = scmp.lt.s32.totalorder %s10, 5
    %p159 = pnand %p157, %p158
    %p160 = pneg %p159
    // Predicated region
    $region33: #{resnet_forward.17} parent=5 // pred_check
      _
    $region34: #{resnet_forward.17} parent=5 // pred_check_branch
      %162 = sbr.rel (%p159) target = $region36
    $region35: #{resnet_forward.17} parent=5 // pred_region
      %s163 = ssub.s32 %s10, 1
      %s164 = smul.u32 2, %s15
      %p165 = scmp.lt.s32.totalorder %s164, 7
      %s166 = scalar_select %p165, %s164, 7
      %s167 = smul.addr %s166, 4
      %s168 = scalar_lea.vmem %s0, %s167
      %p169 = pneg %p36
      %p170 = pneg %p33
      %p171 = pneg %p57
      %p172 = pneg %p54
      %p173 = pneg %p78
      %p174 = pneg %p75
      %p175 = pneg %p99
      %p176 = pneg %p96
      %p177 = pneg %p120
      %p178 = pneg %p117
      %s179 = smul.u32 2, %s15
      %p180 = scmp.lt.s32.totalorder %s179, 7
      %s181 = scalar_select %p180, %s179, 7
      %s182 = smul.addr %s181, 4
      %s183 = scalar_lea.vmem %s0, %s182
      %s184 = smul.u32 2, %s15
      %p185 = scmp.eq.s32.totalorder %s15, 0
      // Predicated region
      $region37: #{resnet_forward.17} parent=35 // pred_check
        %p186 = pneg %p185
      $region38: #{resnet_forward.17} parent=35 // pred_check_branch
        %188 = sbr.rel (%p186) target = $region40
      $region39: #{resnet_forward.17} parent=35 // pred_region
        %189 = vst [vmem:[#allocation3] sm:$0x1] 0.0
        %190 = vst [vmem:[#allocation4] sm:$0x1] 0.0
      $region40: #{resnet_forward.17} parent=35 // pred_fallthru
        _
      %v191 = vld [vmem:[%s183] sm:$0xf]
      %v192 = vld [vmem:[%s183 + $0x4] sm:$0xf]
      %v193 = vld [vmem:[%s1] sm:$0xf]
      %v194 = vld [vmem:[%s1 + $0x4] sm:$0xf]
      %v195 = vld [vmem:[%s1 + $0x8] sm:$0xf]
      %v196 = vld [vmem:[%s1 + $0xc] sm:$0xf]
      %v197 = vld [vmem:[%s1 + $0x10] sm:$0xf]
      %v198 = vld [vmem:[%s1 + $0x14] sm:$0xf]
      %v199 = vld [vmem:[%s1 + $0x18] sm:$0xf]
      %v200 = vld [vmem:[%s1 + $0x1c] sm:$0xf]
      %v201 = vld [vmem:[%s1 + $0x20] sm:$0xf]
      %v202 = vld [vmem:[%s1 + $0x24] sm:$0xf]
      %v203 = vld [vmem:[%s1 + $0x28] sm:$0xf]
      %v204 = vld [vmem:[%s1 + $0x2c] sm:$0xf]
      %v205 = vld [vmem:[%s1 + $0x30] sm:$0xf]
      %v206 = vld [vmem:[%s1 + $0x34] sm:$0xf]
      %v207 = vld [vmem:[%s1 + $0x38] sm:$0xf]
      %v208 = vld [vmem:[%s1 + $0x3c] sm:$0xf]
      %v211 = vunpack.c.l.b16 %v191
      %v212 = vunpack.c.l.b16 %v192
      %v213 = vpack.c.b16 %v212, %v211
      %v231 = vunpack.c.l.b16 %v193
      %v232 = vunpack.c.l.b16 %v194
      %v233 = vunpack.c.l.b16 %v195
      %v234 = vunpack.c.l.b16 %v196
      %v235 = vunpack.c.l.b16 %v197
      %v236 = vunpack.c.l.b16 %v198
      %v237 = vunpack.c.l.b16 %v199
      %v238 = vunpack.c.l.b16 %v200
      %v239 = vunpack.c.l.b16 %v201
      %v240 = vunpack.c.l.b16 %v202
      %v241 = vunpack.c.l.b16 %v203
      %v242 = vunpack.c.l.b16 %v204
      %v243 = vunpack.c.l.b16 %v205
      %v244 = vunpack.c.l.b16 %v206
      %v245 = vunpack.c.l.b16 %v207
      %v246 = vunpack.c.l.b16 %v208
      %v247 = vpack.c.b16 %v232, %v231
      %v248 = vpack.c.b16 %v234, %v233
      %v249 = vpack.c.b16 %v236, %v235
      %v250 = vpack.c.b16 %v238, %v237
      %v251 = vpack.c.b16 %v240, %v239
      %v252 = vpack.c.b16 %v242, %v241
      %v253 = vpack.c.b16 %v244, %v243
      %v254 = vpack.c.b16 %v246, %v245
      %263 = vmatpush.bf16.msra.mxu0 %v254
      %264 = vmatpush.bf16.msra.mxu0 %v253
      %265 = vmatpush.bf16.msra.mxu0 %v252
      %266 = vmatpush.bf16.msra.mxu0 %v251
      %267 = vmatpush.bf16.msra.mxu0 %v250
      %268 = vmatpush.bf16.msra.mxu0 %v249
      %269 = vmatpush.bf16.msra.mxu0 %v248
      %270 = vmatpush.bf16.msra.mxu0 %v247
      %271 = vmatmul.bf16.gmra.mxu0 %v213
      %v272 = vpop.f32.mrf.mxu0
      %v273 = vadd.f32 0.0, %v272
      %v274 = vpop.f32.mrf.mxu0
      %v275 = vadd.f32 0.0, %v274
      %276 = vdwg.mxu0
      %s277 = smul.u32 %s15, 16
      %s278 = scalar_lea.vmem [#allocation2], %s277
      %279 = vst [vmem:[%s278] sm:$0xff] %v273
      %280 = vst [vmem:[%s278 + $0x8] sm:$0xff] %v275
      %v281 = vld [vmem:[#allocation3] sm:$0x1]
      %v282 = vadd.f32 %v273, %v275
      %v283 = vrot.slane %v282, 4
      %v284 = vadd.f32 %v282, %v283
      %v285 = vrot.slane %v284, 2
      %v286 = vadd.f32 %v284, %v285
      %v287 = vrot.slane %v286, 1
      %v288 = vadd.f32 %v286, %v287
      %v289 = vadd.f32 %v281, %v288
      %290 = vst [vmem:[#allocation3] sm:$0x1] %v289
      %v291 = vld [vmem:[#allocation4] sm:$0x1]
      %v292 = vmul.f32 %v273, %v273
      %v293 = vmul.f32 %v275, %v275
      %v294 = vadd.f32 %v292, %v293
      %v295 = vrot.slane %v294, 4
      %v296 = vadd.f32 %v294, %v295
      %v297 = vrot.slane %v296, 2
      %v298 = vadd.f32 %v296, %v297
      %v299 = vrot.slane %v298, 1
      %v300 = vadd.f32 %v298, %v299
      %v301 = vadd.f32 %v291, %v300
      %302 = vst [vmem:[#allocation4] sm:$0x1] %v301
      %p303 = scmp.eq.s32.totalorder %s15, 3
      // Predicated region
      $region41: #{resnet_forward.17} parent=35 // pred_check
        %p304 = pneg %p303
      $region42: #{resnet_forward.17} parent=35 // pred_check_branch
        %306 = sbr.rel (%p304) target = $region44
      $region43: #{resnet_forward.17} parent=35 // pred_region
        %v307 = vld [vmem:[#allocation3] sm:$0x1]
        %v308 = vmul.f32 %v307, 0.015625
        %v309 = vld [vmem:[#allocation4] sm:$0x1]
        %v310 = vmul.f32 %v309, 0.015625
        %v311 = vmul.f32 %v308, %v308
        %v312 = vsub.f32 %v310, %v311
        %v313 = vmax.f32 %v312, 0.0
        %v314 = vadd.f32 %v313, 1e-05
        %v315 = vrsqrt.pop %v314
        %v316 = vmul.f32 %v315, %v314
        %v317 = vmul.f32 %v316, %v315
        %v318 = vmul.f32 0.5, %v317
        %v319 = vsub.f32 1.5, %v318
        %v320 = vmul.f32 %v315, %v319
        %vm321 = vweird.f32 %v314
        %vm322 = vweird.f32 %v315
        %vm323 = vmor %vm321, %vm322
        %v324 = vsel %vm323, %v315, %v320
        %v325 = vld [vmem:[%s2] sm:$0x1]
        %v326 = vmul.f32 %v324, %v325
        %v327 = vld [vmem:[%s3] sm:$0x1]
        %v328 = vmul.f32 %v308, %v326
        %v329 = vsub.f32 %v327, %v328
        %v330 = vld [vmem:[#allocation2] sm:$0xff]
        %v331 = vld [vmem:[#allocation2 + $0x8] sm:$0xff]
        %v332 = vld [vmem:[#allocation2 + $0x10] sm:$0xff]
        %v333 = vld [vmem:[#allocation2 + $0x18] sm:$0xff]
        %v334 = vld [vmem:[#allocation2 + $0x20] sm:$0xff]
        %v335 = vld [vmem:[#allocation2 + $0x28] sm:$0xff]
        %v336 = vld [vmem:[#allocation2 + $0x30] sm:$0xff]
        %v337 = vld [vmem:[#allocation2 + $0x38] sm:$0xff]
        %v339 = vperm.slane %v326, 0
        %v341 = vmul.f32 %v330, %v339
        %v342 = vmul.f32 %v331, %v339
        %v343 = vmul.f32 %v332, %v339
        %v344 = vmul.f32 %v333, %v339
        %v345 = vmul.f32 %v334, %v339
        %v346 = vmul.f32 %v335, %v339
        %v347 = vmul.f32 %v336, %v339
        %v348 = vmul.f32 %v337, %v339
        %v350 = vperm.slane %v329, 0
        %v352 = vadd.f32 %v341, %v350
        %v353 = vadd.f32 %v342, %v350
        %v354 = vadd.f32 %v343, %v350
        %v355 = vadd.f32 %v344, %v350
        %v356 = vadd.f32 %v345, %v350
        %v357 = vadd.f32 %v346, %v350
        %v358 = vadd.f32 %v347, %v350
        %v359 = vadd.f32 %v348, %v350
        %v360 = vpack.c.bf16 %v352, %v352
        %v361 = vpack.c.bf16 %v353, %v353
        %v362 = vpack.c.bf16 %v354, %v354
        %v363 = vpack.c.bf16 %v355, %v355
        %v364 = vpack.c.bf16 %v356, %v356
        %v365 = vpack.c.bf16 %v357, %v357
        %v366 = vpack.c.bf16 %v358, %v358
        %v367 = vpack.c.bf16 %v359, %v359
        %368 = vst [vmem:[%s4] sm:$0xf] %v360
        %369 = vst [vmem:[%s4 + $0x4] sm:$0xf] %v361
        %370 = vst [vmem:[%s4 + $0x8] sm:$0xf] %v362
        %371 = vst [vmem:[%s4 + $0xc] sm:$0xf] %v363
        %372 = vst [vmem:[%s4 + $0x10] sm:$0xf] %v364
        %373 = vst [vmem:[%s4 + $0x14] sm:$0xf] %v365
        %374 = vst [vmem:[%s4 + $0x18] sm:$0xf] %v366
        %375 = vst [vmem:[%s4 + $0x1c] sm:$0xf] %v367
      $region44: #{resnet_forward.17} parent=35 // pred_fallthru
        _
      // Predicated region
      $region45: #{resnet_forward.17} parent=35 // pred_check
        %p376 = pneg %p117
      $region46: #{resnet_forward.17} parent=35 // pred_check_branch
        %378 = sbr.rel (%p376) target = $region48
      $region47: #{resnet_forward.17} parent=35 // pred_region
        _
      $region48: #{resnet_forward.17} parent=35 // pred_fallthru
        _
      // Predicated region
      $region49: #{resnet_forward.17} parent=35 // pred_check
        %p379 = pneg %p117
      $region50: #{resnet_forward.17} parent=35 // pred_check_branch
        %381 = sbr.rel (%p379) target = $region52
      $region51: #{resnet_forward.17} parent=35 // pred_region
        _
      $region52: #{resnet_forward.17} parent=35 // pred_fallthru
        _
    $region36: #{resnet_forward.17} parent=5 // pred_fallthru
      _
    %p382 = scmp.le.s32.totalorder 2, %s10
    // Predicated region
    $region53: #{resnet_forward.17} parent=5 // pred_check
      %p383 = pneg %p382
    $region54: #{resnet_forward.17} parent=5 // pred_check_branch
      %385 = sbr.rel (%p383) target = $region56
    $region55: #{resnet_forward.17} parent=5 // pred_region
      %s386 = ssub.s32 %s10, 2
    $region56: #{resnet_forward.17} parent=5 // pred_fallthru
      _
  $region6: #{resnet_forward.17} parent=0 // loop_footer
    %s14 = sadd.s32 1, %s10
  $region7: #{resnet_forward.17} parent=0 // loop_footer_branch
    %9 = sbr.rel target = $region3
  $region8: #{resnet_forward.17} parent=0 // loop_exit
    _

// kernel: resnet_forward.19
$region0: #{resnet_forward.19}
  #allocation0 [shape = 'u32[]', space=smem, size = 0x4, offset = 0x4, fixed_abs, tag = 'smem constant byte address 0x4 - core index']
  #allocation1 [shape = 'u32[72,128]{1,0:T(1,128)}', space=vmem, size = 0x9000, scoped, tag = 'internal scratch']
  %s0 = inlined_call_operand.vmem [shape: bf16[4,16,128], index: 0, kind: input, shape index: {}]
  %s1 = inlined_call_operand.vmem [shape: f32[128,128], index: 1, kind: input, shape index: {}]
  %s2 = inlined_call_operand.vmem [shape: f32[1,128], index: 2, kind: input, shape index: {}]
  %s3 = inlined_call_operand.hbm [shape: f32[4,128], index: 3, kind: output, shape index: {}]
  %s4 = sld [smem:[#allocation0]]
  $region22: #{resnet_forward.19} parent=0
    _
  %s6 = ssub.s32 1, %s4
  %s7 = scalar_select 0, %s6, %s4
  $region1: #{resnet_forward.19} parent=0
    #allocation2 [shape = 'u8[2048]{0}', space=vmem, size = 0x800, scoped, tag = 'output window, operand 0, single buffered']
    #allocation3 [shape = 's32[1]{0}', space=sflag, size = 0x4, scoped, tag = 'scoped memory for resnet_forward.19']
    %8 = vsyncpa [#allocation3], 0
    // Predicated region
    $region2: #{resnet_forward.19} parent=1 // pred_check
      _
    $region3: #{resnet_forward.19} parent=1 // pred_check_branch
      %10 = sbr.rel (0) target = $region5
    $region4: #{resnet_forward.19} parent=1 // pred_region
      _
    $region5: #{resnet_forward.19} parent=1 // pred_fallthru
      _
    // Predicated region
    $region6: #{resnet_forward.19} parent=1 // pred_check
      _
    $region7: #{resnet_forward.19} parent=1 // pred_check_branch
      %12 = sbr.rel (0) target = $region9
    $region8: #{resnet_forward.19} parent=1 // pred_region
      _
    $region9: #{resnet_forward.19} parent=1 // pred_fallthru
      _
    // Predicated region
    $region10: #{resnet_forward.19} parent=1 // pred_check
      _
    $region11: #{resnet_forward.19} parent=1 // pred_check_branch
      %14 = sbr.rel (0) target = $region13
    $region12: #{resnet_forward.19} parent=1 // pred_region
      _
    $region13: #{resnet_forward.19} parent=1 // pred_fallthru
      _
    %v15 = vld [vmem:[%s0] sm:$0xf]
    %v16 = vld [vmem:[%s0 + $0x4] sm:$0xf]
    %v17 = vld [vmem:[%s0 + $0x8] sm:$0xf]
    %v18 = vld [vmem:[%s0 + $0xc] sm:$0xf]
    %v19 = vld [vmem:[%s0 + $0x10] sm:$0xf]
    %v20 = vld [vmem:[%s0 + $0x14] sm:$0xf]
    %v21 = vld [vmem:[%s0 + $0x18] sm:$0xf]
    %v22 = vld [vmem:[%s0 + $0x1c] sm:$0xf]
    %v23 = vunpack.c.l.bf16 %v15
    %v24 = vunpack.c.l.bf16 %v16
    %v25 = vunpack.c.l.bf16 %v17
    %v26 = vunpack.c.l.bf16 %v18
    %v27 = vunpack.c.l.bf16 %v19
    %v28 = vunpack.c.l.bf16 %v20
    %v29 = vunpack.c.l.bf16 %v21
    %v30 = vunpack.c.l.bf16 %v22
    %v31 = vadd.f32 %v23, %v24
    %v32 = vrot.slane %v31, 4
    %v33 = vadd.f32 %v31, %v32
    %v34 = vrot.slane %v33, 2
    %v35 = vadd.f32 %v33, %v34
    %v36 = vrot.slane %v35, 1
    %v37 = vadd.f32 %v35, %v36
    %v38 = vadd.f32 %v25, %v26
    %v39 = vrot.slane %v38, 4
    %v40 = vadd.f32 %v38, %v39
    %v41 = vrot.slane %v40, 2
    %v42 = vadd.f32 %v40, %v41
    %v43 = vrot.slane %v42, 1
    %v44 = vadd.f32 %v42, %v43
    %v45 = vadd.f32 %v27, %v28
    %v46 = vrot.slane %v45, 4
    %v47 = vadd.f32 %v45, %v46
    %v48 = vrot.slane %v47, 2
    %v49 = vadd.f32 %v47, %v48
    %v50 = vrot.slane %v49, 1
    %v51 = vadd.f32 %v49, %v50
    %v52 = vadd.f32 %v29, %v30
    %v53 = vrot.slane %v52, 4
    %v54 = vadd.f32 %v52, %v53
    %v55 = vrot.slane %v54, 2
    %v56 = vadd.f32 %v54, %v55
    %v57 = vrot.slane %v56, 1
    %v58 = vadd.f32 %v56, %v57
    %v59 = vmul.f32 %v37, 0.0625
    %v60 = vmul.f32 %v44, 0.0625
    %v61 = vmul.f32 %v51, 0.0625
    %v62 = vmul.f32 %v58, 0.0625
    %v63 = vld [vmem:[%s1] sm:$0xff]
    %v64 = vld [vmem:[%s1 + $0x8] sm:$0xff]
    %v65 = vld [vmem:[%s1 + $0x10] sm:$0xff]
    %v66 = vld [vmem:[%s1 + $0x18] sm:$0xff]
    %v67 = vld [vmem:[%s1 + $0x20] sm:$0xff]
    %v68 = vld [vmem:[%s1 + $0x28] sm:$0xff]
    %v69 = vld [vmem:[%s1 + $0x30] sm:$0xff]
    %v70 = vld [vmem:[%s1 + $0x38] sm:$0xff]
    %v71 = vld [vmem:[%s1 + $0x40] sm:$0xff]
    %v72 = vld [vmem:[%s1 + $0x48] sm:$0xff]
    %v73 = vld [vmem:[%s1 + $0x50] sm:$0xff]
    %v74 = vld [vmem:[%s1 + $0x58] sm:$0xff]
    %v75 = vld [vmem:[%s1 + $0x60] sm:$0xff]
    %v76 = vld [vmem:[%s1 + $0x68] sm:$0xff]
    %v77 = vld [vmem:[%s1 + $0x70] sm:$0xff]
    %v78 = vld [vmem:[%s1 + $0x78] sm:$0xff]
    %v79 = vld [vmem:[%s2] sm:$0x1]
    %v81 = vperm.slane %v79, 0
    %vm87 = vcmask 1041409
    %v88 = vsel %vm87, %v60, %v59
    %vm89 = vcmask 1042434
    %v90 = vsel %vm89, %v61, %v88
    %vm91 = vcmask 1043459
    %v92 = vsel %vm91, %v62, %v90
    %94 = vmatpush.msra.mxu0 %v78
    %95 = vmatpush.msra.mxu0 %v77
    %96 = vmatpush.msra.mxu0 %v76
    %97 = vmatpush.msra.mxu0 %v75
    %98 = vmatpush.msra.mxu0 %v74
    %99 = vmatpush.msra.mxu0 %v73
    %100 = vmatpush.msra.mxu0 %v72
    %101 = vmatpush.msra.mxu0 %v71
    %102 = vmatpush.msra.mxu0 %v70
    %103 = vmatpush.msra.mxu0 %v69
    %104 = vmatpush.msra.mxu0 %v68
    %105 = vmatpush.msra.mxu0 %v67
    %106 = vmatpush.msra.mxu0 %v66
    %107 = vmatpush.msra.mxu0 %v65
    %108 = vmatpush.msra.mxu0 %v64
    %109 = vmatpush.msra.mxu0 %v63
    %110 = vmatmul.f32.gmra.mxu0 %v92
    %v111 = vpop.f32.mrf.mxu0
    %v112 = vadd.f32 %v81, %v111
    %113 = vdwg.mxu0
    %114 = vst [vmem:[#allocation2] sm:$0xf] %v112
    // Predicated region
    $region14: #{resnet_forward.19} parent=1 // pred_check
      _
    $region15: #{resnet_forward.19} parent=1 // pred_check_branch
      %116 = sbr.rel (0) target = $region17
    $region16: #{resnet_forward.19} parent=1 // pred_region
      %118 = vsyncadd [#allocation3], 0
      %s120 = sshll.u32 [#allocation2], 4
      %s121 = int_to_ptr.vmem [resolvable:$true] %s120
      %s122 = sshll.u32 %s3, 4
      %s123 = int_to_ptr.hbm [resolvable:$true] %s122
      %125 = dma.vmem_to_hbm [thread:$0]  %s121, 64, %s123, [#allocation3]
    $region17: #{resnet_forward.19} parent=1 // pred_fallthru
      _
    // Predicated region
    $region18: #{resnet_forward.19} parent=1 // pred_check
      _
    $region19: #{resnet_forward.19} parent=1 // pred_check_branch
      %127 = sbr.rel (0) target = $region21
    $region20: #{resnet_forward.19} parent=1 // pred_region
      %129 = dma.done [#allocation3], 64
    $region21: #{resnet_forward.19} parent=1 // pred_fallthru
      _
    %130 = vsyncpa [#allocation3], 1

// kernel: resnet_forward.18
$region0: #{resnet_forward.18}
  #allocation0 [shape = 'u32[]', space=smem, size = 0x4, offset = 0x4, fixed_abs, tag = 'smem constant byte address 0x4 - core index']
  #allocation1 [shape = 'u32[72,128]{1,0:T(1,128)}', space=vmem, size = 0x9000, scoped, tag = 'internal scratch']
  #allocation2 [shape = 'f32[4,16,128]{2,1,0:T(8,128)}', space=vmem, size = 0x8000, scoped, tag = 'scratch operand']
  #allocation3 [shape = 'f32[1,128]{1,0:T(1,128)}', space=vmem, size = 0x200, scoped, tag = 'scratch operand']
  #allocation4 [shape = 'f32[1,128]{1,0:T(1,128)}', space=vmem, size = 0x200, scoped, tag = 'scratch operand']
  %s0 = inlined_call_operand.vmem [shape: bf16[64,640], index: 0, kind: input, shape index: {}]
  %s1 = inlined_call_operand.vmem [shape: bf16[640,128], index: 1, kind: input, shape index: {}]
  %s2 = inlined_call_operand.vmem [shape: f32[1,128], index: 2, kind: input, shape index: {}]
  %s3 = inlined_call_operand.vmem [shape: f32[1,128], index: 3, kind: input, shape index: {}]
  %s4 = inlined_call_operand.vmem [shape: bf16[4,16,128], index: 4, kind: input, shape index: {}]
  %s5 = inlined_call_operand.vmem [shape: bf16[4,16,128], index: 5, kind: output, shape index: {}]
  %s6 = sld [smem:[#allocation0]]
  $region61: #{resnet_forward.18} parent=0
    _
  %s8 = ssub.s32 1, %s6
  %s9 = scalar_select 0, %s8, %s6
  loop: start=0, step=1, limit=6
  $region2: #{resnet_forward.18} parent=0 // loop_pre_header
    _
  $region3: #{resnet_forward.18} parent=0 // loop_header
    %s11 = sphi 0, %s15
    %p12 = scmp.ge.s32.totalorder %s11, 6
    %s21 = sphi 0, %s23
    %s24 = sphi 0, %s21
    %s25 = sphi 0, %s24
    %s41 = sphi 0, %s25
    %s45 = sphi 0, %s45
    %s47 = sphi 0, %s45
    %s48 = sphi 0, %s47
    %s62 = sphi 0, %s48
    %s66 = sphi 0, %s66
    %s68 = sphi 0, %s66
    %s69 = sphi 0, %s68
    %s83 = sphi 0, %s69
    %s87 = sphi 0, %s87
    %s89 = sphi 0, %s87
    %s90 = sphi 0, %s89
    %s104 = sphi 0, %s90
    %s108 = sphi 0, %s108
    %s110 = sphi 0, %s108
    %s111 = sphi 0, %s110
    %s125 = sphi 0, %s111
    %s129 = sphi 0, %s129
    %s131 = sphi 0, %s129
    %s132 = sphi 0, %s131
    %s146 = sphi 0, %s132
  $region4: #{resnet_forward.18} parent=0 // loop_header_branch
    %14 = sbr.rel (%p12) target = $region8
  $region5: #{resnet_forward.18} parent=0 // loop_body
    %s16 = ssub.s32 %s11, 1
    %s17 = ssub.s32 %s11, 2
    %s18 = sadd.s32 %s11, 1
    %s19 = ssub.s32 %s11, %s18
    %p20 = scmp.eq.s32.totalorder %s19, 0
    %s22 = sadd.s32 %s21, 1
    %s23 = scalar_select %p20, %s21, %s22
    %p26 = pneg %p20
    %p27 = scmp.eq.s32.totalorder %s11, 3
    %p28 = por %p26, %p27
    %p29 = scmp.ne.s32.totalorder %s21, %s24
    %p30 = scmp.eq.s32.totalorder %s11, 0
    %p31 = por %p29, %p30
    %p32 = scmp.ne.s32.totalorder %s21, %s24
    %p33 = scmp.eq.s32.totalorder %s16, 3
    %p34 = por %p32, %p33
    %p35 = scmp.ne.s32.totalorder %s24, %s25
    %p36 = scmp.eq.s32.totalorder %s16, 0
    %p37 = por %p35, %p36
    %p38 = scmp.ne.s32.totalorder %s24, %s25
    %p39 = scmp.eq.s32.totalorder %s17, 3
    %p40 = por %p38, %p39
    %p42 = scmp.ne.s32.totalorder %s25, %s41
    %p43 = scmp.eq.s32.totalorder %s17, 0
    %p44 = por %p42, %p43
    %s46 = sadd.s32 %s45, 1
    %p49 = scmp.eq.s32.totalorder %s11, 3
    %p50 = scmp.ne.s32.totalorder %s45, %s47
    %p51 = scmp.eq.s32.totalorder %s11, 0
    %p52 = por %p50, %p51
    %p53 = scmp.ne.s32.totalorder %s45, %s47
    %p54 = scmp.eq.s32.totalorder %s16, 3
    %p55 = por %p53, %p54
    %p56 = scmp.ne.s32.totalorder %s47, %s48
    %p57 = scmp.eq.s32.totalorder %s16, 0
    %p58 = por %p56, %p57
    %p59 = scmp.ne.s32.totalorder %s47, %s48
    %p60 = scmp.eq.s32.totalorder %s17, 3
    %p61 = por %p59, %p60
    %p63 = scmp.ne.s32.totalorder %s48, %s62
    %p64 = scmp.eq.s32.totalorder %s17, 0
    %p65 = por %p63, %p64
    %s67 = sadd.s32 %s66, 1
    %p70 = scmp.eq.s32.totalorder %s11, 3
    %p71 = scmp.ne.s32.totalorder %s66, %s68
    %p72 = scmp.eq.s32.totalorder %s11, 0
    %p73 = por %p71, %p72
    %p74 = scmp.ne.s32.totalorder %s66, %s68
    %p75 = scmp.eq.s32.totalorder %s16, 3
    %p76 = por %p74, %p75
    %p77 = scmp.ne.s32.totalorder %s68, %s69
    %p78 = scmp.eq.s32.totalorder %s16, 0
    %p79 = por %p77, %p78
    %p80 = scmp.ne.s32.totalorder %s68, %s69
    %p81 = scmp.eq.s32.totalorder %s17, 3
    %p82 = por %p80, %p81
    %p84 = scmp.ne.s32.totalorder %s69, %s83
    %p85 = scmp.eq.s32.totalorder %s17, 0
    %p86 = por %p84, %p85
    %s88 = sadd.s32 %s87, 1
    %p91 = scmp.eq.s32.totalorder %s11, 3
    %p92 = scmp.ne.s32.totalorder %s87, %s89
    %p93 = scmp.eq.s32.totalorder %s11, 0
    %p94 = por %p92, %p93
    %p95 = scmp.ne.s32.totalorder %s87, %s89
    %p96 = scmp.eq.s32.totalorder %s16, 3
    %p97 = por %p95, %p96
    %p98 = scmp.ne.s32.totalorder %s89, %s90
    %p99 = scmp.eq.s32.totalorder %s16, 0
    %p100 = por %p98, %p99
    %p101 = scmp.ne.s32.totalorder %s89, %s90
    %p102 = scmp.eq.s32.totalorder %s17, 3
    %p103 = por %p101, %p102
    %p105 = scmp.ne.s32.totalorder %s90, %s104
    %p106 = scmp.eq.s32.totalorder %s17, 0
    %p107 = por %p105, %p106
    %s109 = sadd.s32 %s108, 1
    %p112 = scmp.eq.s32.totalorder %s11, 3
    %p113 = scmp.ne.s32.totalorder %s108, %s110
    %p114 = scmp.eq.s32.totalorder %s11, 0
    %p115 = por %p113, %p114
    %p116 = scmp.ne.s32.totalorder %s108, %s110
    %p117 = scmp.eq.s32.totalorder %s16, 3
    %p118 = por %p116, %p117
    %p119 = scmp.ne.s32.totalorder %s110, %s111
    %p120 = scmp.eq.s32.totalorder %s16, 0
    %p121 = por %p119, %p120
    %p122 = scmp.ne.s32.totalorder %s110, %s111
    %p123 = scmp.eq.s32.totalorder %s17, 3
    %p124 = por %p122, %p123
    %p126 = scmp.ne.s32.totalorder %s111, %s125
    %p127 = scmp.eq.s32.totalorder %s17, 0
    %p128 = por %p126, %p127
    %s130 = sadd.s32 %s129, 1
    %p133 = scmp.eq.s32.totalorder %s11, 3
    %p134 = scmp.ne.s32.totalorder %s129, %s131
    %p135 = scmp.eq.s32.totalorder %s11, 0
    %p136 = por %p134, %p135
    %p137 = scmp.ne.s32.totalorder %s129, %s131
    %p138 = scmp.eq.s32.totalorder %s16, 3
    %p139 = por %p137, %p138
    %p140 = scmp.ne.s32.totalorder %s131, %s132
    %p141 = scmp.eq.s32.totalorder %s16, 0
    %p142 = por %p140, %p141
    %p143 = scmp.ne.s32.totalorder %s131, %s132
    %p144 = scmp.eq.s32.totalorder %s17, 3
    %p145 = por %p143, %p144
    %p147 = scmp.ne.s32.totalorder %s132, %s146
    %p148 = scmp.eq.s32.totalorder %s17, 0
    %p149 = por %p147, %p148
    %p150 = scmp.le.s32.totalorder 1, %s11
    %p151 = scmp.lt.s32.totalorder %s11, 5
    %p152 = pnand %p150, %p151
    %p153 = pneg %p152
    // Predicated region
    $region9: #{resnet_forward.18} parent=5 // pred_check
      _
    $region10: #{resnet_forward.18} parent=5 // pred_check_branch
      %155 = sbr.rel (%p152) target = $region12
    $region11: #{resnet_forward.18} parent=5 // pred_region
      %s156 = ssub.s32 %s11, 1
      // Predicated region
      $region13: #{resnet_forward.18} parent=11 // pred_check
        %p157 = pneg %p58
      $region14: #{resnet_forward.18} parent=11 // pred_check_branch
        %159 = sbr.rel (%p157) target = $region16
      $region15: #{resnet_forward.18} parent=11 // pred_region
        _
      $region16: #{resnet_forward.18} parent=11 // pred_fallthru
        _
      // Predicated region
      $region17: #{resnet_forward.18} parent=11 // pred_check
        %p160 = pneg %p79
      $region18: #{resnet_forward.18} parent=11 // pred_check_branch
        %162 = sbr.rel (%p160) target = $region20
      $region19: #{resnet_forward.18} parent=11 // pred_region
        _
      $region20: #{resnet_forward.18} parent=11 // pred_fallthru
        _
      // Predicated region
      $region21: #{resnet_forward.18} parent=11 // pred_check
        %p163 = pneg %p100
      $region22: #{resnet_forward.18} parent=11 // pred_check_branch
        %165 = sbr.rel (%p163) target = $region24
      $region23: #{resnet_forward.18} parent=11 // pred_region
        _
      $region24: #{resnet_forward.18} parent=11 // pred_fallthru
        _
      // Predicated region
      $region25: #{resnet_forward.18} parent=11 // pred_check
        %p166 = pneg %p121
      $region26: #{resnet_forward.18} parent=11 // pred_check_branch
        %168 = sbr.rel (%p166) target = $region28
      $region27: #{resnet_forward.18} parent=11 // pred_region
        _
      $region28: #{resnet_forward.18} parent=11 // pred_fallthru
        _
    $region12: #{resnet_forward.18} parent=5 // pred_fallthru
      _
    %p169 = scmp.lt.s32.totalorder %s11, 4
    // Predicated region
    $region29: #{resnet_forward.18} parent=5 // pred_check
      %p170 = pneg %p169
    $region30: #{resnet_forward.18} parent=5 // pred_check_branch
      %172 = sbr.rel (%p170) target = $region32
    $region31: #{resnet_forward.18} parent=5 // pred_region
      // Predicated region
      $region33: #{resnet_forward.18} parent=31 // pred_check
        %p173 = pneg %p31
      $region34: #{resnet_forward.18} parent=31 // pred_check_branch
        %175 = sbr.rel (%p173) target = $region36
      $region35: #{resnet_forward.18} parent=31 // pred_region
        %s176 = smul.u32 2, %s11
        %p177 = scmp.lt.s32.totalorder %s176, 7
        %s178 = scalar_select %p177, %s176, 7
        %s179 = smul.addr %s178, 5
        %s180 = smul.addr %s179, 4
        %s181 = scalar_lea.vmem %s0, %s180
        %s182 = smul.u32 2, %s11
      $region36: #{resnet_forward.18} parent=31 // pred_fallthru
        _
    $region32: #{resnet_forward.18} parent=5 // pred_fallthru
      _
    %p183 = scmp.le.s32.totalorder 1, %s11
    %p184 = scmp.lt.s32.totalorder %s11, 5
    %p185 = pnand %p183, %p184
    %p186 = pneg %p185
    // Predicated region
    $region37: #{resnet_forward.18} parent=5 // pred_check
      _
    $region38: #{resnet_forward.18} parent=5 // pred_check_branch
      %188 = sbr.rel (%p185) target = $region40
    $region39: #{resnet_forward.18} parent=5 // pred_region
      %s189 = ssub.s32 %s11, 1
      %s190 = smul.u32 2, %s16
      %p191 = scmp.lt.s32.totalorder %s190, 7
      %s192 = scalar_select %p191, %s190, 7
      %s193 = smul.addr %s192, 5
      %s194 = smul.addr %s193, 4
      %s195 = scalar_lea.vmem %s0, %s194
      %p196 = pneg %p37
      %p197 = pneg %p34
      %p198 = pneg %p58
      %p199 = pneg %p55
      %p200 = pneg %p79
      %p201 = pneg %p76
      %p202 = pneg %p100
      %p203 = pneg %p97
      %p204 = pneg %p121
      %p205 = pneg %p118
      %p206 = pneg %p142
      %p207 = pneg %p139
      %s208 = smul.u32 2, %s16
      %p209 = scmp.lt.s32.totalorder %s208, 7
      %s210 = scalar_select %p209, %s208, 7
      %s211 = smul.addr %s210, 5
      %s212 = smul.addr %s211, 4
      %s213 = scalar_lea.vmem %s0, %s212
      %s214 = smul.u32 2, %s16
      %p215 = scmp.eq.s32.totalorder %s16, 0
      // Predicated region
      $region41: #{resnet_forward.18} parent=39 // pred_check
        %p216 = pneg %p215
      $region42: #{resnet_forward.18} parent=39 // pred_check_branch
        %218 = sbr.rel (%p216) target = $region44
      $region43: #{resnet_forward.18} parent=39 // pred_region
        %219 = vst [vmem:[#allocation3] sm:$0x1] 0.0
        %220 = vst [vmem:[#allocation4] sm:$0x1] 0.0
      $region44: #{resnet_forward.18} parent=39 // pred_fallthru
        _
      %v221 = vld [vmem:[%s213] sm:$0xff]
      %v222 = vld [vmem:[%s213 + $0x8] sm:$0xff]
      %v223 = vld [vmem:[%s213 + $0x10] sm:$0xf]
      %v224 = vld [vmem:[%s213 + $0x14] sm:$0xff]
      %v225 = vld [vmem:[%s213 + $0x1c] sm:$0xff]
      %v226 = vld [vmem:[%s213 + $0x24] sm:$0xf]
      %v227 = vld [vmem:[%s1] sm:$0xf]
      %v228 = vld [vmem:[%s1 + $0x4] sm:$0xf]
      %v229 = vld [vmem:[%s1 + $0x8] sm:$0xf]
      %v230 = vld [vmem:[%s1 + $0xc] sm:$0xf]
      %v231 = vld [vmem:[%s1 + $0x10] sm:$0xf]
      %v232 = vld [vmem:[%s1 + $0x14] sm:$0xf]
      %v233 = vld [vmem:[%s1 + $0x18] sm:$0xf]
      %v234 = vld [vmem:[%s1 + $0x1c] sm:$0xf]
      %v235 = vld [vmem:[%s1 + $0x20] sm:$0xf]
      %v236 = vld [vmem:[%s1 + $0x24] sm:$0xf]
      %v237 = vld [vmem:[%s1 + $0x28] sm:$0xf]
      %v238 = vld [vmem:[%s1 + $0x2c] sm:$0xf]
      %v239 = vld [vmem:[%s1 + $0x30] sm:$0xf]
      %v240 = vld [vmem:[%s1 + $0x34] sm:$0xf]
      %v241 = vld [vmem:[%s1 + $0x38] sm:$0xf]
      %v242 = vld [vmem:[%s1 + $0x3c] sm:$0xf]
      %v243 = vld [vmem:[%s1 + $0x40] sm:$0xf]
      %v244 = vld [vmem:[%s1 + $0x44] sm:$0xf]
      %v245 = vld [vmem:[%s1 + $0x48] sm:$0xf]
      %v246 = vld [vmem:[%s1 + $0x4c] sm:$0xf]
      %v247 = vld [vmem:[%s1 + $0x50] sm:$0xf]
      %v248 = vld [vmem:[%s1 + $0x54] sm:$0xf]
      %v249 = vld [vmem:[%s1 + $0x58] sm:$0xf]
      %v250 = vld [vmem:[%s1 + $0x5c] sm:$0xf]
      %v251 = vld [vmem:[%s1 + $0x60] sm:$0xf]
      %v252 = vld [vmem:[%s1 + $0x64] sm:$0xf]
      %v253 = vld [vmem:[%s1 + $0x68] sm:$0xf]
      %v254 = vld [vmem:[%s1 + $0x6c] sm:$0xf]
      %v255 = vld [vmem:[%s1 + $0x70] sm:$0xf]
      %v256 = vld [vmem:[%s1 + $0x74] sm:$0xf]
      %v257 = vld [vmem:[%s1 + $0x78] sm:$0xf]
      %v258 = vld [vmem:[%s1 + $0x7c] sm:$0xf]
      %v259 = vld [vmem:[%s1 + $0x80] sm:$0xf]
      %v260 = vld [vmem:[%s1 + $0x84] sm:$0xf]
      %v261 = vld [vmem:[%s1 + $0x88] sm:$0xf]
      %v262 = vld [vmem:[%s1 + $0x8c] sm:$0xf]
      %v263 = vld [vmem:[%s1 + $0x90] sm:$0xf]
      %v264 = vld [vmem:[%s1 + $0x94] sm:$0xf]
      %v265 = vld [vmem:[%s1 + $0x98] sm:$0xf]
      %v266 = vld [vmem:[%s1 + $0x9c] sm:$0xf]
      %v267 = vld [vmem:[%s1 + $0xa0] sm:$0xf]
      %v268 = vld [vmem:[%s1 + $0xa4] sm:$0xf]
      %v269 = vld [vmem:[%s1 + $0xa8] sm:$0xf]
      %v270 = vld [vmem:[%s1 + $0xac] sm:$0xf]
      %v271 = vld [vmem:[%s1 + $0xb0] sm:$0xf]
      %v272 = vld [vmem:[%s1 + $0xb4] sm:$0xf]
      %v273 = vld [vmem:[%s1 + $0xb8] sm:$0xf]
      %v274 = vld [vmem:[%s1 + $0xbc] sm:$0xf]
      %v275 = vld [vmem:[%s1 + $0xc0] sm:$0xf]
      %v276 = vld [vmem:[%s1 + $0xc4] sm:$0xf]
      %v277 = vld [vmem:[%s1 + $0xc8] sm:$0xf]
      %v278 = vld [vmem:[%s1 + $0xcc] sm:$0xf]
      %v279 = vld [vmem:[%s1 + $0xd0] sm:$0xf]
      %v280 = vld [vmem:[%s1 + $0xd4] sm:$0xf]
      %v281 = vld [vmem:[%s1 + $0xd8] sm:$0xf]
      %v282 = vld [vmem:[%s1 + $0xdc] sm:$0xf]
      %v283 = vld [vmem:[%s1 + $0xe0] sm:$0xf]
      %v284 = vld [vmem:[%s1 + $0xe4] sm:$0xf]
      %v285 = vld [vmem:[%s1 + $0xe8] sm:$0xf]
      %v286 = vld [vmem:[%s1 + $0xec] sm:$0xf]
      %v287 = vld [vmem:[%s1 + $0xf0] sm:$0xf]
      %v288 = vld [vmem:[%s1 + $0xf4] sm:$0xf]
      %v289 = vld [vmem:[%s1 + $0xf8] sm:$0xf]
      %v290 = vld [vmem:[%s1 + $0xfc] sm:$0xf]
      %v291 = vld [vmem:[%s1 + $0x100] sm:$0xf]
      %v292 = vld [vmem:[%s1 + $0x104] sm:$0xf]
      %v293 = vld [vmem:[%s1 + $0x108] sm:$0xf]
      %v294 = vld [vmem:[%s1 + $0x10c] sm:$0xf]
      %v295 = vld [vmem:[%s1 + $0x110] sm:$0xf]
      %v296 = vld [vmem:[%s1 + $0x114] sm:$0xf]
      %v297 = vld [vmem:[%s1 + $0x118] sm:$0xf]
      %v298 = vld [vmem:[%s1 + $0x11c] sm:$0xf]
      %v299 = vld [vmem:[%s1 + $0x120] sm:$0xf]
      %v300 = vld [vmem:[%s1 + $0x124] sm:$0xf]
      %v301 = vld [vmem:[%s1 + $0x128] sm:$0xf]
      %v302 = vld [vmem:[%s1 + $0x12c] sm:$0xf]
      %v303 = vld [vmem:[%s1 + $0x130] sm:$0xf]
      %v304 = vld [vmem:[%s1 + $0x134] sm:$0xf]
      %v305 = vld [vmem:[%s1 + $0x138] sm:$0xf]
      %v306 = vld [vmem:[%s1 + $0x13c] sm:$0xf]
      %v313 = vunpack.c.l.b16 %v221
      %v314 = vunpack.c.h.b16 %v221
      %v315 = vunpack.c.l.b16 %v222
      %v316 = vunpack.c.h.b16 %v222
      %v317 = vunpack.c.l.b16 %v223
      %v318 = vunpack.c.l.b16 %v224
      %v319 = vunpack.c.h.b16 %v224
      %v320 = vunpack.c.l.b16 %v225
      %v321 = vunpack.c.h.b16 %v225
      %v322 = vunpack.c.l.b16 %v226
      %v323 = vpack.c.b16 %v318, %v313
      %v324 = vpack.c.b16 %v319, %v314
      %v325 = vpack.c.b16 %v320, %v315
      %v326 = vpack.c.b16 %v321, %v316
      %v327 = vpack.c.b16 %v322, %v317
      %v413 = vunpack.c.l.b16 %v227
      %v414 = vunpack.c.l.b16 %v228
      %v415 = vunpack.c.l.b16 %v229
      %v416 = vunpack.c.l.b16 %v230
      %v417 = vunpack.c.l.b16 %v231
      %v418 = vunpack.c.l.b16 %v232
      %v419 = vunpack.c.l.b16 %v233
      %v420 = vunpack.c.l.b16 %v234
      %v421 = vunpack.c.l.b16 %v235
      %v422 = vunpack.c.l.b16 %v236
      %v423 = vunpack.c.l.b16 %v237
      %v424 = vunpack.c.l.b16 %v238
      %v425 = vunpack.c.l.b16 %v239
      %v426 = vunpack.c.l.b16 %v240
      %v427 = vunpack.c.l.b16 %v241
      %v428 = vunpack.c.l.b16 %v242
      %v429 = vunpack.c.l.b16 %v243
      %v430 = vunpack.c.l.b16 %v244
      %v431 = vunpack.c.l.b16 %v245
      %v432 = vunpack.c.l.b16 %v246
      %v433 = vunpack.c.l.b16 %v247
      %v434 = vunpack.c.l.b16 %v248
      %v435 = vunpack.c.l.b16 %v249
      %v436 = vunpack.c.l.b16 %v250
      %v437 = vunpack.c.l.b16 %v251
      %v438 = vunpack.c.l.b16 %v252
      %v439 = vunpack.c.l.b16 %v253
      %v440 = vunpack.c.l.b16 %v254
      %v441 = vunpack.c.l.b16 %v255
      %v442 = vunpack.c.l.b16 %v256
      %v443 = vunpack.c.l.b16 %v257
      %v444 = vunpack.c.l.b16 %v258
      %v445 = vunpack.c.l.b16 %v259
      %v446 = vunpack.c.l.b16 %v260
      %v447 = vunpack.c.l.b16 %v261
      %v448 = vunpack.c.l.b16 %v262
      %v449 = vunpack.c.l.b16 %v263
      %v450 = vunpack.c.l.b16 %v264
      %v451 = vunpack.c.l.b16 %v265
      %v452 = vunpack.c.l.b16 %v266
      %v453 = vunpack.c.l.b16 %v267
      %v454 = vunpack.c.l.b16 %v268
      %v455 = vunpack.c.l.b16 %v269
      %v456 = vunpack.c.l.b16 %v270
      %v457 = vunpack.c.l.b16 %v271
      %v458 = vunpack.c.l.b16 %v272
      %v459 = vunpack.c.l.b16 %v273
      %v460 = vunpack.c.l.b16 %v274
      %v461 = vunpack.c.l.b16 %v275
      %v462 = vunpack.c.l.b16 %v276
      %v463 = vunpack.c.l.b16 %v277
      %v464 = vunpack.c.l.b16 %v278
      %v465 = vunpack.c.l.b16 %v279
      %v466 = vunpack.c.l.b16 %v280
      %v467 = vunpack.c.l.b16 %v281
      %v468 = vunpack.c.l.b16 %v282
      %v469 = vunpack.c.l.b16 %v283
      %v470 = vunpack.c.l.b16 %v284
      %v471 = vunpack.c.l.b16 %v285
      %v472 = vunpack.c.l.b16 %v286
      %v473 = vunpack.c.l.b16 %v287
      %v474 = vunpack.c.l.b16 %v288
      %v475 = vunpack.c.l.b16 %v289
      %v476 = vunpack.c.l.b16 %v290
      %v477 = vunpack.c.l.b16 %v291
      %v478 = vunpack.c.l.b16 %v292
      %v479 = vunpack.c.l.b16 %v293
      %v480 = vunpack.c.l.b16 %v294
      %v481 = vunpack.c.l.b16 %v295
      %v482 = vunpack.c.l.b16 %v296
      %v483 = vunpack.c.l.b16 %v297
      %v484 = vunpack.c.l.b16 %v298
      %v485 = vunpack.c.l.b16 %v299
      %v486 = vunpack.c.l.b16 %v300
      %v487 = vunpack.c.l.b16 %v301
      %v488 = vunpack.c.l.b16 %v302
      %v489 = vunpack.c.l.b16 %v303
      %v490 = vunpack.c.l.b16 %v304
      %v491 = vunpack.c.l.b16 %v305
      %v492 = vunpack.c.l.b16 %v306
      %v493 = vpack.c.b16 %v414, %v413
      %v494 = vpack.c.b16 %v416, %v415
      %v495 = vpack.c.b16 %v418, %v417
      %v496 = vpack.c.b16 %v420, %v419
      %v497 = vpack.c.b16 %v422, %v421
      %v498 = vpack.c.b16 %v424, %v423
      %v499 = vpack.c.b16 %v426, %v425
      %v500 = vpack.c.b16 %v428, %v427
      %v501 = vpack.c.b16 %v430, %v429
      %v502 = vpack.c.b16 %v432, %v431
      %v503 = vpack.c.b16 %v434, %v433
      %v504 = vpack.c.b16 %v436, %v435
      %v505 = vpack.c.b16 %v438, %v437
      %v506 = vpack.c.b16 %v440, %v439
      %v507 = vpack.c.b16 %v442, %v441
      %v508 = vpack.c.b16 %v444, %v443
      %v509 = vpack.c.b16 %v446, %v445
      %v510 = vpack.c.b16 %v448, %v447
      %v511 = vpack.c.b16 %v450, %v449
      %v512 = vpack.c.b16 %v452, %v451
      %v513 = vpack.c.b16 %v454, %v453
      %v514 = vpack.c.b16 %v456, %v455
      %v515 = vpack.c.b16 %v458, %v457
      %v516 = vpack.c.b16 %v460, %v459
      %v517 = vpack.c.b16 %v462, %v461
      %v518 = vpack.c.b16 %v464, %v463
      %v519 = vpack.c.b16 %v466, %v465
      %v520 = vpack.c.b16 %v468, %v467
      %v521 = vpack.c.b16 %v470, %v469
      %v522 = vpack.c.b16 %v472, %v471
      %v523 = vpack.c.b16 %v474, %v473
      %v524 = vpack.c.b16 %v476, %v475
      %v525 = vpack.c.b16 %v478, %v477
      %v526 = vpack.c.b16 %v480, %v479
      %v527 = vpack.c.b16 %v482, %v481
      %v528 = vpack.c.b16 %v484, %v483
      %v529 = vpack.c.b16 %v486, %v485
      %v530 = vpack.c.b16 %v488, %v487
      %v531 = vpack.c.b16 %v490, %v489
      %v532 = vpack.c.b16 %v492, %v491
      %573 = vmatpush.bf16.msra.mxu0 %v500
      %574 = vmatpush.bf16.msra.mxu0 %v499
      %575 = vmatpush.bf16.msra.mxu0 %v498
      %576 = vmatpush.bf16.msra.mxu0 %v497
      %577 = vmatpush.bf16.msra.mxu0 %v496
      %578 = vmatpush.bf16.msra.mxu0 %v495
      %579 = vmatpush.bf16.msra.mxu0 %v494
      %580 = vmatpush.bf16.msra.mxu0 %v493
      %581 = vmatmul.bf16.gmra.mxu0 %v323
      %v582 = vpop.f32.mrf.mxu0
      %v583 = vadd.f32 0.0, %v582
      %v584 = vpop.f32.mrf.mxu0
      %v585 = vadd.f32 0.0, %v584
      %586 = vdwg.mxu0
      %587 = vmatpush.bf16.msra.mxu0 %v508
      %588 = vmatpush.bf16.msra.mxu0 %v507
      %589 = vmatpush.bf16.msra.mxu0 %v506
      %590 = vmatpush.bf16.msra.mxu0 %v505
      %591 = vmatpush.bf16.msra.mxu0 %v504
      %592 = vmatpush.bf16.msra.mxu0 %v503
      %593 = vmatpush.bf16.msra.mxu0 %v502
      %594 = vmatpush.bf16.msra.mxu0 %v501
      %595 = vmatmul.bf16.gmra.mxu0 %v324
      %v596 = vpop.f32.mrf.mxu0
      %v597 = vadd.f32 %v583, %v596
      %v598 = vpop.f32.mrf.mxu0
      %v599 = vadd.f32 %v585, %v598
      %600 = vdwg.mxu0
      %601 = vmatpush.bf16.msra.mxu0 %v516
      %602 = vmatpush.bf16.msra.mxu0 %v515
      %603 = vmatpush.bf16.msra.mxu0 %v514
      %604 = vmatpush.bf16.msra.mxu0 %v513
      %605 = vmatpush.bf16.msra.mxu0 %v512
      %606 = vmatpush.bf16.msra.mxu0 %v511
      %607 = vmatpush.bf16.msra.mxu0 %v510
      %608 = vmatpush.bf16.msra.mxu0 %v509
      %609 = vmatmul.bf16.gmra.mxu0 %v325
      %v610 = vpop.f32.mrf.mxu0
      %v611 = vadd.f32 %v597, %v610
      %v612 = vpop.f32.mrf.mxu0
      %v613 = vadd.f32 %v599, %v612
      %614 = vdwg.mxu0
      %615 = vmatpush.bf16.msra.mxu0 %v524
      %616 = vmatpush.bf16.msra.mxu0 %v523
      %617 = vmatpush.bf16.msra.mxu0 %v522
      %618 = vmatpush.bf16.msra.mxu0 %v521
      %619 = vmatpush.bf16.msra.mxu0 %v520
      %620 = vmatpush.bf16.msra.mxu0 %v519
      %621 = vmatpush.bf16.msra.mxu0 %v518
      %622 = vmatpush.bf16.msra.mxu0 %v517
      %623 = vmatmul.bf16.gmra.mxu0 %v326
      %v624 = vpop.f32.mrf.mxu0
      %v625 = vadd.f32 %v611, %v624
      %v626 = vpop.f32.mrf.mxu0
      %v627 = vadd.f32 %v613, %v626
      %628 = vdwg.mxu0
      %629 = vmatpush.bf16.msra.mxu0 %v532
      %630 = vmatpush.bf16.msra.mxu0 %v531
      %631 = vmatpush.bf16.msra.mxu0 %v530
      %632 = vmatpush.bf16.msra.mxu0 %v529
      %633 = vmatpush.bf16.msra.mxu0 %v528
      %634 = vmatpush.bf16.msra.mxu0 %v527
      %635 = vmatpush.bf16.msra.mxu0 %v526
      %636 = vmatpush.bf16.msra.mxu0 %v525
      %637 = vmatmul.bf16.gmra.mxu0 %v327
      %v638 = vpop.f32.mrf.mxu0
      %v639 = vadd.f32 %v625, %v638
      %v640 = vpop.f32.mrf.mxu0
      %v641 = vadd.f32 %v627, %v640
      %642 = vdwg.mxu0
      %s643 = smul.u32 %s16, 16
      %s644 = scalar_lea.vmem [#allocation2], %s643
      %645 = vst [vmem:[%s644] sm:$0xff] %v639
      %646 = vst [vmem:[%s644 + $0x8] sm:$0xff] %v641
      %v647 = vld [vmem:[#allocation3] sm:$0x1]
      %v648 = vadd.f32 %v639, %v641
      %v649 = vrot.slane %v648, 4
      %v650 = vadd.f32 %v648, %v649
      %v651 = vrot.slane %v650, 2
      %v652 = vadd.f32 %v650, %v651
      %v653 = vrot.slane %v652, 1
      %v654 = vadd.f32 %v652, %v653
      %v655 = vadd.f32 %v647, %v654
      %656 = vst [vmem:[#allocation3] sm:$0x1] %v655
      %v657 = vld [vmem:[#allocation4] sm:$0x1]
      %v658 = vmul.f32 %v639, %v639
      %v659 = vmul.f32 %v641, %v641
      %v660 = vadd.f32 %v658, %v659
      %v661 = vrot.slane %v660, 4
      %v662 = vadd.f32 %v660, %v661
      %v663 = vrot.slane %v662, 2
      %v664 = vadd.f32 %v662, %v663
      %v665 = vrot.slane %v664, 1
      %v666 = vadd.f32 %v664, %v665
      %v667 = vadd.f32 %v657, %v666
      %668 = vst [vmem:[#allocation4] sm:$0x1] %v667
      %p669 = scmp.eq.s32.totalorder %s16, 3
      // Predicated region
      $region45: #{resnet_forward.18} parent=39 // pred_check
        %p670 = pneg %p669
      $region46: #{resnet_forward.18} parent=39 // pred_check_branch
        %672 = sbr.rel (%p670) target = $region48
      $region47: #{resnet_forward.18} parent=39 // pred_region
        %v673 = vld [vmem:[#allocation3] sm:$0x1]
        %v674 = vmul.f32 %v673, 0.015625
        %v675 = vld [vmem:[#allocation4] sm:$0x1]
        %v676 = vmul.f32 %v675, 0.015625
        %v677 = vmul.f32 %v674, %v674
        %v678 = vsub.f32 %v676, %v677
        %v679 = vmax.f32 %v678, 0.0
        %v680 = vadd.f32 %v679, 1e-05
        %v681 = vrsqrt.pop %v680
        %v682 = vmul.f32 %v681, %v680
        %v683 = vmul.f32 %v682, %v681
        %v684 = vmul.f32 0.5, %v683
        %v685 = vsub.f32 1.5, %v684
        %v686 = vmul.f32 %v681, %v685
        %vm687 = vweird.f32 %v680
        %vm688 = vweird.f32 %v681
        %vm689 = vmor %vm687, %vm688
        %v690 = vsel %vm689, %v681, %v686
        %v691 = vld [vmem:[%s2] sm:$0x1]
        %v692 = vmul.f32 %v690, %v691
        %v693 = vld [vmem:[%s3] sm:$0x1]
        %v694 = vmul.f32 %v674, %v692
        %v695 = vsub.f32 %v693, %v694
        %v696 = vld [vmem:[#allocation2] sm:$0xff]
        %v697 = vld [vmem:[#allocation2 + $0x8] sm:$0xff]
        %v698 = vld [vmem:[#allocation2 + $0x10] sm:$0xff]
        %v699 = vld [vmem:[#allocation2 + $0x18] sm:$0xff]
        %v700 = vld [vmem:[#allocation2 + $0x20] sm:$0xff]
        %v701 = vld [vmem:[#allocation2 + $0x28] sm:$0xff]
        %v702 = vld [vmem:[#allocation2 + $0x30] sm:$0xff]
        %v703 = vld [vmem:[#allocation2 + $0x38] sm:$0xff]
        %v705 = vperm.slane %v692, 0
        %v707 = vmul.f32 %v696, %v705
        %v708 = vmul.f32 %v697, %v705
        %v709 = vmul.f32 %v698, %v705
        %v710 = vmul.f32 %v699, %v705
        %v711 = vmul.f32 %v700, %v705
        %v712 = vmul.f32 %v701, %v705
        %v713 = vmul.f32 %v702, %v705
        %v714 = vmul.f32 %v703, %v705
        %v716 = vperm.slane %v695, 0
        %v718 = vadd.f32 %v707, %v716
        %v719 = vadd.f32 %v708, %v716
        %v720 = vadd.f32 %v709, %v716
        %v721 = vadd.f32 %v710, %v716
        %v722 = vadd.f32 %v711, %v716
        %v723 = vadd.f32 %v712, %v716
        %v724 = vadd.f32 %v713, %v716
        %v725 = vadd.f32 %v714, %v716
        %v726 = vld [vmem:[%s4] sm:$0xf]
        %v727 = vld [vmem:[%s4 + $0x4] sm:$0xf]
        %v728 = vld [vmem:[%s4 + $0x8] sm:$0xf]
        %v729 = vld [vmem:[%s4 + $0xc] sm:$0xf]
        %v730 = vld [vmem:[%s4 + $0x10] sm:$0xf]
        %v731 = vld [vmem:[%s4 + $0x14] sm:$0xf]
        %v732 = vld [vmem:[%s4 + $0x18] sm:$0xf]
        %v733 = vld [vmem:[%s4 + $0x1c] sm:$0xf]
        %v734 = vunpack.c.l.bf16 %v726
        %v735 = vunpack.c.l.bf16 %v727
        %v736 = vunpack.c.l.bf16 %v728
        %v737 = vunpack.c.l.bf16 %v729
        %v738 = vunpack.c.l.bf16 %v730
        %v739 = vunpack.c.l.bf16 %v731
        %v740 = vunpack.c.l.bf16 %v732
        %v741 = vunpack.c.l.bf16 %v733
        %v742 = vadd.f32 %v718, %v734
        %v743 = vadd.f32 %v719, %v735
        %v744 = vadd.f32 %v720, %v736
        %v745 = vadd.f32 %v721, %v737
        %v746 = vadd.f32 %v722, %v738
        %v747 = vadd.f32 %v723, %v739
        %v748 = vadd.f32 %v724, %v740
        %v749 = vadd.f32 %v725, %v741
        %v750 = vmax.f32 %v742, 0.0
        %v751 = vmax.f32 %v743, 0.0
        %v752 = vmax.f32 %v744, 0.0
        %v753 = vmax.f32 %v745, 0.0
        %v754 = vmax.f32 %v746, 0.0
        %v755 = vmax.f32 %v747, 0.0
        %v756 = vmax.f32 %v748, 0.0
        %v757 = vmax.f32 %v749, 0.0
        %v758 = vpack.c.bf16 %v750, %v750
        %v759 = vpack.c.bf16 %v751, %v751
        %v760 = vpack.c.bf16 %v752, %v752
        %v761 = vpack.c.bf16 %v753, %v753
        %v762 = vpack.c.bf16 %v754, %v754
        %v763 = vpack.c.bf16 %v755, %v755
        %v764 = vpack.c.bf16 %v756, %v756
        %v765 = vpack.c.bf16 %v757, %v757
        %766 = vst [vmem:[%s5] sm:$0xf] %v758
        %767 = vst [vmem:[%s5 + $0x4] sm:$0xf] %v759
        %768 = vst [vmem:[%s5 + $0x8] sm:$0xf] %v760
        %769 = vst [vmem:[%s5 + $0xc] sm:$0xf] %v761
        %770 = vst [vmem:[%s5 + $0x10] sm:$0xf] %v762
        %771 = vst [vmem:[%s5 + $0x14] sm:$0xf] %v763
        %772 = vst [vmem:[%s5 + $0x18] sm:$0xf] %v764
        %773 = vst [vmem:[%s5 + $0x1c] sm:$0xf] %v765
      $region48: #{resnet_forward.18} parent=39 // pred_fallthru
        _
      // Predicated region
      $region49: #{resnet_forward.18} parent=39 // pred_check
        %p774 = pneg %p139
      $region50: #{resnet_forward.18} parent=39 // pred_check_branch
        %776 = sbr.rel (%p774) target = $region52
      $region51: #{resnet_forward.18} parent=39 // pred_region
        _
      $region52: #{resnet_forward.18} parent=39 // pred_fallthru
        _
      // Predicated region
      $region53: #{resnet_forward.18} parent=39 // pred_check
        %p777 = pneg %p139
      $region54: #{resnet_forward.18} parent=39 // pred_check_branch
        %779 = sbr.rel (%p777) target = $region56
      $region55: #{resnet_forward.18} parent=39 // pred_region
        _
      $region56: #{resnet_forward.18} parent=39 // pred_fallthru
        _
    $region40: #{resnet_forward.18} parent=5 // pred_fallthru
      _
    %p780 = scmp.le.s32.totalorder 2, %s11
    // Predicated region
    $region57: #{resnet_forward.18} parent=5 // pred_check
      %p781 = pneg %p780
    $region58: #{resnet_forward.18} parent=5 // pred_check_branch
      %783 = sbr.rel (%p781) target = $region60
    $region59: #{resnet_forward.18} parent=5 // pred_region
      %s784 = ssub.s32 %s11, 2
    $region60: #{resnet_forward.18} parent=5 // pred_fallthru
      _
  $region6: #{resnet_forward.18} parent=0 // loop_footer
    %s15 = sadd.s32 1, %s11
  $region7: #{resnet_forward.18} parent=0 // loop_footer_branch
    %10 = sbr.rel target = $region3
  $region8: #{resnet_forward.18} parent=0 // loop_exit
    _

</llo_original>
